<compile_context>
chip_gen: v7x
topology: tpu7x:2x2x1
jax: 0.10.0
libtpu: 0.0.40
codegen_flags: <defaults>
</compile_context>

<pallas_src>
import numpy as np
import jax
import jax.numpy as jnp
from jax.experimental import pallas as pl
from jax.experimental.pallas import tpu as pltpu

PAD_token, UNK_token, SOS_token, EOS_token = 0, 1, 2, 3


# ----------------------------- fused Pallas kernel -----------------------------


def _seq2seq_kernel(enc_x_ref, dec_x_ref,
                    e_wih_ref, e_whh_ref, e_bih_ref, e_bhh_ref,
                    d_wx_ref, d_wc_ref, d_whh_ref, d_bih_ref, d_bhh_ref,
                    d_wout_ref, d_bout_ref,
                    logits_ref,
                    gi_enc_ref, enc_st_ref, gx_dec_ref):
    """Whole seq2seq forward in one invocation: GRU encoder + attention GRU decoder."""
    f32, bf = jnp.float32, jnp.bfloat16
    HP = e_whh_ref.shape[0]
    VP = d_wout_ref.shape[1]
    S, B, _ = enc_st_ref.shape
    Tm1 = logits_ref.shape[0]

    # ---- hoisted input-to-hidden matmuls (large M, off the serial recurrence path) ----
    gi_enc_ref[...] = (jnp.dot(enc_x_ref[...], e_wih_ref[...],
                               preferred_element_type=f32) + e_bih_ref[...])
    gx_dec_ref[...] = (jnp.dot(dec_x_ref[...], d_wx_ref[...],
                               preferred_element_type=f32) + d_bih_ref[...])

    # loop-invariant bias broadcasts (broadcast_in_dim is not CSE'd inside loops)
    e_bhh = jnp.broadcast_to(e_bhh_ref[...], (B, 3 * HP))
    d_bhh = jnp.broadcast_to(d_bhh_ref[...], (B, 3 * HP))
    d_bout = jnp.broadcast_to(d_bout_ref[...], (B, VP))

    # ------------------ encoder GRU: h carried as a fori_loop value ------------------
    def enc_step(t, h):
        gi = gi_enc_ref[pl.ds(pl.multiple_of(t * B, B), B)]            # (B, 3HP) f32
        gh = jnp.dot(h.astype(bf), e_whh_ref[...],
                     preferred_element_type=f32) + e_bhh
        r = jax.nn.sigmoid(gi[:, :HP] + gh[:, :HP])
        z = jax.nn.sigmoid(gi[:, HP:2 * HP] + gh[:, HP:2 * HP])
        n = jnp.tanh(gi[:, 2 * HP:] + r * gh[:, 2 * HP:])
        h_new = (1.0 - z) * n + z * h
        enc_st_ref[t] = h_new                                          # attention memory
        return h_new

    h_final = jax.lax.fori_loop(0, S, enc_step,
                                jnp.zeros((B, HP), f32), unroll=True)

    enc = enc_st_ref[...]                                              # (S, B, HP) f32, VMEM-resident

    # ------ decoder: VPU/XLU attention + GRU cell + stacked-K vocab projection ------
    def dec_step(t, h):
        hb = h.astype(bf)

        # dot-product attention kept OFF the MXU (M=1 / K=S matmuls waste it):
        # broadcast-multiply + lane reduce for scores, sum over S vregs for context.
        scores = jnp.sum(enc * h[None, :, :], axis=-1, keepdims=True)  # (S, B, 1)
        scores = scores - jnp.max(scores, axis=0, keepdims=True)
        e = jnp.exp(scores)
        attn = e / jnp.sum(e, axis=0, keepdims=True)                   # exact reciprocal
        ctx = jnp.sum(attn * enc, axis=0)                              # (B, HP) f32
        cb = ctx.astype(bf)

        # GRU cell over [x ; ctx] (x@Wx hoisted; ctx@Wc / h@Whh stay on serial path)
        gi = (gx_dec_ref[pl.ds(pl.multiple_of(t * B, B), B)]
              + jnp.dot(cb, d_wc_ref[...], preferred_element_type=f32))
        gh = jnp.dot(hb, d_whh_ref[...], preferred_element_type=f32) + d_bhh
        r = jax.nn.sigmoid(gi[:, :HP] + gh[:, :HP])
        z = jax.nn.sigmoid(gi[:, HP:2 * HP] + gh[:, HP:2 * HP])
        n = jnp.tanh(gi[:, 2 * HP:] + r * gh[:, 2 * HP:])
        h_new = (1.0 - z) * n + z * h

        # vocab projection over stacked [h_new ; ctx]: one K=2*HP MXU pass
        hc = jnp.concatenate([h_new.astype(bf), cb], axis=-1)          # (B, 2*HP) bf16
        logits_ref[t] = (jnp.dot(hc, d_wout_ref[...],
                                 preferred_element_type=f32) + d_bout)
        return h_new

    jax.lax.fori_loop(0, Tm1, dec_step, h_final, unroll=True)


# ----------------------------- pallas_call wrapper -----------------------------


def run_seq2seq(enc_x_flat, dec_x_flat, S, Tm1, B, p):
    HP = p["enc_whh"].shape[0]
    VP = p["dec_bout"].shape[1]
    # Pre-stack the output projection weight (single K=2*HP contraction in-kernel).
    w_out = jnp.concatenate([p["dec_woh"], p["dec_woc"]], axis=0)      # (2*HP, VP) bf16

    vmem = lambda: pl.BlockSpec(memory_space=pltpu.MemorySpace.VMEM)
    return pl.pallas_call(
        _seq2seq_kernel,
        out_shape=jax.ShapeDtypeStruct((Tm1, B, VP), jnp.float32),
        in_specs=[vmem() for _ in range(13)],
        out_specs=vmem(),
        scratch_shapes=[
            pltpu.VMEM((S * B, 3 * HP), jnp.float32),     # hoisted encoder input gates
            pltpu.VMEM((S, B, HP), jnp.float32),          # encoder states (attention memory)
            pltpu.VMEM((Tm1 * B, 3 * HP), jnp.float32),   # hoisted decoder input gates
        ],
    )(enc_x_flat, dec_x_flat,
      p["enc_wih"], p["enc_whh"], p["enc_bih"], p["enc_bhh"],
      p["dec_wx"], p["dec_wc"], p["dec_whh"], p["dec_bih"], p["dec_bhh"],
      w_out, p["dec_bout"])


# ------------------------------- params / glue --------------------------------


def init_params(key, vocab, emb, hidden, *, ep, hp, vp, neg=-1e30):
    """Padded parameters: weights bf16 (MXU operands), biases f32, gate-aligned lanes."""
    s = float(1.0 / np.sqrt(hidden))
    keys = iter(jax.random.split(key, 32))

    def u(shp):
        return jax.random.uniform(next(keys), shp, jnp.float32, -s, s)

    def pad2(a, rp, cp, fill=0.0):
        out = jnp.full((rp, cp), fill, jnp.float32)
        return out.at[: a.shape[0], : a.shape[1]].set(a)

    def gate_w(rows, rows_p):
        # Three (rows, hidden) gate blocks, each zero-padded to (rows_p, hp), concat on lanes
        # so gi[:, :hp] / [:, hp:2hp] / [:, 2hp:] land exactly on 128-lane boundaries.
        return jnp.concatenate([pad2(u((rows, hidden)), rows_p, hp) for _ in range(3)], axis=1)

    def gate_b():
        return jnp.concatenate([pad2(u((1, hidden)), 1, hp) for _ in range(3)], axis=1)

    bf = jnp.bfloat16
    return {
        "enc_emb": pad2(u((vocab, emb)), vocab, ep).astype(bf),   # (V, EP)
        "enc_wih": gate_w(emb, ep).astype(bf),                    # (EP, 3*HP)
        "enc_whh": gate_w(hidden, hp).astype(bf),                 # (HP, 3*HP)
        "enc_bih": gate_b(),                                      # (1, 3*HP) f32
        "enc_bhh": gate_b(),
        "dec_emb": pad2(u((vocab, emb)), vocab, ep).astype(bf),
        "dec_wx": gate_w(emb, ep).astype(bf),
        "dec_wc": gate_w(hidden, hp).astype(bf),
        "dec_whh": gate_w(hidden, hp).astype(bf),
        "dec_bih": gate_b(),
        "dec_bhh": gate_b(),
        "dec_woh": pad2(u((hidden, vocab)), hp, vp).astype(bf),   # (HP, VP)
        "dec_woc": pad2(u((hidden, vocab)), hp, vp).astype(bf),
        "dec_bout": pad2(u((1, vocab)), 1, vp, fill=neg),         # padded logits -> -1e30
    }


def seq2seq_forward(params, source, target, vocab_size, teacher_forcing_ratio=1.0):
    """Forward pass. teacher_forcing_ratio == 1.0 => decoder input is always target[t-1],
    exactly matching the reference `random.random() < ratio` branch at ratio 1.0."""
    # TODO(synk): ratio < 1.0 requires an on-device greedy-token feedback loop (not implemented).
    S, B = source.shape
    T = target.shape[0]

    # One gather per sequence, already in the flat (rows, EP) layout the kernel wants.
    enc_x = jnp.take(params["enc_emb"], source.reshape(-1), axis=0)        # (S*B, EP) bf16
    dec_x = jnp.take(params["dec_emb"], target[:-1].reshape(-1), axis=0)   # ((T-1)*B, EP) bf16

    logits = run_seq2seq(enc_x, dec_x, S, T - 1, B, params)                # (T-1, B, VP) f32

    outputs = jnp.concatenate(
        [jnp.zeros((1, B, logits.shape[-1]), jnp.float32), logits], axis=0)[:, :, :vocab_size]
    pred = jnp.argmax(logits[:, :, :vocab_size], axis=-1).astype(jnp.int32)   # (T-1, B)
    return outputs, pred


def seq2seq_reference(p, source, target, hp):
    """Pure-JAX (XLA) replica of the kernel math for a correctness check."""
    S, B = source.shape
    T = target.shape[0]
    bf = jnp.bfloat16
    enc_x = jnp.take(p["enc_emb"], source, axis=0)                 # (S, B, EP)
    dec_x = jnp.take(p["dec_emb"], target[:-1], axis=0)            # (T-1, B, EP)

    h = jnp.zeros((B, hp), jnp.float32)
    states = []
    for t in range(S):
        gi = jnp.dot(enc_x[t], p["enc_wih"], preferred_element_type=jnp.float32) + p["enc_bih"]
        gh = jnp.dot(h.astype(bf), p["enc_whh"], preferred_element_type=jnp.float32) + p["enc_bhh"]
        r = jax.nn.sigmoid(gi[:, :hp] + gh[:, :hp])
        z = jax.nn.sigmoid(gi[:, hp:2 * hp] + gh[:, hp:2 * hp])
        n = jnp.tanh(gi[:, 2 * hp:] + r * gh[:, 2 * hp:])
        h = (1.0 - z) * n + z * h
        states.append(h)
    enc = jnp.stack(states, axis=0)                                # (S, B, HP) f32

    logits_all = []
    for t in range(T - 1):
        scores = jnp.sum(enc * h[None, :, :], axis=-1, keepdims=True)
        scores = scores - jnp.max(scores, axis=0, keepdims=True)
        e = jnp.exp(scores)
        attn = e / jnp.sum(e, axis=0, keepdims=True)
        ctx = jnp.sum(attn * enc, axis=0)
        cb = ctx.astype(bf)
        hb = h.astype(bf)
        gi = (jnp.dot(dec_x[t], p["dec_wx"], preferred_element_type=jnp.float32)
              + jnp.dot(cb, p["dec_wc"], preferred_element_type=jnp.float32) + p["dec_bih"])
        gh = jnp.dot(hb, p["dec_whh"], preferred_element_type=jnp.float32) + p["dec_bhh"]
        r = jax.nn.sigmoid(gi[:, :hp] + gh[:, :hp])
        z = jax.nn.sigmoid(gi[:, hp:2 * hp] + gh[:, hp:2 * hp])
        n = jnp.tanh(gi[:, 2 * hp:] + r * gh[:, 2 * hp:])
        h = (1.0 - z) * n + z * h
        logits_all.append(jnp.dot(h.astype(bf), p["dec_woh"], preferred_element_type=jnp.float32)
                          + jnp.dot(cb, p["dec_woc"], preferred_element_type=jnp.float32)
                          + p["dec_bout"])
    return jnp.stack(logits_all, axis=0)                           # (T-1, B, VP)


def correct_sequences_count_np(predicted_sequences, target_sequences, batch_size):
    """Replicates correct_sequences_count on token indices (char == char iff idx == idx)."""
    correct = 0
    for i in range(batch_size):
        def word(seq):
            lst, length = [], 0
            for e in seq:
                idx = int(e)
                lst.append(idx)
                length += 1
                if idx == EOS_token:
                    break
            return lst, length - 1
        t_lst, t_len = word(target_sequences[i])
        p_lst, p_len = word(predicted_sequences[i])
        if t_len == p_len and all(x == y for x, y in zip(t_lst, p_lst)):
            correct += 1
    return correct


# --------------------------------- main -------------------------------------

if __name__ == "__main__":
    V, E, H = 16, 16, 32               # logical vocab, embedding, hidden
    VP = EP = HP = 128                 # lane-padded sizes (multiples of 128)
    B, S, T = 8, 10, 8                 # batch, source len, target len

    key = jax.random.PRNGKey(0)
    kp, ks, kt = jax.random.split(key, 3)
    params = init_params(kp, V, E, H, ep=EP, hp=HP, vp=VP)

    source = jax.random.randint(ks, (S, B), 4, V, dtype=jnp.int32)
    target = jax.random.randint(kt, (T, B), 4, V, dtype=jnp.int32)
    target = target.at[0].set(SOS_token).at[-1].set(EOS_token)

    fwd = jax.jit(seq2seq_forward, static_argnums=(3, 4))
    outputs, pred = fwd(params, source, target, V, 1.0)
    outputs, pred = jax.block_until_ready((outputs, pred))

    # correctness: compare against a pure-JAX replica (loose tol: bf16 MXU, EUP transcendentals)
    ref = seq2seq_reference(params, source, target, HP)
    np.testing.assert_allclose(np.asarray(outputs[1:]), np.asarray(ref[:, :, :V]),
                               rtol=5e-2, atol=5e-2)

    # single device->host transfer of predictions; host-side sequence accounting
    predicted_sequences = np.zeros((T, B), dtype=np.int64)     # sized to target_len
    predicted_sequences[1:] = np.asarray(pred)
    correct = correct_sequences_count_np(predicted_sequences[1:].T,
                                         np.asarray(target)[1:].T, B)

    assert outputs.shape == (T, B, V)
    assert bool(jnp.all(outputs[0] == 0.0))
    assert 0 <= correct <= B
    print("KERNEL_OK")
</pallas_src>

<mosaic_0001>
module attributes {stable_mosaic.version = 11 : i64} {
  func.func @_seq2seq_kernel(%arg0: memref<80x128xbf16, #tpu.memory_space<vmem>>, %arg1: memref<56x128xbf16, #tpu.memory_space<vmem>>, %arg2: memref<128x384xbf16, #tpu.memory_space<vmem>>, %arg3: memref<128x384xbf16, #tpu.memory_space<vmem>>, %arg4: memref<1x384xf32, #tpu.memory_space<vmem>>, %arg5: memref<1x384xf32, #tpu.memory_space<vmem>>, %arg6: memref<128x384xbf16, #tpu.memory_space<vmem>>, %arg7: memref<128x384xbf16, #tpu.memory_space<vmem>>, %arg8: memref<128x384xbf16, #tpu.memory_space<vmem>>, %arg9: memref<1x384xf32, #tpu.memory_space<vmem>>, %arg10: memref<1x384xf32, #tpu.memory_space<vmem>>, %arg11: memref<256x128xbf16, #tpu.memory_space<vmem>>, %arg12: memref<1x128xf32, #tpu.memory_space<vmem>>, %arg13: memref<7x8x128xf32, #tpu.memory_space<vmem>>, %arg14: memref<80x384xf32, #tpu.memory_space<vmem>>, %arg15: memref<10x8x128xf32, #tpu.memory_space<vmem>>, %arg16: memref<56x384xf32, #tpu.memory_space<vmem>>) attributes {dimension_semantics = [], scalar_prefetch = 0 : i64, scratch_operands = 3 : i64, tpu.core_type = #tpu.core_type<tc>} {
    %c0 = arith.constant 0 : index
    %c0_0 = arith.constant 0 : index
    %0 = vector.load %arg0[%c0, %c0_0] : memref<80x128xbf16, #tpu.memory_space<vmem>>, vector<80x128xbf16>
    %c0_1 = arith.constant 0 : index
    %c0_2 = arith.constant 0 : index
    %1 = vector.load %arg2[%c0_1, %c0_2] : memref<128x384xbf16, #tpu.memory_space<vmem>>, vector<128x384xbf16>
    %cst = arith.constant dense<0.000000e+00> : vector<80x384xf32>
    %2 = tpu.matmul %0, %1, %cst {dimension_numbers = #tpu.dot_dimension_numbers<[1], [0], [0], [1], [0, 0, 1, 1], [], []>} : vector<80x128xbf16>, vector<128x384xbf16>, vector<80x384xf32> -> vector<80x384xf32>
    %c0_3 = arith.constant 0 : index
    %c0_4 = arith.constant 0 : index
    %3 = vector.load %arg4[%c0_3, %c0_4] : memref<1x384xf32, #tpu.memory_space<vmem>>, vector<1x384xf32>
    %4 = vector.broadcast %3 : vector<1x384xf32> to vector<80x384xf32>
    %5 = arith.addf %2, %4 : vector<80x384xf32>
    %c0_5 = arith.constant 0 : index
    %c0_6 = arith.constant 0 : index
    %6 = vector.load %arg14[%c0_5, %c0_6] : memref<80x384xf32, #tpu.memory_space<vmem>>, vector<80x384xf32>
    tpu.vector_store %arg14[%c0_5, %c0_6], %5 {strides = array<i32>} : memref<80x384xf32, #tpu.memory_space<vmem>>, vector<80x384xf32>,
    %c0_7 = arith.constant 0 : index
    %c0_8 = arith.constant 0 : index
    %7 = vector.load %arg1[%c0_7, %c0_8] : memref<56x128xbf16, #tpu.memory_space<vmem>>, vector<56x128xbf16>
    %c0_9 = arith.constant 0 : index
    %c0_10 = arith.constant 0 : index
    %8 = vector.load %arg6[%c0_9, %c0_10] : memref<128x384xbf16, #tpu.memory_space<vmem>>, vector<128x384xbf16>
    %cst_11 = arith.constant dense<0.000000e+00> : vector<56x384xf32>
    %9 = tpu.matmul %7, %8, %cst_11 {dimension_numbers = #tpu.dot_dimension_numbers<[1], [0], [0], [1], [0, 0, 1, 1], [], []>} : vector<56x128xbf16>, vector<128x384xbf16>, vector<56x384xf32> -> vector<56x384xf32>
    %c0_12 = arith.constant 0 : index
    %c0_13 = arith.constant 0 : index
    %10 = vector.load %arg9[%c0_12, %c0_13] : memref<1x384xf32, #tpu.memory_space<vmem>>, vector<1x384xf32>
    %11 = vector.broadcast %10 : vector<1x384xf32> to vector<56x384xf32>
    %12 = arith.addf %9, %11 : vector<56x384xf32>
    %c0_14 = arith.constant 0 : index
    %c0_15 = arith.constant 0 : index
    %13 = vector.load %arg16[%c0_14, %c0_15] : memref<56x384xf32, #tpu.memory_space<vmem>>, vector<56x384xf32>
    tpu.vector_store %arg16[%c0_14, %c0_15], %12 {strides = array<i32>} : memref<56x384xf32, #tpu.memory_space<vmem>>, vector<56x384xf32>,
    %c0_16 = arith.constant 0 : index
    %c0_17 = arith.constant 0 : index
    %14 = vector.load %arg5[%c0_16, %c0_17] : memref<1x384xf32, #tpu.memory_space<vmem>>, vector<1x384xf32>
    %15 = vector.shape_cast %14 : vector<1x384xf32> to vector<1x384xf32>
    %16 = vector.broadcast %15 : vector<1x384xf32> to vector<8x384xf32>
    %c0_18 = arith.constant 0 : index
    %c0_19 = arith.constant 0 : index
    %17 = vector.load %arg10[%c0_18, %c0_19] : memref<1x384xf32, #tpu.memory_space<vmem>>, vector<1x384xf32>
    %18 = vector.shape_cast %17 : vector<1x384xf32> to vector<1x384xf32>
    %19 = vector.broadcast %18 : vector<1x384xf32> to vector<8x384xf32>
    %c0_20 = arith.constant 0 : index
    %c0_21 = arith.constant 0 : index
    %20 = vector.load %arg12[%c0_20, %c0_21] : memref<1x128xf32, #tpu.memory_space<vmem>>, vector<1x128xf32>
    %21 = vector.shape_cast %20 : vector<1x128xf32> to vector<1x128xf32>
    %22 = vector.broadcast %21 : vector<1x128xf32> to vector<8x128xf32>
    %cst_22 = arith.constant 0.000000e+00 : f32
    %23 = vector.broadcast %cst_22 : f32 to vector<8x128xf32>
    %c0_i32 = arith.constant 0 : i32
    %c8_i32 = arith.constant 8 : i32
    %24 = arith.muli %c0_i32, %c8_i32 : i32
    %25 = tpu.assume_multiple %24, 8 : i32
    %26 = arith.index_cast %25 : i32 to index
    %c0_23 = arith.constant 0 : index
    %27 = vector.load %arg14[%26, %c0_23] : memref<80x384xf32, #tpu.memory_space<vmem>>, vector<8x384xf32>
    %28 = arith.truncf %23 : vector<8x128xf32> to vector<8x128xbf16>
    %c0_24 = arith.constant 0 : index
    %c0_25 = arith.constant 0 : index
    %29 = vector.load %arg3[%c0_24, %c0_25] : memref<128x384xbf16, #tpu.memory_space<vmem>>, vector<128x384xbf16>
    %cst_26 = arith.constant dense<0.000000e+00> : vector<8x384xf32>
    %30 = tpu.matmul %28, %29, %cst_26 {dimension_numbers = #tpu.dot_dimension_numbers<[1], [0], [0], [1], [0, 0, 1, 1], [], []>} : vector<8x128xbf16>, vector<128x384xbf16>, vector<8x384xf32> -> vector<8x384xf32>
    %31 = arith.addf %30, %16 : vector<8x384xf32>
    %32 = vector.extract_strided_slice %27 {offsets = [0, 0], sizes = [8, 128], strides = [1, 1]} : vector<8x384xf32> to vector<8x128xf32>
    %33 = vector.extract_strided_slice %31 {offsets = [0, 0], sizes = [8, 128], strides = [1, 1]} : vector<8x384xf32> to vector<8x128xf32>
    %34 = arith.addf %32, %33 : vector<8x128xf32>
    %35 = arith.negf %34 : vector<8x128xf32>
    %36 = math.exp %35 : vector<8x128xf32>
    %cst_27 = arith.constant 1.000000e+00 : f32
    %37 = vector.broadcast %cst_27 : f32 to vector<8x128xf32>
    %38 = arith.addf %37, %36 : vector<8x128xf32>
    %39 = arith.divf %37, %38 : vector<8x128xf32>
    %40 = vector.extract_strided_slice %27 {offsets = [0, 128], sizes = [8, 128], strides = [1, 1]} : vector<8x384xf32> to vector<8x128xf32>
    %41 = vector.extract_strided_slice %31 {offsets = [0, 128], sizes = [8, 128], strides = [1, 1]} : vector<8x384xf32> to vector<8x128xf32>
    %42 = arith.addf %40, %41 : vector<8x128xf32>
    %43 = arith.negf %42 : vector<8x128xf32>
    %44 = math.exp %43 : vector<8x128xf32>
    %cst_28 = arith.constant 1.000000e+00 : f32
    %45 = vector.broadcast %cst_28 : f32 to vector<8x128xf32>
    %46 = arith.addf %45, %44 : vector<8x128xf32>
    %47 = arith.divf %45, %46 : vector<8x128xf32>
    %48 = vector.extract_strided_slice %27 {offsets = [0, 256], sizes = [8, 128], strides = [1, 1]} : vector<8x384xf32> to vector<8x128xf32>
    %49 = vector.extract_strided_slice %31 {offsets = [0, 256], sizes = [8, 128], strides = [1, 1]} : vector<8x384xf32> to vector<8x128xf32>
    %50 = arith.mulf %39, %49 : vector<8x128xf32>
    %51 = arith.addf %48, %50 : vector<8x128xf32>
    %52 = math.tanh %51 : vector<8x128xf32>
    %cst_29 = arith.constant 1.000000e+00 : f32
    %53 = vector.broadcast %cst_29 : f32 to vector<8x128xf32>
    %54 = arith.subf %53, %47 : vector<8x128xf32>
    %55 = arith.mulf %54, %52 : vector<8x128xf32>
    %56 = arith.mulf %47, %23 : vector<8x128xf32>
    %57 = arith.addf %55, %56 : vector<8x128xf32>
    %58 = arith.index_cast %c0_i32 : i32 to index
    %c0_30 = arith.constant 0 : index
    %c0_31 = arith.constant 0 : index
    %59 = vector.load %arg15[%58, %c0_30, %c0_31] : memref<10x8x128xf32, #tpu.memory_space<vmem>>, vector<1x8x128xf32>
    %60 = vector.shape_cast %59 : vector<1x8x128xf32> to vector<8x128xf32>
    %61 = vector.shape_cast %57 : vector<8x128xf32> to vector<1x8x128xf32>
    tpu.vector_store %arg15[%58, %c0_30, %c0_31], %61 {strides = array<i32>} : memref<10x8x128xf32, #tpu.memory_space<vmem>>, vector<1x8x128xf32>,
    %c1_i32 = arith.constant 1 : i32
    %c8_i32_32 = arith.constant 8 : i32
    %62 = arith.muli %c1_i32, %c8_i32_32 : i32
    %63 = tpu.assume_multiple %62, 8 : i32
    %64 = arith.index_cast %63 : i32 to index
    %c0_33 = arith.constant 0 : index
    %65 = vector.load %arg14[%64, %c0_33] : memref<80x384xf32, #tpu.memory_space<vmem>>, vector<8x384xf32>
    %66 = arith.truncf %57 : vector<8x128xf32> to vector<8x128xbf16>
    %c0_34 = arith.constant 0 : index
    %c0_35 = arith.constant 0 : index
    %67 = vector.load %arg3[%c0_34, %c0_35] : memref<128x384xbf16, #tpu.memory_space<vmem>>, vector<128x384xbf16>
    %cst_36 = arith.constant dense<0.000000e+00> : vector<8x384xf32>
    %68 = tpu.matmul %66, %67, %cst_36 {dimension_numbers = #tpu.dot_dimension_numbers<[1], [0], [0], [1], [0, 0, 1, 1], [], []>} : vector<8x128xbf16>, vector<128x384xbf16>, vector<8x384xf32> -> vector<8x384xf32>
    %69 = arith.addf %68, %16 : vector<8x384xf32>
    %70 = vector.extract_strided_slice %65 {offsets = [0, 0], sizes = [8, 128], strides = [1, 1]} : vector<8x384xf32> to vector<8x128xf32>
    %71 = vector.extract_strided_slice %69 {offsets = [0, 0], sizes = [8, 128], strides = [1, 1]} : vector<8x384xf32> to vector<8x128xf32>
    %72 = arith.addf %70, %71 : vector<8x128xf32>
    %73 = arith.negf %72 : vector<8x128xf32>
    %74 = math.exp %73 : vector<8x128xf32>
    %cst_37 = arith.constant 1.000000e+00 : f32
    %75 = vector.broadcast %cst_37 : f32 to vector<8x128xf32>
    %76 = arith.addf %75, %74 : vector<8x128xf32>
    %77 = arith.divf %75, %76 : vector<8x128xf32>
    %78 = vector.extract_strided_slice %65 {offsets = [0, 128], sizes = [8, 128], strides = [1, 1]} : vector<8x384xf32> to vector<8x128xf32>
    %79 = vector.extract_strided_slice %69 {offsets = [0, 128], sizes = [8, 128], strides = [1, 1]} : vector<8x384xf32> to vector<8x128xf32>
    %80 = arith.addf %78, %79 : vector<8x128xf32>
    %81 = arith.negf %80 : vector<8x128xf32>
    %82 = math.exp %81 : vector<8x128xf32>
    %cst_38 = arith.constant 1.000000e+00 : f32
    %83 = vector.broadcast %cst_38 : f32 to vector<8x128xf32>
    %84 = arith.addf %83, %82 : vector<8x128xf32>
    %85 = arith.divf %83, %84 : vector<8x128xf32>
    %86 = vector.extract_strided_slice %65 {offsets = [0, 256], sizes = [8, 128], strides = [1, 1]} : vector<8x384xf32> to vector<8x128xf32>
    %87 = vector.extract_strided_slice %69 {offsets = [0, 256], sizes = [8, 128], strides = [1, 1]} : vector<8x384xf32> to vector<8x128xf32>
    %88 = arith.mulf %77, %87 : vector<8x128xf32>
    %89 = arith.addf %86, %88 : vector<8x128xf32>
    %90 = math.tanh %89 : vector<8x128xf32>
    %cst_39 = arith.constant 1.000000e+00 : f32
    %91 = vector.broadcast %cst_39 : f32 to vector<8x128xf32>
    %92 = arith.subf %91, %85 : vector<8x128xf32>
    %93 = arith.mulf %92, %90 : vector<8x128xf32>
    %94 = arith.mulf %85, %57 : vector<8x128xf32>
    %95 = arith.addf %93, %94 : vector<8x128xf32>
    %96 = arith.index_cast %c1_i32 : i32 to index
    %c0_40 = arith.constant 0 : index
    %c0_41 = arith.constant 0 : index
    %97 = vector.load %arg15[%96, %c0_40, %c0_41] : memref<10x8x128xf32, #tpu.memory_space<vmem>>, vector<1x8x128xf32>
    %98 = vector.shape_cast %97 : vector<1x8x128xf32> to vector<8x128xf32>
    %99 = vector.shape_cast %95 : vector<8x128xf32> to vector<1x8x128xf32>
    tpu.vector_store %arg15[%96, %c0_40, %c0_41], %99 {strides = array<i32>} : memref<10x8x128xf32, #tpu.memory_space<vmem>>, vector<1x8x128xf32>,
    %c2_i32 = arith.constant 2 : i32
    %c8_i32_42 = arith.constant 8 : i32
    %100 = arith.muli %c2_i32, %c8_i32_42 : i32
    %101 = tpu.assume_multiple %100, 8 : i32
    %102 = arith.index_cast %101 : i32 to index
    %c0_43 = arith.constant 0 : index
    %103 = vector.load %arg14[%102, %c0_43] : memref<80x384xf32, #tpu.memory_space<vmem>>, vector<8x384xf32>
    %104 = arith.truncf %95 : vector<8x128xf32> to vector<8x128xbf16>
    %c0_44 = arith.constant 0 : index
    %c0_45 = arith.constant 0 : index
    %105 = vector.load %arg3[%c0_44, %c0_45] : memref<128x384xbf16, #tpu.memory_space<vmem>>, vector<128x384xbf16>
    %cst_46 = arith.constant dense<0.000000e+00> : vector<8x384xf32>
    %106 = tpu.matmul %104, %105, %cst_46 {dimension_numbers = #tpu.dot_dimension_numbers<[1], [0], [0], [1], [0, 0, 1, 1], [], []>} : vector<8x128xbf16>, vector<128x384xbf16>, vector<8x384xf32> -> vector<8x384xf32>
    %107 = arith.addf %106, %16 : vector<8x384xf32>
    %108 = vector.extract_strided_slice %103 {offsets = [0, 0], sizes = [8, 128], strides = [1, 1]} : vector<8x384xf32> to vector<8x128xf32>
    %109 = vector.extract_strided_slice %107 {offsets = [0, 0], sizes = [8, 128], strides = [1, 1]} : vector<8x384xf32> to vector<8x128xf32>
    %110 = arith.addf %108, %109 : vector<8x128xf32>
    %111 = arith.negf %110 : vector<8x128xf32>
    %112 = math.exp %111 : vector<8x128xf32>
    %cst_47 = arith.constant 1.000000e+00 : f32
    %113 = vector.broadcast %cst_47 : f32 to vector<8x128xf32>
    %114 = arith.addf %113, %112 : vector<8x128xf32>
    %115 = arith.divf %113, %114 : vector<8x128xf32>
    %116 = vector.extract_strided_slice %103 {offsets = [0, 128], sizes = [8, 128], strides = [1, 1]} : vector<8x384xf32> to vector<8x128xf32>
    %117 = vector.extract_strided_slice %107 {offsets = [0, 128], sizes = [8, 128], strides = [1, 1]} : vector<8x384xf32> to vector<8x128xf32>
    %118 = arith.addf %116, %117 : vector<8x128xf32>
    %119 = arith.negf %118 : vector<8x128xf32>
    %120 = math.exp %119 : vector<8x128xf32>
    %cst_48 = arith.constant 1.000000e+00 : f32
    %121 = vector.broadcast %cst_48 : f32 to vector<8x128xf32>
    %122 = arith.addf %121, %120 : vector<8x128xf32>
    %123 = arith.divf %121, %122 : vector<8x128xf32>
    %124 = vector.extract_strided_slice %103 {offsets = [0, 256], sizes = [8, 128], strides = [1, 1]} : vector<8x384xf32> to vector<8x128xf32>
    %125 = vector.extract_strided_slice %107 {offsets = [0, 256], sizes = [8, 128], strides = [1, 1]} : vector<8x384xf32> to vector<8x128xf32>
    %126 = arith.mulf %115, %125 : vector<8x128xf32>
    %127 = arith.addf %124, %126 : vector<8x128xf32>
    %128 = math.tanh %127 : vector<8x128xf32>
    %cst_49 = arith.constant 1.000000e+00 : f32
    %129 = vector.broadcast %cst_49 : f32 to vector<8x128xf32>
    %130 = arith.subf %129, %123 : vector<8x128xf32>
    %131 = arith.mulf %130, %128 : vector<8x128xf32>
    %132 = arith.mulf %123, %95 : vector<8x128xf32>
    %133 = arith.addf %131, %132 : vector<8x128xf32>
    %134 = arith.index_cast %c2_i32 : i32 to index
    %c0_50 = arith.constant 0 : index
    %c0_51 = arith.constant 0 : index
    %135 = vector.load %arg15[%134, %c0_50, %c0_51] : memref<10x8x128xf32, #tpu.memory_space<vmem>>, vector<1x8x128xf32>
    %136 = vector.shape_cast %135 : vector<1x8x128xf32> to vector<8x128xf32>
    %137 = vector.shape_cast %133 : vector<8x128xf32> to vector<1x8x128xf32>
    tpu.vector_store %arg15[%134, %c0_50, %c0_51], %137 {strides = array<i32>} : memref<10x8x128xf32, #tpu.memory_space<vmem>>, vector<1x8x128xf32>,
    %c3_i32 = arith.constant 3 : i32
    %c8_i32_52 = arith.constant 8 : i32
    %138 = arith.muli %c3_i32, %c8_i32_52 : i32
    %139 = tpu.assume_multiple %138, 8 : i32
    %140 = arith.index_cast %139 : i32 to index
    %c0_53 = arith.constant 0 : index
    %141 = vector.load %arg14[%140, %c0_53] : memref<80x384xf32, #tpu.memory_space<vmem>>, vector<8x384xf32>
    %142 = arith.truncf %133 : vector<8x128xf32> to vector<8x128xbf16>
    %c0_54 = arith.constant 0 : index
    %c0_55 = arith.constant 0 : index
    %143 = vector.load %arg3[%c0_54, %c0_55] : memref<128x384xbf16, #tpu.memory_space<vmem>>, vector<128x384xbf16>
    %cst_56 = arith.constant dense<0.000000e+00> : vector<8x384xf32>
    %144 = tpu.matmul %142, %143, %cst_56 {dimension_numbers = #tpu.dot_dimension_numbers<[1], [0], [0], [1], [0, 0, 1, 1], [], []>} : vector<8x128xbf16>, vector<128x384xbf16>, vector<8x384xf32> -> vector<8x384xf32>
    %145 = arith.addf %144, %16 : vector<8x384xf32>
    %146 = vector.extract_strided_slice %141 {offsets = [0, 0], sizes = [8, 128], strides = [1, 1]} : vector<8x384xf32> to vector<8x128xf32>
    %147 = vector.extract_strided_slice %145 {offsets = [0, 0], sizes = [8, 128], strides = [1, 1]} : vector<8x384xf32> to vector<8x128xf32>
    %148 = arith.addf %146, %147 : vector<8x128xf32>
    %149 = arith.negf %148 : vector<8x128xf32>
    %150 = math.exp %149 : vector<8x128xf32>
    %cst_57 = arith.constant 1.000000e+00 : f32
    %151 = vector.broadcast %cst_57 : f32 to vector<8x128xf32>
    %152 = arith.addf %151, %150 : vector<8x128xf32>
    %153 = arith.divf %151, %152 : vector<8x128xf32>
    %154 = vector.extract_strided_slice %141 {offsets = [0, 128], sizes = [8, 128], strides = [1, 1]} : vector<8x384xf32> to vector<8x128xf32>
    %155 = vector.extract_strided_slice %145 {offsets = [0, 128], sizes = [8, 128], strides = [1, 1]} : vector<8x384xf32> to vector<8x128xf32>
    %156 = arith.addf %154, %155 : vector<8x128xf32>
    %157 = arith.negf %156 : vector<8x128xf32>
    %158 = math.exp %157 : vector<8x128xf32>
    %cst_58 = arith.constant 1.000000e+00 : f32
    %159 = vector.broadcast %cst_58 : f32 to vector<8x128xf32>
    %160 = arith.addf %159, %158 : vector<8x128xf32>
    %161 = arith.divf %159, %160 : vector<8x128xf32>
    %162 = vector.extract_strided_slice %141 {offsets = [0, 256], sizes = [8, 128], strides = [1, 1]} : vector<8x384xf32> to vector<8x128xf32>
    %163 = vector.extract_strided_slice %145 {offsets = [0, 256], sizes = [8, 128], strides = [1, 1]} : vector<8x384xf32> to vector<8x128xf32>
    %164 = arith.mulf %153, %163 : vector<8x128xf32>
    %165 = arith.addf %162, %164 : vector<8x128xf32>
    %166 = math.tanh %165 : vector<8x128xf32>
    %cst_59 = arith.constant 1.000000e+00 : f32
    %167 = vector.broadcast %cst_59 : f32 to vector<8x128xf32>
    %168 = arith.subf %167, %161 : vector<8x128xf32>
    %169 = arith.mulf %168, %166 : vector<8x128xf32>
    %170 = arith.mulf %161, %133 : vector<8x128xf32>
    %171 = arith.addf %169, %170 : vector<8x128xf32>
    %172 = arith.index_cast %c3_i32 : i32 to index
    %c0_60 = arith.constant 0 : index
    %c0_61 = arith.constant 0 : index
    %173 = vector.load %arg15[%172, %c0_60, %c0_61] : memref<10x8x128xf32, #tpu.memory_space<vmem>>, vector<1x8x128xf32>
    %174 = vector.shape_cast %173 : vector<1x8x128xf32> to vector<8x128xf32>
    %175 = vector.shape_cast %171 : vector<8x128xf32> to vector<1x8x128xf32>
    tpu.vector_store %arg15[%172, %c0_60, %c0_61], %175 {strides = array<i32>} : memref<10x8x128xf32, #tpu.memory_space<vmem>>, vector<1x8x128xf32>,
    %c4_i32 = arith.constant 4 : i32
    %c8_i32_62 = arith.constant 8 : i32
    %176 = arith.muli %c4_i32, %c8_i32_62 : i32
    %177 = tpu.assume_multiple %176, 8 : i32
    %178 = arith.index_cast %177 : i32 to index
    %c0_63 = arith.constant 0 : index
    %179 = vector.load %arg14[%178, %c0_63] : memref<80x384xf32, #tpu.memory_space<vmem>>, vector<8x384xf32>
    %180 = arith.truncf %171 : vector<8x128xf32> to vector<8x128xbf16>
    %c0_64 = arith.constant 0 : index
    %c0_65 = arith.constant 0 : index
    %181 = vector.load %arg3[%c0_64, %c0_65] : memref<128x384xbf16, #tpu.memory_space<vmem>>, vector<128x384xbf16>
    %cst_66 = arith.constant dense<0.000000e+00> : vector<8x384xf32>
    %182 = tpu.matmul %180, %181, %cst_66 {dimension_numbers = #tpu.dot_dimension_numbers<[1], [0], [0], [1], [0, 0, 1, 1], [], []>} : vector<8x128xbf16>, vector<128x384xbf16>, vector<8x384xf32> -> vector<8x384xf32>
    %183 = arith.addf %182, %16 : vector<8x384xf32>
    %184 = vector.extract_strided_slice %179 {offsets = [0, 0], sizes = [8, 128], strides = [1, 1]} : vector<8x384xf32> to vector<8x128xf32>
    %185 = vector.extract_strided_slice %183 {offsets = [0, 0], sizes = [8, 128], strides = [1, 1]} : vector<8x384xf32> to vector<8x128xf32>
    %186 = arith.addf %184, %185 : vector<8x128xf32>
    %187 = arith.negf %186 : vector<8x128xf32>
    %188 = math.exp %187 : vector<8x128xf32>
    %cst_67 = arith.constant 1.000000e+00 : f32
    %189 = vector.broadcast %cst_67 : f32 to vector<8x128xf32>
    %190 = arith.addf %189, %188 : vector<8x128xf32>
    %191 = arith.divf %189, %190 : vector<8x128xf32>
    %192 = vector.extract_strided_slice %179 {offsets = [0, 128], sizes = [8, 128], strides = [1, 1]} : vector<8x384xf32> to vector<8x128xf32>
    %193 = vector.extract_strided_slice %183 {offsets = [0, 128], sizes = [8, 128], strides = [1, 1]} : vector<8x384xf32> to vector<8x128xf32>
    %194 = arith.addf %192, %193 : vector<8x128xf32>
    %195 = arith.negf %194 : vector<8x128xf32>
    %196 = math.exp %195 : vector<8x128xf32>
    %cst_68 = arith.constant 1.000000e+00 : f32
    %197 = vector.broadcast %cst_68 : f32 to vector<8x128xf32>
    %198 = arith.addf %197, %196 : vector<8x128xf32>
    %199 = arith.divf %197, %198 : vector<8x128xf32>
    %200 = vector.extract_strided_slice %179 {offsets = [0, 256], sizes = [8, 128], strides = [1, 1]} : vector<8x384xf32> to vector<8x128xf32>
    %201 = vector.extract_strided_slice %183 {offsets = [0, 256], sizes = [8, 128], strides = [1, 1]} : vector<8x384xf32> to vector<8x128xf32>
    %202 = arith.mulf %191, %201 : vector<8x128xf32>
    %203 = arith.addf %200, %202 : vector<8x128xf32>
    %204 = math.tanh %203 : vector<8x128xf32>
    %cst_69 = arith.constant 1.000000e+00 : f32
    %205 = vector.broadcast %cst_69 : f32 to vector<8x128xf32>
    %206 = arith.subf %205, %199 : vector<8x128xf32>
    %207 = arith.mulf %206, %204 : vector<8x128xf32>
    %208 = arith.mulf %199, %171 : vector<8x128xf32>
    %209 = arith.addf %207, %208 : vector<8x128xf32>
    %210 = arith.index_cast %c4_i32 : i32 to index
    %c0_70 = arith.constant 0 : index
    %c0_71 = arith.constant 0 : index
    %211 = vector.load %arg15[%210, %c0_70, %c0_71] : memref<10x8x128xf32, #tpu.memory_space<vmem>>, vector<1x8x128xf32>
    %212 = vector.shape_cast %211 : vector<1x8x128xf32> to vector<8x128xf32>
    %213 = vector.shape_cast %209 : vector<8x128xf32> to vector<1x8x128xf32>
    tpu.vector_store %arg15[%210, %c0_70, %c0_71], %213 {strides = array<i32>} : memref<10x8x128xf32, #tpu.memory_space<vmem>>, vector<1x8x128xf32>,
    %c5_i32 = arith.constant 5 : i32
    %c8_i32_72 = arith.constant 8 : i32
    %214 = arith.muli %c5_i32, %c8_i32_72 : i32
    %215 = tpu.assume_multiple %214, 8 : i32
    %216 = arith.index_cast %215 : i32 to index
    %c0_73 = arith.constant 0 : index
    %217 = vector.load %arg14[%216, %c0_73] : memref<80x384xf32, #tpu.memory_space<vmem>>, vector<8x384xf32>
    %218 = arith.truncf %209 : vector<8x128xf32> to vector<8x128xbf16>
    %c0_74 = arith.constant 0 : index
    %c0_75 = arith.constant 0 : index
    %219 = vector.load %arg3[%c0_74, %c0_75] : memref<128x384xbf16, #tpu.memory_space<vmem>>, vector<128x384xbf16>
    %cst_76 = arith.constant dense<0.000000e+00> : vector<8x384xf32>
    %220 = tpu.matmul %218, %219, %cst_76 {dimension_numbers = #tpu.dot_dimension_numbers<[1], [0], [0], [1], [0, 0, 1, 1], [], []>} : vector<8x128xbf16>, vector<128x384xbf16>, vector<8x384xf32> -> vector<8x384xf32>
    %221 = arith.addf %220, %16 : vector<8x384xf32>
    %222 = vector.extract_strided_slice %217 {offsets = [0, 0], sizes = [8, 128], strides = [1, 1]} : vector<8x384xf32> to vector<8x128xf32>
    %223 = vector.extract_strided_slice %221 {offsets = [0, 0], sizes = [8, 128], strides = [1, 1]} : vector<8x384xf32> to vector<8x128xf32>
    %224 = arith.addf %222, %223 : vector<8x128xf32>
    %225 = arith.negf %224 : vector<8x128xf32>
    %226 = math.exp %225 : vector<8x128xf32>
    %cst_77 = arith.constant 1.000000e+00 : f32
    %227 = vector.broadcast %cst_77 : f32 to vector<8x128xf32>
    %228 = arith.addf %227, %226 : vector<8x128xf32>
    %229 = arith.divf %227, %228 : vector<8x128xf32>
    %230 = vector.extract_strided_slice %217 {offsets = [0, 128], sizes = [8, 128], strides = [1, 1]} : vector<8x384xf32> to vector<8x128xf32>
    %231 = vector.extract_strided_slice %221 {offsets = [0, 128], sizes = [8, 128], strides = [1, 1]} : vector<8x384xf32> to vector<8x128xf32>
    %232 = arith.addf %230, %231 : vector<8x128xf32>
    %233 = arith.negf %232 : vector<8x128xf32>
    %234 = math.exp %233 : vector<8x128xf32>
    %cst_78 = arith.constant 1.000000e+00 : f32
    %235 = vector.broadcast %cst_78 : f32 to vector<8x128xf32>
    %236 = arith.addf %235, %234 : vector<8x128xf32>
    %237 = arith.divf %235, %236 : vector<8x128xf32>
    %238 = vector.extract_strided_slice %217 {offsets = [0, 256], sizes = [8, 128], strides = [1, 1]} : vector<8x384xf32> to vector<8x128xf32>
    %239 = vector.extract_strided_slice %221 {offsets = [0, 256], sizes = [8, 128], strides = [1, 1]} : vector<8x384xf32> to vector<8x128xf32>
    %240 = arith.mulf %229, %239 : vector<8x128xf32>
    %241 = arith.addf %238, %240 : vector<8x128xf32>
    %242 = math.tanh %241 : vector<8x128xf32>
    %cst_79 = arith.constant 1.000000e+00 : f32
    %243 = vector.broadcast %cst_79 : f32 to vector<8x128xf32>
    %244 = arith.subf %243, %237 : vector<8x128xf32>
    %245 = arith.mulf %244, %242 : vector<8x128xf32>
    %246 = arith.mulf %237, %209 : vector<8x128xf32>
    %247 = arith.addf %245, %246 : vector<8x128xf32>
    %248 = arith.index_cast %c5_i32 : i32 to index
    %c0_80 = arith.constant 0 : index
    %c0_81 = arith.constant 0 : index
    %249 = vector.load %arg15[%248, %c0_80, %c0_81] : memref<10x8x128xf32, #tpu.memory_space<vmem>>, vector<1x8x128xf32>
    %250 = vector.shape_cast %249 : vector<1x8x128xf32> to vector<8x128xf32>
    %251 = vector.shape_cast %247 : vector<8x128xf32> to vector<1x8x128xf32>
    tpu.vector_store %arg15[%248, %c0_80, %c0_81], %251 {strides = array<i32>} : memref<10x8x128xf32, #tpu.memory_space<vmem>>, vector<1x8x128xf32>,
    %c6_i32 = arith.constant 6 : i32
    %c8_i32_82 = arith.constant 8 : i32
    %252 = arith.muli %c6_i32, %c8_i32_82 : i32
    %253 = tpu.assume_multiple %252, 8 : i32
    %254 = arith.index_cast %253 : i32 to index
    %c0_83 = arith.constant 0 : index
    %255 = vector.load %arg14[%254, %c0_83] : memref<80x384xf32, #tpu.memory_space<vmem>>, vector<8x384xf32>
    %256 = arith.truncf %247 : vector<8x128xf32> to vector<8x128xbf16>
    %c0_84 = arith.constant 0 : index
    %c0_85 = arith.constant 0 : index
    %257 = vector.load %arg3[%c0_84, %c0_85] : memref<128x384xbf16, #tpu.memory_space<vmem>>, vector<128x384xbf16>
    %cst_86 = arith.constant dense<0.000000e+00> : vector<8x384xf32>
    %258 = tpu.matmul %256, %257, %cst_86 {dimension_numbers = #tpu.dot_dimension_numbers<[1], [0], [0], [1], [0, 0, 1, 1], [], []>} : vector<8x128xbf16>, vector<128x384xbf16>, vector<8x384xf32> -> vector<8x384xf32>
    %259 = arith.addf %258, %16 : vector<8x384xf32>
    %260 = vector.extract_strided_slice %255 {offsets = [0, 0], sizes = [8, 128], strides = [1, 1]} : vector<8x384xf32> to vector<8x128xf32>
    %261 = vector.extract_strided_slice %259 {offsets = [0, 0], sizes = [8, 128], strides = [1, 1]} : vector<8x384xf32> to vector<8x128xf32>
    %262 = arith.addf %260, %261 : vector<8x128xf32>
    %263 = arith.negf %262 : vector<8x128xf32>
    %264 = math.exp %263 : vector<8x128xf32>
    %cst_87 = arith.constant 1.000000e+00 : f32
    %265 = vector.broadcast %cst_87 : f32 to vector<8x128xf32>
    %266 = arith.addf %265, %264 : vector<8x128xf32>
    %267 = arith.divf %265, %266 : vector<8x128xf32>
    %268 = vector.extract_strided_slice %255 {offsets = [0, 128], sizes = [8, 128], strides = [1, 1]} : vector<8x384xf32> to vector<8x128xf32>
    %269 = vector.extract_strided_slice %259 {offsets = [0, 128], sizes = [8, 128], strides = [1, 1]} : vector<8x384xf32> to vector<8x128xf32>
    %270 = arith.addf %268, %269 : vector<8x128xf32>
    %271 = arith.negf %270 : vector<8x128xf32>
    %272 = math.exp %271 : vector<8x128xf32>
    %cst_88 = arith.constant 1.000000e+00 : f32
    %273 = vector.broadcast %cst_88 : f32 to vector<8x128xf32>
    %274 = arith.addf %273, %272 : vector<8x128xf32>
    %275 = arith.divf %273, %274 : vector<8x128xf32>
    %276 = vector.extract_strided_slice %255 {offsets = [0, 256], sizes = [8, 128], strides = [1, 1]} : vector<8x384xf32> to vector<8x128xf32>
    %277 = vector.extract_strided_slice %259 {offsets = [0, 256], sizes = [8, 128], strides = [1, 1]} : vector<8x384xf32> to vector<8x128xf32>
    %278 = arith.mulf %267, %277 : vector<8x128xf32>
    %279 = arith.addf %276, %278 : vector<8x128xf32>
    %280 = math.tanh %279 : vector<8x128xf32>
    %cst_89 = arith.constant 1.000000e+00 : f32
    %281 = vector.broadcast %cst_89 : f32 to vector<8x128xf32>
    %282 = arith.subf %281, %275 : vector<8x128xf32>
    %283 = arith.mulf %282, %280 : vector<8x128xf32>
    %284 = arith.mulf %275, %247 : vector<8x128xf32>
    %285 = arith.addf %283, %284 : vector<8x128xf32>
    %286 = arith.index_cast %c6_i32 : i32 to index
    %c0_90 = arith.constant 0 : index
    %c0_91 = arith.constant 0 : index
    %287 = vector.load %arg15[%286, %c0_90, %c0_91] : memref<10x8x128xf32, #tpu.memory_space<vmem>>, vector<1x8x128xf32>
    %288 = vector.shape_cast %287 : vector<1x8x128xf32> to vector<8x128xf32>
    %289 = vector.shape_cast %285 : vector<8x128xf32> to vector<1x8x128xf32>
    tpu.vector_store %arg15[%286, %c0_90, %c0_91], %289 {strides = array<i32>} : memref<10x8x128xf32, #tpu.memory_space<vmem>>, vector<1x8x128xf32>,
    %c7_i32 = arith.constant 7 : i32
    %c8_i32_92 = arith.constant 8 : i32
    %290 = arith.muli %c7_i32, %c8_i32_92 : i32
    %291 = tpu.assume_multiple %290, 8 : i32
    %292 = arith.index_cast %291 : i32 to index
    %c0_93 = arith.constant 0 : index
    %293 = vector.load %arg14[%292, %c0_93] : memref<80x384xf32, #tpu.memory_space<vmem>>, vector<8x384xf32>
    %294 = arith.truncf %285 : vector<8x128xf32> to vector<8x128xbf16>
    %c0_94 = arith.constant 0 : index
    %c0_95 = arith.constant 0 : index
    %295 = vector.load %arg3[%c0_94, %c0_95] : memref<128x384xbf16, #tpu.memory_space<vmem>>, vector<128x384xbf16>
    %cst_96 = arith.constant dense<0.000000e+00> : vector<8x384xf32>
    %296 = tpu.matmul %294, %295, %cst_96 {dimension_numbers = #tpu.dot_dimension_numbers<[1], [0], [0], [1], [0, 0, 1, 1], [], []>} : vector<8x128xbf16>, vector<128x384xbf16>, vector<8x384xf32> -> vector<8x384xf32>
    %297 = arith.addf %296, %16 : vector<8x384xf32>
    %298 = vector.extract_strided_slice %293 {offsets = [0, 0], sizes = [8, 128], strides = [1, 1]} : vector<8x384xf32> to vector<8x128xf32>
    %299 = vector.extract_strided_slice %297 {offsets = [0, 0], sizes = [8, 128], strides = [1, 1]} : vector<8x384xf32> to vector<8x128xf32>
    %300 = arith.addf %298, %299 : vector<8x128xf32>
    %301 = arith.negf %300 : vector<8x128xf32>
    %302 = math.exp %301 : vector<8x128xf32>
    %cst_97 = arith.constant 1.000000e+00 : f32
    %303 = vector.broadcast %cst_97 : f32 to vector<8x128xf32>
    %304 = arith.addf %303, %302 : vector<8x128xf32>
    %305 = arith.divf %303, %304 : vector<8x128xf32>
    %306 = vector.extract_strided_slice %293 {offsets = [0, 128], sizes = [8, 128], strides = [1, 1]} : vector<8x384xf32> to vector<8x128xf32>
    %307 = vector.extract_strided_slice %297 {offsets = [0, 128], sizes = [8, 128], strides = [1, 1]} : vector<8x384xf32> to vector<8x128xf32>
    %308 = arith.addf %306, %307 : vector<8x128xf32>
    %309 = arith.negf %308 : vector<8x128xf32>
    %310 = math.exp %309 : vector<8x128xf32>
    %cst_98 = arith.constant 1.000000e+00 : f32
    %311 = vector.broadcast %cst_98 : f32 to vector<8x128xf32>
    %312 = arith.addf %311, %310 : vector<8x128xf32>
    %313 = arith.divf %311, %312 : vector<8x128xf32>
    %314 = vector.extract_strided_slice %293 {offsets = [0, 256], sizes = [8, 128], strides = [1, 1]} : vector<8x384xf32> to vector<8x128xf32>
    %315 = vector.extract_strided_slice %297 {offsets = [0, 256], sizes = [8, 128], strides = [1, 1]} : vector<8x384xf32> to vector<8x128xf32>
    %316 = arith.mulf %305, %315 : vector<8x128xf32>
    %317 = arith.addf %314, %316 : vector<8x128xf32>
    %318 = math.tanh %317 : vector<8x128xf32>
    %cst_99 = arith.constant 1.000000e+00 : f32
    %319 = vector.broadcast %cst_99 : f32 to vector<8x128xf32>
    %320 = arith.subf %319, %313 : vector<8x128xf32>
    %321 = arith.mulf %320, %318 : vector<8x128xf32>
    %322 = arith.mulf %313, %285 : vector<8x128xf32>
    %323 = arith.addf %321, %322 : vector<8x128xf32>
    %324 = arith.index_cast %c7_i32 : i32 to index
    %c0_100 = arith.constant 0 : index
    %c0_101 = arith.constant 0 : index
    %325 = vector.load %arg15[%324, %c0_100, %c0_101] : memref<10x8x128xf32, #tpu.memory_space<vmem>>, vector<1x8x128xf32>
    %326 = vector.shape_cast %325 : vector<1x8x128xf32> to vector<8x128xf32>
    %327 = vector.shape_cast %323 : vector<8x128xf32> to vector<1x8x128xf32>
    tpu.vector_store %arg15[%324, %c0_100, %c0_101], %327 {strides = array<i32>} : memref<10x8x128xf32, #tpu.memory_space<vmem>>, vector<1x8x128xf32>,
    %c8_i32_102 = arith.constant 8 : i32
    %c8_i32_103 = arith.constant 8 : i32
    %328 = arith.muli %c8_i32_102, %c8_i32_103 : i32
    %329 = tpu.assume_multiple %328, 8 : i32
    %330 = arith.index_cast %329 : i32 to index
    %c0_104 = arith.constant 0 : index
    %331 = vector.load %arg14[%330, %c0_104] : memref<80x384xf32, #tpu.memory_space<vmem>>, vector<8x384xf32>
    %332 = arith.truncf %323 : vector<8x128xf32> to vector<8x128xbf16>
    %c0_105 = arith.constant 0 : index
    %c0_106 = arith.constant 0 : index
    %333 = vector.load %arg3[%c0_105, %c0_106] : memref<128x384xbf16, #tpu.memory_space<vmem>>, vector<128x384xbf16>
    %cst_107 = arith.constant dense<0.000000e+00> : vector<8x384xf32>
    %334 = tpu.matmul %332, %333, %cst_107 {dimension_numbers = #tpu.dot_dimension_numbers<[1], [0], [0], [1], [0, 0, 1, 1], [], []>} : vector<8x128xbf16>, vector<128x384xbf16>, vector<8x384xf32> -> vector<8x384xf32>
    %335 = arith.addf %334, %16 : vector<8x384xf32>
    %336 = vector.extract_strided_slice %331 {offsets = [0, 0], sizes = [8, 128], strides = [1, 1]} : vector<8x384xf32> to vector<8x128xf32>
    %337 = vector.extract_strided_slice %335 {offsets = [0, 0], sizes = [8, 128], strides = [1, 1]} : vector<8x384xf32> to vector<8x128xf32>
    %338 = arith.addf %336, %337 : vector<8x128xf32>
    %339 = arith.negf %338 : vector<8x128xf32>
    %340 = math.exp %339 : vector<8x128xf32>
    %cst_108 = arith.constant 1.000000e+00 : f32
    %341 = vector.broadcast %cst_108 : f32 to vector<8x128xf32>
    %342 = arith.addf %341, %340 : vector<8x128xf32>
    %343 = arith.divf %341, %342 : vector<8x128xf32>
    %344 = vector.extract_strided_slice %331 {offsets = [0, 128], sizes = [8, 128], strides = [1, 1]} : vector<8x384xf32> to vector<8x128xf32>
    %345 = vector.extract_strided_slice %335 {offsets = [0, 128], sizes = [8, 128], strides = [1, 1]} : vector<8x384xf32> to vector<8x128xf32>
    %346 = arith.addf %344, %345 : vector<8x128xf32>
    %347 = arith.negf %346 : vector<8x128xf32>
    %348 = math.exp %347 : vector<8x128xf32>
    %cst_109 = arith.constant 1.000000e+00 : f32
    %349 = vector.broadcast %cst_109 : f32 to vector<8x128xf32>
    %350 = arith.addf %349, %348 : vector<8x128xf32>
    %351 = arith.divf %349, %350 : vector<8x128xf32>
    %352 = vector.extract_strided_slice %331 {offsets = [0, 256], sizes = [8, 128], strides = [1, 1]} : vector<8x384xf32> to vector<8x128xf32>
    %353 = vector.extract_strided_slice %335 {offsets = [0, 256], sizes = [8, 128], strides = [1, 1]} : vector<8x384xf32> to vector<8x128xf32>
    %354 = arith.mulf %343, %353 : vector<8x128xf32>
    %355 = arith.addf %352, %354 : vector<8x128xf32>
    %356 = math.tanh %355 : vector<8x128xf32>
    %cst_110 = arith.constant 1.000000e+00 : f32
    %357 = vector.broadcast %cst_110 : f32 to vector<8x128xf32>
    %358 = arith.subf %357, %351 : vector<8x128xf32>
    %359 = arith.mulf %358, %356 : vector<8x128xf32>
    %360 = arith.mulf %351, %323 : vector<8x128xf32>
    %361 = arith.addf %359, %360 : vector<8x128xf32>
    %362 = arith.index_cast %c8_i32_102 : i32 to index
    %c0_111 = arith.constant 0 : index
    %c0_112 = arith.constant 0 : index
    %363 = vector.load %arg15[%362, %c0_111, %c0_112] : memref<10x8x128xf32, #tpu.memory_space<vmem>>, vector<1x8x128xf32>
    %364 = vector.shape_cast %363 : vector<1x8x128xf32> to vector<8x128xf32>
    %365 = vector.shape_cast %361 : vector<8x128xf32> to vector<1x8x128xf32>
    tpu.vector_store %arg15[%362, %c0_111, %c0_112], %365 {strides = array<i32>} : memref<10x8x128xf32, #tpu.memory_space<vmem>>, vector<1x8x128xf32>,
    %c9_i32 = arith.constant 9 : i32
    %c8_i32_113 = arith.constant 8 : i32
    %366 = arith.muli %c9_i32, %c8_i32_113 : i32
    %367 = tpu.assume_multiple %366, 8 : i32
    %368 = arith.index_cast %367 : i32 to index
    %c0_114 = arith.constant 0 : index
    %369 = vector.load %arg14[%368, %c0_114] : memref<80x384xf32, #tpu.memory_space<vmem>>, vector<8x384xf32>
    %370 = arith.truncf %361 : vector<8x128xf32> to vector<8x128xbf16>
    %c0_115 = arith.constant 0 : index
    %c0_116 = arith.constant 0 : index
    %371 = vector.load %arg3[%c0_115, %c0_116] : memref<128x384xbf16, #tpu.memory_space<vmem>>, vector<128x384xbf16>
    %cst_117 = arith.constant dense<0.000000e+00> : vector<8x384xf32>
    %372 = tpu.matmul %370, %371, %cst_117 {dimension_numbers = #tpu.dot_dimension_numbers<[1], [0], [0], [1], [0, 0, 1, 1], [], []>} : vector<8x128xbf16>, vector<128x384xbf16>, vector<8x384xf32> -> vector<8x384xf32>
    %373 = arith.addf %372, %16 : vector<8x384xf32>
    %374 = vector.extract_strided_slice %369 {offsets = [0, 0], sizes = [8, 128], strides = [1, 1]} : vector<8x384xf32> to vector<8x128xf32>
    %375 = vector.extract_strided_slice %373 {offsets = [0, 0], sizes = [8, 128], strides = [1, 1]} : vector<8x384xf32> to vector<8x128xf32>
    %376 = arith.addf %374, %375 : vector<8x128xf32>
    %377 = arith.negf %376 : vector<8x128xf32>
    %378 = math.exp %377 : vector<8x128xf32>
    %cst_118 = arith.constant 1.000000e+00 : f32
    %379 = vector.broadcast %cst_118 : f32 to vector<8x128xf32>
    %380 = arith.addf %379, %378 : vector<8x128xf32>
    %381 = arith.divf %379, %380 : vector<8x128xf32>
    %382 = vector.extract_strided_slice %369 {offsets = [0, 128], sizes = [8, 128], strides = [1, 1]} : vector<8x384xf32> to vector<8x128xf32>
    %383 = vector.extract_strided_slice %373 {offsets = [0, 128], sizes = [8, 128], strides = [1, 1]} : vector<8x384xf32> to vector<8x128xf32>
    %384 = arith.addf %382, %383 : vector<8x128xf32>
    %385 = arith.negf %384 : vector<8x128xf32>
    %386 = math.exp %385 : vector<8x128xf32>
    %cst_119 = arith.constant 1.000000e+00 : f32
    %387 = vector.broadcast %cst_119 : f32 to vector<8x128xf32>
    %388 = arith.addf %387, %386 : vector<8x128xf32>
    %389 = arith.divf %387, %388 : vector<8x128xf32>
    %390 = vector.extract_strided_slice %369 {offsets = [0, 256], sizes = [8, 128], strides = [1, 1]} : vector<8x384xf32> to vector<8x128xf32>
    %391 = vector.extract_strided_slice %373 {offsets = [0, 256], sizes = [8, 128], strides = [1, 1]} : vector<8x384xf32> to vector<8x128xf32>
    %392 = arith.mulf %381, %391 : vector<8x128xf32>
    %393 = arith.addf %390, %392 : vector<8x128xf32>
    %394 = math.tanh %393 : vector<8x128xf32>
    %cst_120 = arith.constant 1.000000e+00 : f32
    %395 = vector.broadcast %cst_120 : f32 to vector<8x128xf32>
    %396 = arith.subf %395, %389 : vector<8x128xf32>
    %397 = arith.mulf %396, %394 : vector<8x128xf32>
    %398 = arith.mulf %389, %361 : vector<8x128xf32>
    %399 = arith.addf %397, %398 : vector<8x128xf32>
    %400 = arith.index_cast %c9_i32 : i32 to index
    %c0_121 = arith.constant 0 : index
    %c0_122 = arith.constant 0 : index
    %401 = vector.load %arg15[%400, %c0_121, %c0_122] : memref<10x8x128xf32, #tpu.memory_space<vmem>>, vector<1x8x128xf32>
    %402 = vector.shape_cast %401 : vector<1x8x128xf32> to vector<8x128xf32>
    %403 = vector.shape_cast %399 : vector<8x128xf32> to vector<1x8x128xf32>
    tpu.vector_store %arg15[%400, %c0_121, %c0_122], %403 {strides = array<i32>} : memref<10x8x128xf32, #tpu.memory_space<vmem>>, vector<1x8x128xf32>,
    %c10_i32 = arith.constant 10 : i32
    %c0_123 = arith.constant 0 : index
    %c0_124 = arith.constant 0 : index
    %c0_125 = arith.constant 0 : index
    %404 = vector.load %arg15[%c0_123, %c0_124, %c0_125] : memref<10x8x128xf32, #tpu.memory_space<vmem>>, vector<10x8x128xf32>
    %c0_i32_126 = arith.constant 0 : i32
    %405 = arith.truncf %399 : vector<8x128xf32> to vector<8x128xbf16>
    %406 = vector.shape_cast %399 : vector<8x128xf32> to vector<1x8x128xf32>
    %407 = vector.broadcast %406 : vector<1x8x128xf32> to vector<10x8x128xf32>
    %408 = arith.mulf %404, %407 : vector<10x8x128xf32>
    %cst_127 = arith.constant dense<0.000000e+00> : vector<10x8xf32>
    %409 = vector.multi_reduction <add>, %408, %cst_127 [2] : vector<10x8x128xf32> to vector<10x8xf32>
    %410 = vector.shape_cast %409 : vector<10x8xf32> to vector<10x8x1xf32>
    %cst_128 = arith.constant dense<0xFF800000> : vector<8x1xf32>
    %411 = vector.multi_reduction <maximumf>, %410, %cst_128 [0] : vector<10x8x1xf32> to vector<8x1xf32>
    %412 = vector.shape_cast %411 : vector<8x1xf32> to vector<1x8x1xf32>
    %413 = vector.broadcast %412 : vector<1x8x1xf32> to vector<10x8x1xf32>
    %414 = arith.subf %410, %413 : vector<10x8x1xf32>
    %415 = math.exp %414 : vector<10x8x1xf32>
    %cst_129 = arith.constant dense<0.000000e+00> : vector<8x1xf32>
    %416 = vector.multi_reduction <add>, %415, %cst_129 [0] : vector<10x8x1xf32> to vector<8x1xf32>
    %417 = vector.shape_cast %416 : vector<8x1xf32> to vector<1x8x1xf32>
    %418 = vector.broadcast %417 : vector<1x8x1xf32> to vector<10x8x1xf32>
    %419 = arith.divf %415, %418 : vector<10x8x1xf32>
    %420 = vector.broadcast %419 : vector<10x8x1xf32> to vector<10x8x128xf32>
    %421 = arith.mulf %420, %404 : vector<10x8x128xf32>
    %cst_130 = arith.constant dense<0.000000e+00> : vector<8x128xf32>
    %422 = vector.multi_reduction <add>, %421, %cst_130 [0] : vector<10x8x128xf32> to vector<8x128xf32>
    %423 = arith.truncf %422 : vector<8x128xf32> to vector<8x128xbf16>
    %c8_i32_131 = arith.constant 8 : i32
    %424 = arith.muli %c0_i32_126, %c8_i32_131 : i32
    %425 = tpu.assume_multiple %424, 8 : i32
    %426 = arith.index_cast %425 : i32 to index
    %c0_132 = arith.constant 0 : index
    %427 = vector.load %arg16[%426, %c0_132] : memref<56x384xf32, #tpu.memory_space<vmem>>, vector<8x384xf32>
    %c0_133 = arith.constant 0 : index
    %c0_134 = arith.constant 0 : index
    %428 = vector.load %arg7[%c0_133, %c0_134] : memref<128x384xbf16, #tpu.memory_space<vmem>>, vector<128x384xbf16>
    %cst_135 = arith.constant dense<0.000000e+00> : vector<8x384xf32>
    %429 = tpu.matmul %423, %428, %cst_135 {dimension_numbers = #tpu.dot_dimension_numbers<[1], [0], [0], [1], [0, 0, 1, 1], [], []>} : vector<8x128xbf16>, vector<128x384xbf16>, vector<8x384xf32> -> vector<8x384xf32>
    %430 = arith.addf %427, %429 : vector<8x384xf32>
    %c0_136 = arith.constant 0 : index
    %c0_137 = arith.constant 0 : index
    %431 = vector.load %arg8[%c0_136, %c0_137] : memref<128x384xbf16, #tpu.memory_space<vmem>>, vector<128x384xbf16>
    %cst_138 = arith.constant dense<0.000000e+00> : vector<8x384xf32>
    %432 = tpu.matmul %405, %431, %cst_138 {dimension_numbers = #tpu.dot_dimension_numbers<[1], [0], [0], [1], [0, 0, 1, 1], [], []>} : vector<8x128xbf16>, vector<128x384xbf16>, vector<8x384xf32> -> vector<8x384xf32>
    %433 = arith.addf %432, %19 : vector<8x384xf32>
    %434 = vector.extract_strided_slice %430 {offsets = [0, 0], sizes = [8, 128], strides = [1, 1]} : vector<8x384xf32> to vector<8x128xf32>
    %435 = vector.extract_strided_slice %433 {offsets = [0, 0], sizes = [8, 128], strides = [1, 1]} : vector<8x384xf32> to vector<8x128xf32>
    %436 = arith.addf %434, %435 : vector<8x128xf32>
    %437 = arith.negf %436 : vector<8x128xf32>
    %438 = math.exp %437 : vector<8x128xf32>
    %cst_139 = arith.constant 1.000000e+00 : f32
    %439 = vector.broadcast %cst_139 : f32 to vector<8x128xf32>
    %440 = arith.addf %439, %438 : vector<8x128xf32>
    %441 = arith.divf %439, %440 : vector<8x128xf32>
    %442 = vector.extract_strided_slice %430 {offsets = [0, 128], sizes = [8, 128], strides = [1, 1]} : vector<8x384xf32> to vector<8x128xf32>
    %443 = vector.extract_strided_slice %433 {offsets = [0, 128], sizes = [8, 128], strides = [1, 1]} : vector<8x384xf32> to vector<8x128xf32>
    %444 = arith.addf %442, %443 : vector<8x128xf32>
    %445 = arith.negf %444 : vector<8x128xf32>
    %446 = math.exp %445 : vector<8x128xf32>
    %cst_140 = arith.constant 1.000000e+00 : f32
    %447 = vector.broadcast %cst_140 : f32 to vector<8x128xf32>
    %448 = arith.addf %447, %446 : vector<8x128xf32>
    %449 = arith.divf %447, %448 : vector<8x128xf32>
    %450 = vector.extract_strided_slice %430 {offsets = [0, 256], sizes = [8, 128], strides = [1, 1]} : vector<8x384xf32> to vector<8x128xf32>
    %451 = vector.extract_strided_slice %433 {offsets = [0, 256], sizes = [8, 128], strides = [1, 1]} : vector<8x384xf32> to vector<8x128xf32>
    %452 = arith.mulf %441, %451 : vector<8x128xf32>
    %453 = arith.addf %450, %452 : vector<8x128xf32>
    %454 = math.tanh %453 : vector<8x128xf32>
    %cst_141 = arith.constant 1.000000e+00 : f32
    %455 = vector.broadcast %cst_141 : f32 to vector<8x128xf32>
    %456 = arith.subf %455, %449 : vector<8x128xf32>
    %457 = arith.mulf %456, %454 : vector<8x128xf32>
    %458 = arith.mulf %449, %399 : vector<8x128xf32>
    %459 = arith.addf %457, %458 : vector<8x128xf32>
    %460 = arith.truncf %459 : vector<8x128xf32> to vector<8x128xbf16>
    %461 = tpu.concatenate %460, %423 in 1 : vector<8x128xbf16>, vector<8x128xbf16> -> vector<8x256xbf16>
    %c0_142 = arith.constant 0 : index
    %c0_143 = arith.constant 0 : index
    %462 = vector.load %arg11[%c0_142, %c0_143] : memref<256x128xbf16, #tpu.memory_space<vmem>>, vector<256x128xbf16>
    %cst_144 = arith.constant dense<0.000000e+00> : vector<8x128xf32>
    %463 = tpu.matmul %461, %462, %cst_144 {dimension_numbers = #tpu.dot_dimension_numbers<[1], [0], [0], [1], [0, 0, 1, 1], [], []>} : vector<8x256xbf16>, vector<256x128xbf16>, vector<8x128xf32> -> vector<8x128xf32>
    %464 = arith.addf %463, %22 : vector<8x128xf32>
    %465 = arith.index_cast %c0_i32_126 : i32 to index
    %c0_145 = arith.constant 0 : index
    %c0_146 = arith.constant 0 : index
    %466 = vector.load %arg13[%465, %c0_145, %c0_146] : memref<7x8x128xf32, #tpu.memory_space<vmem>>, vector<1x8x128xf32>
    %467 = vector.shape_cast %466 : vector<1x8x128xf32> to vector<8x128xf32>
    %468 = vector.shape_cast %464 : vector<8x128xf32> to vector<1x8x128xf32>
    tpu.vector_store %arg13[%465, %c0_145, %c0_146], %468 {strides = array<i32>} : memref<7x8x128xf32, #tpu.memory_space<vmem>>, vector<1x8x128xf32>,
    %c1_i32_147 = arith.constant 1 : i32
    %469 = arith.truncf %459 : vector<8x128xf32> to vector<8x128xbf16>
    %470 = vector.shape_cast %459 : vector<8x128xf32> to vector<1x8x128xf32>
    %471 = vector.broadcast %470 : vector<1x8x128xf32> to vector<10x8x128xf32>
    %472 = arith.mulf %404, %471 : vector<10x8x128xf32>
    %cst_148 = arith.constant dense<0.000000e+00> : vector<10x8xf32>
    %473 = vector.multi_reduction <add>, %472, %cst_148 [2] : vector<10x8x128xf32> to vector<10x8xf32>
    %474 = vector.shape_cast %473 : vector<10x8xf32> to vector<10x8x1xf32>
    %cst_149 = arith.constant dense<0xFF800000> : vector<8x1xf32>
    %475 = vector.multi_reduction <maximumf>, %474, %cst_149 [0] : vector<10x8x1xf32> to vector<8x1xf32>
    %476 = vector.shape_cast %475 : vector<8x1xf32> to vector<1x8x1xf32>
    %477 = vector.broadcast %476 : vector<1x8x1xf32> to vector<10x8x1xf32>
    %478 = arith.subf %474, %477 : vector<10x8x1xf32>
    %479 = math.exp %478 : vector<10x8x1xf32>
    %cst_150 = arith.constant dense<0.000000e+00> : vector<8x1xf32>
    %480 = vector.multi_reduction <add>, %479, %cst_150 [0] : vector<10x8x1xf32> to vector<8x1xf32>
    %481 = vector.shape_cast %480 : vector<8x1xf32> to vector<1x8x1xf32>
    %482 = vector.broadcast %481 : vector<1x8x1xf32> to vector<10x8x1xf32>
    %483 = arith.divf %479, %482 : vector<10x8x1xf32>
    %484 = vector.broadcast %483 : vector<10x8x1xf32> to vector<10x8x128xf32>
    %485 = arith.mulf %484, %404 : vector<10x8x128xf32>
    %cst_151 = arith.constant dense<0.000000e+00> : vector<8x128xf32>
    %486 = vector.multi_reduction <add>, %485, %cst_151 [0] : vector<10x8x128xf32> to vector<8x128xf32>
    %487 = arith.truncf %486 : vector<8x128xf32> to vector<8x128xbf16>
    %c8_i32_152 = arith.constant 8 : i32
    %488 = arith.muli %c1_i32_147, %c8_i32_152 : i32
    %489 = tpu.assume_multiple %488, 8 : i32
    %490 = arith.index_cast %489 : i32 to index
    %c0_153 = arith.constant 0 : index
    %491 = vector.load %arg16[%490, %c0_153] : memref<56x384xf32, #tpu.memory_space<vmem>>, vector<8x384xf32>
    %c0_154 = arith.constant 0 : index
    %c0_155 = arith.constant 0 : index
    %492 = vector.load %arg7[%c0_154, %c0_155] : memref<128x384xbf16, #tpu.memory_space<vmem>>, vector<128x384xbf16>
    %cst_156 = arith.constant dense<0.000000e+00> : vector<8x384xf32>
    %493 = tpu.matmul %487, %492, %cst_156 {dimension_numbers = #tpu.dot_dimension_numbers<[1], [0], [0], [1], [0, 0, 1, 1], [], []>} : vector<8x128xbf16>, vector<128x384xbf16>, vector<8x384xf32> -> vector<8x384xf32>
    %494 = arith.addf %491, %493 : vector<8x384xf32>
    %c0_157 = arith.constant 0 : index
    %c0_158 = arith.constant 0 : index
    %495 = vector.load %arg8[%c0_157, %c0_158] : memref<128x384xbf16, #tpu.memory_space<vmem>>, vector<128x384xbf16>
    %cst_159 = arith.constant dense<0.000000e+00> : vector<8x384xf32>
    %496 = tpu.matmul %469, %495, %cst_159 {dimension_numbers = #tpu.dot_dimension_numbers<[1], [0], [0], [1], [0, 0, 1, 1], [], []>} : vector<8x128xbf16>, vector<128x384xbf16>, vector<8x384xf32> -> vector<8x384xf32>
    %497 = arith.addf %496, %19 : vector<8x384xf32>
    %498 = vector.extract_strided_slice %494 {offsets = [0, 0], sizes = [8, 128], strides = [1, 1]} : vector<8x384xf32> to vector<8x128xf32>
    %499 = vector.extract_strided_slice %497 {offsets = [0, 0], sizes = [8, 128], strides = [1, 1]} : vector<8x384xf32> to vector<8x128xf32>
    %500 = arith.addf %498, %499 : vector<8x128xf32>
    %501 = arith.negf %500 : vector<8x128xf32>
    %502 = math.exp %501 : vector<8x128xf32>
    %cst_160 = arith.constant 1.000000e+00 : f32
    %503 = vector.broadcast %cst_160 : f32 to vector<8x128xf32>
    %504 = arith.addf %503, %502 : vector<8x128xf32>
    %505 = arith.divf %503, %504 : vector<8x128xf32>
    %506 = vector.extract_strided_slice %494 {offsets = [0, 128], sizes = [8, 128], strides = [1, 1]} : vector<8x384xf32> to vector<8x128xf32>
    %507 = vector.extract_strided_slice %497 {offsets = [0, 128], sizes = [8, 128], strides = [1, 1]} : vector<8x384xf32> to vector<8x128xf32>
    %508 = arith.addf %506, %507 : vector<8x128xf32>
    %509 = arith.negf %508 : vector<8x128xf32>
    %510 = math.exp %509 : vector<8x128xf32>
    %cst_161 = arith.constant 1.000000e+00 : f32
    %511 = vector.broadcast %cst_161 : f32 to vector<8x128xf32>
    %512 = arith.addf %511, %510 : vector<8x128xf32>
    %513 = arith.divf %511, %512 : vector<8x128xf32>
    %514 = vector.extract_strided_slice %494 {offsets = [0, 256], sizes = [8, 128], strides = [1, 1]} : vector<8x384xf32> to vector<8x128xf32>
    %515 = vector.extract_strided_slice %497 {offsets = [0, 256], sizes = [8, 128], strides = [1, 1]} : vector<8x384xf32> to vector<8x128xf32>
    %516 = arith.mulf %505, %515 : vector<8x128xf32>
    %517 = arith.addf %514, %516 : vector<8x128xf32>
    %518 = math.tanh %517 : vector<8x128xf32>
    %cst_162 = arith.constant 1.000000e+00 : f32
    %519 = vector.broadcast %cst_162 : f32 to vector<8x128xf32>
    %520 = arith.subf %519, %513 : vector<8x128xf32>
    %521 = arith.mulf %520, %518 : vector<8x128xf32>
    %522 = arith.mulf %513, %459 : vector<8x128xf32>
    %523 = arith.addf %521, %522 : vector<8x128xf32>
    %524 = arith.truncf %523 : vector<8x128xf32> to vector<8x128xbf16>
    %525 = tpu.concatenate %524, %487 in 1 : vector<8x128xbf16>, vector<8x128xbf16> -> vector<8x256xbf16>
    %c0_163 = arith.constant 0 : index
    %c0_164 = arith.constant 0 : index
    %526 = vector.load %arg11[%c0_163, %c0_164] : memref<256x128xbf16, #tpu.memory_space<vmem>>, vector<256x128xbf16>
    %cst_165 = arith.constant dense<0.000000e+00> : vector<8x128xf32>
    %527 = tpu.matmul %525, %526, %cst_165 {dimension_numbers = #tpu.dot_dimension_numbers<[1], [0], [0], [1], [0, 0, 1, 1], [], []>} : vector<8x256xbf16>, vector<256x128xbf16>, vector<8x128xf32> -> vector<8x128xf32>
    %528 = arith.addf %527, %22 : vector<8x128xf32>
    %529 = arith.index_cast %c1_i32_147 : i32 to index
    %c0_166 = arith.constant 0 : index
    %c0_167 = arith.constant 0 : index
    %530 = vector.load %arg13[%529, %c0_166, %c0_167] : memref<7x8x128xf32, #tpu.memory_space<vmem>>, vector<1x8x128xf32>
    %531 = vector.shape_cast %530 : vector<1x8x128xf32> to vector<8x128xf32>
    %532 = vector.shape_cast %528 : vector<8x128xf32> to vector<1x8x128xf32>
    tpu.vector_store %arg13[%529, %c0_166, %c0_167], %532 {strides = array<i32>} : memref<7x8x128xf32, #tpu.memory_space<vmem>>, vector<1x8x128xf32>,
    %c2_i32_168 = arith.constant 2 : i32
    %533 = arith.truncf %523 : vector<8x128xf32> to vector<8x128xbf16>
    %534 = vector.shape_cast %523 : vector<8x128xf32> to vector<1x8x128xf32>
    %535 = vector.broadcast %534 : vector<1x8x128xf32> to vector<10x8x128xf32>
    %536 = arith.mulf %404, %535 : vector<10x8x128xf32>
    %cst_169 = arith.constant dense<0.000000e+00> : vector<10x8xf32>
    %537 = vector.multi_reduction <add>, %536, %cst_169 [2] : vector<10x8x128xf32> to vector<10x8xf32>
    %538 = vector.shape_cast %537 : vector<10x8xf32> to vector<10x8x1xf32>
    %cst_170 = arith.constant dense<0xFF800000> : vector<8x1xf32>
    %539 = vector.multi_reduction <maximumf>, %538, %cst_170 [0] : vector<10x8x1xf32> to vector<8x1xf32>
    %540 = vector.shape_cast %539 : vector<8x1xf32> to vector<1x8x1xf32>
    %541 = vector.broadcast %540 : vector<1x8x1xf32> to vector<10x8x1xf32>
    %542 = arith.subf %538, %541 : vector<10x8x1xf32>
    %543 = math.exp %542 : vector<10x8x1xf32>
    %cst_171 = arith.constant dense<0.000000e+00> : vector<8x1xf32>
    %544 = vector.multi_reduction <add>, %543, %cst_171 [0] : vector<10x8x1xf32> to vector<8x1xf32>
    %545 = vector.shape_cast %544 : vector<8x1xf32> to vector<1x8x1xf32>
    %546 = vector.broadcast %545 : vector<1x8x1xf32> to vector<10x8x1xf32>
    %547 = arith.divf %543, %546 : vector<10x8x1xf32>
    %548 = vector.broadcast %547 : vector<10x8x1xf32> to vector<10x8x128xf32>
    %549 = arith.mulf %548, %404 : vector<10x8x128xf32>
    %cst_172 = arith.constant dense<0.000000e+00> : vector<8x128xf32>
    %550 = vector.multi_reduction <add>, %549, %cst_172 [0] : vector<10x8x128xf32> to vector<8x128xf32>
    %551 = arith.truncf %550 : vector<8x128xf32> to vector<8x128xbf16>
    %c8_i32_173 = arith.constant 8 : i32
    %552 = arith.muli %c2_i32_168, %c8_i32_173 : i32
    %553 = tpu.assume_multiple %552, 8 : i32
    %554 = arith.index_cast %553 : i32 to index
    %c0_174 = arith.constant 0 : index
    %555 = vector.load %arg16[%554, %c0_174] : memref<56x384xf32, #tpu.memory_space<vmem>>, vector<8x384xf32>
    %c0_175 = arith.constant 0 : index
    %c0_176 = arith.constant 0 : index
    %556 = vector.load %arg7[%c0_175, %c0_176] : memref<128x384xbf16, #tpu.memory_space<vmem>>, vector<128x384xbf16>
    %cst_177 = arith.constant dense<0.000000e+00> : vector<8x384xf32>
    %557 = tpu.matmul %551, %556, %cst_177 {dimension_numbers = #tpu.dot_dimension_numbers<[1], [0], [0], [1], [0, 0, 1, 1], [], []>} : vector<8x128xbf16>, vector<128x384xbf16>, vector<8x384xf32> -> vector<8x384xf32>
    %558 = arith.addf %555, %557 : vector<8x384xf32>
    %c0_178 = arith.constant 0 : index
    %c0_179 = arith.constant 0 : index
    %559 = vector.load %arg8[%c0_178, %c0_179] : memref<128x384xbf16, #tpu.memory_space<vmem>>, vector<128x384xbf16>
    %cst_180 = arith.constant dense<0.000000e+00> : vector<8x384xf32>
    %560 = tpu.matmul %533, %559, %cst_180 {dimension_numbers = #tpu.dot_dimension_numbers<[1], [0], [0], [1], [0, 0, 1, 1], [], []>} : vector<8x128xbf16>, vector<128x384xbf16>, vector<8x384xf32> -> vector<8x384xf32>
    %561 = arith.addf %560, %19 : vector<8x384xf32>
    %562 = vector.extract_strided_slice %558 {offsets = [0, 0], sizes = [8, 128], strides = [1, 1]} : vector<8x384xf32> to vector<8x128xf32>
    %563 = vector.extract_strided_slice %561 {offsets = [0, 0], sizes = [8, 128], strides = [1, 1]} : vector<8x384xf32> to vector<8x128xf32>
    %564 = arith.addf %562, %563 : vector<8x128xf32>
    %565 = arith.negf %564 : vector<8x128xf32>
    %566 = math.exp %565 : vector<8x128xf32>
    %cst_181 = arith.constant 1.000000e+00 : f32
    %567 = vector.broadcast %cst_181 : f32 to vector<8x128xf32>
    %568 = arith.addf %567, %566 : vector<8x128xf32>
    %569 = arith.divf %567, %568 : vector<8x128xf32>
    %570 = vector.extract_strided_slice %558 {offsets = [0, 128], sizes = [8, 128], strides = [1, 1]} : vector<8x384xf32> to vector<8x128xf32>
    %571 = vector.extract_strided_slice %561 {offsets = [0, 128], sizes = [8, 128], strides = [1, 1]} : vector<8x384xf32> to vector<8x128xf32>
    %572 = arith.addf %570, %571 : vector<8x128xf32>
    %573 = arith.negf %572 : vector<8x128xf32>
    %574 = math.exp %573 : vector<8x128xf32>
    %cst_182 = arith.constant 1.000000e+00 : f32
    %575 = vector.broadcast %cst_182 : f32 to vector<8x128xf32>
    %576 = arith.addf %575, %574 : vector<8x128xf32>
    %577 = arith.divf %575, %576 : vector<8x128xf32>
    %578 = vector.extract_strided_slice %558 {offsets = [0, 256], sizes = [8, 128], strides = [1, 1]} : vector<8x384xf32> to vector<8x128xf32>
    %579 = vector.extract_strided_slice %561 {offsets = [0, 256], sizes = [8, 128], strides = [1, 1]} : vector<8x384xf32> to vector<8x128xf32>
    %580 = arith.mulf %569, %579 : vector<8x128xf32>
    %581 = arith.addf %578, %580 : vector<8x128xf32>
    %582 = math.tanh %581 : vector<8x128xf32>
    %cst_183 = arith.constant 1.000000e+00 : f32
    %583 = vector.broadcast %cst_183 : f32 to vector<8x128xf32>
    %584 = arith.subf %583, %577 : vector<8x128xf32>
    %585 = arith.mulf %584, %582 : vector<8x128xf32>
    %586 = arith.mulf %577, %523 : vector<8x128xf32>
    %587 = arith.addf %585, %586 : vector<8x128xf32>
    %588 = arith.truncf %587 : vector<8x128xf32> to vector<8x128xbf16>
    %589 = tpu.concatenate %588, %551 in 1 : vector<8x128xbf16>, vector<8x128xbf16> -> vector<8x256xbf16>
    %c0_184 = arith.constant 0 : index
    %c0_185 = arith.constant 0 : index
    %590 = vector.load %arg11[%c0_184, %c0_185] : memref<256x128xbf16, #tpu.memory_space<vmem>>, vector<256x128xbf16>
    %cst_186 = arith.constant dense<0.000000e+00> : vector<8x128xf32>
    %591 = tpu.matmul %589, %590, %cst_186 {dimension_numbers = #tpu.dot_dimension_numbers<[1], [0], [0], [1], [0, 0, 1, 1], [], []>} : vector<8x256xbf16>, vector<256x128xbf16>, vector<8x128xf32> -> vector<8x128xf32>
    %592 = arith.addf %591, %22 : vector<8x128xf32>
    %593 = arith.index_cast %c2_i32_168 : i32 to index
    %c0_187 = arith.constant 0 : index
    %c0_188 = arith.constant 0 : index
    %594 = vector.load %arg13[%593, %c0_187, %c0_188] : memref<7x8x128xf32, #tpu.memory_space<vmem>>, vector<1x8x128xf32>
    %595 = vector.shape_cast %594 : vector<1x8x128xf32> to vector<8x128xf32>
    %596 = vector.shape_cast %592 : vector<8x128xf32> to vector<1x8x128xf32>
    tpu.vector_store %arg13[%593, %c0_187, %c0_188], %596 {strides = array<i32>} : memref<7x8x128xf32, #tpu.memory_space<vmem>>, vector<1x8x128xf32>,
    %c3_i32_189 = arith.constant 3 : i32
    %597 = arith.truncf %587 : vector<8x128xf32> to vector<8x128xbf16>
    %598 = vector.shape_cast %587 : vector<8x128xf32> to vector<1x8x128xf32>
    %599 = vector.broadcast %598 : vector<1x8x128xf32> to vector<10x8x128xf32>
    %600 = arith.mulf %404, %599 : vector<10x8x128xf32>
    %cst_190 = arith.constant dense<0.000000e+00> : vector<10x8xf32>
    %601 = vector.multi_reduction <add>, %600, %cst_190 [2] : vector<10x8x128xf32> to vector<10x8xf32>
    %602 = vector.shape_cast %601 : vector<10x8xf32> to vector<10x8x1xf32>
    %cst_191 = arith.constant dense<0xFF800000> : vector<8x1xf32>
    %603 = vector.multi_reduction <maximumf>, %602, %cst_191 [0] : vector<10x8x1xf32> to vector<8x1xf32>
    %604 = vector.shape_cast %603 : vector<8x1xf32> to vector<1x8x1xf32>
    %605 = vector.broadcast %604 : vector<1x8x1xf32> to vector<10x8x1xf32>
    %606 = arith.subf %602, %605 : vector<10x8x1xf32>
    %607 = math.exp %606 : vector<10x8x1xf32>
    %cst_192 = arith.constant dense<0.000000e+00> : vector<8x1xf32>
    %608 = vector.multi_reduction <add>, %607, %cst_192 [0] : vector<10x8x1xf32> to vector<8x1xf32>
    %609 = vector.shape_cast %608 : vector<8x1xf32> to vector<1x8x1xf32>
    %610 = vector.broadcast %609 : vector<1x8x1xf32> to vector<10x8x1xf32>
    %611 = arith.divf %607, %610 : vector<10x8x1xf32>
    %612 = vector.broadcast %611 : vector<10x8x1xf32> to vector<10x8x128xf32>
    %613 = arith.mulf %612, %404 : vector<10x8x128xf32>
    %cst_193 = arith.constant dense<0.000000e+00> : vector<8x128xf32>
    %614 = vector.multi_reduction <add>, %613, %cst_193 [0] : vector<10x8x128xf32> to vector<8x128xf32>
    %615 = arith.truncf %614 : vector<8x128xf32> to vector<8x128xbf16>
    %c8_i32_194 = arith.constant 8 : i32
    %616 = arith.muli %c3_i32_189, %c8_i32_194 : i32
    %617 = tpu.assume_multiple %616, 8 : i32
    %618 = arith.index_cast %617 : i32 to index
    %c0_195 = arith.constant 0 : index
    %619 = vector.load %arg16[%618, %c0_195] : memref<56x384xf32, #tpu.memory_space<vmem>>, vector<8x384xf32>
    %c0_196 = arith.constant 0 : index
    %c0_197 = arith.constant 0 : index
    %620 = vector.load %arg7[%c0_196, %c0_197] : memref<128x384xbf16, #tpu.memory_space<vmem>>, vector<128x384xbf16>
    %cst_198 = arith.constant dense<0.000000e+00> : vector<8x384xf32>
    %621 = tpu.matmul %615, %620, %cst_198 {dimension_numbers = #tpu.dot_dimension_numbers<[1], [0], [0], [1], [0, 0, 1, 1], [], []>} : vector<8x128xbf16>, vector<128x384xbf16>, vector<8x384xf32> -> vector<8x384xf32>
    %622 = arith.addf %619, %621 : vector<8x384xf32>
    %c0_199 = arith.constant 0 : index
    %c0_200 = arith.constant 0 : index
    %623 = vector.load %arg8[%c0_199, %c0_200] : memref<128x384xbf16, #tpu.memory_space<vmem>>, vector<128x384xbf16>
    %cst_201 = arith.constant dense<0.000000e+00> : vector<8x384xf32>
    %624 = tpu.matmul %597, %623, %cst_201 {dimension_numbers = #tpu.dot_dimension_numbers<[1], [0], [0], [1], [0, 0, 1, 1], [], []>} : vector<8x128xbf16>, vector<128x384xbf16>, vector<8x384xf32> -> vector<8x384xf32>
    %625 = arith.addf %624, %19 : vector<8x384xf32>
    %626 = vector.extract_strided_slice %622 {offsets = [0, 0], sizes = [8, 128], strides = [1, 1]} : vector<8x384xf32> to vector<8x128xf32>
    %627 = vector.extract_strided_slice %625 {offsets = [0, 0], sizes = [8, 128], strides = [1, 1]} : vector<8x384xf32> to vector<8x128xf32>
    %628 = arith.addf %626, %627 : vector<8x128xf32>
    %629 = arith.negf %628 : vector<8x128xf32>
    %630 = math.exp %629 : vector<8x128xf32>
    %cst_202 = arith.constant 1.000000e+00 : f32
    %631 = vector.broadcast %cst_202 : f32 to vector<8x128xf32>
    %632 = arith.addf %631, %630 : vector<8x128xf32>
    %633 = arith.divf %631, %632 : vector<8x128xf32>
    %634 = vector.extract_strided_slice %622 {offsets = [0, 128], sizes = [8, 128], strides = [1, 1]} : vector<8x384xf32> to vector<8x128xf32>
    %635 = vector.extract_strided_slice %625 {offsets = [0, 128], sizes = [8, 128], strides = [1, 1]} : vector<8x384xf32> to vector<8x128xf32>
    %636 = arith.addf %634, %635 : vector<8x128xf32>
    %637 = arith.negf %636 : vector<8x128xf32>
    %638 = math.exp %637 : vector<8x128xf32>
    %cst_203 = arith.constant 1.000000e+00 : f32
    %639 = vector.broadcast %cst_203 : f32 to vector<8x128xf32>
    %640 = arith.addf %639, %638 : vector<8x128xf32>
    %641 = arith.divf %639, %640 : vector<8x128xf32>
    %642 = vector.extract_strided_slice %622 {offsets = [0, 256], sizes = [8, 128], strides = [1, 1]} : vector<8x384xf32> to vector<8x128xf32>
    %643 = vector.extract_strided_slice %625 {offsets = [0, 256], sizes = [8, 128], strides = [1, 1]} : vector<8x384xf32> to vector<8x128xf32>
    %644 = arith.mulf %633, %643 : vector<8x128xf32>
    %645 = arith.addf %642, %644 : vector<8x128xf32>
    %646 = math.tanh %645 : vector<8x128xf32>
    %cst_204 = arith.constant 1.000000e+00 : f32
    %647 = vector.broadcast %cst_204 : f32 to vector<8x128xf32>
    %648 = arith.subf %647, %641 : vector<8x128xf32>
    %649 = arith.mulf %648, %646 : vector<8x128xf32>
    %650 = arith.mulf %641, %587 : vector<8x128xf32>
    %651 = arith.addf %649, %650 : vector<8x128xf32>
    %652 = arith.truncf %651 : vector<8x128xf32> to vector<8x128xbf16>
    %653 = tpu.concatenate %652, %615 in 1 : vector<8x128xbf16>, vector<8x128xbf16> -> vector<8x256xbf16>
    %c0_205 = arith.constant 0 : index
    %c0_206 = arith.constant 0 : index
    %654 = vector.load %arg11[%c0_205, %c0_206] : memref<256x128xbf16, #tpu.memory_space<vmem>>, vector<256x128xbf16>
    %cst_207 = arith.constant dense<0.000000e+00> : vector<8x128xf32>
    %655 = tpu.matmul %653, %654, %cst_207 {dimension_numbers = #tpu.dot_dimension_numbers<[1], [0], [0], [1], [0, 0, 1, 1], [], []>} : vector<8x256xbf16>, vector<256x128xbf16>, vector<8x128xf32> -> vector<8x128xf32>
    %656 = arith.addf %655, %22 : vector<8x128xf32>
    %657 = arith.index_cast %c3_i32_189 : i32 to index
    %c0_208 = arith.constant 0 : index
    %c0_209 = arith.constant 0 : index
    %658 = vector.load %arg13[%657, %c0_208, %c0_209] : memref<7x8x128xf32, #tpu.memory_space<vmem>>, vector<1x8x128xf32>
    %659 = vector.shape_cast %658 : vector<1x8x128xf32> to vector<8x128xf32>
    %660 = vector.shape_cast %656 : vector<8x128xf32> to vector<1x8x128xf32>
    tpu.vector_store %arg13[%657, %c0_208, %c0_209], %660 {strides = array<i32>} : memref<7x8x128xf32, #tpu.memory_space<vmem>>, vector<1x8x128xf32>,
    %c4_i32_210 = arith.constant 4 : i32
    %661 = arith.truncf %651 : vector<8x128xf32> to vector<8x128xbf16>
    %662 = vector.shape_cast %651 : vector<8x128xf32> to vector<1x8x128xf32>
    %663 = vector.broadcast %662 : vector<1x8x128xf32> to vector<10x8x128xf32>
    %664 = arith.mulf %404, %663 : vector<10x8x128xf32>
    %cst_211 = arith.constant dense<0.000000e+00> : vector<10x8xf32>
    %665 = vector.multi_reduction <add>, %664, %cst_211 [2] : vector<10x8x128xf32> to vector<10x8xf32>
    %666 = vector.shape_cast %665 : vector<10x8xf32> to vector<10x8x1xf32>
    %cst_212 = arith.constant dense<0xFF800000> : vector<8x1xf32>
    %667 = vector.multi_reduction <maximumf>, %666, %cst_212 [0] : vector<10x8x1xf32> to vector<8x1xf32>
    %668 = vector.shape_cast %667 : vector<8x1xf32> to vector<1x8x1xf32>
    %669 = vector.broadcast %668 : vector<1x8x1xf32> to vector<10x8x1xf32>
    %670 = arith.subf %666, %669 : vector<10x8x1xf32>
    %671 = math.exp %670 : vector<10x8x1xf32>
    %cst_213 = arith.constant dense<0.000000e+00> : vector<8x1xf32>
    %672 = vector.multi_reduction <add>, %671, %cst_213 [0] : vector<10x8x1xf32> to vector<8x1xf32>
    %673 = vector.shape_cast %672 : vector<8x1xf32> to vector<1x8x1xf32>
    %674 = vector.broadcast %673 : vector<1x8x1xf32> to vector<10x8x1xf32>
    %675 = arith.divf %671, %674 : vector<10x8x1xf32>
    %676 = vector.broadcast %675 : vector<10x8x1xf32> to vector<10x8x128xf32>
    %677 = arith.mulf %676, %404 : vector<10x8x128xf32>
    %cst_214 = arith.constant dense<0.000000e+00> : vector<8x128xf32>
    %678 = vector.multi_reduction <add>, %677, %cst_214 [0] : vector<10x8x128xf32> to vector<8x128xf32>
    %679 = arith.truncf %678 : vector<8x128xf32> to vector<8x128xbf16>
    %c8_i32_215 = arith.constant 8 : i32
    %680 = arith.muli %c4_i32_210, %c8_i32_215 : i32
    %681 = tpu.assume_multiple %680, 8 : i32
    %682 = arith.index_cast %681 : i32 to index
    %c0_216 = arith.constant 0 : index
    %683 = vector.load %arg16[%682, %c0_216] : memref<56x384xf32, #tpu.memory_space<vmem>>, vector<8x384xf32>
    %c0_217 = arith.constant 0 : index
    %c0_218 = arith.constant 0 : index
    %684 = vector.load %arg7[%c0_217, %c0_218] : memref<128x384xbf16, #tpu.memory_space<vmem>>, vector<128x384xbf16>
    %cst_219 = arith.constant dense<0.000000e+00> : vector<8x384xf32>
    %685 = tpu.matmul %679, %684, %cst_219 {dimension_numbers = #tpu.dot_dimension_numbers<[1], [0], [0], [1], [0, 0, 1, 1], [], []>} : vector<8x128xbf16>, vector<128x384xbf16>, vector<8x384xf32> -> vector<8x384xf32>
    %686 = arith.addf %683, %685 : vector<8x384xf32>
    %c0_220 = arith.constant 0 : index
    %c0_221 = arith.constant 0 : index
    %687 = vector.load %arg8[%c0_220, %c0_221] : memref<128x384xbf16, #tpu.memory_space<vmem>>, vector<128x384xbf16>
    %cst_222 = arith.constant dense<0.000000e+00> : vector<8x384xf32>
    %688 = tpu.matmul %661, %687, %cst_222 {dimension_numbers = #tpu.dot_dimension_numbers<[1], [0], [0], [1], [0, 0, 1, 1], [], []>} : vector<8x128xbf16>, vector<128x384xbf16>, vector<8x384xf32> -> vector<8x384xf32>
    %689 = arith.addf %688, %19 : vector<8x384xf32>
    %690 = vector.extract_strided_slice %686 {offsets = [0, 0], sizes = [8, 128], strides = [1, 1]} : vector<8x384xf32> to vector<8x128xf32>
    %691 = vector.extract_strided_slice %689 {offsets = [0, 0], sizes = [8, 128], strides = [1, 1]} : vector<8x384xf32> to vector<8x128xf32>
    %692 = arith.addf %690, %691 : vector<8x128xf32>
    %693 = arith.negf %692 : vector<8x128xf32>
    %694 = math.exp %693 : vector<8x128xf32>
    %cst_223 = arith.constant 1.000000e+00 : f32
    %695 = vector.broadcast %cst_223 : f32 to vector<8x128xf32>
    %696 = arith.addf %695, %694 : vector<8x128xf32>
    %697 = arith.divf %695, %696 : vector<8x128xf32>
    %698 = vector.extract_strided_slice %686 {offsets = [0, 128], sizes = [8, 128], strides = [1, 1]} : vector<8x384xf32> to vector<8x128xf32>
    %699 = vector.extract_strided_slice %689 {offsets = [0, 128], sizes = [8, 128], strides = [1, 1]} : vector<8x384xf32> to vector<8x128xf32>
    %700 = arith.addf %698, %699 : vector<8x128xf32>
    %701 = arith.negf %700 : vector<8x128xf32>
    %702 = math.exp %701 : vector<8x128xf32>
    %cst_224 = arith.constant 1.000000e+00 : f32
    %703 = vector.broadcast %cst_224 : f32 to vector<8x128xf32>
    %704 = arith.addf %703, %702 : vector<8x128xf32>
    %705 = arith.divf %703, %704 : vector<8x128xf32>
    %706 = vector.extract_strided_slice %686 {offsets = [0, 256], sizes = [8, 128], strides = [1, 1]} : vector<8x384xf32> to vector<8x128xf32>
    %707 = vector.extract_strided_slice %689 {offsets = [0, 256], sizes = [8, 128], strides = [1, 1]} : vector<8x384xf32> to vector<8x128xf32>
    %708 = arith.mulf %697, %707 : vector<8x128xf32>
    %709 = arith.addf %706, %708 : vector<8x128xf32>
    %710 = math.tanh %709 : vector<8x128xf32>
    %cst_225 = arith.constant 1.000000e+00 : f32
    %711 = vector.broadcast %cst_225 : f32 to vector<8x128xf32>
    %712 = arith.subf %711, %705 : vector<8x128xf32>
    %713 = arith.mulf %712, %710 : vector<8x128xf32>
    %714 = arith.mulf %705, %651 : vector<8x128xf32>
    %715 = arith.addf %713, %714 : vector<8x128xf32>
    %716 = arith.truncf %715 : vector<8x128xf32> to vector<8x128xbf16>
    %717 = tpu.concatenate %716, %679 in 1 : vector<8x128xbf16>, vector<8x128xbf16> -> vector<8x256xbf16>
    %c0_226 = arith.constant 0 : index
    %c0_227 = arith.constant 0 : index
    %718 = vector.load %arg11[%c0_226, %c0_227] : memref<256x128xbf16, #tpu.memory_space<vmem>>, vector<256x128xbf16>
    %cst_228 = arith.constant dense<0.000000e+00> : vector<8x128xf32>
    %719 = tpu.matmul %717, %718, %cst_228 {dimension_numbers = #tpu.dot_dimension_numbers<[1], [0], [0], [1], [0, 0, 1, 1], [], []>} : vector<8x256xbf16>, vector<256x128xbf16>, vector<8x128xf32> -> vector<8x128xf32>
    %720 = arith.addf %719, %22 : vector<8x128xf32>
    %721 = arith.index_cast %c4_i32_210 : i32 to index
    %c0_229 = arith.constant 0 : index
    %c0_230 = arith.constant 0 : index
    %722 = vector.load %arg13[%721, %c0_229, %c0_230] : memref<7x8x128xf32, #tpu.memory_space<vmem>>, vector<1x8x128xf32>
    %723 = vector.shape_cast %722 : vector<1x8x128xf32> to vector<8x128xf32>
    %724 = vector.shape_cast %720 : vector<8x128xf32> to vector<1x8x128xf32>
    tpu.vector_store %arg13[%721, %c0_229, %c0_230], %724 {strides = array<i32>} : memref<7x8x128xf32, #tpu.memory_space<vmem>>, vector<1x8x128xf32>,
    %c5_i32_231 = arith.constant 5 : i32
    %725 = arith.truncf %715 : vector<8x128xf32> to vector<8x128xbf16>
    %726 = vector.shape_cast %715 : vector<8x128xf32> to vector<1x8x128xf32>
    %727 = vector.broadcast %726 : vector<1x8x128xf32> to vector<10x8x128xf32>
    %728 = arith.mulf %404, %727 : vector<10x8x128xf32>
    %cst_232 = arith.constant dense<0.000000e+00> : vector<10x8xf32>
    %729 = vector.multi_reduction <add>, %728, %cst_232 [2] : vector<10x8x128xf32> to vector<10x8xf32>
    %730 = vector.shape_cast %729 : vector<10x8xf32> to vector<10x8x1xf32>
    %cst_233 = arith.constant dense<0xFF800000> : vector<8x1xf32>
    %731 = vector.multi_reduction <maximumf>, %730, %cst_233 [0] : vector<10x8x1xf32> to vector<8x1xf32>
    %732 = vector.shape_cast %731 : vector<8x1xf32> to vector<1x8x1xf32>
    %733 = vector.broadcast %732 : vector<1x8x1xf32> to vector<10x8x1xf32>
    %734 = arith.subf %730, %733 : vector<10x8x1xf32>
    %735 = math.exp %734 : vector<10x8x1xf32>
    %cst_234 = arith.constant dense<0.000000e+00> : vector<8x1xf32>
    %736 = vector.multi_reduction <add>, %735, %cst_234 [0] : vector<10x8x1xf32> to vector<8x1xf32>
    %737 = vector.shape_cast %736 : vector<8x1xf32> to vector<1x8x1xf32>
    %738 = vector.broadcast %737 : vector<1x8x1xf32> to vector<10x8x1xf32>
    %739 = arith.divf %735, %738 : vector<10x8x1xf32>
    %740 = vector.broadcast %739 : vector<10x8x1xf32> to vector<10x8x128xf32>
    %741 = arith.mulf %740, %404 : vector<10x8x128xf32>
    %cst_235 = arith.constant dense<0.000000e+00> : vector<8x128xf32>
    %742 = vector.multi_reduction <add>, %741, %cst_235 [0] : vector<10x8x128xf32> to vector<8x128xf32>
    %743 = arith.truncf %742 : vector<8x128xf32> to vector<8x128xbf16>
    %c8_i32_236 = arith.constant 8 : i32
    %744 = arith.muli %c5_i32_231, %c8_i32_236 : i32
    %745 = tpu.assume_multiple %744, 8 : i32
    %746 = arith.index_cast %745 : i32 to index
    %c0_237 = arith.constant 0 : index
    %747 = vector.load %arg16[%746, %c0_237] : memref<56x384xf32, #tpu.memory_space<vmem>>, vector<8x384xf32>
    %c0_238 = arith.constant 0 : index
    %c0_239 = arith.constant 0 : index
    %748 = vector.load %arg7[%c0_238, %c0_239] : memref<128x384xbf16, #tpu.memory_space<vmem>>, vector<128x384xbf16>
    %cst_240 = arith.constant dense<0.000000e+00> : vector<8x384xf32>
    %749 = tpu.matmul %743, %748, %cst_240 {dimension_numbers = #tpu.dot_dimension_numbers<[1], [0], [0], [1], [0, 0, 1, 1], [], []>} : vector<8x128xbf16>, vector<128x384xbf16>, vector<8x384xf32> -> vector<8x384xf32>
    %750 = arith.addf %747, %749 : vector<8x384xf32>
    %c0_241 = arith.constant 0 : index
    %c0_242 = arith.constant 0 : index
    %751 = vector.load %arg8[%c0_241, %c0_242] : memref<128x384xbf16, #tpu.memory_space<vmem>>, vector<128x384xbf16>
    %cst_243 = arith.constant dense<0.000000e+00> : vector<8x384xf32>
    %752 = tpu.matmul %725, %751, %cst_243 {dimension_numbers = #tpu.dot_dimension_numbers<[1], [0], [0], [1], [0, 0, 1, 1], [], []>} : vector<8x128xbf16>, vector<128x384xbf16>, vector<8x384xf32> -> vector<8x384xf32>
    %753 = arith.addf %752, %19 : vector<8x384xf32>
    %754 = vector.extract_strided_slice %750 {offsets = [0, 0], sizes = [8, 128], strides = [1, 1]} : vector<8x384xf32> to vector<8x128xf32>
    %755 = vector.extract_strided_slice %753 {offsets = [0, 0], sizes = [8, 128], strides = [1, 1]} : vector<8x384xf32> to vector<8x128xf32>
    %756 = arith.addf %754, %755 : vector<8x128xf32>
    %757 = arith.negf %756 : vector<8x128xf32>
    %758 = math.exp %757 : vector<8x128xf32>
    %cst_244 = arith.constant 1.000000e+00 : f32
    %759 = vector.broadcast %cst_244 : f32 to vector<8x128xf32>
    %760 = arith.addf %759, %758 : vector<8x128xf32>
    %761 = arith.divf %759, %760 : vector<8x128xf32>
    %762 = vector.extract_strided_slice %750 {offsets = [0, 128], sizes = [8, 128], strides = [1, 1]} : vector<8x384xf32> to vector<8x128xf32>
    %763 = vector.extract_strided_slice %753 {offsets = [0, 128], sizes = [8, 128], strides = [1, 1]} : vector<8x384xf32> to vector<8x128xf32>
    %764 = arith.addf %762, %763 : vector<8x128xf32>
    %765 = arith.negf %764 : vector<8x128xf32>
    %766 = math.exp %765 : vector<8x128xf32>
    %cst_245 = arith.constant 1.000000e+00 : f32
    %767 = vector.broadcast %cst_245 : f32 to vector<8x128xf32>
    %768 = arith.addf %767, %766 : vector<8x128xf32>
    %769 = arith.divf %767, %768 : vector<8x128xf32>
    %770 = vector.extract_strided_slice %750 {offsets = [0, 256], sizes = [8, 128], strides = [1, 1]} : vector<8x384xf32> to vector<8x128xf32>
    %771 = vector.extract_strided_slice %753 {offsets = [0, 256], sizes = [8, 128], strides = [1, 1]} : vector<8x384xf32> to vector<8x128xf32>
    %772 = arith.mulf %761, %771 : vector<8x128xf32>
    %773 = arith.addf %770, %772 : vector<8x128xf32>
    %774 = math.tanh %773 : vector<8x128xf32>
    %cst_246 = arith.constant 1.000000e+00 : f32
    %775 = vector.broadcast %cst_246 : f32 to vector<8x128xf32>
    %776 = arith.subf %775, %769 : vector<8x128xf32>
    %777 = arith.mulf %776, %774 : vector<8x128xf32>
    %778 = arith.mulf %769, %715 : vector<8x128xf32>
    %779 = arith.addf %777, %778 : vector<8x128xf32>
    %780 = arith.truncf %779 : vector<8x128xf32> to vector<8x128xbf16>
    %781 = tpu.concatenate %780, %743 in 1 : vector<8x128xbf16>, vector<8x128xbf16> -> vector<8x256xbf16>
    %c0_247 = arith.constant 0 : index
    %c0_248 = arith.constant 0 : index
    %782 = vector.load %arg11[%c0_247, %c0_248] : memref<256x128xbf16, #tpu.memory_space<vmem>>, vector<256x128xbf16>
    %cst_249 = arith.constant dense<0.000000e+00> : vector<8x128xf32>
    %783 = tpu.matmul %781, %782, %cst_249 {dimension_numbers = #tpu.dot_dimension_numbers<[1], [0], [0], [1], [0, 0, 1, 1], [], []>} : vector<8x256xbf16>, vector<256x128xbf16>, vector<8x128xf32> -> vector<8x128xf32>
    %784 = arith.addf %783, %22 : vector<8x128xf32>
    %785 = arith.index_cast %c5_i32_231 : i32 to index
    %c0_250 = arith.constant 0 : index
    %c0_251 = arith.constant 0 : index
    %786 = vector.load %arg13[%785, %c0_250, %c0_251] : memref<7x8x128xf32, #tpu.memory_space<vmem>>, vector<1x8x128xf32>
    %787 = vector.shape_cast %786 : vector<1x8x128xf32> to vector<8x128xf32>
    %788 = vector.shape_cast %784 : vector<8x128xf32> to vector<1x8x128xf32>
    tpu.vector_store %arg13[%785, %c0_250, %c0_251], %788 {strides = array<i32>} : memref<7x8x128xf32, #tpu.memory_space<vmem>>, vector<1x8x128xf32>,
    %c6_i32_252 = arith.constant 6 : i32
    %789 = arith.truncf %779 : vector<8x128xf32> to vector<8x128xbf16>
    %790 = vector.shape_cast %779 : vector<8x128xf32> to vector<1x8x128xf32>
    %791 = vector.broadcast %790 : vector<1x8x128xf32> to vector<10x8x128xf32>
    %792 = arith.mulf %404, %791 : vector<10x8x128xf32>
    %cst_253 = arith.constant dense<0.000000e+00> : vector<10x8xf32>
    %793 = vector.multi_reduction <add>, %792, %cst_253 [2] : vector<10x8x128xf32> to vector<10x8xf32>
    %794 = vector.shape_cast %793 : vector<10x8xf32> to vector<10x8x1xf32>
    %cst_254 = arith.constant dense<0xFF800000> : vector<8x1xf32>
    %795 = vector.multi_reduction <maximumf>, %794, %cst_254 [0] : vector<10x8x1xf32> to vector<8x1xf32>
    %796 = vector.shape_cast %795 : vector<8x1xf32> to vector<1x8x1xf32>
    %797 = vector.broadcast %796 : vector<1x8x1xf32> to vector<10x8x1xf32>
    %798 = arith.subf %794, %797 : vector<10x8x1xf32>
    %799 = math.exp %798 : vector<10x8x1xf32>
    %cst_255 = arith.constant dense<0.000000e+00> : vector<8x1xf32>
    %800 = vector.multi_reduction <add>, %799, %cst_255 [0] : vector<10x8x1xf32> to vector<8x1xf32>
    %801 = vector.shape_cast %800 : vector<8x1xf32> to vector<1x8x1xf32>
    %802 = vector.broadcast %801 : vector<1x8x1xf32> to vector<10x8x1xf32>
    %803 = arith.divf %799, %802 : vector<10x8x1xf32>
    %804 = vector.broadcast %803 : vector<10x8x1xf32> to vector<10x8x128xf32>
    %805 = arith.mulf %804, %404 : vector<10x8x128xf32>
    %cst_256 = arith.constant dense<0.000000e+00> : vector<8x128xf32>
    %806 = vector.multi_reduction <add>, %805, %cst_256 [0] : vector<10x8x128xf32> to vector<8x128xf32>
    %807 = arith.truncf %806 : vector<8x128xf32> to vector<8x128xbf16>
    %c8_i32_257 = arith.constant 8 : i32
    %808 = arith.muli %c6_i32_252, %c8_i32_257 : i32
    %809 = tpu.assume_multiple %808, 8 : i32
    %810 = arith.index_cast %809 : i32 to index
    %c0_258 = arith.constant 0 : index
    %811 = vector.load %arg16[%810, %c0_258] : memref<56x384xf32, #tpu.memory_space<vmem>>, vector<8x384xf32>
    %c0_259 = arith.constant 0 : index
    %c0_260 = arith.constant 0 : index
    %812 = vector.load %arg7[%c0_259, %c0_260] : memref<128x384xbf16, #tpu.memory_space<vmem>>, vector<128x384xbf16>
    %cst_261 = arith.constant dense<0.000000e+00> : vector<8x384xf32>
    %813 = tpu.matmul %807, %812, %cst_261 {dimension_numbers = #tpu.dot_dimension_numbers<[1], [0], [0], [1], [0, 0, 1, 1], [], []>} : vector<8x128xbf16>, vector<128x384xbf16>, vector<8x384xf32> -> vector<8x384xf32>
    %814 = arith.addf %811, %813 : vector<8x384xf32>
    %c0_262 = arith.constant 0 : index
    %c0_263 = arith.constant 0 : index
    %815 = vector.load %arg8[%c0_262, %c0_263] : memref<128x384xbf16, #tpu.memory_space<vmem>>, vector<128x384xbf16>
    %cst_264 = arith.constant dense<0.000000e+00> : vector<8x384xf32>
    %816 = tpu.matmul %789, %815, %cst_264 {dimension_numbers = #tpu.dot_dimension_numbers<[1], [0], [0], [1], [0, 0, 1, 1], [], []>} : vector<8x128xbf16>, vector<128x384xbf16>, vector<8x384xf32> -> vector<8x384xf32>
    %817 = arith.addf %816, %19 : vector<8x384xf32>
    %818 = vector.extract_strided_slice %814 {offsets = [0, 0], sizes = [8, 128], strides = [1, 1]} : vector<8x384xf32> to vector<8x128xf32>
    %819 = vector.extract_strided_slice %817 {offsets = [0, 0], sizes = [8, 128], strides = [1, 1]} : vector<8x384xf32> to vector<8x128xf32>
    %820 = arith.addf %818, %819 : vector<8x128xf32>
    %821 = arith.negf %820 : vector<8x128xf32>
    %822 = math.exp %821 : vector<8x128xf32>
    %cst_265 = arith.constant 1.000000e+00 : f32
    %823 = vector.broadcast %cst_265 : f32 to vector<8x128xf32>
    %824 = arith.addf %823, %822 : vector<8x128xf32>
    %825 = arith.divf %823, %824 : vector<8x128xf32>
    %826 = vector.extract_strided_slice %814 {offsets = [0, 128], sizes = [8, 128], strides = [1, 1]} : vector<8x384xf32> to vector<8x128xf32>
    %827 = vector.extract_strided_slice %817 {offsets = [0, 128], sizes = [8, 128], strides = [1, 1]} : vector<8x384xf32> to vector<8x128xf32>
    %828 = arith.addf %826, %827 : vector<8x128xf32>
    %829 = arith.negf %828 : vector<8x128xf32>
    %830 = math.exp %829 : vector<8x128xf32>
    %cst_266 = arith.constant 1.000000e+00 : f32
    %831 = vector.broadcast %cst_266 : f32 to vector<8x128xf32>
    %832 = arith.addf %831, %830 : vector<8x128xf32>
    %833 = arith.divf %831, %832 : vector<8x128xf32>
    %834 = vector.extract_strided_slice %814 {offsets = [0, 256], sizes = [8, 128], strides = [1, 1]} : vector<8x384xf32> to vector<8x128xf32>
    %835 = vector.extract_strided_slice %817 {offsets = [0, 256], sizes = [8, 128], strides = [1, 1]} : vector<8x384xf32> to vector<8x128xf32>
    %836 = arith.mulf %825, %835 : vector<8x128xf32>
    %837 = arith.addf %834, %836 : vector<8x128xf32>
    %838 = math.tanh %837 : vector<8x128xf32>
    %cst_267 = arith.constant 1.000000e+00 : f32
    %839 = vector.broadcast %cst_267 : f32 to vector<8x128xf32>
    %840 = arith.subf %839, %833 : vector<8x128xf32>
    %841 = arith.mulf %840, %838 : vector<8x128xf32>
    %842 = arith.mulf %833, %779 : vector<8x128xf32>
    %843 = arith.addf %841, %842 : vector<8x128xf32>
    %844 = arith.truncf %843 : vector<8x128xf32> to vector<8x128xbf16>
    %845 = tpu.concatenate %844, %807 in 1 : vector<8x128xbf16>, vector<8x128xbf16> -> vector<8x256xbf16>
    %c0_268 = arith.constant 0 : index
    %c0_269 = arith.constant 0 : index
    %846 = vector.load %arg11[%c0_268, %c0_269] : memref<256x128xbf16, #tpu.memory_space<vmem>>, vector<256x128xbf16>
    %cst_270 = arith.constant dense<0.000000e+00> : vector<8x128xf32>
    %847 = tpu.matmul %845, %846, %cst_270 {dimension_numbers = #tpu.dot_dimension_numbers<[1], [0], [0], [1], [0, 0, 1, 1], [], []>} : vector<8x256xbf16>, vector<256x128xbf16>, vector<8x128xf32> -> vector<8x128xf32>
    %848 = arith.addf %847, %22 : vector<8x128xf32>
    %849 = arith.index_cast %c6_i32_252 : i32 to index
    %c0_271 = arith.constant 0 : index
    %c0_272 = arith.constant 0 : index
    %850 = vector.load %arg13[%849, %c0_271, %c0_272] : memref<7x8x128xf32, #tpu.memory_space<vmem>>, vector<1x8x128xf32>
    %851 = vector.shape_cast %850 : vector<1x8x128xf32> to vector<8x128xf32>
    %852 = vector.shape_cast %848 : vector<8x128xf32> to vector<1x8x128xf32>
    tpu.vector_store %arg13[%849, %c0_271, %c0_272], %852 {strides = array<i32>} : memref<7x8x128xf32, #tpu.memory_space<vmem>>, vector<1x8x128xf32>,
    %c7_i32_273 = arith.constant 7 : i32
    return
  }
}

</mosaic_0001>

<llo_original>
// kernel: seq2seq_forward.1
$region0: #{seq2seq_forward.1}
  #allocation0 [shape = 'u32[]', space=smem, size = 0x4, offset = 0x4, fixed_abs, tag = 'smem constant byte address 0x4 - core index']
  #allocation1 [shape = 'u32[144,128]{1,0:T(1,128)}', space=vmem, size = 0x12000, scoped, tag = 'internal scratch']
  #allocation2 [shape = 'f32[80,384]{1,0:T(8,128)}', space=vmem, size = 0x1e000, scoped, tag = 'scratch operand']
  #allocation3 [shape = 'f32[10,8,128]{2,1,0:T(8,128)}', space=vmem, size = 0xa000, scoped, tag = 'scratch operand']
  #allocation4 [shape = 'f32[56,384]{1,0:T(8,128)}', space=vmem, size = 0x15000, scoped, tag = 'scratch operand']
  %s0 = inlined_call_operand.vmem [shape: bf16[80,128], index: 0, kind: input, shape index: {}]
  %s1 = inlined_call_operand.vmem [shape: bf16[56,128], index: 1, kind: input, shape index: {}]
  %s2 = inlined_call_operand.vmem [shape: bf16[128,384], index: 2, kind: input, shape index: {}]
  %s3 = inlined_call_operand.vmem [shape: bf16[128,384], index: 3, kind: input, shape index: {}]
  %s4 = inlined_call_operand.vmem [shape: f32[1,384], index: 4, kind: input, shape index: {}]
  %s5 = inlined_call_operand.vmem [shape: f32[1,384], index: 5, kind: input, shape index: {}]
  %s6 = inlined_call_operand.vmem [shape: bf16[128,384], index: 6, kind: input, shape index: {}]
  %s7 = inlined_call_operand.vmem [shape: bf16[128,384], index: 7, kind: input, shape index: {}]
  %s8 = inlined_call_operand.vmem [shape: bf16[128,384], index: 8, kind: input, shape index: {}]
  %s9 = inlined_call_operand.vmem [shape: f32[1,384], index: 9, kind: input, shape index: {}]
  %s10 = inlined_call_operand.vmem [shape: f32[1,384], index: 10, kind: input, shape index: {}]
  %s11 = inlined_call_operand.vmem [shape: bf16[256,128], index: 11, kind: input, shape index: {}]
  %s12 = inlined_call_operand.vmem [shape: f32[1,128], index: 12, kind: input, shape index: {}]
  %s13 = inlined_call_operand.vmem [shape: f32[7,8,128], index: 13, kind: output, shape index: {}]
  %s14 = sld [smem:[#allocation0]]
  $region62: #{seq2seq_forward.1} parent=0
    _
  %s16 = ssub.s32 1, %s14
  %s17 = scalar_select 0, %s16, %s14
  // Predicated region
  $region2: #{seq2seq_forward.1} parent=0 // pred_check
    _
  $region3: #{seq2seq_forward.1} parent=0 // pred_check_branch
    %19 = sbr.rel (0) target = $region5
  $region4: #{seq2seq_forward.1} parent=0 // pred_region
    _
  $region5: #{seq2seq_forward.1} parent=0 // pred_fallthru
    _
  // Predicated region
  $region6: #{seq2seq_forward.1} parent=0 // pred_check
    _
  $region7: #{seq2seq_forward.1} parent=0 // pred_check_branch
    %21 = sbr.rel (0) target = $region9
  $region8: #{seq2seq_forward.1} parent=0 // pred_region
    _
  $region9: #{seq2seq_forward.1} parent=0 // pred_fallthru
    _
  // Predicated region
  $region10: #{seq2seq_forward.1} parent=0 // pred_check
    _
  $region11: #{seq2seq_forward.1} parent=0 // pred_check_branch
    %23 = sbr.rel (0) target = $region13
  $region12: #{seq2seq_forward.1} parent=0 // pred_region
    _
  $region13: #{seq2seq_forward.1} parent=0 // pred_fallthru
    _
  // Predicated region
  $region14: #{seq2seq_forward.1} parent=0 // pred_check
    _
  $region15: #{seq2seq_forward.1} parent=0 // pred_check_branch
    %25 = sbr.rel (0) target = $region17
  $region16: #{seq2seq_forward.1} parent=0 // pred_region
    _
  $region17: #{seq2seq_forward.1} parent=0 // pred_fallthru
    _
  // Predicated region
  $region18: #{seq2seq_forward.1} parent=0 // pred_check
    _
  $region19: #{seq2seq_forward.1} parent=0 // pred_check_branch
    %27 = sbr.rel (0) target = $region21
  $region20: #{seq2seq_forward.1} parent=0 // pred_region
    _
  $region21: #{seq2seq_forward.1} parent=0 // pred_fallthru
    _
  // Predicated region
  $region22: #{seq2seq_forward.1} parent=0 // pred_check
    _
  $region23: #{seq2seq_forward.1} parent=0 // pred_check_branch
    %29 = sbr.rel (0) target = $region25
  $region24: #{seq2seq_forward.1} parent=0 // pred_region
    _
  $region25: #{seq2seq_forward.1} parent=0 // pred_fallthru
    _
  // Predicated region
  $region26: #{seq2seq_forward.1} parent=0 // pred_check
    _
  $region27: #{seq2seq_forward.1} parent=0 // pred_check_branch
    %31 = sbr.rel (0) target = $region29
  $region28: #{seq2seq_forward.1} parent=0 // pred_region
    _
  $region29: #{seq2seq_forward.1} parent=0 // pred_fallthru
    _
  // Predicated region
  $region30: #{seq2seq_forward.1} parent=0 // pred_check
    _
  $region31: #{seq2seq_forward.1} parent=0 // pred_check_branch
    %33 = sbr.rel (0) target = $region33
  $region32: #{seq2seq_forward.1} parent=0 // pred_region
    _
  $region33: #{seq2seq_forward.1} parent=0 // pred_fallthru
    _
  // Predicated region
  $region34: #{seq2seq_forward.1} parent=0 // pred_check
    _
  $region35: #{seq2seq_forward.1} parent=0 // pred_check_branch
    %35 = sbr.rel (0) target = $region37
  $region36: #{seq2seq_forward.1} parent=0 // pred_region
    _
  $region37: #{seq2seq_forward.1} parent=0 // pred_fallthru
    _
  // Predicated region
  $region38: #{seq2seq_forward.1} parent=0 // pred_check
    _
  $region39: #{seq2seq_forward.1} parent=0 // pred_check_branch
    %37 = sbr.rel (0) target = $region41
  $region40: #{seq2seq_forward.1} parent=0 // pred_region
    _
  $region41: #{seq2seq_forward.1} parent=0 // pred_fallthru
    _
  // Predicated region
  $region42: #{seq2seq_forward.1} parent=0 // pred_check
    _
  $region43: #{seq2seq_forward.1} parent=0 // pred_check_branch
    %39 = sbr.rel (0) target = $region45
  $region44: #{seq2seq_forward.1} parent=0 // pred_region
    _
  $region45: #{seq2seq_forward.1} parent=0 // pred_fallthru
    _
  // Predicated region
  $region46: #{seq2seq_forward.1} parent=0 // pred_check
    _
  $region47: #{seq2seq_forward.1} parent=0 // pred_check_branch
    %41 = sbr.rel (0) target = $region49
  $region48: #{seq2seq_forward.1} parent=0 // pred_region
    _
  $region49: #{seq2seq_forward.1} parent=0 // pred_fallthru
    _
  // Predicated region
  $region50: #{seq2seq_forward.1} parent=0 // pred_check
    _
  $region51: #{seq2seq_forward.1} parent=0 // pred_check_branch
    %43 = sbr.rel (0) target = $region53
  $region52: #{seq2seq_forward.1} parent=0 // pred_region
    _
  $region53: #{seq2seq_forward.1} parent=0 // pred_fallthru
    _
  %v45 = vld [vmem:[%s0] sm:$0xf]
  %v46 = vld [vmem:[%s0 + $0x4] sm:$0xf]
  %v47 = vld [vmem:[%s0 + $0x8] sm:$0xf]
  %v48 = vld [vmem:[%s0 + $0xc] sm:$0xf]
  %v49 = vld [vmem:[%s0 + $0x10] sm:$0xf]
  %v50 = vld [vmem:[%s0 + $0x14] sm:$0xf]
  %v51 = vld [vmem:[%s0 + $0x18] sm:$0xf]
  %v52 = vld [vmem:[%s0 + $0x1c] sm:$0xf]
  %v53 = vld [vmem:[%s0 + $0x20] sm:$0xf]
  %v54 = vld [vmem:[%s0 + $0x24] sm:$0xf]
  %v55 = vld [vmem:[%s2] sm:$0xff]
  %v56 = vld [vmem:[%s2 + $0x8] sm:$0xf]
  %v57 = vld [vmem:[%s2 + $0xc] sm:$0xff]
  %v58 = vld [vmem:[%s2 + $0x14] sm:$0xf]
  %v59 = vld [vmem:[%s2 + $0x18] sm:$0xff]
  %v60 = vld [vmem:[%s2 + $0x20] sm:$0xf]
  %v61 = vld [vmem:[%s2 + $0x24] sm:$0xff]
  %v62 = vld [vmem:[%s2 + $0x2c] sm:$0xf]
  %v63 = vld [vmem:[%s2 + $0x30] sm:$0xff]
  %v64 = vld [vmem:[%s2 + $0x38] sm:$0xf]
  %v65 = vld [vmem:[%s2 + $0x3c] sm:$0xff]
  %v66 = vld [vmem:[%s2 + $0x44] sm:$0xf]
  %v67 = vld [vmem:[%s2 + $0x48] sm:$0xff]
  %v68 = vld [vmem:[%s2 + $0x50] sm:$0xf]
  %v69 = vld [vmem:[%s2 + $0x54] sm:$0xff]
  %v70 = vld [vmem:[%s2 + $0x5c] sm:$0xf]
  %v71 = vld [vmem:[%s2 + $0x60] sm:$0xff]
  %v72 = vld [vmem:[%s2 + $0x68] sm:$0xf]
  %v73 = vld [vmem:[%s2 + $0x6c] sm:$0xff]
  %v74 = vld [vmem:[%s2 + $0x74] sm:$0xf]
  %v75 = vld [vmem:[%s2 + $0x78] sm:$0xff]
  %v76 = vld [vmem:[%s2 + $0x80] sm:$0xf]
  %v77 = vld [vmem:[%s2 + $0x84] sm:$0xff]
  %v78 = vld [vmem:[%s2 + $0x8c] sm:$0xf]
  %v79 = vld [vmem:[%s2 + $0x90] sm:$0xff]
  %v80 = vld [vmem:[%s2 + $0x98] sm:$0xf]
  %v81 = vld [vmem:[%s2 + $0x9c] sm:$0xff]
  %v82 = vld [vmem:[%s2 + $0xa4] sm:$0xf]
  %v83 = vld [vmem:[%s2 + $0xa8] sm:$0xff]
  %v84 = vld [vmem:[%s2 + $0xb0] sm:$0xf]
  %v85 = vld [vmem:[%s2 + $0xb4] sm:$0xff]
  %v86 = vld [vmem:[%s2 + $0xbc] sm:$0xf]
  %v87 = vld [vmem:[%s4] sm:$0x7]
  %v89 = vlaneseq
  %v90 = vshrl.u32 %v89, 7
  %v91 = vsub.s32 0, %v90
  %v92 = vrot.slane %v87, %v91
  %v93 = vlaneseq
  %v94 = vshrl.u32 %v93, 7
  %v95 = vsub.s32 1, %v94
  %v96 = vrot.slane %v87, %v95
  %v97 = vlaneseq
  %v98 = vshrl.u32 %v97, 7
  %v99 = vsub.s32 2, %v98
  %v100 = vrot.slane %v87, %v99
  %v114 = vunpack.c.l.b16 %v45
  %v115 = vunpack.c.l.b16 %v46
  %v116 = vunpack.c.l.b16 %v47
  %v117 = vunpack.c.l.b16 %v48
  %v118 = vunpack.c.l.b16 %v49
  %v119 = vunpack.c.l.b16 %v50
  %v120 = vunpack.c.l.b16 %v51
  %v121 = vunpack.c.l.b16 %v52
  %v122 = vunpack.c.l.b16 %v53
  %v123 = vunpack.c.l.b16 %v54
  %v124 = vpack.c.b16 %v115, %v114
  %v125 = vpack.c.b16 %v117, %v116
  %v126 = vpack.c.b16 %v119, %v118
  %v127 = vpack.c.b16 %v121, %v120
  %v128 = vpack.c.b16 %v123, %v122
  %v166 = vunpack.c.l.b16 %v55
  %v167 = vunpack.c.h.b16 %v55
  %v168 = vunpack.c.l.b16 %v56
  %v169 = vunpack.c.l.b16 %v57
  %v170 = vunpack.c.h.b16 %v57
  %v171 = vunpack.c.l.b16 %v58
  %v172 = vunpack.c.l.b16 %v59
  %v173 = vunpack.c.h.b16 %v59
  %v174 = vunpack.c.l.b16 %v60
  %v175 = vunpack.c.l.b16 %v61
  %v176 = vunpack.c.h.b16 %v61
  %v177 = vunpack.c.l.b16 %v62
  %v178 = vunpack.c.l.b16 %v63
  %v179 = vunpack.c.h.b16 %v63
  %v180 = vunpack.c.l.b16 %v64
  %v181 = vunpack.c.l.b16 %v65
  %v182 = vunpack.c.h.b16 %v65
  %v183 = vunpack.c.l.b16 %v66
  %v184 = vunpack.c.l.b16 %v67
  %v185 = vunpack.c.h.b16 %v67
  %v186 = vunpack.c.l.b16 %v68
  %v187 = vunpack.c.l.b16 %v69
  %v188 = vunpack.c.h.b16 %v69
  %v189 = vunpack.c.l.b16 %v70
  %v190 = vunpack.c.l.b16 %v71
  %v191 = vunpack.c.h.b16 %v71
  %v192 = vunpack.c.l.b16 %v72
  %v193 = vunpack.c.l.b16 %v73
  %v194 = vunpack.c.h.b16 %v73
  %v195 = vunpack.c.l.b16 %v74
  %v196 = vunpack.c.l.b16 %v75
  %v197 = vunpack.c.h.b16 %v75
  %v198 = vunpack.c.l.b16 %v76
  %v199 = vunpack.c.l.b16 %v77
  %v200 = vunpack.c.h.b16 %v77
  %v201 = vunpack.c.l.b16 %v78
  %v202 = vunpack.c.l.b16 %v79
  %v203 = vunpack.c.h.b16 %v79
  %v204 = vunpack.c.l.b16 %v80
  %v205 = vunpack.c.l.b16 %v81
  %v206 = vunpack.c.h.b16 %v81
  %v207 = vunpack.c.l.b16 %v82
  %v208 = vunpack.c.l.b16 %v83
  %v209 = vunpack.c.h.b16 %v83
  %v210 = vunpack.c.l.b16 %v84
  %v211 = vunpack.c.l.b16 %v85
  %v212 = vunpack.c.h.b16 %v85
  %v213 = vunpack.c.l.b16 %v86
  %v214 = vpack.c.b16 %v169, %v166
  %v215 = vpack.c.b16 %v170, %v167
  %v216 = vpack.c.b16 %v171, %v168
  %v217 = vpack.c.b16 %v175, %v172
  %v218 = vpack.c.b16 %v176, %v173
  %v219 = vpack.c.b16 %v177, %v174
  %v220 = vpack.c.b16 %v181, %v178
  %v221 = vpack.c.b16 %v182, %v179
  %v222 = vpack.c.b16 %v183, %v180
  %v223 = vpack.c.b16 %v187, %v184
  %v224 = vpack.c.b16 %v188, %v185
  %v225 = vpack.c.b16 %v189, %v186
  %v226 = vpack.c.b16 %v193, %v190
  %v227 = vpack.c.b16 %v194, %v191
  %v228 = vpack.c.b16 %v195, %v192
  %v229 = vpack.c.b16 %v199, %v196
  %v230 = vpack.c.b16 %v200, %v197
  %v231 = vpack.c.b16 %v201, %v198
  %v232 = vpack.c.b16 %v205, %v202
  %v233 = vpack.c.b16 %v206, %v203
  %v234 = vpack.c.b16 %v207, %v204
  %v235 = vpack.c.b16 %v211, %v208
  %v236 = vpack.c.b16 %v212, %v209
  %v237 = vpack.c.b16 %v213, %v210
  %262 = vmatprep.subr.bf16.mxu0 %v215
  %263 = vmatpush1.bf16.msra.mxu0 %v214
  %264 = vmatprep.subr.bf16.mxu0 %v218
  %265 = vmatpush1.bf16.msra.mxu0 %v217
  %266 = vmatprep.subr.bf16.mxu0 %v221
  %267 = vmatpush1.bf16.msra.mxu0 %v220
  %268 = vmatprep.subr.bf16.mxu0 %v224
  %269 = vmatpush1.bf16.msra.mxu0 %v223
  %270 = vmatprep.subr.bf16.mxu0 %v227
  %271 = vmatpush1.bf16.msra.mxu0 %v226
  %272 = vmatprep.subr.bf16.mxu0 %v230
  %273 = vmatpush1.bf16.msra.mxu0 %v229
  %274 = vmatprep.subr.bf16.mxu0 %v233
  %275 = vmatpush1.bf16.msra.mxu0 %v232
  %276 = vmatprep.subr.bf16.mxu0 %v236
  %277 = vmatpush1.bf16.msra.mxu0 %v235
  %278 = vmatprep.subr.bf16.mxu0 0
  %279 = vmatpush1.bf16.msra.mxu0 0
  %280 = vmatprep.subr.bf16.mxu0 0
  %281 = vmatpush1.bf16.msra.mxu0 0
  %282 = vmatprep.subr.bf16.mxu0 0
  %283 = vmatpush1.bf16.msra.mxu0 0
  %284 = vmatprep.subr.bf16.mxu0 0
  %285 = vmatpush1.bf16.msra.mxu0 0
  %286 = vmatprep.subr.bf16.mxu0 0
  %287 = vmatpush1.bf16.msra.mxu0 0
  %288 = vmatprep.subr.bf16.mxu0 0
  %289 = vmatpush1.bf16.msra.mxu0 0
  %290 = vmatprep.subr.bf16.mxu0 0
  %291 = vmatpush1.bf16.msra.mxu0 0
  %292 = vmatprep.subr.bf16.mxu0 0
  %293 = vmatpush1.bf16.msra.mxu0 0
  %294 = vmatprep.mubr.bf16.mxu0 0
  %295 = vmatmul.mubr.bf16.gmra.mrb[0].mxu0 %v124
  %v296 = vpop.f32.mrb[0].mxu0
  %v297 = vadd.f32 %v92, %v296
  %v298 = vpop.f32.mrb[0].mxu0
  %v299 = vadd.f32 %v96, %v298
  %v300 = vpop.f32.mrb[0].mxu0
  %v301 = vadd.f32 %v92, %v300
  %v302 = vpop.f32.mrb[0].mxu0
  %v303 = vadd.f32 %v96, %v302
  %304 = vmatprep.mubr.bf16.mxu0 0
  %305 = vmatmul.mubr.bf16.gmra.mrb[0].mxu0 %v125
  %v306 = vpop.f32.mrb[0].mxu0
  %v307 = vadd.f32 %v92, %v306
  %v308 = vpop.f32.mrb[0].mxu0
  %v309 = vadd.f32 %v96, %v308
  %v310 = vpop.f32.mrb[0].mxu0
  %v311 = vadd.f32 %v92, %v310
  %v312 = vpop.f32.mrb[0].mxu0
  %v313 = vadd.f32 %v96, %v312
  %314 = vmatprep.mubr.bf16.mxu0 0
  %315 = vmatmul.mubr.bf16.gmra.mrb[0].mxu0 %v126
  %v316 = vpop.f32.mrb[0].mxu0
  %v317 = vadd.f32 %v92, %v316
  %v318 = vpop.f32.mrb[0].mxu0
  %v319 = vadd.f32 %v96, %v318
  %v320 = vpop.f32.mrb[0].mxu0
  %v321 = vadd.f32 %v92, %v320
  %v322 = vpop.f32.mrb[0].mxu0
  %v323 = vadd.f32 %v96, %v322
  %324 = vmatprep.mubr.bf16.mxu0 0
  %325 = vmatmul.mubr.bf16.gmra.mrb[0].mxu0 %v127
  %v326 = vpop.f32.mrb[0].mxu0
  %v327 = vadd.f32 %v92, %v326
  %v328 = vpop.f32.mrb[0].mxu0
  %v329 = vadd.f32 %v96, %v328
  %v330 = vpop.f32.mrb[0].mxu0
  %v331 = vadd.f32 %v92, %v330
  %v332 = vpop.f32.mrb[0].mxu0
  %v333 = vadd.f32 %v96, %v332
  %334 = vmatprep.mubr.bf16.mxu0 0
  %335 = vmatmul.mubr.bf16.gmra.mrb[0].mxu0 %v128
  %v336 = vpop.f32.mrb[0].mxu0
  %v337 = vadd.f32 %v92, %v336
  %v338 = vpop.f32.mrb[0].mxu0
  %v339 = vadd.f32 %v96, %v338
  %v340 = vpop.f32.mrb[0].mxu0
  %v341 = vadd.f32 %v92, %v340
  %v342 = vpop.f32.mrb[0].mxu0
  %v343 = vadd.f32 %v96, %v342
  %344 = vdwg.mxu0
  %345 = vmatprep.subr.bf16.mxu0 0
  %346 = vmatpush1.bf16.msra.mxu0 %v216
  %347 = vmatprep.subr.bf16.mxu0 0
  %348 = vmatpush1.bf16.msra.mxu0 %v219
  %349 = vmatprep.subr.bf16.mxu0 0
  %350 = vmatpush1.bf16.msra.mxu0 %v222
  %351 = vmatprep.subr.bf16.mxu0 0
  %352 = vmatpush1.bf16.msra.mxu0 %v225
  %353 = vmatprep.subr.bf16.mxu0 0
  %354 = vmatpush1.bf16.msra.mxu0 %v228
  %355 = vmatprep.subr.bf16.mxu0 0
  %356 = vmatpush1.bf16.msra.mxu0 %v231
  %357 = vmatprep.subr.bf16.mxu0 0
  %358 = vmatpush1.bf16.msra.mxu0 %v234
  %359 = vmatprep.subr.bf16.mxu0 0
  %360 = vmatpush1.bf16.msra.mxu0 %v237
  %361 = vmatprep.subr.bf16.mxu0 0
  %362 = vmatpush1.bf16.msra.mxu0 0
  %363 = vmatprep.subr.bf16.mxu0 0
  %364 = vmatpush1.bf16.msra.mxu0 0
  %365 = vmatprep.subr.bf16.mxu0 0
  %366 = vmatpush1.bf16.msra.mxu0 0
  %367 = vmatprep.subr.bf16.mxu0 0
  %368 = vmatpush1.bf16.msra.mxu0 0
  %369 = vmatprep.subr.bf16.mxu0 0
  %370 = vmatpush1.bf16.msra.mxu0 0
  %371 = vmatprep.subr.bf16.mxu0 0
  %372 = vmatpush1.bf16.msra.mxu0 0
  %373 = vmatprep.subr.bf16.mxu0 0
  %374 = vmatpush1.bf16.msra.mxu0 0
  %375 = vmatprep.subr.bf16.mxu0 0
  %376 = vmatpush1.bf16.msra.mxu0 0
  %377 = vmatprep.mubr.bf16.mxu0 0
  %378 = vmatmul.mubr.bf16.gmra.mrb[0].mxu0 %v124
  %v379 = vpop.f32.mrb[0].mxu0
  %v380 = vadd.f32 %v100, %v379
  %v381 = vpop.f32.mrb[0].mxu0
  %v382 = vpop.f32.mrb[0].mxu0
  %v383 = vadd.f32 %v100, %v382
  %v384 = vpop.f32.mrb[0].mxu0
  %385 = vmatprep.mubr.bf16.mxu0 0
  %386 = vmatmul.mubr.bf16.gmra.mrb[0].mxu0 %v125
  %v387 = vpop.f32.mrb[0].mxu0
  %v388 = vadd.f32 %v100, %v387
  %v389 = vpop.f32.mrb[0].mxu0
  %v390 = vpop.f32.mrb[0].mxu0
  %v391 = vadd.f32 %v100, %v390
  %v392 = vpop.f32.mrb[0].mxu0
  %393 = vmatprep.mubr.bf16.mxu0 0
  %394 = vmatmul.mubr.bf16.gmra.mrb[0].mxu0 %v126
  %v395 = vpop.f32.mrb[0].mxu0
  %v396 = vadd.f32 %v100, %v395
  %v397 = vpop.f32.mrb[0].mxu0
  %v398 = vpop.f32.mrb[0].mxu0
  %v399 = vadd.f32 %v100, %v398
  %v400 = vpop.f32.mrb[0].mxu0
  %401 = vmatprep.mubr.bf16.mxu0 0
  %402 = vmatmul.mubr.bf16.gmra.mrb[0].mxu0 %v127
  %v403 = vpop.f32.mrb[0].mxu0
  %v404 = vadd.f32 %v100, %v403
  %v405 = vpop.f32.mrb[0].mxu0
  %v406 = vpop.f32.mrb[0].mxu0
  %v407 = vadd.f32 %v100, %v406
  %v408 = vpop.f32.mrb[0].mxu0
  %409 = vmatprep.mubr.bf16.mxu0 0
  %410 = vmatmul.mubr.bf16.gmra.mrb[0].mxu0 %v128
  %v411 = vpop.f32.mrb[0].mxu0
  %v412 = vadd.f32 %v100, %v411
  %v413 = vpop.f32.mrb[0].mxu0
  %v414 = vpop.f32.mrb[0].mxu0
  %v415 = vadd.f32 %v100, %v414
  %v416 = vpop.f32.mrb[0].mxu0
  %417 = vdwg.mxu0
  %418 = vst [vmem:[#allocation2] sm:$0xff] %v297
  %419 = vst [vmem:[#allocation2 + $0x8] sm:$0xff] %v299
  %420 = vst [vmem:[#allocation2 + $0x10] sm:$0xff] %v380
  %421 = vst [vmem:[#allocation2 + $0x18] sm:$0xff] %v301
  %422 = vst [vmem:[#allocation2 + $0x20] sm:$0xff] %v303
  %423 = vst [vmem:[#allocation2 + $0x28] sm:$0xff] %v383
  %424 = vst [vmem:[#allocation2 + $0x30] sm:$0xff] %v307
  %425 = vst [vmem:[#allocation2 + $0x38] sm:$0xff] %v309
  %426 = vst [vmem:[#allocation2 + $0x40] sm:$0xff] %v388
  %427 = vst [vmem:[#allocation2 + $0x48] sm:$0xff] %v311
  %428 = vst [vmem:[#allocation2 + $0x50] sm:$0xff] %v313
  %429 = vst [vmem:[#allocation2 + $0x58] sm:$0xff] %v391
  %430 = vst [vmem:[#allocation2 + $0x60] sm:$0xff] %v317
  %431 = vst [vmem:[#allocation2 + $0x68] sm:$0xff] %v319
  %432 = vst [vmem:[#allocation2 + $0x70] sm:$0xff] %v396
  %433 = vst [vmem:[#allocation2 + $0x78] sm:$0xff] %v321
  %434 = vst [vmem:[#allocation2 + $0x80] sm:$0xff] %v323
  %435 = vst [vmem:[#allocation2 + $0x88] sm:$0xff] %v399
  %436 = vst [vmem:[#allocation2 + $0x90] sm:$0xff] %v327
  %437 = vst [vmem:[#allocation2 + $0x98] sm:$0xff] %v329
  %438 = vst [vmem:[#allocation2 + $0xa0] sm:$0xff] %v404
  %439 = vst [vmem:[#allocation2 + $0xa8] sm:$0xff] %v331
  %440 = vst [vmem:[#allocation2 + $0xb0] sm:$0xff] %v333
  %441 = vst [vmem:[#allocation2 + $0xb8] sm:$0xff] %v407
  %442 = vst [vmem:[#allocation2 + $0xc0] sm:$0xff] %v337
  %443 = vst [vmem:[#allocation2 + $0xc8] sm:$0xff] %v339
  %444 = vst [vmem:[#allocation2 + $0xd0] sm:$0xff] %v412
  %445 = vst [vmem:[#allocation2 + $0xd8] sm:$0xff] %v341
  %446 = vst [vmem:[#allocation2 + $0xe0] sm:$0xff] %v343
  %447 = vst [vmem:[#allocation2 + $0xe8] sm:$0xff] %v415
  %v448 = vld [vmem:[%s1] sm:$0xf]
  %v449 = vld [vmem:[%s1 + $0x4] sm:$0xf]
  %v450 = vld [vmem:[%s1 + $0x8] sm:$0xf]
  %v451 = vld [vmem:[%s1 + $0xc] sm:$0xf]
  %v452 = vld [vmem:[%s1 + $0x10] sm:$0xf]
  %v453 = vld [vmem:[%s1 + $0x14] sm:$0xf]
  %v454 = vld [vmem:[%s1 + $0x18] sm:$0xf]
  %v455 = vld [vmem:[%s6] sm:$0xff]
  %v456 = vld [vmem:[%s6 + $0x8] sm:$0xf]
  %v457 = vld [vmem:[%s6 + $0xc] sm:$0xff]
  %v458 = vld [vmem:[%s6 + $0x14] sm:$0xf]
  %v459 = vld [vmem:[%s6 + $0x18] sm:$0xff]
  %v460 = vld [vmem:[%s6 + $0x20] sm:$0xf]
  %v461 = vld [vmem:[%s6 + $0x24] sm:$0xff]
  %v462 = vld [vmem:[%s6 + $0x2c] sm:$0xf]
  %v463 = vld [vmem:[%s6 + $0x30] sm:$0xff]
  %v464 = vld [vmem:[%s6 + $0x38] sm:$0xf]
  %v465 = vld [vmem:[%s6 + $0x3c] sm:$0xff]
  %v466 = vld [vmem:[%s6 + $0x44] sm:$0xf]
  %v467 = vld [vmem:[%s6 + $0x48] sm:$0xff]
  %v468 = vld [vmem:[%s6 + $0x50] sm:$0xf]
  %v469 = vld [vmem:[%s6 + $0x54] sm:$0xff]
  %v470 = vld [vmem:[%s6 + $0x5c] sm:$0xf]
  %v471 = vld [vmem:[%s6 + $0x60] sm:$0xff]
  %v472 = vld [vmem:[%s6 + $0x68] sm:$0xf]
  %v473 = vld [vmem:[%s6 + $0x6c] sm:$0xff]
  %v474 = vld [vmem:[%s6 + $0x74] sm:$0xf]
  %v475 = vld [vmem:[%s6 + $0x78] sm:$0xff]
  %v476 = vld [vmem:[%s6 + $0x80] sm:$0xf]
  %v477 = vld [vmem:[%s6 + $0x84] sm:$0xff]
  %v478 = vld [vmem:[%s6 + $0x8c] sm:$0xf]
  %v479 = vld [vmem:[%s6 + $0x90] sm:$0xff]
  %v480 = vld [vmem:[%s6 + $0x98] sm:$0xf]
  %v481 = vld [vmem:[%s6 + $0x9c] sm:$0xff]
  %v482 = vld [vmem:[%s6 + $0xa4] sm:$0xf]
  %v483 = vld [vmem:[%s6 + $0xa8] sm:$0xff]
  %v484 = vld [vmem:[%s6 + $0xb0] sm:$0xf]
  %v485 = vld [vmem:[%s6 + $0xb4] sm:$0xff]
  %v486 = vld [vmem:[%s6 + $0xbc] sm:$0xf]
  %v487 = vld [vmem:[%s9] sm:$0x7]
  %v489 = vlaneseq
  %v490 = vshrl.u32 %v489, 7
  %v491 = vsub.s32 0, %v490
  %v492 = vrot.slane %v487, %v491
  %v493 = vlaneseq
  %v494 = vshrl.u32 %v493, 7
  %v495 = vsub.s32 1, %v494
  %v496 = vrot.slane %v487, %v495
  %v497 = vlaneseq
  %v498 = vshrl.u32 %v497, 7
  %v499 = vsub.s32 2, %v498
  %v500 = vrot.slane %v487, %v499
  %v511 = vunpack.c.l.b16 %v448
  %v512 = vunpack.c.l.b16 %v449
  %v513 = vunpack.c.l.b16 %v450
  %v514 = vunpack.c.l.b16 %v451
  %v515 = vunpack.c.l.b16 %v452
  %v516 = vunpack.c.l.b16 %v453
  %v517 = vunpack.c.l.b16 %v454
  %v518 = vpack.c.b16 %v512, %v511
  %v519 = vpack.c.b16 %v514, %v513
  %v520 = vpack.c.b16 %v516, %v515
  %v521 = vpack.c.b16 %v517, %v517
  %v558 = vunpack.c.l.b16 %v455
  %v559 = vunpack.c.h.b16 %v455
  %v560 = vunpack.c.l.b16 %v456
  %v561 = vunpack.c.l.b16 %v457
  %v562 = vunpack.c.h.b16 %v457
  %v563 = vunpack.c.l.b16 %v458
  %v564 = vunpack.c.l.b16 %v459
  %v565 = vunpack.c.h.b16 %v459
  %v566 = vunpack.c.l.b16 %v460
  %v567 = vunpack.c.l.b16 %v461
  %v568 = vunpack.c.h.b16 %v461
  %v569 = vunpack.c.l.b16 %v462
  %v570 = vunpack.c.l.b16 %v463
  %v571 = vunpack.c.h.b16 %v463
  %v572 = vunpack.c.l.b16 %v464
  %v573 = vunpack.c.l.b16 %v465
  %v574 = vunpack.c.h.b16 %v465
  %v575 = vunpack.c.l.b16 %v466
  %v576 = vunpack.c.l.b16 %v467
  %v577 = vunpack.c.h.b16 %v467
  %v578 = vunpack.c.l.b16 %v468
  %v579 = vunpack.c.l.b16 %v469
  %v580 = vunpack.c.h.b16 %v469
  %v581 = vunpack.c.l.b16 %v470
  %v582 = vunpack.c.l.b16 %v471
  %v583 = vunpack.c.h.b16 %v471
  %v584 = vunpack.c.l.b16 %v472
  %v585 = vunpack.c.l.b16 %v473
  %v586 = vunpack.c.h.b16 %v473
  %v587 = vunpack.c.l.b16 %v474
  %v588 = vunpack.c.l.b16 %v475
  %v589 = vunpack.c.h.b16 %v475
  %v590 = vunpack.c.l.b16 %v476
  %v591 = vunpack.c.l.b16 %v477
  %v592 = vunpack.c.h.b16 %v477
  %v593 = vunpack.c.l.b16 %v478
  %v594 = vunpack.c.l.b16 %v479
  %v595 = vunpack.c.h.b16 %v479
  %v596 = vunpack.c.l.b16 %v480
  %v597 = vunpack.c.l.b16 %v481
  %v598 = vunpack.c.h.b16 %v481
  %v599 = vunpack.c.l.b16 %v482
  %v600 = vunpack.c.l.b16 %v483
  %v601 = vunpack.c.h.b16 %v483
  %v602 = vunpack.c.l.b16 %v484
  %v603 = vunpack.c.l.b16 %v485
  %v604 = vunpack.c.h.b16 %v485
  %v605 = vunpack.c.l.b16 %v486
  %v606 = vpack.c.b16 %v561, %v558
  %v607 = vpack.c.b16 %v562, %v559
  %v608 = vpack.c.b16 %v563, %v560
  %v609 = vpack.c.b16 %v567, %v564
  %v610 = vpack.c.b16 %v568, %v565
  %v611 = vpack.c.b16 %v569, %v566
  %v612 = vpack.c.b16 %v573, %v570
  %v613 = vpack.c.b16 %v574, %v571
  %v614 = vpack.c.b16 %v575, %v572
  %v615 = vpack.c.b16 %v579, %v576
  %v616 = vpack.c.b16 %v580, %v577
  %v617 = vpack.c.b16 %v581, %v578
  %v618 = vpack.c.b16 %v585, %v582
  %v619 = vpack.c.b16 %v586, %v583
  %v620 = vpack.c.b16 %v587, %v584
  %v621 = vpack.c.b16 %v591, %v588
  %v622 = vpack.c.b16 %v592, %v589
  %v623 = vpack.c.b16 %v593, %v590
  %v624 = vpack.c.b16 %v597, %v594
  %v625 = vpack.c.b16 %v598, %v595
  %v626 = vpack.c.b16 %v599, %v596
  %v627 = vpack.c.b16 %v603, %v600
  %v628 = vpack.c.b16 %v604, %v601
  %v629 = vpack.c.b16 %v605, %v602
  %654 = vmatprep.subr.bf16.mxu0 %v607
  %655 = vmatpush1.bf16.msra.mxu0 %v606
  %656 = vmatprep.subr.bf16.mxu0 %v610
  %657 = vmatpush1.bf16.msra.mxu0 %v609
  %658 = vmatprep.subr.bf16.mxu0 %v613
  %659 = vmatpush1.bf16.msra.mxu0 %v612
  %660 = vmatprep.subr.bf16.mxu0 %v616
  %661 = vmatpush1.bf16.msra.mxu0 %v615
  %662 = vmatprep.subr.bf16.mxu0 %v619
  %663 = vmatpush1.bf16.msra.mxu0 %v618
  %664 = vmatprep.subr.bf16.mxu0 %v622
  %665 = vmatpush1.bf16.msra.mxu0 %v621
  %666 = vmatprep.subr.bf16.mxu0 %v625
  %667 = vmatpush1.bf16.msra.mxu0 %v624
  %668 = vmatprep.subr.bf16.mxu0 %v628
  %669 = vmatpush1.bf16.msra.mxu0 %v627
  %670 = vmatprep.subr.bf16.mxu0 0
  %671 = vmatpush1.bf16.msra.mxu0 0
  %672 = vmatprep.subr.bf16.mxu0 0
  %673 = vmatpush1.bf16.msra.mxu0 0
  %674 = vmatprep.subr.bf16.mxu0 0
  %675 = vmatpush1.bf16.msra.mxu0 0
  %676 = vmatprep.subr.bf16.mxu0 0
  %677 = vmatpush1.bf16.msra.mxu0 0
  %678 = vmatprep.subr.bf16.mxu0 0
  %679 = vmatpush1.bf16.msra.mxu0 0
  %680 = vmatprep.subr.bf16.mxu0 0
  %681 = vmatpush1.bf16.msra.mxu0 0
  %682 = vmatprep.subr.bf16.mxu0 0
  %683 = vmatpush1.bf16.msra.mxu0 0
  %684 = vmatprep.subr.bf16.mxu0 0
  %685 = vmatpush1.bf16.msra.mxu0 0
  %686 = vmatprep.mubr.bf16.mxu0 0
  %687 = vmatmul.mubr.bf16.gmra.mrb[0].mxu0 %v518
  %v688 = vpop.f32.mrb[0].mxu0
  %v689 = vadd.f32 %v492, %v688
  %v690 = vpop.f32.mrb[0].mxu0
  %v691 = vadd.f32 %v496, %v690
  %v692 = vpop.f32.mrb[0].mxu0
  %v693 = vadd.f32 %v492, %v692
  %v694 = vpop.f32.mrb[0].mxu0
  %v695 = vadd.f32 %v496, %v694
  %696 = vmatprep.mubr.bf16.mxu0 0
  %697 = vmatmul.mubr.bf16.gmra.mrb[0].mxu0 %v519
  %v698 = vpop.f32.mrb[0].mxu0
  %v699 = vadd.f32 %v492, %v698
  %v700 = vpop.f32.mrb[0].mxu0
  %v701 = vadd.f32 %v496, %v700
  %v702 = vpop.f32.mrb[0].mxu0
  %v703 = vadd.f32 %v492, %v702
  %v704 = vpop.f32.mrb[0].mxu0
  %v705 = vadd.f32 %v496, %v704
  %706 = vmatprep.mubr.bf16.mxu0 0
  %707 = vmatmul.mubr.bf16.gmra.mrb[0].mxu0 %v520
  %v708 = vpop.f32.mrb[0].mxu0
  %v709 = vadd.f32 %v492, %v708
  %v710 = vpop.f32.mrb[0].mxu0
  %v711 = vadd.f32 %v496, %v710
  %v712 = vpop.f32.mrb[0].mxu0
  %v713 = vadd.f32 %v492, %v712
  %v714 = vpop.f32.mrb[0].mxu0
  %v715 = vadd.f32 %v496, %v714
  %716 = vmatprep.mubr.bf16.mxu0 0
  %717 = vmatmul.mubr.bf16.gmra.mrb[0].mxu0 %v521
  %v718 = vpop.f32.mrb[0].mxu0
  %v719 = vadd.f32 %v492, %v718
  %v720 = vpop.f32.mrb[0].mxu0
  %v721 = vadd.f32 %v496, %v720
  %v722 = vpop.f32.mrb[0].mxu0
  %v723 = vpop.f32.mrb[0].mxu0
  %724 = vdwg.mxu0
  %725 = vmatprep.subr.bf16.mxu0 0
  %726 = vmatpush1.bf16.msra.mxu0 %v608
  %727 = vmatprep.subr.bf16.mxu0 0
  %728 = vmatpush1.bf16.msra.mxu0 %v611
  %729 = vmatprep.subr.bf16.mxu0 0
  %730 = vmatpush1.bf16.msra.mxu0 %v614
  %731 = vmatprep.subr.bf16.mxu0 0
  %732 = vmatpush1.bf16.msra.mxu0 %v617
  %733 = vmatprep.subr.bf16.mxu0 0
  %734 = vmatpush1.bf16.msra.mxu0 %v620
  %735 = vmatprep.subr.bf16.mxu0 0
  %736 = vmatpush1.bf16.msra.mxu0 %v623
  %737 = vmatprep.subr.bf16.mxu0 0
  %738 = vmatpush1.bf16.msra.mxu0 %v626
  %739 = vmatprep.subr.bf16.mxu0 0
  %740 = vmatpush1.bf16.msra.mxu0 %v629
  %741 = vmatprep.subr.bf16.mxu0 0
  %742 = vmatpush1.bf16.msra.mxu0 0
  %743 = vmatprep.subr.bf16.mxu0 0
  %744 = vmatpush1.bf16.msra.mxu0 0
  %745 = vmatprep.subr.bf16.mxu0 0
  %746 = vmatpush1.bf16.msra.mxu0 0
  %747 = vmatprep.subr.bf16.mxu0 0
  %748 = vmatpush1.bf16.msra.mxu0 0
  %749 = vmatprep.subr.bf16.mxu0 0
  %750 = vmatpush1.bf16.msra.mxu0 0
  %751 = vmatprep.subr.bf16.mxu0 0
  %752 = vmatpush1.bf16.msra.mxu0 0
  %753 = vmatprep.subr.bf16.mxu0 0
  %754 = vmatpush1.bf16.msra.mxu0 0
  %755 = vmatprep.subr.bf16.mxu0 0
  %756 = vmatpush1.bf16.msra.mxu0 0
  %757 = vmatprep.mubr.bf16.mxu0 0
  %758 = vmatmul.mubr.bf16.gmra.mrb[0].mxu0 %v518
  %v759 = vpop.f32.mrb[0].mxu0
  %v760 = vadd.f32 %v500, %v759
  %v761 = vpop.f32.mrb[0].mxu0
  %v762 = vpop.f32.mrb[0].mxu0
  %v763 = vadd.f32 %v500, %v762
  %v764 = vpop.f32.mrb[0].mxu0
  %765 = vmatprep.mubr.bf16.mxu0 0
  %766 = vmatmul.mubr.bf16.gmra.mrb[0].mxu0 %v519
  %v767 = vpop.f32.mrb[0].mxu0
  %v768 = vadd.f32 %v500, %v767
  %v769 = vpop.f32.mrb[0].mxu0
  %v770 = vpop.f32.mrb[0].mxu0
  %v771 = vadd.f32 %v500, %v770
  %v772 = vpop.f32.mrb[0].mxu0
  %773 = vmatprep.mubr.bf16.mxu0 0
  %774 = vmatmul.mubr.bf16.gmra.mrb[0].mxu0 %v520
  %v775 = vpop.f32.mrb[0].mxu0
  %v776 = vadd.f32 %v500, %v775
  %v777 = vpop.f32.mrb[0].mxu0
  %v778 = vpop.f32.mrb[0].mxu0
  %v779 = vadd.f32 %v500, %v778
  %v780 = vpop.f32.mrb[0].mxu0
  %781 = vmatprep.mubr.bf16.mxu0 0
  %782 = vmatmul.mubr.bf16.gmra.mrb[0].mxu0 %v521
  %v783 = vpop.f32.mrb[0].mxu0
  %v784 = vadd.f32 %v500, %v783
  %v785 = vpop.f32.mrb[0].mxu0
  %v786 = vpop.f32.mrb[0].mxu0
  %v787 = vpop.f32.mrb[0].mxu0
  %788 = vdwg.mxu0
  %789 = vst [vmem:[#allocation4] sm:$0xff] %v689
  %790 = vst [vmem:[#allocation4 + $0x8] sm:$0xff] %v691
  %791 = vst [vmem:[#allocation4 + $0x10] sm:$0xff] %v760
  %792 = vst [vmem:[#allocation4 + $0x18] sm:$0xff] %v693
  %793 = vst [vmem:[#allocation4 + $0x20] sm:$0xff] %v695
  %794 = vst [vmem:[#allocation4 + $0x28] sm:$0xff] %v763
  %795 = vst [vmem:[#allocation4 + $0x30] sm:$0xff] %v699
  %796 = vst [vmem:[#allocation4 + $0x38] sm:$0xff] %v701
  %797 = vst [vmem:[#allocation4 + $0x40] sm:$0xff] %v768
  %798 = vst [vmem:[#allocation4 + $0x48] sm:$0xff] %v703
  %799 = vst [vmem:[#allocation4 + $0x50] sm:$0xff] %v705
  %800 = vst [vmem:[#allocation4 + $0x58] sm:$0xff] %v771
  %801 = vst [vmem:[#allocation4 + $0x60] sm:$0xff] %v709
  %802 = vst [vmem:[#allocation4 + $0x68] sm:$0xff] %v711
  %803 = vst [vmem:[#allocation4 + $0x70] sm:$0xff] %v776
  %804 = vst [vmem:[#allocation4 + $0x78] sm:$0xff] %v713
  %805 = vst [vmem:[#allocation4 + $0x80] sm:$0xff] %v715
  %806 = vst [vmem:[#allocation4 + $0x88] sm:$0xff] %v779
  %807 = vst [vmem:[#allocation4 + $0x90] sm:$0xff] %v719
  %808 = vst [vmem:[#allocation4 + $0x98] sm:$0xff] %v721
  %809 = vst [vmem:[#allocation4 + $0xa0] sm:$0xff] %v784
  %v810 = vld [vmem:[%s5] sm:$0x7]
  %v812 = vlaneseq
  %v813 = vshrl.u32 %v812, 7
  %v814 = vsub.s32 0, %v813
  %v815 = vrot.slane %v810, %v814
  %v816 = vlaneseq
  %v817 = vshrl.u32 %v816, 7
  %v818 = vsub.s32 1, %v817
  %v819 = vrot.slane %v810, %v818
  %v820 = vlaneseq
  %v821 = vshrl.u32 %v820, 7
  %v822 = vsub.s32 2, %v821
  %v823 = vrot.slane %v810, %v822
  %v827 = vld [vmem:[%s10] sm:$0x7]
  %v829 = vlaneseq
  %v830 = vshrl.u32 %v829, 7
  %v831 = vsub.s32 0, %v830
  %v832 = vrot.slane %v827, %v831
  %v833 = vlaneseq
  %v834 = vshrl.u32 %v833, 7
  %v835 = vsub.s32 1, %v834
  %v836 = vrot.slane %v827, %v835
  %v837 = vlaneseq
  %v838 = vshrl.u32 %v837, 7
  %v839 = vsub.s32 2, %v838
  %v840 = vrot.slane %v827, %v839
  %v844 = vld [vmem:[%s12] sm:$0x1]
  %v846 = vlaneseq
  %v847 = vshrl.u32 %v846, 7
  %v848 = vsub.s32 0, %v847
  %v849 = vrot.slane %v844, %v848
  %s851 = smul.u32 0, 3
  %s852 = smul.addr %s851, 8
  %s853 = scalar_lea.vmem [#allocation2], %s852
  %v854 = vld [vmem:[%s853] sm:$0xff]
  %v855 = vld [vmem:[%s853 + $0x8] sm:$0xff]
  %v856 = vld [vmem:[%s853 + $0x10] sm:$0xff]
  %v857 = vld [vmem:[%s3] sm:$0xff]
  %v858 = vld [vmem:[%s3 + $0x8] sm:$0xf]
  %v859 = vld [vmem:[%s3 + $0xc] sm:$0xff]
  %v860 = vld [vmem:[%s3 + $0x14] sm:$0xf]
  %v861 = vld [vmem:[%s3 + $0x18] sm:$0xff]
  %v862 = vld [vmem:[%s3 + $0x20] sm:$0xf]
  %v863 = vld [vmem:[%s3 + $0x24] sm:$0xff]
  %v864 = vld [vmem:[%s3 + $0x2c] sm:$0xf]
  %v865 = vld [vmem:[%s3 + $0x30] sm:$0xff]
  %v866 = vld [vmem:[%s3 + $0x38] sm:$0xf]
  %v867 = vld [vmem:[%s3 + $0x3c] sm:$0xff]
  %v868 = vld [vmem:[%s3 + $0x44] sm:$0xf]
  %v869 = vld [vmem:[%s3 + $0x48] sm:$0xff]
  %v870 = vld [vmem:[%s3 + $0x50] sm:$0xf]
  %v871 = vld [vmem:[%s3 + $0x54] sm:$0xff]
  %v872 = vld [vmem:[%s3 + $0x5c] sm:$0xf]
  %v873 = vld [vmem:[%s3 + $0x60] sm:$0xff]
  %v874 = vld [vmem:[%s3 + $0x68] sm:$0xf]
  %v875 = vld [vmem:[%s3 + $0x6c] sm:$0xff]
  %v876 = vld [vmem:[%s3 + $0x74] sm:$0xf]
  %v877 = vld [vmem:[%s3 + $0x78] sm:$0xff]
  %v878 = vld [vmem:[%s3 + $0x80] sm:$0xf]
  %v879 = vld [vmem:[%s3 + $0x84] sm:$0xff]
  %v880 = vld [vmem:[%s3 + $0x8c] sm:$0xf]
  %v881 = vld [vmem:[%s3 + $0x90] sm:$0xff]
  %v882 = vld [vmem:[%s3 + $0x98] sm:$0xf]
  %v883 = vld [vmem:[%s3 + $0x9c] sm:$0xff]
  %v884 = vld [vmem:[%s3 + $0xa4] sm:$0xf]
  %v885 = vld [vmem:[%s3 + $0xa8] sm:$0xff]
  %v886 = vld [vmem:[%s3 + $0xb0] sm:$0xf]
  %v887 = vld [vmem:[%s3 + $0xb4] sm:$0xff]
  %v888 = vld [vmem:[%s3 + $0xbc] sm:$0xf]
  %v921 = vunpack.c.l.b16 %v857
  %v922 = vunpack.c.h.b16 %v857
  %v923 = vunpack.c.l.b16 %v858
  %v924 = vunpack.c.l.b16 %v859
  %v925 = vunpack.c.h.b16 %v859
  %v926 = vunpack.c.l.b16 %v860
  %v927 = vunpack.c.l.b16 %v861
  %v928 = vunpack.c.h.b16 %v861
  %v929 = vunpack.c.l.b16 %v862
  %v930 = vunpack.c.l.b16 %v863
  %v931 = vunpack.c.h.b16 %v863
  %v932 = vunpack.c.l.b16 %v864
  %v933 = vunpack.c.l.b16 %v865
  %v934 = vunpack.c.h.b16 %v865
  %v935 = vunpack.c.l.b16 %v866
  %v936 = vunpack.c.l.b16 %v867
  %v937 = vunpack.c.h.b16 %v867
  %v938 = vunpack.c.l.b16 %v868
  %v939 = vunpack.c.l.b16 %v869
  %v940 = vunpack.c.h.b16 %v869
  %v941 = vunpack.c.l.b16 %v870
  %v942 = vunpack.c.l.b16 %v871
  %v943 = vunpack.c.h.b16 %v871
  %v944 = vunpack.c.l.b16 %v872
  %v945 = vunpack.c.l.b16 %v873
  %v946 = vunpack.c.h.b16 %v873
  %v947 = vunpack.c.l.b16 %v874
  %v948 = vunpack.c.l.b16 %v875
  %v949 = vunpack.c.h.b16 %v875
  %v950 = vunpack.c.l.b16 %v876
  %v951 = vunpack.c.l.b16 %v877
  %v952 = vunpack.c.h.b16 %v877
  %v953 = vunpack.c.l.b16 %v878
  %v954 = vunpack.c.l.b16 %v879
  %v955 = vunpack.c.h.b16 %v879
  %v956 = vunpack.c.l.b16 %v880
  %v957 = vunpack.c.l.b16 %v881
  %v958 = vunpack.c.h.b16 %v881
  %v959 = vunpack.c.l.b16 %v882
  %v960 = vunpack.c.l.b16 %v883
  %v961 = vunpack.c.h.b16 %v883
  %v962 = vunpack.c.l.b16 %v884
  %v963 = vunpack.c.l.b16 %v885
  %v964 = vunpack.c.h.b16 %v885
  %v965 = vunpack.c.l.b16 %v886
  %v966 = vunpack.c.l.b16 %v887
  %v967 = vunpack.c.h.b16 %v887
  %v968 = vunpack.c.l.b16 %v888
  %v969 = vpack.c.b16 %v924, %v921
  %v970 = vpack.c.b16 %v925, %v922
  %v971 = vpack.c.b16 %v926, %v923
  %v972 = vpack.c.b16 %v930, %v927
  %v973 = vpack.c.b16 %v931, %v928
  %v974 = vpack.c.b16 %v932, %v929
  %v975 = vpack.c.b16 %v936, %v933
  %v976 = vpack.c.b16 %v937, %v934
  %v977 = vpack.c.b16 %v938, %v935
  %v978 = vpack.c.b16 %v942, %v939
  %v979 = vpack.c.b16 %v943, %v940
  %v980 = vpack.c.b16 %v944, %v941
  %v981 = vpack.c.b16 %v948, %v945
  %v982 = vpack.c.b16 %v949, %v946
  %v983 = vpack.c.b16 %v950, %v947
  %v984 = vpack.c.b16 %v954, %v951
  %v985 = vpack.c.b16 %v955, %v952
  %v986 = vpack.c.b16 %v956, %v953
  %v987 = vpack.c.b16 %v960, %v957
  %v988 = vpack.c.b16 %v961, %v958
  %v989 = vpack.c.b16 %v962, %v959
  %v990 = vpack.c.b16 %v966, %v963
  %v991 = vpack.c.b16 %v967, %v964
  %v992 = vpack.c.b16 %v968, %v965
  %1017 = vmatprep.subr.bf16.mxu0 %v970
  %1018 = vmatpush1.bf16.msra.mxu0 %v969
  %1019 = vmatprep.subr.bf16.mxu0 %v973
  %1020 = vmatpush1.bf16.msra.mxu0 %v972
  %1021 = vmatprep.subr.bf16.mxu0 %v976
  %1022 = vmatpush1.bf16.msra.mxu0 %v975
  %1023 = vmatprep.subr.bf16.mxu0 %v979
  %1024 = vmatpush1.bf16.msra.mxu0 %v978
  %1025 = vmatprep.subr.bf16.mxu0 %v982
  %1026 = vmatpush1.bf16.msra.mxu0 %v981
  %1027 = vmatprep.subr.bf16.mxu0 %v985
  %1028 = vmatpush1.bf16.msra.mxu0 %v984
  %1029 = vmatprep.subr.bf16.mxu0 %v988
  %1030 = vmatpush1.bf16.msra.mxu0 %v987
  %1031 = vmatprep.subr.bf16.mxu0 %v991
  %1032 = vmatpush1.bf16.msra.mxu0 %v990
  %1033 = vmatprep.subr.bf16.mxu0 0
  %1034 = vmatpush1.bf16.msra.mxu0 0
  %1035 = vmatprep.subr.bf16.mxu0 0
  %1036 = vmatpush1.bf16.msra.mxu0 0
  %1037 = vmatprep.subr.bf16.mxu0 0
  %1038 = vmatpush1.bf16.msra.mxu0 0
  %1039 = vmatprep.subr.bf16.mxu0 0
  %1040 = vmatpush1.bf16.msra.mxu0 0
  %1041 = vmatprep.subr.bf16.mxu0 0
  %1042 = vmatpush1.bf16.msra.mxu0 0
  %1043 = vmatprep.subr.bf16.mxu0 0
  %1044 = vmatpush1.bf16.msra.mxu0 0
  %1045 = vmatprep.subr.bf16.mxu0 0
  %1046 = vmatpush1.bf16.msra.mxu0 0
  %1047 = vmatprep.subr.bf16.mxu0 0
  %1048 = vmatpush1.bf16.msra.mxu0 0
  %1049 = vmatprep.mubr.bf16.mxu0 0
  %1050 = vmatmul.mubr.bf16.gmra.mrb[0].mxu0 0
  %v1051 = vpop.f32.mrb[0].mxu0
  %v1052 = vadd.f32 %v815, %v1051
  %v1053 = vpop.f32.mrb[0].mxu0
  %v1054 = vadd.f32 %v819, %v1053
  %v1055 = vpop.f32.mrb[0].mxu0
  %v1056 = vpop.f32.mrb[0].mxu0
  %1057 = vdwg.mxu0
  %1058 = vmatprep.subr.bf16.mxu0 0
  %1059 = vmatpush1.bf16.msra.mxu0 %v971
  %1060 = vmatprep.subr.bf16.mxu0 0
  %1061 = vmatpush1.bf16.msra.mxu0 %v974
  %1062 = vmatprep.subr.bf16.mxu0 0
  %1063 = vmatpush1.bf16.msra.mxu0 %v977
  %1064 = vmatprep.subr.bf16.mxu0 0
  %1065 = vmatpush1.bf16.msra.mxu0 %v980
  %1066 = vmatprep.subr.bf16.mxu0 0
  %1067 = vmatpush1.bf16.msra.mxu0 %v983
  %1068 = vmatprep.subr.bf16.mxu0 0
  %1069 = vmatpush1.bf16.msra.mxu0 %v986
  %1070 = vmatprep.subr.bf16.mxu0 0
  %1071 = vmatpush1.bf16.msra.mxu0 %v989
  %1072 = vmatprep.subr.bf16.mxu0 0
  %1073 = vmatpush1.bf16.msra.mxu0 %v992
  %1074 = vmatprep.subr.bf16.mxu0 0
  %1075 = vmatpush1.bf16.msra.mxu0 0
  %1076 = vmatprep.subr.bf16.mxu0 0
  %1077 = vmatpush1.bf16.msra.mxu0 0
  %1078 = vmatprep.subr.bf16.mxu0 0
  %1079 = vmatpush1.bf16.msra.mxu0 0
  %1080 = vmatprep.subr.bf16.mxu0 0
  %1081 = vmatpush1.bf16.msra.mxu0 0
  %1082 = vmatprep.subr.bf16.mxu0 0
  %1083 = vmatpush1.bf16.msra.mxu0 0
  %1084 = vmatprep.subr.bf16.mxu0 0
  %1085 = vmatpush1.bf16.msra.mxu0 0
  %1086 = vmatprep.subr.bf16.mxu0 0
  %1087 = vmatpush1.bf16.msra.mxu0 0
  %1088 = vmatprep.subr.bf16.mxu0 0
  %1089 = vmatpush1.bf16.msra.mxu0 0
  %1090 = vmatprep.mubr.bf16.mxu0 0
  %1091 = vmatmul.mubr.bf16.gmra.mrb[0].mxu0 0
  %v1092 = vpop.f32.mrb[0].mxu0
  %v1093 = vadd.f32 %v823, %v1092
  %v1094 = vpop.f32.mrb[0].mxu0
  %v1095 = vpop.f32.mrb[0].mxu0
  %v1096 = vpop.f32.mrb[0].mxu0
  %1097 = vdwg.mxu0
  %v1098 = vadd.f32 %v854, %v1052
  %v1099 = vxor.u32 %v1098, 2147483648
  %v1100 = vmul.f32 %v1099, 1.442695
  %v1101 = vpow.pop %v1100
  %v1102 = vadd.f32 %v1101, 1.0
  %v1103 = vrcp.pop %v1102
  %v1104 = vmul.f32 1.0, %v1103
  %v1105 = vadd.f32 %v855, %v1054
  %v1106 = vxor.u32 %v1105, 2147483648
  %v1107 = vmul.f32 %v1106, 1.442695
  %v1108 = vpow.pop %v1107
  %v1109 = vadd.f32 %v1108, 1.0
  %v1110 = vrcp.pop %v1109
  %v1111 = vmul.f32 1.0, %v1110
  %v1112 = vmul.f32 %v1104, %v1093
  %v1113 = vadd.f32 %v856, %v1112
  %v1114 = vtanh.pop %v1113
  %v1115 = vsub.f32 1.0, %v1111
  %v1116 = vmul.f32 %v1115, %v1114
  %v1117 = vmul.f32 %v1111, 0.0
  %v1118 = vadd.f32 %v1116, %v1117
  %1119 = vst [vmem:[#allocation3] sm:$0xff] %v1118
  %s1120 = smul.u32 1, 3
  %s1121 = smul.addr %s1120, 8
  %s1122 = scalar_lea.vmem [#allocation2], %s1121
  %v1123 = vld [vmem:[%s1122] sm:$0xff]
  %v1124 = vld [vmem:[%s1122 + $0x8] sm:$0xff]
  %v1125 = vld [vmem:[%s1122 + $0x10] sm:$0xff]
  %v1126 = vpack.c.bf16 %v1118, %v1118
  %v1127 = vld [vmem:[%s3] sm:$0xff]
  %v1128 = vld [vmem:[%s3 + $0x8] sm:$0xf]
  %v1129 = vld [vmem:[%s3 + $0xc] sm:$0xff]
  %v1130 = vld [vmem:[%s3 + $0x14] sm:$0xf]
  %v1131 = vld [vmem:[%s3 + $0x18] sm:$0xff]
  %v1132 = vld [vmem:[%s3 + $0x20] sm:$0xf]
  %v1133 = vld [vmem:[%s3 + $0x24] sm:$0xff]
  %v1134 = vld [vmem:[%s3 + $0x2c] sm:$0xf]
  %v1135 = vld [vmem:[%s3 + $0x30] sm:$0xff]
  %v1136 = vld [vmem:[%s3 + $0x38] sm:$0xf]
  %v1137 = vld [vmem:[%s3 + $0x3c] sm:$0xff]
  %v1138 = vld [vmem:[%s3 + $0x44] sm:$0xf]
  %v1139 = vld [vmem:[%s3 + $0x48] sm:$0xff]
  %v1140 = vld [vmem:[%s3 + $0x50] sm:$0xf]
  %v1141 = vld [vmem:[%s3 + $0x54] sm:$0xff]
  %v1142 = vld [vmem:[%s3 + $0x5c] sm:$0xf]
  %v1143 = vld [vmem:[%s3 + $0x60] sm:$0xff]
  %v1144 = vld [vmem:[%s3 + $0x68] sm:$0xf]
  %v1145 = vld [vmem:[%s3 + $0x6c] sm:$0xff]
  %v1146 = vld [vmem:[%s3 + $0x74] sm:$0xf]
  %v1147 = vld [vmem:[%s3 + $0x78] sm:$0xff]
  %v1148 = vld [vmem:[%s3 + $0x80] sm:$0xf]
  %v1149 = vld [vmem:[%s3 + $0x84] sm:$0xff]
  %v1150 = vld [vmem:[%s3 + $0x8c] sm:$0xf]
  %v1151 = vld [vmem:[%s3 + $0x90] sm:$0xff]
  %v1152 = vld [vmem:[%s3 + $0x98] sm:$0xf]
  %v1153 = vld [vmem:[%s3 + $0x9c] sm:$0xff]
  %v1154 = vld [vmem:[%s3 + $0xa4] sm:$0xf]
  %v1155 = vld [vmem:[%s3 + $0xa8] sm:$0xff]
  %v1156 = vld [vmem:[%s3 + $0xb0] sm:$0xf]
  %v1157 = vld [vmem:[%s3 + $0xb4] sm:$0xff]
  %v1158 = vld [vmem:[%s3 + $0xbc] sm:$0xf]
  %v1191 = vunpack.c.l.b16 %v1127
  %v1192 = vunpack.c.h.b16 %v1127
  %v1193 = vunpack.c.l.b16 %v1128
  %v1194 = vunpack.c.l.b16 %v1129
  %v1195 = vunpack.c.h.b16 %v1129
  %v1196 = vunpack.c.l.b16 %v1130
  %v1197 = vunpack.c.l.b16 %v1131
  %v1198 = vunpack.c.h.b16 %v1131
  %v1199 = vunpack.c.l.b16 %v1132
  %v1200 = vunpack.c.l.b16 %v1133
  %v1201 = vunpack.c.h.b16 %v1133
  %v1202 = vunpack.c.l.b16 %v1134
  %v1203 = vunpack.c.l.b16 %v1135
  %v1204 = vunpack.c.h.b16 %v1135
  %v1205 = vunpack.c.l.b16 %v1136
  %v1206 = vunpack.c.l.b16 %v1137
  %v1207 = vunpack.c.h.b16 %v1137
  %v1208 = vunpack.c.l.b16 %v1138
  %v1209 = vunpack.c.l.b16 %v1139
  %v1210 = vunpack.c.h.b16 %v1139
  %v1211 = vunpack.c.l.b16 %v1140
  %v1212 = vunpack.c.l.b16 %v1141
  %v1213 = vunpack.c.h.b16 %v1141
  %v1214 = vunpack.c.l.b16 %v1142
  %v1215 = vunpack.c.l.b16 %v1143
  %v1216 = vunpack.c.h.b16 %v1143
  %v1217 = vunpack.c.l.b16 %v1144
  %v1218 = vunpack.c.l.b16 %v1145
  %v1219 = vunpack.c.h.b16 %v1145
  %v1220 = vunpack.c.l.b16 %v1146
  %v1221 = vunpack.c.l.b16 %v1147
  %v1222 = vunpack.c.h.b16 %v1147
  %v1223 = vunpack.c.l.b16 %v1148
  %v1224 = vunpack.c.l.b16 %v1149
  %v1225 = vunpack.c.h.b16 %v1149
  %v1226 = vunpack.c.l.b16 %v1150
  %v1227 = vunpack.c.l.b16 %v1151
  %v1228 = vunpack.c.h.b16 %v1151
  %v1229 = vunpack.c.l.b16 %v1152
  %v1230 = vunpack.c.l.b16 %v1153
  %v1231 = vunpack.c.h.b16 %v1153
  %v1232 = vunpack.c.l.b16 %v1154
  %v1233 = vunpack.c.l.b16 %v1155
  %v1234 = vunpack.c.h.b16 %v1155
  %v1235 = vunpack.c.l.b16 %v1156
  %v1236 = vunpack.c.l.b16 %v1157
  %v1237 = vunpack.c.h.b16 %v1157
  %v1238 = vunpack.c.l.b16 %v1158
  %v1239 = vpack.c.b16 %v1194, %v1191
  %v1240 = vpack.c.b16 %v1195, %v1192
  %v1241 = vpack.c.b16 %v1196, %v1193
  %v1242 = vpack.c.b16 %v1200, %v1197
  %v1243 = vpack.c.b16 %v1201, %v1198
  %v1244 = vpack.c.b16 %v1202, %v1199
  %v1245 = vpack.c.b16 %v1206, %v1203
  %v1246 = vpack.c.b16 %v1207, %v1204
  %v1247 = vpack.c.b16 %v1208, %v1205
  %v1248 = vpack.c.b16 %v1212, %v1209
  %v1249 = vpack.c.b16 %v1213, %v1210
  %v1250 = vpack.c.b16 %v1214, %v1211
  %v1251 = vpack.c.b16 %v1218, %v1215
  %v1252 = vpack.c.b16 %v1219, %v1216
  %v1253 = vpack.c.b16 %v1220, %v1217
  %v1254 = vpack.c.b16 %v1224, %v1221
  %v1255 = vpack.c.b16 %v1225, %v1222
  %v1256 = vpack.c.b16 %v1226, %v1223
  %v1257 = vpack.c.b16 %v1230, %v1227
  %v1258 = vpack.c.b16 %v1231, %v1228
  %v1259 = vpack.c.b16 %v1232, %v1229
  %v1260 = vpack.c.b16 %v1236, %v1233
  %v1261 = vpack.c.b16 %v1237, %v1234
  %v1262 = vpack.c.b16 %v1238, %v1235
  %1287 = vmatprep.subr.bf16.mxu0 %v1240
  %1288 = vmatpush1.bf16.msra.mxu0 %v1239
  %1289 = vmatprep.subr.bf16.mxu0 %v1243
  %1290 = vmatpush1.bf16.msra.mxu0 %v1242
  %1291 = vmatprep.subr.bf16.mxu0 %v1246
  %1292 = vmatpush1.bf16.msra.mxu0 %v1245
  %1293 = vmatprep.subr.bf16.mxu0 %v1249
  %1294 = vmatpush1.bf16.msra.mxu0 %v1248
  %1295 = vmatprep.subr.bf16.mxu0 %v1252
  %1296 = vmatpush1.bf16.msra.mxu0 %v1251
  %1297 = vmatprep.subr.bf16.mxu0 %v1255
  %1298 = vmatpush1.bf16.msra.mxu0 %v1254
  %1299 = vmatprep.subr.bf16.mxu0 %v1258
  %1300 = vmatpush1.bf16.msra.mxu0 %v1257
  %1301 = vmatprep.subr.bf16.mxu0 %v1261
  %1302 = vmatpush1.bf16.msra.mxu0 %v1260
  %1303 = vmatprep.subr.bf16.mxu0 0
  %1304 = vmatpush1.bf16.msra.mxu0 0
  %1305 = vmatprep.subr.bf16.mxu0 0
  %1306 = vmatpush1.bf16.msra.mxu0 0
  %1307 = vmatprep.subr.bf16.mxu0 0
  %1308 = vmatpush1.bf16.msra.mxu0 0
  %1309 = vmatprep.subr.bf16.mxu0 0
  %1310 = vmatpush1.bf16.msra.mxu0 0
  %1311 = vmatprep.subr.bf16.mxu0 0
  %1312 = vmatpush1.bf16.msra.mxu0 0
  %1313 = vmatprep.subr.bf16.mxu0 0
  %1314 = vmatpush1.bf16.msra.mxu0 0
  %1315 = vmatprep.subr.bf16.mxu0 0
  %1316 = vmatpush1.bf16.msra.mxu0 0
  %1317 = vmatprep.subr.bf16.mxu0 0
  %1318 = vmatpush1.bf16.msra.mxu0 0
  %1319 = vmatprep.mubr.bf16.mxu0 0
  %1320 = vmatmul.mubr.bf16.gmra.mrb[0].mxu0 %v1126
  %v1321 = vpop.f32.mrb[0].mxu0
  %v1322 = vadd.f32 %v815, %v1321
  %v1323 = vpop.f32.mrb[0].mxu0
  %v1324 = vadd.f32 %v819, %v1323
  %v1325 = vpop.f32.mrb[0].mxu0
  %v1326 = vpop.f32.mrb[0].mxu0
  %1327 = vdwg.mxu0
  %1328 = vmatprep.subr.bf16.mxu0 0
  %1329 = vmatpush1.bf16.msra.mxu0 %v1241
  %1330 = vmatprep.subr.bf16.mxu0 0
  %1331 = vmatpush1.bf16.msra.mxu0 %v1244
  %1332 = vmatprep.subr.bf16.mxu0 0
  %1333 = vmatpush1.bf16.msra.mxu0 %v1247
  %1334 = vmatprep.subr.bf16.mxu0 0
  %1335 = vmatpush1.bf16.msra.mxu0 %v1250
  %1336 = vmatprep.subr.bf16.mxu0 0
  %1337 = vmatpush1.bf16.msra.mxu0 %v1253
  %1338 = vmatprep.subr.bf16.mxu0 0
  %1339 = vmatpush1.bf16.msra.mxu0 %v1256
  %1340 = vmatprep.subr.bf16.mxu0 0
  %1341 = vmatpush1.bf16.msra.mxu0 %v1259
  %1342 = vmatprep.subr.bf16.mxu0 0
  %1343 = vmatpush1.bf16.msra.mxu0 %v1262
  %1344 = vmatprep.subr.bf16.mxu0 0
  %1345 = vmatpush1.bf16.msra.mxu0 0
  %1346 = vmatprep.subr.bf16.mxu0 0
  %1347 = vmatpush1.bf16.msra.mxu0 0
  %1348 = vmatprep.subr.bf16.mxu0 0
  %1349 = vmatpush1.bf16.msra.mxu0 0
  %1350 = vmatprep.subr.bf16.mxu0 0
  %1351 = vmatpush1.bf16.msra.mxu0 0
  %1352 = vmatprep.subr.bf16.mxu0 0
  %1353 = vmatpush1.bf16.msra.mxu0 0
  %1354 = vmatprep.subr.bf16.mxu0 0
  %1355 = vmatpush1.bf16.msra.mxu0 0
  %1356 = vmatprep.subr.bf16.mxu0 0
  %1357 = vmatpush1.bf16.msra.mxu0 0
  %1358 = vmatprep.subr.bf16.mxu0 0
  %1359 = vmatpush1.bf16.msra.mxu0 0
  %1360 = vmatprep.mubr.bf16.mxu0 0
  %1361 = vmatmul.mubr.bf16.gmra.mrb[0].mxu0 %v1126
  %v1362 = vpop.f32.mrb[0].mxu0
  %v1363 = vadd.f32 %v823, %v1362
  %v1364 = vpop.f32.mrb[0].mxu0
  %v1365 = vpop.f32.mrb[0].mxu0
  %v1366 = vpop.f32.mrb[0].mxu0
  %1367 = vdwg.mxu0
  %v1368 = vadd.f32 %v1123, %v1322
  %v1369 = vxor.u32 %v1368, 2147483648
  %v1370 = vmul.f32 %v1369, 1.442695
  %v1371 = vpow.pop %v1370
  %v1372 = vadd.f32 %v1371, 1.0
  %v1373 = vrcp.pop %v1372
  %v1374 = vmul.f32 1.0, %v1373
  %v1375 = vadd.f32 %v1124, %v1324
  %v1376 = vxor.u32 %v1375, 2147483648
  %v1377 = vmul.f32 %v1376, 1.442695
  %v1378 = vpow.pop %v1377
  %v1379 = vadd.f32 %v1378, 1.0
  %v1380 = vrcp.pop %v1379
  %v1381 = vmul.f32 1.0, %v1380
  %v1382 = vmul.f32 %v1374, %v1363
  %v1383 = vadd.f32 %v1125, %v1382
  %v1384 = vtanh.pop %v1383
  %v1385 = vsub.f32 1.0, %v1381
  %v1386 = vmul.f32 %v1385, %v1384
  %v1387 = vmul.f32 %v1381, %v1118
  %v1388 = vadd.f32 %v1386, %v1387
  %s1389 = scalar_lea.vmem [#allocation3], 8
  %1390 = vst [vmem:[%s1389] sm:$0xff] %v1388
  %s1391 = smul.u32 2, 3
  %s1392 = smul.addr %s1391, 8
  %s1393 = scalar_lea.vmem [#allocation2], %s1392
  %v1394 = vld [vmem:[%s1393] sm:$0xff]
  %v1395 = vld [vmem:[%s1393 + $0x8] sm:$0xff]
  %v1396 = vld [vmem:[%s1393 + $0x10] sm:$0xff]
  %v1397 = vpack.c.bf16 %v1388, %v1388
  %v1398 = vld [vmem:[%s3] sm:$0xff]
  %v1399 = vld [vmem:[%s3 + $0x8] sm:$0xf]
  %v1400 = vld [vmem:[%s3 + $0xc] sm:$0xff]
  %v1401 = vld [vmem:[%s3 + $0x14] sm:$0xf]
  %v1402 = vld [vmem:[%s3 + $0x18] sm:$0xff]
  %v1403 = vld [vmem:[%s3 + $0x20] sm:$0xf]
  %v1404 = vld [vmem:[%s3 + $0x24] sm:$0xff]
  %v1405 = vld [vmem:[%s3 + $0x2c] sm:$0xf]
  %v1406 = vld [vmem:[%s3 + $0x30] sm:$0xff]
  %v1407 = vld [vmem:[%s3 + $0x38] sm:$0xf]
  %v1408 = vld [vmem:[%s3 + $0x3c] sm:$0xff]
  %v1409 = vld [vmem:[%s3 + $0x44] sm:$0xf]
  %v1410 = vld [vmem:[%s3 + $0x48] sm:$0xff]
  %v1411 = vld [vmem:[%s3 + $0x50] sm:$0xf]
  %v1412 = vld [vmem:[%s3 + $0x54] sm:$0xff]
  %v1413 = vld [vmem:[%s3 + $0x5c] sm:$0xf]
  %v1414 = vld [vmem:[%s3 + $0x60] sm:$0xff]
  %v1415 = vld [vmem:[%s3 + $0x68] sm:$0xf]
  %v1416 = vld [vmem:[%s3 + $0x6c] sm:$0xff]
  %v1417 = vld [vmem:[%s3 + $0x74] sm:$0xf]
  %v1418 = vld [vmem:[%s3 + $0x78] sm:$0xff]
  %v1419 = vld [vmem:[%s3 + $0x80] sm:$0xf]
  %v1420 = vld [vmem:[%s3 + $0x84] sm:$0xff]
  %v1421 = vld [vmem:[%s3 + $0x8c] sm:$0xf]
  %v1422 = vld [vmem:[%s3 + $0x90] sm:$0xff]
  %v1423 = vld [vmem:[%s3 + $0x98] sm:$0xf]
  %v1424 = vld [vmem:[%s3 + $0x9c] sm:$0xff]
  %v1425 = vld [vmem:[%s3 + $0xa4] sm:$0xf]
  %v1426 = vld [vmem:[%s3 + $0xa8] sm:$0xff]
  %v1427 = vld [vmem:[%s3 + $0xb0] sm:$0xf]
  %v1428 = vld [vmem:[%s3 + $0xb4] sm:$0xff]
  %v1429 = vld [vmem:[%s3 + $0xbc] sm:$0xf]
  %v1462 = vunpack.c.l.b16 %v1398
  %v1463 = vunpack.c.h.b16 %v1398
  %v1464 = vunpack.c.l.b16 %v1399
  %v1465 = vunpack.c.l.b16 %v1400
  %v1466 = vunpack.c.h.b16 %v1400
  %v1467 = vunpack.c.l.b16 %v1401
  %v1468 = vunpack.c.l.b16 %v1402
  %v1469 = vunpack.c.h.b16 %v1402
  %v1470 = vunpack.c.l.b16 %v1403
  %v1471 = vunpack.c.l.b16 %v1404
  %v1472 = vunpack.c.h.b16 %v1404
  %v1473 = vunpack.c.l.b16 %v1405
  %v1474 = vunpack.c.l.b16 %v1406
  %v1475 = vunpack.c.h.b16 %v1406
  %v1476 = vunpack.c.l.b16 %v1407
  %v1477 = vunpack.c.l.b16 %v1408
  %v1478 = vunpack.c.h.b16 %v1408
  %v1479 = vunpack.c.l.b16 %v1409
  %v1480 = vunpack.c.l.b16 %v1410
  %v1481 = vunpack.c.h.b16 %v1410
  %v1482 = vunpack.c.l.b16 %v1411
  %v1483 = vunpack.c.l.b16 %v1412
  %v1484 = vunpack.c.h.b16 %v1412
  %v1485 = vunpack.c.l.b16 %v1413
  %v1486 = vunpack.c.l.b16 %v1414
  %v1487 = vunpack.c.h.b16 %v1414
  %v1488 = vunpack.c.l.b16 %v1415
  %v1489 = vunpack.c.l.b16 %v1416
  %v1490 = vunpack.c.h.b16 %v1416
  %v1491 = vunpack.c.l.b16 %v1417
  %v1492 = vunpack.c.l.b16 %v1418
  %v1493 = vunpack.c.h.b16 %v1418
  %v1494 = vunpack.c.l.b16 %v1419
  %v1495 = vunpack.c.l.b16 %v1420
  %v1496 = vunpack.c.h.b16 %v1420
  %v1497 = vunpack.c.l.b16 %v1421
  %v1498 = vunpack.c.l.b16 %v1422
  %v1499 = vunpack.c.h.b16 %v1422
  %v1500 = vunpack.c.l.b16 %v1423
  %v1501 = vunpack.c.l.b16 %v1424
  %v1502 = vunpack.c.h.b16 %v1424
  %v1503 = vunpack.c.l.b16 %v1425
  %v1504 = vunpack.c.l.b16 %v1426
  %v1505 = vunpack.c.h.b16 %v1426
  %v1506 = vunpack.c.l.b16 %v1427
  %v1507 = vunpack.c.l.b16 %v1428
  %v1508 = vunpack.c.h.b16 %v1428
  %v1509 = vunpack.c.l.b16 %v1429
  %v1510 = vpack.c.b16 %v1465, %v1462
  %v1511 = vpack.c.b16 %v1466, %v1463
  %v1512 = vpack.c.b16 %v1467, %v1464
  %v1513 = vpack.c.b16 %v1471, %v1468
  %v1514 = vpack.c.b16 %v1472, %v1469
  %v1515 = vpack.c.b16 %v1473, %v1470
  %v1516 = vpack.c.b16 %v1477, %v1474
  %v1517 = vpack.c.b16 %v1478, %v1475
  %v1518 = vpack.c.b16 %v1479, %v1476
  %v1519 = vpack.c.b16 %v1483, %v1480
  %v1520 = vpack.c.b16 %v1484, %v1481
  %v1521 = vpack.c.b16 %v1485, %v1482
  %v1522 = vpack.c.b16 %v1489, %v1486
  %v1523 = vpack.c.b16 %v1490, %v1487
  %v1524 = vpack.c.b16 %v1491, %v1488
  %v1525 = vpack.c.b16 %v1495, %v1492
  %v1526 = vpack.c.b16 %v1496, %v1493
  %v1527 = vpack.c.b16 %v1497, %v1494
  %v1528 = vpack.c.b16 %v1501, %v1498
  %v1529 = vpack.c.b16 %v1502, %v1499
  %v1530 = vpack.c.b16 %v1503, %v1500
  %v1531 = vpack.c.b16 %v1507, %v1504
  %v1532 = vpack.c.b16 %v1508, %v1505
  %v1533 = vpack.c.b16 %v1509, %v1506
  %1558 = vmatprep.subr.bf16.mxu0 %v1511
  %1559 = vmatpush1.bf16.msra.mxu0 %v1510
  %1560 = vmatprep.subr.bf16.mxu0 %v1514
  %1561 = vmatpush1.bf16.msra.mxu0 %v1513
  %1562 = vmatprep.subr.bf16.mxu0 %v1517
  %1563 = vmatpush1.bf16.msra.mxu0 %v1516
  %1564 = vmatprep.subr.bf16.mxu0 %v1520
  %1565 = vmatpush1.bf16.msra.mxu0 %v1519
  %1566 = vmatprep.subr.bf16.mxu0 %v1523
  %1567 = vmatpush1.bf16.msra.mxu0 %v1522
  %1568 = vmatprep.subr.bf16.mxu0 %v1526
  %1569 = vmatpush1.bf16.msra.mxu0 %v1525
  %1570 = vmatprep.subr.bf16.mxu0 %v1529
  %1571 = vmatpush1.bf16.msra.mxu0 %v1528
  %1572 = vmatprep.subr.bf16.mxu0 %v1532
  %1573 = vmatpush1.bf16.msra.mxu0 %v1531
  %1574 = vmatprep.subr.bf16.mxu0 0
  %1575 = vmatpush1.bf16.msra.mxu0 0
  %1576 = vmatprep.subr.bf16.mxu0 0
  %1577 = vmatpush1.bf16.msra.mxu0 0
  %1578 = vmatprep.subr.bf16.mxu0 0
  %1579 = vmatpush1.bf16.msra.mxu0 0
  %1580 = vmatprep.subr.bf16.mxu0 0
  %1581 = vmatpush1.bf16.msra.mxu0 0
  %1582 = vmatprep.subr.bf16.mxu0 0
  %1583 = vmatpush1.bf16.msra.mxu0 0
  %1584 = vmatprep.subr.bf16.mxu0 0
  %1585 = vmatpush1.bf16.msra.mxu0 0
  %1586 = vmatprep.subr.bf16.mxu0 0
  %1587 = vmatpush1.bf16.msra.mxu0 0
  %1588 = vmatprep.subr.bf16.mxu0 0
  %1589 = vmatpush1.bf16.msra.mxu0 0
  %1590 = vmatprep.mubr.bf16.mxu0 0
  %1591 = vmatmul.mubr.bf16.gmra.mrb[0].mxu0 %v1397
  %v1592 = vpop.f32.mrb[0].mxu0
  %v1593 = vadd.f32 %v815, %v1592
  %v1594 = vpop.f32.mrb[0].mxu0
  %v1595 = vadd.f32 %v819, %v1594
  %v1596 = vpop.f32.mrb[0].mxu0
  %v1597 = vpop.f32.mrb[0].mxu0
  %1598 = vdwg.mxu0
  %1599 = vmatprep.subr.bf16.mxu0 0
  %1600 = vmatpush1.bf16.msra.mxu0 %v1512
  %1601 = vmatprep.subr.bf16.mxu0 0
  %1602 = vmatpush1.bf16.msra.mxu0 %v1515
  %1603 = vmatprep.subr.bf16.mxu0 0
  %1604 = vmatpush1.bf16.msra.mxu0 %v1518
  %1605 = vmatprep.subr.bf16.mxu0 0
  %1606 = vmatpush1.bf16.msra.mxu0 %v1521
  %1607 = vmatprep.subr.bf16.mxu0 0
  %1608 = vmatpush1.bf16.msra.mxu0 %v1524
  %1609 = vmatprep.subr.bf16.mxu0 0
  %1610 = vmatpush1.bf16.msra.mxu0 %v1527
  %1611 = vmatprep.subr.bf16.mxu0 0
  %1612 = vmatpush1.bf16.msra.mxu0 %v1530
  %1613 = vmatprep.subr.bf16.mxu0 0
  %1614 = vmatpush1.bf16.msra.mxu0 %v1533
  %1615 = vmatprep.subr.bf16.mxu0 0
  %1616 = vmatpush1.bf16.msra.mxu0 0
  %1617 = vmatprep.subr.bf16.mxu0 0
  %1618 = vmatpush1.bf16.msra.mxu0 0
  %1619 = vmatprep.subr.bf16.mxu0 0
  %1620 = vmatpush1.bf16.msra.mxu0 0
  %1621 = vmatprep.subr.bf16.mxu0 0
  %1622 = vmatpush1.bf16.msra.mxu0 0
  %1623 = vmatprep.subr.bf16.mxu0 0
  %1624 = vmatpush1.bf16.msra.mxu0 0
  %1625 = vmatprep.subr.bf16.mxu0 0
  %1626 = vmatpush1.bf16.msra.mxu0 0
  %1627 = vmatprep.subr.bf16.mxu0 0
  %1628 = vmatpush1.bf16.msra.mxu0 0
  %1629 = vmatprep.subr.bf16.mxu0 0
  %1630 = vmatpush1.bf16.msra.mxu0 0
  %1631 = vmatprep.mubr.bf16.mxu0 0
  %1632 = vmatmul.mubr.bf16.gmra.mrb[0].mxu0 %v1397
  %v1633 = vpop.f32.mrb[0].mxu0
  %v1634 = vadd.f32 %v823, %v1633
  %v1635 = vpop.f32.mrb[0].mxu0
  %v1636 = vpop.f32.mrb[0].mxu0
  %v1637 = vpop.f32.mrb[0].mxu0
  %1638 = vdwg.mxu0
  %v1639 = vadd.f32 %v1394, %v1593
  %v1640 = vxor.u32 %v1639, 2147483648
  %v1641 = vmul.f32 %v1640, 1.442695
  %v1642 = vpow.pop %v1641
  %v1643 = vadd.f32 %v1642, 1.0
  %v1644 = vrcp.pop %v1643
  %v1645 = vmul.f32 1.0, %v1644
  %v1646 = vadd.f32 %v1395, %v1595
  %v1647 = vxor.u32 %v1646, 2147483648
  %v1648 = vmul.f32 %v1647, 1.442695
  %v1649 = vpow.pop %v1648
  %v1650 = vadd.f32 %v1649, 1.0
  %v1651 = vrcp.pop %v1650
  %v1652 = vmul.f32 1.0, %v1651
  %v1653 = vmul.f32 %v1645, %v1634
  %v1654 = vadd.f32 %v1396, %v1653
  %v1655 = vtanh.pop %v1654
  %v1656 = vsub.f32 1.0, %v1652
  %v1657 = vmul.f32 %v1656, %v1655
  %v1658 = vmul.f32 %v1652, %v1388
  %v1659 = vadd.f32 %v1657, %v1658
  %s1660 = scalar_lea.vmem [#allocation3], 16
  %1661 = vst [vmem:[%s1660] sm:$0xff] %v1659
  %s1662 = smul.u32 3, 3
  %s1663 = smul.addr %s1662, 8
  %s1664 = scalar_lea.vmem [#allocation2], %s1663
  %v1665 = vld [vmem:[%s1664] sm:$0xff]
  %v1666 = vld [vmem:[%s1664 + $0x8] sm:$0xff]
  %v1667 = vld [vmem:[%s1664 + $0x10] sm:$0xff]
  %v1668 = vpack.c.bf16 %v1659, %v1659
  %v1669 = vld [vmem:[%s3] sm:$0xff]
  %v1670 = vld [vmem:[%s3 + $0x8] sm:$0xf]
  %v1671 = vld [vmem:[%s3 + $0xc] sm:$0xff]
  %v1672 = vld [vmem:[%s3 + $0x14] sm:$0xf]
  %v1673 = vld [vmem:[%s3 + $0x18] sm:$0xff]
  %v1674 = vld [vmem:[%s3 + $0x20] sm:$0xf]
  %v1675 = vld [vmem:[%s3 + $0x24] sm:$0xff]
  %v1676 = vld [vmem:[%s3 + $0x2c] sm:$0xf]
  %v1677 = vld [vmem:[%s3 + $0x30] sm:$0xff]
  %v1678 = vld [vmem:[%s3 + $0x38] sm:$0xf]
  %v1679 = vld [vmem:[%s3 + $0x3c] sm:$0xff]
  %v1680 = vld [vmem:[%s3 + $0x44] sm:$0xf]
  %v1681 = vld [vmem:[%s3 + $0x48] sm:$0xff]
  %v1682 = vld [vmem:[%s3 + $0x50] sm:$0xf]
  %v1683 = vld [vmem:[%s3 + $0x54] sm:$0xff]
  %v1684 = vld [vmem:[%s3 + $0x5c] sm:$0xf]
  %v1685 = vld [vmem:[%s3 + $0x60] sm:$0xff]
  %v1686 = vld [vmem:[%s3 + $0x68] sm:$0xf]
  %v1687 = vld [vmem:[%s3 + $0x6c] sm:$0xff]
  %v1688 = vld [vmem:[%s3 + $0x74] sm:$0xf]
  %v1689 = vld [vmem:[%s3 + $0x78] sm:$0xff]
  %v1690 = vld [vmem:[%s3 + $0x80] sm:$0xf]
  %v1691 = vld [vmem:[%s3 + $0x84] sm:$0xff]
  %v1692 = vld [vmem:[%s3 + $0x8c] sm:$0xf]
  %v1693 = vld [vmem:[%s3 + $0x90] sm:$0xff]
  %v1694 = vld [vmem:[%s3 + $0x98] sm:$0xf]
  %v1695 = vld [vmem:[%s3 + $0x9c] sm:$0xff]
  %v1696 = vld [vmem:[%s3 + $0xa4] sm:$0xf]
  %v1697 = vld [vmem:[%s3 + $0xa8] sm:$0xff]
  %v1698 = vld [vmem:[%s3 + $0xb0] sm:$0xf]
  %v1699 = vld [vmem:[%s3 + $0xb4] sm:$0xff]
  %v1700 = vld [vmem:[%s3 + $0xbc] sm:$0xf]
  %v1733 = vunpack.c.l.b16 %v1669
  %v1734 = vunpack.c.h.b16 %v1669
  %v1735 = vunpack.c.l.b16 %v1670
  %v1736 = vunpack.c.l.b16 %v1671
  %v1737 = vunpack.c.h.b16 %v1671
  %v1738 = vunpack.c.l.b16 %v1672
  %v1739 = vunpack.c.l.b16 %v1673
  %v1740 = vunpack.c.h.b16 %v1673
  %v1741 = vunpack.c.l.b16 %v1674
  %v1742 = vunpack.c.l.b16 %v1675
  %v1743 = vunpack.c.h.b16 %v1675
  %v1744 = vunpack.c.l.b16 %v1676
  %v1745 = vunpack.c.l.b16 %v1677
  %v1746 = vunpack.c.h.b16 %v1677
  %v1747 = vunpack.c.l.b16 %v1678
  %v1748 = vunpack.c.l.b16 %v1679
  %v1749 = vunpack.c.h.b16 %v1679
  %v1750 = vunpack.c.l.b16 %v1680
  %v1751 = vunpack.c.l.b16 %v1681
  %v1752 = vunpack.c.h.b16 %v1681
  %v1753 = vunpack.c.l.b16 %v1682
  %v1754 = vunpack.c.l.b16 %v1683
  %v1755 = vunpack.c.h.b16 %v1683
  %v1756 = vunpack.c.l.b16 %v1684
  %v1757 = vunpack.c.l.b16 %v1685
  %v1758 = vunpack.c.h.b16 %v1685
  %v1759 = vunpack.c.l.b16 %v1686
  %v1760 = vunpack.c.l.b16 %v1687
  %v1761 = vunpack.c.h.b16 %v1687
  %v1762 = vunpack.c.l.b16 %v1688
  %v1763 = vunpack.c.l.b16 %v1689
  %v1764 = vunpack.c.h.b16 %v1689
  %v1765 = vunpack.c.l.b16 %v1690
  %v1766 = vunpack.c.l.b16 %v1691
  %v1767 = vunpack.c.h.b16 %v1691
  %v1768 = vunpack.c.l.b16 %v1692
  %v1769 = vunpack.c.l.b16 %v1693
  %v1770 = vunpack.c.h.b16 %v1693
  %v1771 = vunpack.c.l.b16 %v1694
  %v1772 = vunpack.c.l.b16 %v1695
  %v1773 = vunpack.c.h.b16 %v1695
  %v1774 = vunpack.c.l.b16 %v1696
  %v1775 = vunpack.c.l.b16 %v1697
  %v1776 = vunpack.c.h.b16 %v1697
  %v1777 = vunpack.c.l.b16 %v1698
  %v1778 = vunpack.c.l.b16 %v1699
  %v1779 = vunpack.c.h.b16 %v1699
  %v1780 = vunpack.c.l.b16 %v1700
  %v1781 = vpack.c.b16 %v1736, %v1733
  %v1782 = vpack.c.b16 %v1737, %v1734
  %v1783 = vpack.c.b16 %v1738, %v1735
  %v1784 = vpack.c.b16 %v1742, %v1739
  %v1785 = vpack.c.b16 %v1743, %v1740
  %v1786 = vpack.c.b16 %v1744, %v1741
  %v1787 = vpack.c.b16 %v1748, %v1745
  %v1788 = vpack.c.b16 %v1749, %v1746
  %v1789 = vpack.c.b16 %v1750, %v1747
  %v1790 = vpack.c.b16 %v1754, %v1751
  %v1791 = vpack.c.b16 %v1755, %v1752
  %v1792 = vpack.c.b16 %v1756, %v1753
  %v1793 = vpack.c.b16 %v1760, %v1757
  %v1794 = vpack.c.b16 %v1761, %v1758
  %v1795 = vpack.c.b16 %v1762, %v1759
  %v1796 = vpack.c.b16 %v1766, %v1763
  %v1797 = vpack.c.b16 %v1767, %v1764
  %v1798 = vpack.c.b16 %v1768, %v1765
  %v1799 = vpack.c.b16 %v1772, %v1769
  %v1800 = vpack.c.b16 %v1773, %v1770
  %v1801 = vpack.c.b16 %v1774, %v1771
  %v1802 = vpack.c.b16 %v1778, %v1775
  %v1803 = vpack.c.b16 %v1779, %v1776
  %v1804 = vpack.c.b16 %v1780, %v1777
  %1829 = vmatprep.subr.bf16.mxu0 %v1782
  %1830 = vmatpush1.bf16.msra.mxu0 %v1781
  %1831 = vmatprep.subr.bf16.mxu0 %v1785
  %1832 = vmatpush1.bf16.msra.mxu0 %v1784
  %1833 = vmatprep.subr.bf16.mxu0 %v1788
  %1834 = vmatpush1.bf16.msra.mxu0 %v1787
  %1835 = vmatprep.subr.bf16.mxu0 %v1791
  %1836 = vmatpush1.bf16.msra.mxu0 %v1790
  %1837 = vmatprep.subr.bf16.mxu0 %v1794
  %1838 = vmatpush1.bf16.msra.mxu0 %v1793
  %1839 = vmatprep.subr.bf16.mxu0 %v1797
  %1840 = vmatpush1.bf16.msra.mxu0 %v1796
  %1841 = vmatprep.subr.bf16.mxu0 %v1800
  %1842 = vmatpush1.bf16.msra.mxu0 %v1799
  %1843 = vmatprep.subr.bf16.mxu0 %v1803
  %1844 = vmatpush1.bf16.msra.mxu0 %v1802
  %1845 = vmatprep.subr.bf16.mxu0 0
  %1846 = vmatpush1.bf16.msra.mxu0 0
  %1847 = vmatprep.subr.bf16.mxu0 0
  %1848 = vmatpush1.bf16.msra.mxu0 0
  %1849 = vmatprep.subr.bf16.mxu0 0
  %1850 = vmatpush1.bf16.msra.mxu0 0
  %1851 = vmatprep.subr.bf16.mxu0 0
  %1852 = vmatpush1.bf16.msra.mxu0 0
  %1853 = vmatprep.subr.bf16.mxu0 0
  %1854 = vmatpush1.bf16.msra.mxu0 0
  %1855 = vmatprep.subr.bf16.mxu0 0
  %1856 = vmatpush1.bf16.msra.mxu0 0
  %1857 = vmatprep.subr.bf16.mxu0 0
  %1858 = vmatpush1.bf16.msra.mxu0 0
  %1859 = vmatprep.subr.bf16.mxu0 0
  %1860 = vmatpush1.bf16.msra.mxu0 0
  %1861 = vmatprep.mubr.bf16.mxu0 0
  %1862 = vmatmul.mubr.bf16.gmra.mrb[0].mxu0 %v1668
  %v1863 = vpop.f32.mrb[0].mxu0
  %v1864 = vadd.f32 %v815, %v1863
  %v1865 = vpop.f32.mrb[0].mxu0
  %v1866 = vadd.f32 %v819, %v1865
  %v1867 = vpop.f32.mrb[0].mxu0
  %v1868 = vpop.f32.mrb[0].mxu0
  %1869 = vdwg.mxu0
  %1870 = vmatprep.subr.bf16.mxu0 0
  %1871 = vmatpush1.bf16.msra.mxu0 %v1783
  %1872 = vmatprep.subr.bf16.mxu0 0
  %1873 = vmatpush1.bf16.msra.mxu0 %v1786
  %1874 = vmatprep.subr.bf16.mxu0 0
  %1875 = vmatpush1.bf16.msra.mxu0 %v1789
  %1876 = vmatprep.subr.bf16.mxu0 0
  %1877 = vmatpush1.bf16.msra.mxu0 %v1792
  %1878 = vmatprep.subr.bf16.mxu0 0
  %1879 = vmatpush1.bf16.msra.mxu0 %v1795
  %1880 = vmatprep.subr.bf16.mxu0 0
  %1881 = vmatpush1.bf16.msra.mxu0 %v1798
  %1882 = vmatprep.subr.bf16.mxu0 0
  %1883 = vmatpush1.bf16.msra.mxu0 %v1801
  %1884 = vmatprep.subr.bf16.mxu0 0
  %1885 = vmatpush1.bf16.msra.mxu0 %v1804
  %1886 = vmatprep.subr.bf16.mxu0 0
  %1887 = vmatpush1.bf16.msra.mxu0 0
  %1888 = vmatprep.subr.bf16.mxu0 0
  %1889 = vmatpush1.bf16.msra.mxu0 0
  %1890 = vmatprep.subr.bf16.mxu0 0
  %1891 = vmatpush1.bf16.msra.mxu0 0
  %1892 = vmatprep.subr.bf16.mxu0 0
  %1893 = vmatpush1.bf16.msra.mxu0 0
  %1894 = vmatprep.subr.bf16.mxu0 0
  %1895 = vmatpush1.bf16.msra.mxu0 0
  %1896 = vmatprep.subr.bf16.mxu0 0
  %1897 = vmatpush1.bf16.msra.mxu0 0
  %1898 = vmatprep.subr.bf16.mxu0 0
  %1899 = vmatpush1.bf16.msra.mxu0 0
  %1900 = vmatprep.subr.bf16.mxu0 0
  %1901 = vmatpush1.bf16.msra.mxu0 0
  %1902 = vmatprep.mubr.bf16.mxu0 0
  %1903 = vmatmul.mubr.bf16.gmra.mrb[0].mxu0 %v1668
  %v1904 = vpop.f32.mrb[0].mxu0
  %v1905 = vadd.f32 %v823, %v1904
  %v1906 = vpop.f32.mrb[0].mxu0
  %v1907 = vpop.f32.mrb[0].mxu0
  %v1908 = vpop.f32.mrb[0].mxu0
  %1909 = vdwg.mxu0
  %v1910 = vadd.f32 %v1665, %v1864
  %v1911 = vxor.u32 %v1910, 2147483648
  %v1912 = vmul.f32 %v1911, 1.442695
  %v1913 = vpow.pop %v1912
  %v1914 = vadd.f32 %v1913, 1.0
  %v1915 = vrcp.pop %v1914
  %v1916 = vmul.f32 1.0, %v1915
  %v1917 = vadd.f32 %v1666, %v1866
  %v1918 = vxor.u32 %v1917, 2147483648
  %v1919 = vmul.f32 %v1918, 1.442695
  %v1920 = vpow.pop %v1919
  %v1921 = vadd.f32 %v1920, 1.0
  %v1922 = vrcp.pop %v1921
  %v1923 = vmul.f32 1.0, %v1922
  %v1924 = vmul.f32 %v1916, %v1905
  %v1925 = vadd.f32 %v1667, %v1924
  %v1926 = vtanh.pop %v1925
  %v1927 = vsub.f32 1.0, %v1923
  %v1928 = vmul.f32 %v1927, %v1926
  %v1929 = vmul.f32 %v1923, %v1659
  %v1930 = vadd.f32 %v1928, %v1929
  %s1931 = scalar_lea.vmem [#allocation3], 24
  %1932 = vst [vmem:[%s1931] sm:$0xff] %v1930
  %s1933 = smul.u32 4, 3
  %s1934 = smul.addr %s1933, 8
  %s1935 = scalar_lea.vmem [#allocation2], %s1934
  %v1936 = vld [vmem:[%s1935] sm:$0xff]
  %v1937 = vld [vmem:[%s1935 + $0x8] sm:$0xff]
  %v1938 = vld [vmem:[%s1935 + $0x10] sm:$0xff]
  %v1939 = vpack.c.bf16 %v1930, %v1930
  %v1940 = vld [vmem:[%s3] sm:$0xff]
  %v1941 = vld [vmem:[%s3 + $0x8] sm:$0xf]
  %v1942 = vld [vmem:[%s3 + $0xc] sm:$0xff]
  %v1943 = vld [vmem:[%s3 + $0x14] sm:$0xf]
  %v1944 = vld [vmem:[%s3 + $0x18] sm:$0xff]
  %v1945 = vld [vmem:[%s3 + $0x20] sm:$0xf]
  %v1946 = vld [vmem:[%s3 + $0x24] sm:$0xff]
  %v1947 = vld [vmem:[%s3 + $0x2c] sm:$0xf]
  %v1948 = vld [vmem:[%s3 + $0x30] sm:$0xff]
  %v1949 = vld [vmem:[%s3 + $0x38] sm:$0xf]
  %v1950 = vld [vmem:[%s3 + $0x3c] sm:$0xff]
  %v1951 = vld [vmem:[%s3 + $0x44] sm:$0xf]
  %v1952 = vld [vmem:[%s3 + $0x48] sm:$0xff]
  %v1953 = vld [vmem:[%s3 + $0x50] sm:$0xf]
  %v1954 = vld [vmem:[%s3 + $0x54] sm:$0xff]
  %v1955 = vld [vmem:[%s3 + $0x5c] sm:$0xf]
  %v1956 = vld [vmem:[%s3 + $0x60] sm:$0xff]
  %v1957 = vld [vmem:[%s3 + $0x68] sm:$0xf]
  %v1958 = vld [vmem:[%s3 + $0x6c] sm:$0xff]
  %v1959 = vld [vmem:[%s3 + $0x74] sm:$0xf]
  %v1960 = vld [vmem:[%s3 + $0x78] sm:$0xff]
  %v1961 = vld [vmem:[%s3 + $0x80] sm:$0xf]
  %v1962 = vld [vmem:[%s3 + $0x84] sm:$0xff]
  %v1963 = vld [vmem:[%s3 + $0x8c] sm:$0xf]
  %v1964 = vld [vmem:[%s3 + $0x90] sm:$0xff]
  %v1965 = vld [vmem:[%s3 + $0x98] sm:$0xf]
  %v1966 = vld [vmem:[%s3 + $0x9c] sm:$0xff]
  %v1967 = vld [vmem:[%s3 + $0xa4] sm:$0xf]
  %v1968 = vld [vmem:[%s3 + $0xa8] sm:$0xff]
  %v1969 = vld [vmem:[%s3 + $0xb0] sm:$0xf]
  %v1970 = vld [vmem:[%s3 + $0xb4] sm:$0xff]
  %v1971 = vld [vmem:[%s3 + $0xbc] sm:$0xf]
  %v2004 = vunpack.c.l.b16 %v1940
  %v2005 = vunpack.c.h.b16 %v1940
  %v2006 = vunpack.c.l.b16 %v1941
  %v2007 = vunpack.c.l.b16 %v1942
  %v2008 = vunpack.c.h.b16 %v1942
  %v2009 = vunpack.c.l.b16 %v1943
  %v2010 = vunpack.c.l.b16 %v1944
  %v2011 = vunpack.c.h.b16 %v1944
  %v2012 = vunpack.c.l.b16 %v1945
  %v2013 = vunpack.c.l.b16 %v1946
  %v2014 = vunpack.c.h.b16 %v1946
  %v2015 = vunpack.c.l.b16 %v1947
  %v2016 = vunpack.c.l.b16 %v1948
  %v2017 = vunpack.c.h.b16 %v1948
  %v2018 = vunpack.c.l.b16 %v1949
  %v2019 = vunpack.c.l.b16 %v1950
  %v2020 = vunpack.c.h.b16 %v1950
  %v2021 = vunpack.c.l.b16 %v1951
  %v2022 = vunpack.c.l.b16 %v1952
  %v2023 = vunpack.c.h.b16 %v1952
  %v2024 = vunpack.c.l.b16 %v1953
  %v2025 = vunpack.c.l.b16 %v1954
  %v2026 = vunpack.c.h.b16 %v1954
  %v2027 = vunpack.c.l.b16 %v1955
  %v2028 = vunpack.c.l.b16 %v1956
  %v2029 = vunpack.c.h.b16 %v1956
  %v2030 = vunpack.c.l.b16 %v1957
  %v2031 = vunpack.c.l.b16 %v1958
  %v2032 = vunpack.c.h.b16 %v1958
  %v2033 = vunpack.c.l.b16 %v1959
  %v2034 = vunpack.c.l.b16 %v1960
  %v2035 = vunpack.c.h.b16 %v1960
  %v2036 = vunpack.c.l.b16 %v1961
  %v2037 = vunpack.c.l.b16 %v1962
  %v2038 = vunpack.c.h.b16 %v1962
  %v2039 = vunpack.c.l.b16 %v1963
  %v2040 = vunpack.c.l.b16 %v1964
  %v2041 = vunpack.c.h.b16 %v1964
  %v2042 = vunpack.c.l.b16 %v1965
  %v2043 = vunpack.c.l.b16 %v1966
  %v2044 = vunpack.c.h.b16 %v1966
  %v2045 = vunpack.c.l.b16 %v1967
  %v2046 = vunpack.c.l.b16 %v1968
  %v2047 = vunpack.c.h.b16 %v1968
  %v2048 = vunpack.c.l.b16 %v1969
  %v2049 = vunpack.c.l.b16 %v1970
  %v2050 = vunpack.c.h.b16 %v1970
  %v2051 = vunpack.c.l.b16 %v1971
  %v2052 = vpack.c.b16 %v2007, %v2004
  %v2053 = vpack.c.b16 %v2008, %v2005
  %v2054 = vpack.c.b16 %v2009, %v2006
  %v2055 = vpack.c.b16 %v2013, %v2010
  %v2056 = vpack.c.b16 %v2014, %v2011
  %v2057 = vpack.c.b16 %v2015, %v2012
  %v2058 = vpack.c.b16 %v2019, %v2016
  %v2059 = vpack.c.b16 %v2020, %v2017
  %v2060 = vpack.c.b16 %v2021, %v2018
  %v2061 = vpack.c.b16 %v2025, %v2022
  %v2062 = vpack.c.b16 %v2026, %v2023
  %v2063 = vpack.c.b16 %v2027, %v2024
  %v2064 = vpack.c.b16 %v2031, %v2028
  %v2065 = vpack.c.b16 %v2032, %v2029
  %v2066 = vpack.c.b16 %v2033, %v2030
  %v2067 = vpack.c.b16 %v2037, %v2034
  %v2068 = vpack.c.b16 %v2038, %v2035
  %v2069 = vpack.c.b16 %v2039, %v2036
  %v2070 = vpack.c.b16 %v2043, %v2040
  %v2071 = vpack.c.b16 %v2044, %v2041
  %v2072 = vpack.c.b16 %v2045, %v2042
  %v2073 = vpack.c.b16 %v2049, %v2046
  %v2074 = vpack.c.b16 %v2050, %v2047
  %v2075 = vpack.c.b16 %v2051, %v2048
  %2100 = vmatprep.subr.bf16.mxu0 %v2053
  %2101 = vmatpush1.bf16.msra.mxu0 %v2052
  %2102 = vmatprep.subr.bf16.mxu0 %v2056
  %2103 = vmatpush1.bf16.msra.mxu0 %v2055
  %2104 = vmatprep.subr.bf16.mxu0 %v2059
  %2105 = vmatpush1.bf16.msra.mxu0 %v2058
  %2106 = vmatprep.subr.bf16.mxu0 %v2062
  %2107 = vmatpush1.bf16.msra.mxu0 %v2061
  %2108 = vmatprep.subr.bf16.mxu0 %v2065
  %2109 = vmatpush1.bf16.msra.mxu0 %v2064
  %2110 = vmatprep.subr.bf16.mxu0 %v2068
  %2111 = vmatpush1.bf16.msra.mxu0 %v2067
  %2112 = vmatprep.subr.bf16.mxu0 %v2071
  %2113 = vmatpush1.bf16.msra.mxu0 %v2070
  %2114 = vmatprep.subr.bf16.mxu0 %v2074
  %2115 = vmatpush1.bf16.msra.mxu0 %v2073
  %2116 = vmatprep.subr.bf16.mxu0 0
  %2117 = vmatpush1.bf16.msra.mxu0 0
  %2118 = vmatprep.subr.bf16.mxu0 0
  %2119 = vmatpush1.bf16.msra.mxu0 0
  %2120 = vmatprep.subr.bf16.mxu0 0
  %2121 = vmatpush1.bf16.msra.mxu0 0
  %2122 = vmatprep.subr.bf16.mxu0 0
  %2123 = vmatpush1.bf16.msra.mxu0 0
  %2124 = vmatprep.subr.bf16.mxu0 0
  %2125 = vmatpush1.bf16.msra.mxu0 0
  %2126 = vmatprep.subr.bf16.mxu0 0
  %2127 = vmatpush1.bf16.msra.mxu0 0
  %2128 = vmatprep.subr.bf16.mxu0 0
  %2129 = vmatpush1.bf16.msra.mxu0 0
  %2130 = vmatprep.subr.bf16.mxu0 0
  %2131 = vmatpush1.bf16.msra.mxu0 0
  %2132 = vmatprep.mubr.bf16.mxu0 0
  %2133 = vmatmul.mubr.bf16.gmra.mrb[0].mxu0 %v1939
  %v2134 = vpop.f32.mrb[0].mxu0
  %v2135 = vadd.f32 %v815, %v2134
  %v2136 = vpop.f32.mrb[0].mxu0
  %v2137 = vadd.f32 %v819, %v2136
  %v2138 = vpop.f32.mrb[0].mxu0
  %v2139 = vpop.f32.mrb[0].mxu0
  %2140 = vdwg.mxu0
  %2141 = vmatprep.subr.bf16.mxu0 0
  %2142 = vmatpush1.bf16.msra.mxu0 %v2054
  %2143 = vmatprep.subr.bf16.mxu0 0
  %2144 = vmatpush1.bf16.msra.mxu0 %v2057
  %2145 = vmatprep.subr.bf16.mxu0 0
  %2146 = vmatpush1.bf16.msra.mxu0 %v2060
  %2147 = vmatprep.subr.bf16.mxu0 0
  %2148 = vmatpush1.bf16.msra.mxu0 %v2063
  %2149 = vmatprep.subr.bf16.mxu0 0
  %2150 = vmatpush1.bf16.msra.mxu0 %v2066
  %2151 = vmatprep.subr.bf16.mxu0 0
  %2152 = vmatpush1.bf16.msra.mxu0 %v2069
  %2153 = vmatprep.subr.bf16.mxu0 0
  %2154 = vmatpush1.bf16.msra.mxu0 %v2072
  %2155 = vmatprep.subr.bf16.mxu0 0
  %2156 = vmatpush1.bf16.msra.mxu0 %v2075
  %2157 = vmatprep.subr.bf16.mxu0 0
  %2158 = vmatpush1.bf16.msra.mxu0 0
  %2159 = vmatprep.subr.bf16.mxu0 0
  %2160 = vmatpush1.bf16.msra.mxu0 0
  %2161 = vmatprep.subr.bf16.mxu0 0
  %2162 = vmatpush1.bf16.msra.mxu0 0
  %2163 = vmatprep.subr.bf16.mxu0 0
  %2164 = vmatpush1.bf16.msra.mxu0 0
  %2165 = vmatprep.subr.bf16.mxu0 0
  %2166 = vmatpush1.bf16.msra.mxu0 0
  %2167 = vmatprep.subr.bf16.mxu0 0
  %2168 = vmatpush1.bf16.msra.mxu0 0
  %2169 = vmatprep.subr.bf16.mxu0 0
  %2170 = vmatpush1.bf16.msra.mxu0 0
  %2171 = vmatprep.subr.bf16.mxu0 0
  %2172 = vmatpush1.bf16.msra.mxu0 0
  %2173 = vmatprep.mubr.bf16.mxu0 0
  %2174 = vmatmul.mubr.bf16.gmra.mrb[0].mxu0 %v1939
  %v2175 = vpop.f32.mrb[0].mxu0
  %v2176 = vadd.f32 %v823, %v2175
  %v2177 = vpop.f32.mrb[0].mxu0
  %v2178 = vpop.f32.mrb[0].mxu0
  %v2179 = vpop.f32.mrb[0].mxu0
  %2180 = vdwg.mxu0
  %v2181 = vadd.f32 %v1936, %v2135
  %v2182 = vxor.u32 %v2181, 2147483648
  %v2183 = vmul.f32 %v2182, 1.442695
  %v2184 = vpow.pop %v2183
  %v2185 = vadd.f32 %v2184, 1.0
  %v2186 = vrcp.pop %v2185
  %v2187 = vmul.f32 1.0, %v2186
  %v2188 = vadd.f32 %v1937, %v2137
  %v2189 = vxor.u32 %v2188, 2147483648
  %v2190 = vmul.f32 %v2189, 1.442695
  %v2191 = vpow.pop %v2190
  %v2192 = vadd.f32 %v2191, 1.0
  %v2193 = vrcp.pop %v2192
  %v2194 = vmul.f32 1.0, %v2193
  %v2195 = vmul.f32 %v2187, %v2176
  %v2196 = vadd.f32 %v1938, %v2195
  %v2197 = vtanh.pop %v2196
  %v2198 = vsub.f32 1.0, %v2194
  %v2199 = vmul.f32 %v2198, %v2197
  %v2200 = vmul.f32 %v2194, %v1930
  %v2201 = vadd.f32 %v2199, %v2200
  %s2202 = scalar_lea.vmem [#allocation3], 32
  %2203 = vst [vmem:[%s2202] sm:$0xff] %v2201
  %s2204 = smul.u32 5, 3
  %s2205 = smul.addr %s2204, 8
  %s2206 = scalar_lea.vmem [#allocation2], %s2205
  %v2207 = vld [vmem:[%s2206] sm:$0xff]
  %v2208 = vld [vmem:[%s2206 + $0x8] sm:$0xff]
  %v2209 = vld [vmem:[%s2206 + $0x10] sm:$0xff]
  %v2210 = vpack.c.bf16 %v2201, %v2201
  %v2211 = vld [vmem:[%s3] sm:$0xff]
  %v2212 = vld [vmem:[%s3 + $0x8] sm:$0xf]
  %v2213 = vld [vmem:[%s3 + $0xc] sm:$0xff]
  %v2214 = vld [vmem:[%s3 + $0x14] sm:$0xf]
  %v2215 = vld [vmem:[%s3 + $0x18] sm:$0xff]
  %v2216 = vld [vmem:[%s3 + $0x20] sm:$0xf]
  %v2217 = vld [vmem:[%s3 + $0x24] sm:$0xff]
  %v2218 = vld [vmem:[%s3 + $0x2c] sm:$0xf]
  %v2219 = vld [vmem:[%s3 + $0x30] sm:$0xff]
  %v2220 = vld [vmem:[%s3 + $0x38] sm:$0xf]
  %v2221 = vld [vmem:[%s3 + $0x3c] sm:$0xff]
  %v2222 = vld [vmem:[%s3 + $0x44] sm:$0xf]
  %v2223 = vld [vmem:[%s3 + $0x48] sm:$0xff]
  %v2224 = vld [vmem:[%s3 + $0x50] sm:$0xf]
  %v2225 = vld [vmem:[%s3 + $0x54] sm:$0xff]
  %v2226 = vld [vmem:[%s3 + $0x5c] sm:$0xf]
  %v2227 = vld [vmem:[%s3 + $0x60] sm:$0xff]
  %v2228 = vld [vmem:[%s3 + $0x68] sm:$0xf]
  %v2229 = vld [vmem:[%s3 + $0x6c] sm:$0xff]
  %v2230 = vld [vmem:[%s3 + $0x74] sm:$0xf]
  %v2231 = vld [vmem:[%s3 + $0x78] sm:$0xff]
  %v2232 = vld [vmem:[%s3 + $0x80] sm:$0xf]
  %v2233 = vld [vmem:[%s3 + $0x84] sm:$0xff]
  %v2234 = vld [vmem:[%s3 + $0x8c] sm:$0xf]
  %v2235 = vld [vmem:[%s3 + $0x90] sm:$0xff]
  %v2236 = vld [vmem:[%s3 + $0x98] sm:$0xf]
  %v2237 = vld [vmem:[%s3 + $0x9c] sm:$0xff]
  %v2238 = vld [vmem:[%s3 + $0xa4] sm:$0xf]
  %v2239 = vld [vmem:[%s3 + $0xa8] sm:$0xff]
  %v2240 = vld [vmem:[%s3 + $0xb0] sm:$0xf]
  %v2241 = vld [vmem:[%s3 + $0xb4] sm:$0xff]
  %v2242 = vld [vmem:[%s3 + $0xbc] sm:$0xf]
  %v2275 = vunpack.c.l.b16 %v2211
  %v2276 = vunpack.c.h.b16 %v2211
  %v2277 = vunpack.c.l.b16 %v2212
  %v2278 = vunpack.c.l.b16 %v2213
  %v2279 = vunpack.c.h.b16 %v2213
  %v2280 = vunpack.c.l.b16 %v2214
  %v2281 = vunpack.c.l.b16 %v2215
  %v2282 = vunpack.c.h.b16 %v2215
  %v2283 = vunpack.c.l.b16 %v2216
  %v2284 = vunpack.c.l.b16 %v2217
  %v2285 = vunpack.c.h.b16 %v2217
  %v2286 = vunpack.c.l.b16 %v2218
  %v2287 = vunpack.c.l.b16 %v2219
  %v2288 = vunpack.c.h.b16 %v2219
  %v2289 = vunpack.c.l.b16 %v2220
  %v2290 = vunpack.c.l.b16 %v2221
  %v2291 = vunpack.c.h.b16 %v2221
  %v2292 = vunpack.c.l.b16 %v2222
  %v2293 = vunpack.c.l.b16 %v2223
  %v2294 = vunpack.c.h.b16 %v2223
  %v2295 = vunpack.c.l.b16 %v2224
  %v2296 = vunpack.c.l.b16 %v2225
  %v2297 = vunpack.c.h.b16 %v2225
  %v2298 = vunpack.c.l.b16 %v2226
  %v2299 = vunpack.c.l.b16 %v2227
  %v2300 = vunpack.c.h.b16 %v2227
  %v2301 = vunpack.c.l.b16 %v2228
  %v2302 = vunpack.c.l.b16 %v2229
  %v2303 = vunpack.c.h.b16 %v2229
  %v2304 = vunpack.c.l.b16 %v2230
  %v2305 = vunpack.c.l.b16 %v2231
  %v2306 = vunpack.c.h.b16 %v2231
  %v2307 = vunpack.c.l.b16 %v2232
  %v2308 = vunpack.c.l.b16 %v2233
  %v2309 = vunpack.c.h.b16 %v2233
  %v2310 = vunpack.c.l.b16 %v2234
  %v2311 = vunpack.c.l.b16 %v2235
  %v2312 = vunpack.c.h.b16 %v2235
  %v2313 = vunpack.c.l.b16 %v2236
  %v2314 = vunpack.c.l.b16 %v2237
  %v2315 = vunpack.c.h.b16 %v2237
  %v2316 = vunpack.c.l.b16 %v2238
  %v2317 = vunpack.c.l.b16 %v2239
  %v2318 = vunpack.c.h.b16 %v2239
  %v2319 = vunpack.c.l.b16 %v2240
  %v2320 = vunpack.c.l.b16 %v2241
  %v2321 = vunpack.c.h.b16 %v2241
  %v2322 = vunpack.c.l.b16 %v2242
  %v2323 = vpack.c.b16 %v2278, %v2275
  %v2324 = vpack.c.b16 %v2279, %v2276
  %v2325 = vpack.c.b16 %v2280, %v2277
  %v2326 = vpack.c.b16 %v2284, %v2281
  %v2327 = vpack.c.b16 %v2285, %v2282
  %v2328 = vpack.c.b16 %v2286, %v2283
  %v2329 = vpack.c.b16 %v2290, %v2287
  %v2330 = vpack.c.b16 %v2291, %v2288
  %v2331 = vpack.c.b16 %v2292, %v2289
  %v2332 = vpack.c.b16 %v2296, %v2293
  %v2333 = vpack.c.b16 %v2297, %v2294
  %v2334 = vpack.c.b16 %v2298, %v2295
  %v2335 = vpack.c.b16 %v2302, %v2299
  %v2336 = vpack.c.b16 %v2303, %v2300
  %v2337 = vpack.c.b16 %v2304, %v2301
  %v2338 = vpack.c.b16 %v2308, %v2305
  %v2339 = vpack.c.b16 %v2309, %v2306
  %v2340 = vpack.c.b16 %v2310, %v2307
  %v2341 = vpack.c.b16 %v2314, %v2311
  %v2342 = vpack.c.b16 %v2315, %v2312
  %v2343 = vpack.c.b16 %v2316, %v2313
  %v2344 = vpack.c.b16 %v2320, %v2317
  %v2345 = vpack.c.b16 %v2321, %v2318
  %v2346 = vpack.c.b16 %v2322, %v2319
  %2371 = vmatprep.subr.bf16.mxu0 %v2324
  %2372 = vmatpush1.bf16.msra.mxu0 %v2323
  %2373 = vmatprep.subr.bf16.mxu0 %v2327
  %2374 = vmatpush1.bf16.msra.mxu0 %v2326
  %2375 = vmatprep.subr.bf16.mxu0 %v2330
  %2376 = vmatpush1.bf16.msra.mxu0 %v2329
  %2377 = vmatprep.subr.bf16.mxu0 %v2333
  %2378 = vmatpush1.bf16.msra.mxu0 %v2332
  %2379 = vmatprep.subr.bf16.mxu0 %v2336
  %2380 = vmatpush1.bf16.msra.mxu0 %v2335
  %2381 = vmatprep.subr.bf16.mxu0 %v2339
  %2382 = vmatpush1.bf16.msra.mxu0 %v2338
  %2383 = vmatprep.subr.bf16.mxu0 %v2342
  %2384 = vmatpush1.bf16.msra.mxu0 %v2341
  %2385 = vmatprep.subr.bf16.mxu0 %v2345
  %2386 = vmatpush1.bf16.msra.mxu0 %v2344
  %2387 = vmatprep.subr.bf16.mxu0 0
  %2388 = vmatpush1.bf16.msra.mxu0 0
  %2389 = vmatprep.subr.bf16.mxu0 0
  %2390 = vmatpush1.bf16.msra.mxu0 0
  %2391 = vmatprep.subr.bf16.mxu0 0
  %2392 = vmatpush1.bf16.msra.mxu0 0
  %2393 = vmatprep.subr.bf16.mxu0 0
  %2394 = vmatpush1.bf16.msra.mxu0 0
  %2395 = vmatprep.subr.bf16.mxu0 0
  %2396 = vmatpush1.bf16.msra.mxu0 0
  %2397 = vmatprep.subr.bf16.mxu0 0
  %2398 = vmatpush1.bf16.msra.mxu0 0
  %2399 = vmatprep.subr.bf16.mxu0 0
  %2400 = vmatpush1.bf16.msra.mxu0 0
  %2401 = vmatprep.subr.bf16.mxu0 0
  %2402 = vmatpush1.bf16.msra.mxu0 0
  %2403 = vmatprep.mubr.bf16.mxu0 0
  %2404 = vmatmul.mubr.bf16.gmra.mrb[0].mxu0 %v2210
  %v2405 = vpop.f32.mrb[0].mxu0
  %v2406 = vadd.f32 %v815, %v2405
  %v2407 = vpop.f32.mrb[0].mxu0
  %v2408 = vadd.f32 %v819, %v2407
  %v2409 = vpop.f32.mrb[0].mxu0
  %v2410 = vpop.f32.mrb[0].mxu0
  %2411 = vdwg.mxu0
  %2412 = vmatprep.subr.bf16.mxu0 0
  %2413 = vmatpush1.bf16.msra.mxu0 %v2325
  %2414 = vmatprep.subr.bf16.mxu0 0
  %2415 = vmatpush1.bf16.msra.mxu0 %v2328
  %2416 = vmatprep.subr.bf16.mxu0 0
  %2417 = vmatpush1.bf16.msra.mxu0 %v2331
  %2418 = vmatprep.subr.bf16.mxu0 0
  %2419 = vmatpush1.bf16.msra.mxu0 %v2334
  %2420 = vmatprep.subr.bf16.mxu0 0
  %2421 = vmatpush1.bf16.msra.mxu0 %v2337
  %2422 = vmatprep.subr.bf16.mxu0 0
  %2423 = vmatpush1.bf16.msra.mxu0 %v2340
  %2424 = vmatprep.subr.bf16.mxu0 0
  %2425 = vmatpush1.bf16.msra.mxu0 %v2343
  %2426 = vmatprep.subr.bf16.mxu0 0
  %2427 = vmatpush1.bf16.msra.mxu0 %v2346
  %2428 = vmatprep.subr.bf16.mxu0 0
  %2429 = vmatpush1.bf16.msra.mxu0 0
  %2430 = vmatprep.subr.bf16.mxu0 0
  %2431 = vmatpush1.bf16.msra.mxu0 0
  %2432 = vmatprep.subr.bf16.mxu0 0
  %2433 = vmatpush1.bf16.msra.mxu0 0
  %2434 = vmatprep.subr.bf16.mxu0 0
  %2435 = vmatpush1.bf16.msra.mxu0 0
  %2436 = vmatprep.subr.bf16.mxu0 0
  %2437 = vmatpush1.bf16.msra.mxu0 0
  %2438 = vmatprep.subr.bf16.mxu0 0
  %2439 = vmatpush1.bf16.msra.mxu0 0
  %2440 = vmatprep.subr.bf16.mxu0 0
  %2441 = vmatpush1.bf16.msra.mxu0 0
  %2442 = vmatprep.subr.bf16.mxu0 0
  %2443 = vmatpush1.bf16.msra.mxu0 0
  %2444 = vmatprep.mubr.bf16.mxu0 0
  %2445 = vmatmul.mubr.bf16.gmra.mrb[0].mxu0 %v2210
  %v2446 = vpop.f32.mrb[0].mxu0
  %v2447 = vadd.f32 %v823, %v2446
  %v2448 = vpop.f32.mrb[0].mxu0
  %v2449 = vpop.f32.mrb[0].mxu0
  %v2450 = vpop.f32.mrb[0].mxu0
  %2451 = vdwg.mxu0
  %v2452 = vadd.f32 %v2207, %v2406
  %v2453 = vxor.u32 %v2452, 2147483648
  %v2454 = vmul.f32 %v2453, 1.442695
  %v2455 = vpow.pop %v2454
  %v2456 = vadd.f32 %v2455, 1.0
  %v2457 = vrcp.pop %v2456
  %v2458 = vmul.f32 1.0, %v2457
  %v2459 = vadd.f32 %v2208, %v2408
  %v2460 = vxor.u32 %v2459, 2147483648
  %v2461 = vmul.f32 %v2460, 1.442695
  %v2462 = vpow.pop %v2461
  %v2463 = vadd.f32 %v2462, 1.0
  %v2464 = vrcp.pop %v2463
  %v2465 = vmul.f32 1.0, %v2464
  %v2466 = vmul.f32 %v2458, %v2447
  %v2467 = vadd.f32 %v2209, %v2466
  %v2468 = vtanh.pop %v2467
  %v2469 = vsub.f32 1.0, %v2465
  %v2470 = vmul.f32 %v2469, %v2468
  %v2471 = vmul.f32 %v2465, %v2201
  %v2472 = vadd.f32 %v2470, %v2471
  %s2473 = scalar_lea.vmem [#allocation3], 40
  %2474 = vst [vmem:[%s2473] sm:$0xff] %v2472
  %s2475 = smul.u32 6, 3
  %s2476 = smul.addr %s2475, 8
  %s2477 = scalar_lea.vmem [#allocation2], %s2476
  %v2478 = vld [vmem:[%s2477] sm:$0xff]
  %v2479 = vld [vmem:[%s2477 + $0x8] sm:$0xff]
  %v2480 = vld [vmem:[%s2477 + $0x10] sm:$0xff]
  %v2481 = vpack.c.bf16 %v2472, %v2472
  %v2482 = vld [vmem:[%s3] sm:$0xff]
  %v2483 = vld [vmem:[%s3 + $0x8] sm:$0xf]
  %v2484 = vld [vmem:[%s3 + $0xc] sm:$0xff]
  %v2485 = vld [vmem:[%s3 + $0x14] sm:$0xf]
  %v2486 = vld [vmem:[%s3 + $0x18] sm:$0xff]
  %v2487 = vld [vmem:[%s3 + $0x20] sm:$0xf]
  %v2488 = vld [vmem:[%s3 + $0x24] sm:$0xff]
  %v2489 = vld [vmem:[%s3 + $0x2c] sm:$0xf]
  %v2490 = vld [vmem:[%s3 + $0x30] sm:$0xff]
  %v2491 = vld [vmem:[%s3 + $0x38] sm:$0xf]
  %v2492 = vld [vmem:[%s3 + $0x3c] sm:$0xff]
  %v2493 = vld [vmem:[%s3 + $0x44] sm:$0xf]
  %v2494 = vld [vmem:[%s3 + $0x48] sm:$0xff]
  %v2495 = vld [vmem:[%s3 + $0x50] sm:$0xf]
  %v2496 = vld [vmem:[%s3 + $0x54] sm:$0xff]
  %v2497 = vld [vmem:[%s3 + $0x5c] sm:$0xf]
  %v2498 = vld [vmem:[%s3 + $0x60] sm:$0xff]
  %v2499 = vld [vmem:[%s3 + $0x68] sm:$0xf]
  %v2500 = vld [vmem:[%s3 + $0x6c] sm:$0xff]
  %v2501 = vld [vmem:[%s3 + $0x74] sm:$0xf]
  %v2502 = vld [vmem:[%s3 + $0x78] sm:$0xff]
  %v2503 = vld [vmem:[%s3 + $0x80] sm:$0xf]
  %v2504 = vld [vmem:[%s3 + $0x84] sm:$0xff]
  %v2505 = vld [vmem:[%s3 + $0x8c] sm:$0xf]
  %v2506 = vld [vmem:[%s3 + $0x90] sm:$0xff]
  %v2507 = vld [vmem:[%s3 + $0x98] sm:$0xf]
  %v2508 = vld [vmem:[%s3 + $0x9c] sm:$0xff]
  %v2509 = vld [vmem:[%s3 + $0xa4] sm:$0xf]
  %v2510 = vld [vmem:[%s3 + $0xa8] sm:$0xff]
  %v2511 = vld [vmem:[%s3 + $0xb0] sm:$0xf]
  %v2512 = vld [vmem:[%s3 + $0xb4] sm:$0xff]
  %v2513 = vld [vmem:[%s3 + $0xbc] sm:$0xf]
  %v2546 = vunpack.c.l.b16 %v2482
  %v2547 = vunpack.c.h.b16 %v2482
  %v2548 = vunpack.c.l.b16 %v2483
  %v2549 = vunpack.c.l.b16 %v2484
  %v2550 = vunpack.c.h.b16 %v2484
  %v2551 = vunpack.c.l.b16 %v2485
  %v2552 = vunpack.c.l.b16 %v2486
  %v2553 = vunpack.c.h.b16 %v2486
  %v2554 = vunpack.c.l.b16 %v2487
  %v2555 = vunpack.c.l.b16 %v2488
  %v2556 = vunpack.c.h.b16 %v2488
  %v2557 = vunpack.c.l.b16 %v2489
  %v2558 = vunpack.c.l.b16 %v2490
  %v2559 = vunpack.c.h.b16 %v2490
  %v2560 = vunpack.c.l.b16 %v2491
  %v2561 = vunpack.c.l.b16 %v2492
  %v2562 = vunpack.c.h.b16 %v2492
  %v2563 = vunpack.c.l.b16 %v2493
  %v2564 = vunpack.c.l.b16 %v2494
  %v2565 = vunpack.c.h.b16 %v2494
  %v2566 = vunpack.c.l.b16 %v2495
  %v2567 = vunpack.c.l.b16 %v2496
  %v2568 = vunpack.c.h.b16 %v2496
  %v2569 = vunpack.c.l.b16 %v2497
  %v2570 = vunpack.c.l.b16 %v2498
  %v2571 = vunpack.c.h.b16 %v2498
  %v2572 = vunpack.c.l.b16 %v2499
  %v2573 = vunpack.c.l.b16 %v2500
  %v2574 = vunpack.c.h.b16 %v2500
  %v2575 = vunpack.c.l.b16 %v2501
  %v2576 = vunpack.c.l.b16 %v2502
  %v2577 = vunpack.c.h.b16 %v2502
  %v2578 = vunpack.c.l.b16 %v2503
  %v2579 = vunpack.c.l.b16 %v2504
  %v2580 = vunpack.c.h.b16 %v2504
  %v2581 = vunpack.c.l.b16 %v2505
  %v2582 = vunpack.c.l.b16 %v2506
  %v2583 = vunpack.c.h.b16 %v2506
  %v2584 = vunpack.c.l.b16 %v2507
  %v2585 = vunpack.c.l.b16 %v2508
  %v2586 = vunpack.c.h.b16 %v2508
  %v2587 = vunpack.c.l.b16 %v2509
  %v2588 = vunpack.c.l.b16 %v2510
  %v2589 = vunpack.c.h.b16 %v2510
  %v2590 = vunpack.c.l.b16 %v2511
  %v2591 = vunpack.c.l.b16 %v2512
  %v2592 = vunpack.c.h.b16 %v2512
  %v2593 = vunpack.c.l.b16 %v2513
  %v2594 = vpack.c.b16 %v2549, %v2546
  %v2595 = vpack.c.b16 %v2550, %v2547
  %v2596 = vpack.c.b16 %v2551, %v2548
  %v2597 = vpack.c.b16 %v2555, %v2552
  %v2598 = vpack.c.b16 %v2556, %v2553
  %v2599 = vpack.c.b16 %v2557, %v2554
  %v2600 = vpack.c.b16 %v2561, %v2558
  %v2601 = vpack.c.b16 %v2562, %v2559
  %v2602 = vpack.c.b16 %v2563, %v2560
  %v2603 = vpack.c.b16 %v2567, %v2564
  %v2604 = vpack.c.b16 %v2568, %v2565
  %v2605 = vpack.c.b16 %v2569, %v2566
  %v2606 = vpack.c.b16 %v2573, %v2570
  %v2607 = vpack.c.b16 %v2574, %v2571
  %v2608 = vpack.c.b16 %v2575, %v2572
  %v2609 = vpack.c.b16 %v2579, %v2576
  %v2610 = vpack.c.b16 %v2580, %v2577
  %v2611 = vpack.c.b16 %v2581, %v2578
  %v2612 = vpack.c.b16 %v2585, %v2582
  %v2613 = vpack.c.b16 %v2586, %v2583
  %v2614 = vpack.c.b16 %v2587, %v2584
  %v2615 = vpack.c.b16 %v2591, %v2588
  %v2616 = vpack.c.b16 %v2592, %v2589
  %v2617 = vpack.c.b16 %v2593, %v2590
  %2642 = vmatprep.subr.bf16.mxu0 %v2595
  %2643 = vmatpush1.bf16.msra.mxu0 %v2594
  %2644 = vmatprep.subr.bf16.mxu0 %v2598
  %2645 = vmatpush1.bf16.msra.mxu0 %v2597
  %2646 = vmatprep.subr.bf16.mxu0 %v2601
  %2647 = vmatpush1.bf16.msra.mxu0 %v2600
  %2648 = vmatprep.subr.bf16.mxu0 %v2604
  %2649 = vmatpush1.bf16.msra.mxu0 %v2603
  %2650 = vmatprep.subr.bf16.mxu0 %v2607
  %2651 = vmatpush1.bf16.msra.mxu0 %v2606
  %2652 = vmatprep.subr.bf16.mxu0 %v2610
  %2653 = vmatpush1.bf16.msra.mxu0 %v2609
  %2654 = vmatprep.subr.bf16.mxu0 %v2613
  %2655 = vmatpush1.bf16.msra.mxu0 %v2612
  %2656 = vmatprep.subr.bf16.mxu0 %v2616
  %2657 = vmatpush1.bf16.msra.mxu0 %v2615
  %2658 = vmatprep.subr.bf16.mxu0 0
  %2659 = vmatpush1.bf16.msra.mxu0 0
  %2660 = vmatprep.subr.bf16.mxu0 0
  %2661 = vmatpush1.bf16.msra.mxu0 0
  %2662 = vmatprep.subr.bf16.mxu0 0
  %2663 = vmatpush1.bf16.msra.mxu0 0
  %2664 = vmatprep.subr.bf16.mxu0 0
  %2665 = vmatpush1.bf16.msra.mxu0 0
  %2666 = vmatprep.subr.bf16.mxu0 0
  %2667 = vmatpush1.bf16.msra.mxu0 0
  %2668 = vmatprep.subr.bf16.mxu0 0
  %2669 = vmatpush1.bf16.msra.mxu0 0
  %2670 = vmatprep.subr.bf16.mxu0 0
  %2671 = vmatpush1.bf16.msra.mxu0 0
  %2672 = vmatprep.subr.bf16.mxu0 0
  %2673 = vmatpush1.bf16.msra.mxu0 0
  %2674 = vmatprep.mubr.bf16.mxu0 0
  %2675 = vmatmul.mubr.bf16.gmra.mrb[0].mxu0 %v2481
  %v2676 = vpop.f32.mrb[0].mxu0
  %v2677 = vadd.f32 %v815, %v2676
  %v2678 = vpop.f32.mrb[0].mxu0
  %v2679 = vadd.f32 %v819, %v2678
  %v2680 = vpop.f32.mrb[0].mxu0
  %v2681 = vpop.f32.mrb[0].mxu0
  %2682 = vdwg.mxu0
  %2683 = vmatprep.subr.bf16.mxu0 0
  %2684 = vmatpush1.bf16.msra.mxu0 %v2596
  %2685 = vmatprep.subr.bf16.mxu0 0
  %2686 = vmatpush1.bf16.msra.mxu0 %v2599
  %2687 = vmatprep.subr.bf16.mxu0 0
  %2688 = vmatpush1.bf16.msra.mxu0 %v2602
  %2689 = vmatprep.subr.bf16.mxu0 0
  %2690 = vmatpush1.bf16.msra.mxu0 %v2605
  %2691 = vmatprep.subr.bf16.mxu0 0
  %2692 = vmatpush1.bf16.msra.mxu0 %v2608
  %2693 = vmatprep.subr.bf16.mxu0 0
  %2694 = vmatpush1.bf16.msra.mxu0 %v2611
  %2695 = vmatprep.subr.bf16.mxu0 0
  %2696 = vmatpush1.bf16.msra.mxu0 %v2614
  %2697 = vmatprep.subr.bf16.mxu0 0
  %2698 = vmatpush1.bf16.msra.mxu0 %v2617
  %2699 = vmatprep.subr.bf16.mxu0 0
  %2700 = vmatpush1.bf16.msra.mxu0 0
  %2701 = vmatprep.subr.bf16.mxu0 0
  %2702 = vmatpush1.bf16.msra.mxu0 0
  %2703 = vmatprep.subr.bf16.mxu0 0
  %2704 = vmatpush1.bf16.msra.mxu0 0
  %2705 = vmatprep.subr.bf16.mxu0 0
  %2706 = vmatpush1.bf16.msra.mxu0 0
  %2707 = vmatprep.subr.bf16.mxu0 0
  %2708 = vmatpush1.bf16.msra.mxu0 0
  %2709 = vmatprep.subr.bf16.mxu0 0
  %2710 = vmatpush1.bf16.msra.mxu0 0
  %2711 = vmatprep.subr.bf16.mxu0 0
  %2712 = vmatpush1.bf16.msra.mxu0 0
  %2713 = vmatprep.subr.bf16.mxu0 0
  %2714 = vmatpush1.bf16.msra.mxu0 0
  %2715 = vmatprep.mubr.bf16.mxu0 0
  %2716 = vmatmul.mubr.bf16.gmra.mrb[0].mxu0 %v2481
  %v2717 = vpop.f32.mrb[0].mxu0
  %v2718 = vadd.f32 %v823, %v2717
  %v2719 = vpop.f32.mrb[0].mxu0
  %v2720 = vpop.f32.mrb[0].mxu0
  %v2721 = vpop.f32.mrb[0].mxu0
  %2722 = vdwg.mxu0
  %v2723 = vadd.f32 %v2478, %v2677
  %v2724 = vxor.u32 %v2723, 2147483648
  %v2725 = vmul.f32 %v2724, 1.442695
  %v2726 = vpow.pop %v2725
  %v2727 = vadd.f32 %v2726, 1.0
  %v2728 = vrcp.pop %v2727
  %v2729 = vmul.f32 1.0, %v2728
  %v2730 = vadd.f32 %v2479, %v2679
  %v2731 = vxor.u32 %v2730, 2147483648
  %v2732 = vmul.f32 %v2731, 1.442695
  %v2733 = vpow.pop %v2732
  %v2734 = vadd.f32 %v2733, 1.0
  %v2735 = vrcp.pop %v2734
  %v2736 = vmul.f32 1.0, %v2735
  %v2737 = vmul.f32 %v2729, %v2718
  %v2738 = vadd.f32 %v2480, %v2737
  %v2739 = vtanh.pop %v2738
  %v2740 = vsub.f32 1.0, %v2736
  %v2741 = vmul.f32 %v2740, %v2739
  %v2742 = vmul.f32 %v2736, %v2472
  %v2743 = vadd.f32 %v2741, %v2742
  %s2744 = scalar_lea.vmem [#allocation3], 48
  %2745 = vst [vmem:[%s2744] sm:$0xff] %v2743
  %s2746 = smul.u32 7, 3
  %s2747 = smul.addr %s2746, 8
  %s2748 = scalar_lea.vmem [#allocation2], %s2747
  %v2749 = vld [vmem:[%s2748] sm:$0xff]
  %v2750 = vld [vmem:[%s2748 + $0x8] sm:$0xff]
  %v2751 = vld [vmem:[%s2748 + $0x10] sm:$0xff]
  %v2752 = vpack.c.bf16 %v2743, %v2743
  %v2753 = vld [vmem:[%s3] sm:$0xff]
  %v2754 = vld [vmem:[%s3 + $0x8] sm:$0xf]
  %v2755 = vld [vmem:[%s3 + $0xc] sm:$0xff]
  %v2756 = vld [vmem:[%s3 + $0x14] sm:$0xf]
  %v2757 = vld [vmem:[%s3 + $0x18] sm:$0xff]
  %v2758 = vld [vmem:[%s3 + $0x20] sm:$0xf]
  %v2759 = vld [vmem:[%s3 + $0x24] sm:$0xff]
  %v2760 = vld [vmem:[%s3 + $0x2c] sm:$0xf]
  %v2761 = vld [vmem:[%s3 + $0x30] sm:$0xff]
  %v2762 = vld [vmem:[%s3 + $0x38] sm:$0xf]
  %v2763 = vld [vmem:[%s3 + $0x3c] sm:$0xff]
  %v2764 = vld [vmem:[%s3 + $0x44] sm:$0xf]
  %v2765 = vld [vmem:[%s3 + $0x48] sm:$0xff]
  %v2766 = vld [vmem:[%s3 + $0x50] sm:$0xf]
  %v2767 = vld [vmem:[%s3 + $0x54] sm:$0xff]
  %v2768 = vld [vmem:[%s3 + $0x5c] sm:$0xf]
  %v2769 = vld [vmem:[%s3 + $0x60] sm:$0xff]
  %v2770 = vld [vmem:[%s3 + $0x68] sm:$0xf]
  %v2771 = vld [vmem:[%s3 + $0x6c] sm:$0xff]
  %v2772 = vld [vmem:[%s3 + $0x74] sm:$0xf]
  %v2773 = vld [vmem:[%s3 + $0x78] sm:$0xff]
  %v2774 = vld [vmem:[%s3 + $0x80] sm:$0xf]
  %v2775 = vld [vmem:[%s3 + $0x84] sm:$0xff]
  %v2776 = vld [vmem:[%s3 + $0x8c] sm:$0xf]
  %v2777 = vld [vmem:[%s3 + $0x90] sm:$0xff]
  %v2778 = vld [vmem:[%s3 + $0x98] sm:$0xf]
  %v2779 = vld [vmem:[%s3 + $0x9c] sm:$0xff]
  %v2780 = vld [vmem:[%s3 + $0xa4] sm:$0xf]
  %v2781 = vld [vmem:[%s3 + $0xa8] sm:$0xff]
  %v2782 = vld [vmem:[%s3 + $0xb0] sm:$0xf]
  %v2783 = vld [vmem:[%s3 + $0xb4] sm:$0xff]
  %v2784 = vld [vmem:[%s3 + $0xbc] sm:$0xf]
  %v2817 = vunpack.c.l.b16 %v2753
  %v2818 = vunpack.c.h.b16 %v2753
  %v2819 = vunpack.c.l.b16 %v2754
  %v2820 = vunpack.c.l.b16 %v2755
  %v2821 = vunpack.c.h.b16 %v2755
  %v2822 = vunpack.c.l.b16 %v2756
  %v2823 = vunpack.c.l.b16 %v2757
  %v2824 = vunpack.c.h.b16 %v2757
  %v2825 = vunpack.c.l.b16 %v2758
  %v2826 = vunpack.c.l.b16 %v2759
  %v2827 = vunpack.c.h.b16 %v2759
  %v2828 = vunpack.c.l.b16 %v2760
  %v2829 = vunpack.c.l.b16 %v2761
  %v2830 = vunpack.c.h.b16 %v2761
  %v2831 = vunpack.c.l.b16 %v2762
  %v2832 = vunpack.c.l.b16 %v2763
  %v2833 = vunpack.c.h.b16 %v2763
  %v2834 = vunpack.c.l.b16 %v2764
  %v2835 = vunpack.c.l.b16 %v2765
  %v2836 = vunpack.c.h.b16 %v2765
  %v2837 = vunpack.c.l.b16 %v2766
  %v2838 = vunpack.c.l.b16 %v2767
  %v2839 = vunpack.c.h.b16 %v2767
  %v2840 = vunpack.c.l.b16 %v2768
  %v2841 = vunpack.c.l.b16 %v2769
  %v2842 = vunpack.c.h.b16 %v2769
  %v2843 = vunpack.c.l.b16 %v2770
  %v2844 = vunpack.c.l.b16 %v2771
  %v2845 = vunpack.c.h.b16 %v2771
  %v2846 = vunpack.c.l.b16 %v2772
  %v2847 = vunpack.c.l.b16 %v2773
  %v2848 = vunpack.c.h.b16 %v2773
  %v2849 = vunpack.c.l.b16 %v2774
  %v2850 = vunpack.c.l.b16 %v2775
  %v2851 = vunpack.c.h.b16 %v2775
  %v2852 = vunpack.c.l.b16 %v2776
  %v2853 = vunpack.c.l.b16 %v2777
  %v2854 = vunpack.c.h.b16 %v2777
  %v2855 = vunpack.c.l.b16 %v2778
  %v2856 = vunpack.c.l.b16 %v2779
  %v2857 = vunpack.c.h.b16 %v2779
  %v2858 = vunpack.c.l.b16 %v2780
  %v2859 = vunpack.c.l.b16 %v2781
  %v2860 = vunpack.c.h.b16 %v2781
  %v2861 = vunpack.c.l.b16 %v2782
  %v2862 = vunpack.c.l.b16 %v2783
  %v2863 = vunpack.c.h.b16 %v2783
  %v2864 = vunpack.c.l.b16 %v2784
  %v2865 = vpack.c.b16 %v2820, %v2817
  %v2866 = vpack.c.b16 %v2821, %v2818
  %v2867 = vpack.c.b16 %v2822, %v2819
  %v2868 = vpack.c.b16 %v2826, %v2823
  %v2869 = vpack.c.b16 %v2827, %v2824
  %v2870 = vpack.c.b16 %v2828, %v2825
  %v2871 = vpack.c.b16 %v2832, %v2829
  %v2872 = vpack.c.b16 %v2833, %v2830
  %v2873 = vpack.c.b16 %v2834, %v2831
  %v2874 = vpack.c.b16 %v2838, %v2835
  %v2875 = vpack.c.b16 %v2839, %v2836
  %v2876 = vpack.c.b16 %v2840, %v2837
  %v2877 = vpack.c.b16 %v2844, %v2841
  %v2878 = vpack.c.b16 %v2845, %v2842
  %v2879 = vpack.c.b16 %v2846, %v2843
  %v2880 = vpack.c.b16 %v2850, %v2847
  %v2881 = vpack.c.b16 %v2851, %v2848
  %v2882 = vpack.c.b16 %v2852, %v2849
  %v2883 = vpack.c.b16 %v2856, %v2853
  %v2884 = vpack.c.b16 %v2857, %v2854
  %v2885 = vpack.c.b16 %v2858, %v2855
  %v2886 = vpack.c.b16 %v2862, %v2859
  %v2887 = vpack.c.b16 %v2863, %v2860
  %v2888 = vpack.c.b16 %v2864, %v2861
  %2913 = vmatprep.subr.bf16.mxu0 %v2866
  %2914 = vmatpush1.bf16.msra.mxu0 %v2865
  %2915 = vmatprep.subr.bf16.mxu0 %v2869
  %2916 = vmatpush1.bf16.msra.mxu0 %v2868
  %2917 = vmatprep.subr.bf16.mxu0 %v2872
  %2918 = vmatpush1.bf16.msra.mxu0 %v2871
  %2919 = vmatprep.subr.bf16.mxu0 %v2875
  %2920 = vmatpush1.bf16.msra.mxu0 %v2874
  %2921 = vmatprep.subr.bf16.mxu0 %v2878
  %2922 = vmatpush1.bf16.msra.mxu0 %v2877
  %2923 = vmatprep.subr.bf16.mxu0 %v2881
  %2924 = vmatpush1.bf16.msra.mxu0 %v2880
  %2925 = vmatprep.subr.bf16.mxu0 %v2884
  %2926 = vmatpush1.bf16.msra.mxu0 %v2883
  %2927 = vmatprep.subr.bf16.mxu0 %v2887
  %2928 = vmatpush1.bf16.msra.mxu0 %v2886
  %2929 = vmatprep.subr.bf16.mxu0 0
  %2930 = vmatpush1.bf16.msra.mxu0 0
  %2931 = vmatprep.subr.bf16.mxu0 0
  %2932 = vmatpush1.bf16.msra.mxu0 0
  %2933 = vmatprep.subr.bf16.mxu0 0
  %2934 = vmatpush1.bf16.msra.mxu0 0
  %2935 = vmatprep.subr.bf16.mxu0 0
  %2936 = vmatpush1.bf16.msra.mxu0 0
  %2937 = vmatprep.subr.bf16.mxu0 0
  %2938 = vmatpush1.bf16.msra.mxu0 0
  %2939 = vmatprep.subr.bf16.mxu0 0
  %2940 = vmatpush1.bf16.msra.mxu0 0
  %2941 = vmatprep.subr.bf16.mxu0 0
  %2942 = vmatpush1.bf16.msra.mxu0 0
  %2943 = vmatprep.subr.bf16.mxu0 0
  %2944 = vmatpush1.bf16.msra.mxu0 0
  %2945 = vmatprep.mubr.bf16.mxu0 0
  %2946 = vmatmul.mubr.bf16.gmra.mrb[0].mxu0 %v2752
  %v2947 = vpop.f32.mrb[0].mxu0
  %v2948 = vadd.f32 %v815, %v2947
  %v2949 = vpop.f32.mrb[0].mxu0
  %v2950 = vadd.f32 %v819, %v2949
  %v2951 = vpop.f32.mrb[0].mxu0
  %v2952 = vpop.f32.mrb[0].mxu0
  %2953 = vdwg.mxu0
  %2954 = vmatprep.subr.bf16.mxu0 0
  %2955 = vmatpush1.bf16.msra.mxu0 %v2867
  %2956 = vmatprep.subr.bf16.mxu0 0
  %2957 = vmatpush1.bf16.msra.mxu0 %v2870
  %2958 = vmatprep.subr.bf16.mxu0 0
  %2959 = vmatpush1.bf16.msra.mxu0 %v2873
  %2960 = vmatprep.subr.bf16.mxu0 0
  %2961 = vmatpush1.bf16.msra.mxu0 %v2876
  %2962 = vmatprep.subr.bf16.mxu0 0
  %2963 = vmatpush1.bf16.msra.mxu0 %v2879
  %2964 = vmatprep.subr.bf16.mxu0 0
  %2965 = vmatpush1.bf16.msra.mxu0 %v2882
  %2966 = vmatprep.subr.bf16.mxu0 0
  %2967 = vmatpush1.bf16.msra.mxu0 %v2885
  %2968 = vmatprep.subr.bf16.mxu0 0
  %2969 = vmatpush1.bf16.msra.mxu0 %v2888
  %2970 = vmatprep.subr.bf16.mxu0 0
  %2971 = vmatpush1.bf16.msra.mxu0 0
  %2972 = vmatprep.subr.bf16.mxu0 0
  %2973 = vmatpush1.bf16.msra.mxu0 0
  %2974 = vmatprep.subr.bf16.mxu0 0
  %2975 = vmatpush1.bf16.msra.mxu0 0
  %2976 = vmatprep.subr.bf16.mxu0 0
  %2977 = vmatpush1.bf16.msra.mxu0 0
  %2978 = vmatprep.subr.bf16.mxu0 0
  %2979 = vmatpush1.bf16.msra.mxu0 0
  %2980 = vmatprep.subr.bf16.mxu0 0
  %2981 = vmatpush1.bf16.msra.mxu0 0
  %2982 = vmatprep.subr.bf16.mxu0 0
  %2983 = vmatpush1.bf16.msra.mxu0 0
  %2984 = vmatprep.subr.bf16.mxu0 0
  %2985 = vmatpush1.bf16.msra.mxu0 0
  %2986 = vmatprep.mubr.bf16.mxu0 0
  %2987 = vmatmul.mubr.bf16.gmra.mrb[0].mxu0 %v2752
  %v2988 = vpop.f32.mrb[0].mxu0
  %v2989 = vadd.f32 %v823, %v2988
  %v2990 = vpop.f32.mrb[0].mxu0
  %v2991 = vpop.f32.mrb[0].mxu0
  %v2992 = vpop.f32.mrb[0].mxu0
  %2993 = vdwg.mxu0
  %v2994 = vadd.f32 %v2749, %v2948
  %v2995 = vxor.u32 %v2994, 2147483648
  %v2996 = vmul.f32 %v2995, 1.442695
  %v2997 = vpow.pop %v2996
  %v2998 = vadd.f32 %v2997, 1.0
  %v2999 = vrcp.pop %v2998
  %v3000 = vmul.f32 1.0, %v2999
  %v3001 = vadd.f32 %v2750, %v2950
  %v3002 = vxor.u32 %v3001, 2147483648
  %v3003 = vmul.f32 %v3002, 1.442695
  %v3004 = vpow.pop %v3003
  %v3005 = vadd.f32 %v3004, 1.0
  %v3006 = vrcp.pop %v3005
  %v3007 = vmul.f32 1.0, %v3006
  %v3008 = vmul.f32 %v3000, %v2989
  %v3009 = vadd.f32 %v2751, %v3008
  %v3010 = vtanh.pop %v3009
  %v3011 = vsub.f32 1.0, %v3007
  %v3012 = vmul.f32 %v3011, %v3010
  %v3013 = vmul.f32 %v3007, %v2743
  %v3014 = vadd.f32 %v3012, %v3013
  %s3015 = scalar_lea.vmem [#allocation3], 56
  %3016 = vst [vmem:[%s3015] sm:$0xff] %v3014
  %s3017 = smul.u32 8, 3
  %s3018 = smul.addr %s3017, 8
  %s3019 = scalar_lea.vmem [#allocation2], %s3018
  %v3020 = vld [vmem:[%s3019] sm:$0xff]
  %v3021 = vld [vmem:[%s3019 + $0x8] sm:$0xff]
  %v3022 = vld [vmem:[%s3019 + $0x10] sm:$0xff]
  %v3023 = vpack.c.bf16 %v3014, %v3014
  %v3024 = vld [vmem:[%s3] sm:$0xff]
  %v3025 = vld [vmem:[%s3 + $0x8] sm:$0xf]
  %v3026 = vld [vmem:[%s3 + $0xc] sm:$0xff]
  %v3027 = vld [vmem:[%s3 + $0x14] sm:$0xf]
  %v3028 = vld [vmem:[%s3 + $0x18] sm:$0xff]
  %v3029 = vld [vmem:[%s3 + $0x20] sm:$0xf]
  %v3030 = vld [vmem:[%s3 + $0x24] sm:$0xff]
  %v3031 = vld [vmem:[%s3 + $0x2c] sm:$0xf]
  %v3032 = vld [vmem:[%s3 + $0x30] sm:$0xff]
  %v3033 = vld [vmem:[%s3 + $0x38] sm:$0xf]
  %v3034 = vld [vmem:[%s3 + $0x3c] sm:$0xff]
  %v3035 = vld [vmem:[%s3 + $0x44] sm:$0xf]
  %v3036 = vld [vmem:[%s3 + $0x48] sm:$0xff]
  %v3037 = vld [vmem:[%s3 + $0x50] sm:$0xf]
  %v3038 = vld [vmem:[%s3 + $0x54] sm:$0xff]
  %v3039 = vld [vmem:[%s3 + $0x5c] sm:$0xf]
  %v3040 = vld [vmem:[%s3 + $0x60] sm:$0xff]
  %v3041 = vld [vmem:[%s3 + $0x68] sm:$0xf]
  %v3042 = vld [vmem:[%s3 + $0x6c] sm:$0xff]
  %v3043 = vld [vmem:[%s3 + $0x74] sm:$0xf]
  %v3044 = vld [vmem:[%s3 + $0x78] sm:$0xff]
  %v3045 = vld [vmem:[%s3 + $0x80] sm:$0xf]
  %v3046 = vld [vmem:[%s3 + $0x84] sm:$0xff]
  %v3047 = vld [vmem:[%s3 + $0x8c] sm:$0xf]
  %v3048 = vld [vmem:[%s3 + $0x90] sm:$0xff]
  %v3049 = vld [vmem:[%s3 + $0x98] sm:$0xf]
  %v3050 = vld [vmem:[%s3 + $0x9c] sm:$0xff]
  %v3051 = vld [vmem:[%s3 + $0xa4] sm:$0xf]
  %v3052 = vld [vmem:[%s3 + $0xa8] sm:$0xff]
  %v3053 = vld [vmem:[%s3 + $0xb0] sm:$0xf]
  %v3054 = vld [vmem:[%s3 + $0xb4] sm:$0xff]
  %v3055 = vld [vmem:[%s3 + $0xbc] sm:$0xf]
  %v3088 = vunpack.c.l.b16 %v3024
  %v3089 = vunpack.c.h.b16 %v3024
  %v3090 = vunpack.c.l.b16 %v3025
  %v3091 = vunpack.c.l.b16 %v3026
  %v3092 = vunpack.c.h.b16 %v3026
  %v3093 = vunpack.c.l.b16 %v3027
  %v3094 = vunpack.c.l.b16 %v3028
  %v3095 = vunpack.c.h.b16 %v3028
  %v3096 = vunpack.c.l.b16 %v3029
  %v3097 = vunpack.c.l.b16 %v3030
  %v3098 = vunpack.c.h.b16 %v3030
  %v3099 = vunpack.c.l.b16 %v3031
  %v3100 = vunpack.c.l.b16 %v3032
  %v3101 = vunpack.c.h.b16 %v3032
  %v3102 = vunpack.c.l.b16 %v3033
  %v3103 = vunpack.c.l.b16 %v3034
  %v3104 = vunpack.c.h.b16 %v3034
  %v3105 = vunpack.c.l.b16 %v3035
  %v3106 = vunpack.c.l.b16 %v3036
  %v3107 = vunpack.c.h.b16 %v3036
  %v3108 = vunpack.c.l.b16 %v3037
  %v3109 = vunpack.c.l.b16 %v3038
  %v3110 = vunpack.c.h.b16 %v3038
  %v3111 = vunpack.c.l.b16 %v3039
  %v3112 = vunpack.c.l.b16 %v3040
  %v3113 = vunpack.c.h.b16 %v3040
  %v3114 = vunpack.c.l.b16 %v3041
  %v3115 = vunpack.c.l.b16 %v3042
  %v3116 = vunpack.c.h.b16 %v3042
  %v3117 = vunpack.c.l.b16 %v3043
  %v3118 = vunpack.c.l.b16 %v3044
  %v3119 = vunpack.c.h.b16 %v3044
  %v3120 = vunpack.c.l.b16 %v3045
  %v3121 = vunpack.c.l.b16 %v3046
  %v3122 = vunpack.c.h.b16 %v3046
  %v3123 = vunpack.c.l.b16 %v3047
  %v3124 = vunpack.c.l.b16 %v3048
  %v3125 = vunpack.c.h.b16 %v3048
  %v3126 = vunpack.c.l.b16 %v3049
  %v3127 = vunpack.c.l.b16 %v3050
  %v3128 = vunpack.c.h.b16 %v3050
  %v3129 = vunpack.c.l.b16 %v3051
  %v3130 = vunpack.c.l.b16 %v3052
  %v3131 = vunpack.c.h.b16 %v3052
  %v3132 = vunpack.c.l.b16 %v3053
  %v3133 = vunpack.c.l.b16 %v3054
  %v3134 = vunpack.c.h.b16 %v3054
  %v3135 = vunpack.c.l.b16 %v3055
  %v3136 = vpack.c.b16 %v3091, %v3088
  %v3137 = vpack.c.b16 %v3092, %v3089
  %v3138 = vpack.c.b16 %v3093, %v3090
  %v3139 = vpack.c.b16 %v3097, %v3094
  %v3140 = vpack.c.b16 %v3098, %v3095
  %v3141 = vpack.c.b16 %v3099, %v3096
  %v3142 = vpack.c.b16 %v3103, %v3100
  %v3143 = vpack.c.b16 %v3104, %v3101
  %v3144 = vpack.c.b16 %v3105, %v3102
  %v3145 = vpack.c.b16 %v3109, %v3106
  %v3146 = vpack.c.b16 %v3110, %v3107
  %v3147 = vpack.c.b16 %v3111, %v3108
  %v3148 = vpack.c.b16 %v3115, %v3112
  %v3149 = vpack.c.b16 %v3116, %v3113
  %v3150 = vpack.c.b16 %v3117, %v3114
  %v3151 = vpack.c.b16 %v3121, %v3118
  %v3152 = vpack.c.b16 %v3122, %v3119
  %v3153 = vpack.c.b16 %v3123, %v3120
  %v3154 = vpack.c.b16 %v3127, %v3124
  %v3155 = vpack.c.b16 %v3128, %v3125
  %v3156 = vpack.c.b16 %v3129, %v3126
  %v3157 = vpack.c.b16 %v3133, %v3130
  %v3158 = vpack.c.b16 %v3134, %v3131
  %v3159 = vpack.c.b16 %v3135, %v3132
  %3184 = vmatprep.subr.bf16.mxu0 %v3137
  %3185 = vmatpush1.bf16.msra.mxu0 %v3136
  %3186 = vmatprep.subr.bf16.mxu0 %v3140
  %3187 = vmatpush1.bf16.msra.mxu0 %v3139
  %3188 = vmatprep.subr.bf16.mxu0 %v3143
  %3189 = vmatpush1.bf16.msra.mxu0 %v3142
  %3190 = vmatprep.subr.bf16.mxu0 %v3146
  %3191 = vmatpush1.bf16.msra.mxu0 %v3145
  %3192 = vmatprep.subr.bf16.mxu0 %v3149
  %3193 = vmatpush1.bf16.msra.mxu0 %v3148
  %3194 = vmatprep.subr.bf16.mxu0 %v3152
  %3195 = vmatpush1.bf16.msra.mxu0 %v3151
  %3196 = vmatprep.subr.bf16.mxu0 %v3155
  %3197 = vmatpush1.bf16.msra.mxu0 %v3154
  %3198 = vmatprep.subr.bf16.mxu0 %v3158
  %3199 = vmatpush1.bf16.msra.mxu0 %v3157
  %3200 = vmatprep.subr.bf16.mxu0 0
  %3201 = vmatpush1.bf16.msra.mxu0 0
  %3202 = vmatprep.subr.bf16.mxu0 0
  %3203 = vmatpush1.bf16.msra.mxu0 0
  %3204 = vmatprep.subr.bf16.mxu0 0
  %3205 = vmatpush1.bf16.msra.mxu0 0
  %3206 = vmatprep.subr.bf16.mxu0 0
  %3207 = vmatpush1.bf16.msra.mxu0 0
  %3208 = vmatprep.subr.bf16.mxu0 0
  %3209 = vmatpush1.bf16.msra.mxu0 0
  %3210 = vmatprep.subr.bf16.mxu0 0
  %3211 = vmatpush1.bf16.msra.mxu0 0
  %3212 = vmatprep.subr.bf16.mxu0 0
  %3213 = vmatpush1.bf16.msra.mxu0 0
  %3214 = vmatprep.subr.bf16.mxu0 0
  %3215 = vmatpush1.bf16.msra.mxu0 0
  %3216 = vmatprep.mubr.bf16.mxu0 0
  %3217 = vmatmul.mubr.bf16.gmra.mrb[0].mxu0 %v3023
  %v3218 = vpop.f32.mrb[0].mxu0
  %v3219 = vadd.f32 %v815, %v3218
  %v3220 = vpop.f32.mrb[0].mxu0
  %v3221 = vadd.f32 %v819, %v3220
  %v3222 = vpop.f32.mrb[0].mxu0
  %v3223 = vpop.f32.mrb[0].mxu0
  %3224 = vdwg.mxu0
  %3225 = vmatprep.subr.bf16.mxu0 0
  %3226 = vmatpush1.bf16.msra.mxu0 %v3138
  %3227 = vmatprep.subr.bf16.mxu0 0
  %3228 = vmatpush1.bf16.msra.mxu0 %v3141
  %3229 = vmatprep.subr.bf16.mxu0 0
  %3230 = vmatpush1.bf16.msra.mxu0 %v3144
  %3231 = vmatprep.subr.bf16.mxu0 0
  %3232 = vmatpush1.bf16.msra.mxu0 %v3147
  %3233 = vmatprep.subr.bf16.mxu0 0
  %3234 = vmatpush1.bf16.msra.mxu0 %v3150
  %3235 = vmatprep.subr.bf16.mxu0 0
  %3236 = vmatpush1.bf16.msra.mxu0 %v3153
  %3237 = vmatprep.subr.bf16.mxu0 0
  %3238 = vmatpush1.bf16.msra.mxu0 %v3156
  %3239 = vmatprep.subr.bf16.mxu0 0
  %3240 = vmatpush1.bf16.msra.mxu0 %v3159
  %3241 = vmatprep.subr.bf16.mxu0 0
  %3242 = vmatpush1.bf16.msra.mxu0 0
  %3243 = vmatprep.subr.bf16.mxu0 0
  %3244 = vmatpush1.bf16.msra.mxu0 0
  %3245 = vmatprep.subr.bf16.mxu0 0
  %3246 = vmatpush1.bf16.msra.mxu0 0
  %3247 = vmatprep.subr.bf16.mxu0 0
  %3248 = vmatpush1.bf16.msra.mxu0 0
  %3249 = vmatprep.subr.bf16.mxu0 0
  %3250 = vmatpush1.bf16.msra.mxu0 0
  %3251 = vmatprep.subr.bf16.mxu0 0
  %3252 = vmatpush1.bf16.msra.mxu0 0
  %3253 = vmatprep.subr.bf16.mxu0 0
  %3254 = vmatpush1.bf16.msra.mxu0 0
  %3255 = vmatprep.subr.bf16.mxu0 0
  %3256 = vmatpush1.bf16.msra.mxu0 0
  %3257 = vmatprep.mubr.bf16.mxu0 0
  %3258 = vmatmul.mubr.bf16.gmra.mrb[0].mxu0 %v3023
  %v3259 = vpop.f32.mrb[0].mxu0
  %v3260 = vadd.f32 %v823, %v3259
  %v3261 = vpop.f32.mrb[0].mxu0
  %v3262 = vpop.f32.mrb[0].mxu0
  %v3263 = vpop.f32.mrb[0].mxu0
  %3264 = vdwg.mxu0
  %v3265 = vadd.f32 %v3020, %v3219
  %v3266 = vxor.u32 %v3265, 2147483648
  %v3267 = vmul.f32 %v3266, 1.442695
  %v3268 = vpow.pop %v3267
  %v3269 = vadd.f32 %v3268, 1.0
  %v3270 = vrcp.pop %v3269
  %v3271 = vmul.f32 1.0, %v3270
  %v3272 = vadd.f32 %v3021, %v3221
  %v3273 = vxor.u32 %v3272, 2147483648
  %v3274 = vmul.f32 %v3273, 1.442695
  %v3275 = vpow.pop %v3274
  %v3276 = vadd.f32 %v3275, 1.0
  %v3277 = vrcp.pop %v3276
  %v3278 = vmul.f32 1.0, %v3277
  %v3279 = vmul.f32 %v3271, %v3260
  %v3280 = vadd.f32 %v3022, %v3279
  %v3281 = vtanh.pop %v3280
  %v3282 = vsub.f32 1.0, %v3278
  %v3283 = vmul.f32 %v3282, %v3281
  %v3284 = vmul.f32 %v3278, %v3014
  %v3285 = vadd.f32 %v3283, %v3284
  %s3286 = scalar_lea.vmem [#allocation3], 64
  %3287 = vst [vmem:[%s3286] sm:$0xff] %v3285
  %s3288 = smul.u32 9, 3
  %s3289 = smul.addr %s3288, 8
  %s3290 = scalar_lea.vmem [#allocation2], %s3289
  %v3291 = vld [vmem:[%s3290] sm:$0xff]
  %v3292 = vld [vmem:[%s3290 + $0x8] sm:$0xff]
  %v3293 = vld [vmem:[%s3290 + $0x10] sm:$0xff]
  %v3294 = vpack.c.bf16 %v3285, %v3285
  %v3295 = vld [vmem:[%s3] sm:$0xff]
  %v3296 = vld [vmem:[%s3 + $0x8] sm:$0xf]
  %v3297 = vld [vmem:[%s3 + $0xc] sm:$0xff]
  %v3298 = vld [vmem:[%s3 + $0x14] sm:$0xf]
  %v3299 = vld [vmem:[%s3 + $0x18] sm:$0xff]
  %v3300 = vld [vmem:[%s3 + $0x20] sm:$0xf]
  %v3301 = vld [vmem:[%s3 + $0x24] sm:$0xff]
  %v3302 = vld [vmem:[%s3 + $0x2c] sm:$0xf]
  %v3303 = vld [vmem:[%s3 + $0x30] sm:$0xff]
  %v3304 = vld [vmem:[%s3 + $0x38] sm:$0xf]
  %v3305 = vld [vmem:[%s3 + $0x3c] sm:$0xff]
  %v3306 = vld [vmem:[%s3 + $0x44] sm:$0xf]
  %v3307 = vld [vmem:[%s3 + $0x48] sm:$0xff]
  %v3308 = vld [vmem:[%s3 + $0x50] sm:$0xf]
  %v3309 = vld [vmem:[%s3 + $0x54] sm:$0xff]
  %v3310 = vld [vmem:[%s3 + $0x5c] sm:$0xf]
  %v3311 = vld [vmem:[%s3 + $0x60] sm:$0xff]
  %v3312 = vld [vmem:[%s3 + $0x68] sm:$0xf]
  %v3313 = vld [vmem:[%s3 + $0x6c] sm:$0xff]
  %v3314 = vld [vmem:[%s3 + $0x74] sm:$0xf]
  %v3315 = vld [vmem:[%s3 + $0x78] sm:$0xff]
  %v3316 = vld [vmem:[%s3 + $0x80] sm:$0xf]
  %v3317 = vld [vmem:[%s3 + $0x84] sm:$0xff]
  %v3318 = vld [vmem:[%s3 + $0x8c] sm:$0xf]
  %v3319 = vld [vmem:[%s3 + $0x90] sm:$0xff]
  %v3320 = vld [vmem:[%s3 + $0x98] sm:$0xf]
  %v3321 = vld [vmem:[%s3 + $0x9c] sm:$0xff]
  %v3322 = vld [vmem:[%s3 + $0xa4] sm:$0xf]
  %v3323 = vld [vmem:[%s3 + $0xa8] sm:$0xff]
  %v3324 = vld [vmem:[%s3 + $0xb0] sm:$0xf]
  %v3325 = vld [vmem:[%s3 + $0xb4] sm:$0xff]
  %v3326 = vld [vmem:[%s3 + $0xbc] sm:$0xf]
  %v3359 = vunpack.c.l.b16 %v3295
  %v3360 = vunpack.c.h.b16 %v3295
  %v3361 = vunpack.c.l.b16 %v3296
  %v3362 = vunpack.c.l.b16 %v3297
  %v3363 = vunpack.c.h.b16 %v3297
  %v3364 = vunpack.c.l.b16 %v3298
  %v3365 = vunpack.c.l.b16 %v3299
  %v3366 = vunpack.c.h.b16 %v3299
  %v3367 = vunpack.c.l.b16 %v3300
  %v3368 = vunpack.c.l.b16 %v3301
  %v3369 = vunpack.c.h.b16 %v3301
  %v3370 = vunpack.c.l.b16 %v3302
  %v3371 = vunpack.c.l.b16 %v3303
  %v3372 = vunpack.c.h.b16 %v3303
  %v3373 = vunpack.c.l.b16 %v3304
  %v3374 = vunpack.c.l.b16 %v3305
  %v3375 = vunpack.c.h.b16 %v3305
  %v3376 = vunpack.c.l.b16 %v3306
  %v3377 = vunpack.c.l.b16 %v3307
  %v3378 = vunpack.c.h.b16 %v3307
  %v3379 = vunpack.c.l.b16 %v3308
  %v3380 = vunpack.c.l.b16 %v3309
  %v3381 = vunpack.c.h.b16 %v3309
  %v3382 = vunpack.c.l.b16 %v3310
  %v3383 = vunpack.c.l.b16 %v3311
  %v3384 = vunpack.c.h.b16 %v3311
  %v3385 = vunpack.c.l.b16 %v3312
  %v3386 = vunpack.c.l.b16 %v3313
  %v3387 = vunpack.c.h.b16 %v3313
  %v3388 = vunpack.c.l.b16 %v3314
  %v3389 = vunpack.c.l.b16 %v3315
  %v3390 = vunpack.c.h.b16 %v3315
  %v3391 = vunpack.c.l.b16 %v3316
  %v3392 = vunpack.c.l.b16 %v3317
  %v3393 = vunpack.c.h.b16 %v3317
  %v3394 = vunpack.c.l.b16 %v3318
  %v3395 = vunpack.c.l.b16 %v3319
  %v3396 = vunpack.c.h.b16 %v3319
  %v3397 = vunpack.c.l.b16 %v3320
  %v3398 = vunpack.c.l.b16 %v3321
  %v3399 = vunpack.c.h.b16 %v3321
  %v3400 = vunpack.c.l.b16 %v3322
  %v3401 = vunpack.c.l.b16 %v3323
  %v3402 = vunpack.c.h.b16 %v3323
  %v3403 = vunpack.c.l.b16 %v3324
  %v3404 = vunpack.c.l.b16 %v3325
  %v3405 = vunpack.c.h.b16 %v3325
  %v3406 = vunpack.c.l.b16 %v3326
  %v3407 = vpack.c.b16 %v3362, %v3359
  %v3408 = vpack.c.b16 %v3363, %v3360
  %v3409 = vpack.c.b16 %v3364, %v3361
  %v3410 = vpack.c.b16 %v3368, %v3365
  %v3411 = vpack.c.b16 %v3369, %v3366
  %v3412 = vpack.c.b16 %v3370, %v3367
  %v3413 = vpack.c.b16 %v3374, %v3371
  %v3414 = vpack.c.b16 %v3375, %v3372
  %v3415 = vpack.c.b16 %v3376, %v3373
  %v3416 = vpack.c.b16 %v3380, %v3377
  %v3417 = vpack.c.b16 %v3381, %v3378
  %v3418 = vpack.c.b16 %v3382, %v3379
  %v3419 = vpack.c.b16 %v3386, %v3383
  %v3420 = vpack.c.b16 %v3387, %v3384
  %v3421 = vpack.c.b16 %v3388, %v3385
  %v3422 = vpack.c.b16 %v3392, %v3389
  %v3423 = vpack.c.b16 %v3393, %v3390
  %v3424 = vpack.c.b16 %v3394, %v3391
  %v3425 = vpack.c.b16 %v3398, %v3395
  %v3426 = vpack.c.b16 %v3399, %v3396
  %v3427 = vpack.c.b16 %v3400, %v3397
  %v3428 = vpack.c.b16 %v3404, %v3401
  %v3429 = vpack.c.b16 %v3405, %v3402
  %v3430 = vpack.c.b16 %v3406, %v3403
  %3455 = vmatprep.subr.bf16.mxu0 %v3408
  %3456 = vmatpush1.bf16.msra.mxu0 %v3407
  %3457 = vmatprep.subr.bf16.mxu0 %v3411
  %3458 = vmatpush1.bf16.msra.mxu0 %v3410
  %3459 = vmatprep.subr.bf16.mxu0 %v3414
  %3460 = vmatpush1.bf16.msra.mxu0 %v3413
  %3461 = vmatprep.subr.bf16.mxu0 %v3417
  %3462 = vmatpush1.bf16.msra.mxu0 %v3416
  %3463 = vmatprep.subr.bf16.mxu0 %v3420
  %3464 = vmatpush1.bf16.msra.mxu0 %v3419
  %3465 = vmatprep.subr.bf16.mxu0 %v3423
  %3466 = vmatpush1.bf16.msra.mxu0 %v3422
  %3467 = vmatprep.subr.bf16.mxu0 %v3426
  %3468 = vmatpush1.bf16.msra.mxu0 %v3425
  %3469 = vmatprep.subr.bf16.mxu0 %v3429
  %3470 = vmatpush1.bf16.msra.mxu0 %v3428
  %3471 = vmatprep.subr.bf16.mxu0 0
  %3472 = vmatpush1.bf16.msra.mxu0 0
  %3473 = vmatprep.subr.bf16.mxu0 0
  %3474 = vmatpush1.bf16.msra.mxu0 0
  %3475 = vmatprep.subr.bf16.mxu0 0
  %3476 = vmatpush1.bf16.msra.mxu0 0
  %3477 = vmatprep.subr.bf16.mxu0 0
  %3478 = vmatpush1.bf16.msra.mxu0 0
  %3479 = vmatprep.subr.bf16.mxu0 0
  %3480 = vmatpush1.bf16.msra.mxu0 0
  %3481 = vmatprep.subr.bf16.mxu0 0
  %3482 = vmatpush1.bf16.msra.mxu0 0
  %3483 = vmatprep.subr.bf16.mxu0 0
  %3484 = vmatpush1.bf16.msra.mxu0 0
  %3485 = vmatprep.subr.bf16.mxu0 0
  %3486 = vmatpush1.bf16.msra.mxu0 0
  %3487 = vmatprep.mubr.bf16.mxu0 0
  %3488 = vmatmul.mubr.bf16.gmra.mrb[0].mxu0 %v3294
  %v3489 = vpop.f32.mrb[0].mxu0
  %v3490 = vadd.f32 %v815, %v3489
  %v3491 = vpop.f32.mrb[0].mxu0
  %v3492 = vadd.f32 %v819, %v3491
  %v3493 = vpop.f32.mrb[0].mxu0
  %v3494 = vpop.f32.mrb[0].mxu0
  %3495 = vdwg.mxu0
  %3496 = vmatprep.subr.bf16.mxu0 0
  %3497 = vmatpush1.bf16.msra.mxu0 %v3409
  %3498 = vmatprep.subr.bf16.mxu0 0
  %3499 = vmatpush1.bf16.msra.mxu0 %v3412
  %3500 = vmatprep.subr.bf16.mxu0 0
  %3501 = vmatpush1.bf16.msra.mxu0 %v3415
  %3502 = vmatprep.subr.bf16.mxu0 0
  %3503 = vmatpush1.bf16.msra.mxu0 %v3418
  %3504 = vmatprep.subr.bf16.mxu0 0
  %3505 = vmatpush1.bf16.msra.mxu0 %v3421
  %3506 = vmatprep.subr.bf16.mxu0 0
  %3507 = vmatpush1.bf16.msra.mxu0 %v3424
  %3508 = vmatprep.subr.bf16.mxu0 0
  %3509 = vmatpush1.bf16.msra.mxu0 %v3427
  %3510 = vmatprep.subr.bf16.mxu0 0
  %3511 = vmatpush1.bf16.msra.mxu0 %v3430
  %3512 = vmatprep.subr.bf16.mxu0 0
  %3513 = vmatpush1.bf16.msra.mxu0 0
  %3514 = vmatprep.subr.bf16.mxu0 0
  %3515 = vmatpush1.bf16.msra.mxu0 0
  %3516 = vmatprep.subr.bf16.mxu0 0
  %3517 = vmatpush1.bf16.msra.mxu0 0
  %3518 = vmatprep.subr.bf16.mxu0 0
  %3519 = vmatpush1.bf16.msra.mxu0 0
  %3520 = vmatprep.subr.bf16.mxu0 0
  %3521 = vmatpush1.bf16.msra.mxu0 0
  %3522 = vmatprep.subr.bf16.mxu0 0
  %3523 = vmatpush1.bf16.msra.mxu0 0
  %3524 = vmatprep.subr.bf16.mxu0 0
  %3525 = vmatpush1.bf16.msra.mxu0 0
  %3526 = vmatprep.subr.bf16.mxu0 0
  %3527 = vmatpush1.bf16.msra.mxu0 0
  %3528 = vmatprep.mubr.bf16.mxu0 0
  %3529 = vmatmul.mubr.bf16.gmra.mrb[0].mxu0 %v3294
  %v3530 = vpop.f32.mrb[0].mxu0
  %v3531 = vadd.f32 %v823, %v3530
  %v3532 = vpop.f32.mrb[0].mxu0
  %v3533 = vpop.f32.mrb[0].mxu0
  %v3534 = vpop.f32.mrb[0].mxu0
  %3535 = vdwg.mxu0
  %v3536 = vadd.f32 %v3291, %v3490
  %v3537 = vxor.u32 %v3536, 2147483648
  %v3538 = vmul.f32 %v3537, 1.442695
  %v3539 = vpow.pop %v3538
  %v3540 = vadd.f32 %v3539, 1.0
  %v3541 = vrcp.pop %v3540
  %v3542 = vmul.f32 1.0, %v3541
  %v3543 = vadd.f32 %v3292, %v3492
  %v3544 = vxor.u32 %v3543, 2147483648
  %v3545 = vmul.f32 %v3544, 1.442695
  %v3546 = vpow.pop %v3545
  %v3547 = vadd.f32 %v3546, 1.0
  %v3548 = vrcp.pop %v3547
  %v3549 = vmul.f32 1.0, %v3548
  %v3550 = vmul.f32 %v3542, %v3531
  %v3551 = vadd.f32 %v3293, %v3550
  %v3552 = vtanh.pop %v3551
  %v3553 = vsub.f32 1.0, %v3549
  %v3554 = vmul.f32 %v3553, %v3552
  %v3555 = vmul.f32 %v3549, %v3285
  %v3556 = vadd.f32 %v3554, %v3555
  %s3557 = scalar_lea.vmem [#allocation3], 72
  %3558 = vst [vmem:[%s3557] sm:$0xff] %v3556
  %v3559 = vld [vmem:[#allocation3] sm:$0xff]
  %v3560 = vld [vmem:[#allocation3 + $0x8] sm:$0xff]
  %v3561 = vld [vmem:[#allocation3 + $0x10] sm:$0xff]
  %v3562 = vld [vmem:[#allocation3 + $0x18] sm:$0xff]
  %v3563 = vld [vmem:[#allocation3 + $0x20] sm:$0xff]
  %v3564 = vld [vmem:[#allocation3 + $0x28] sm:$0xff]
  %v3565 = vld [vmem:[#allocation3 + $0x30] sm:$0xff]
  %v3566 = vld [vmem:[#allocation3 + $0x38] sm:$0xff]
  %v3567 = vld [vmem:[#allocation3 + $0x40] sm:$0xff]
  %v3568 = vld [vmem:[#allocation3 + $0x48] sm:$0xff]
  %v3569 = vpack.c.bf16 %v3556, %v3556
  %v3570 = vmul.f32 %v3559, %v3556
  %v3571 = vmul.f32 %v3560, %v3556
  %v3572 = vmul.f32 %v3561, %v3556
  %v3573 = vmul.f32 %v3562, %v3556
  %v3574 = vmul.f32 %v3563, %v3556
  %v3575 = vmul.f32 %v3564, %v3556
  %v3576 = vmul.f32 %v3565, %v3556
  %v3577 = vmul.f32 %v3566, %v3556
  %v3578 = vmul.f32 %v3567, %v3556
  %v3579 = vmul.f32 %v3568, %v3556
  %3580 = vadd.xlane.f32.xlu0 %v3570
  %v3581 = vpop.xlane.xlu0 %3580
  %3582 = vadd.xlane.f32.xlu0 %v3571
  %v3583 = vpop.xlane.xlu0 %3582
  %3584 = vadd.xlane.f32.xlu0 %v3572
  %v3585 = vpop.xlane.xlu0 %3584
  %3586 = vadd.xlane.f32.xlu0 %v3573
  %v3587 = vpop.xlane.xlu0 %3586
  %3588 = vadd.xlane.f32.xlu0 %v3574
  %v3589 = vpop.xlane.xlu0 %3588
  %3590 = vadd.xlane.f32.xlu0 %v3575
  %v3591 = vpop.xlane.xlu0 %3590
  %3592 = vadd.xlane.f32.xlu0 %v3576
  %v3593 = vpop.xlane.xlu0 %3592
  %3594 = vadd.xlane.f32.xlu0 %v3577
  %v3595 = vpop.xlane.xlu0 %3594
  %3596 = vadd.xlane.f32.xlu0 %v3578
  %v3597 = vpop.xlane.xlu0 %3596
  %3598 = vadd.xlane.f32.xlu0 %v3579
  %v3599 = vpop.xlane.xlu0 %3598
  %v3600 = vmax.f32 %v3581, %v3589
  %v3601 = vmax.f32 %v3583, %v3591
  %v3602 = vmax.f32 %v3585, %v3593
  %v3603 = vmax.f32 %v3587, %v3595
  %v3604 = vmax.f32 %v3600, %v3597
  %v3605 = vmax.f32 %v3601, %v3599
  %v3606 = vmax.f32 %v3604, %v3605
  %v3607 = vmax.f32 %v3602, %v3603
  %v3608 = vmax.f32 %v3606, %v3607
  %v3609 = vsub.f32 %v3581, %v3608
  %v3610 = vsub.f32 %v3583, %v3608
  %v3611 = vsub.f32 %v3585, %v3608
  %v3612 = vsub.f32 %v3587, %v3608
  %v3613 = vsub.f32 %v3589, %v3608
  %v3614 = vsub.f32 %v3591, %v3608
  %v3615 = vsub.f32 %v3593, %v3608
  %v3616 = vsub.f32 %v3595, %v3608
  %v3617 = vsub.f32 %v3597, %v3608
  %v3618 = vsub.f32 %v3599, %v3608
  %v3619 = vmul.f32 %v3609, 1.442695
  %v3620 = vpow.pop %v3619
  %v3621 = vmul.f32 %v3610, 1.442695
  %v3622 = vpow.pop %v3621
  %v3623 = vmul.f32 %v3611, 1.442695
  %v3624 = vpow.pop %v3623
  %v3625 = vmul.f32 %v3612, 1.442695
  %v3626 = vpow.pop %v3625
  %v3627 = vmul.f32 %v3613, 1.442695
  %v3628 = vpow.pop %v3627
  %v3629 = vmul.f32 %v3614, 1.442695
  %v3630 = vpow.pop %v3629
  %v3631 = vmul.f32 %v3615, 1.442695
  %v3632 = vpow.pop %v3631
  %v3633 = vmul.f32 %v3616, 1.442695
  %v3634 = vpow.pop %v3633
  %v3635 = vmul.f32 %v3617, 1.442695
  %v3636 = vpow.pop %v3635
  %v3637 = vmul.f32 %v3618, 1.442695
  %v3638 = vpow.pop %v3637
  %v3639 = vadd.f32 %v3620, %v3622
  %v3640 = vadd.f32 %v3639, %v3624
  %v3641 = vadd.f32 %v3640, %v3626
  %v3642 = vadd.f32 %v3641, %v3628
  %v3643 = vadd.f32 %v3642, %v3630
  %v3644 = vadd.f32 %v3643, %v3632
  %v3645 = vadd.f32 %v3644, %v3634
  %v3646 = vadd.f32 %v3645, %v3636
  %v3647 = vadd.f32 %v3646, %v3638
  %v3648 = vrcp.pop %v3647
  %v3649 = vmul.f32 %v3620, %v3648
  %v3650 = vmul.f32 %v3622, %v3648
  %v3651 = vmul.f32 %v3624, %v3648
  %v3652 = vmul.f32 %v3626, %v3648
  %v3653 = vmul.f32 %v3628, %v3648
  %v3654 = vmul.f32 %v3630, %v3648
  %v3655 = vmul.f32 %v3632, %v3648
  %v3656 = vmul.f32 %v3634, %v3648
  %v3657 = vmul.f32 %v3636, %v3648
  %v3658 = vmul.f32 %v3638, %v3648
  %v3659 = vmul.f32 %v3649, %v3559
  %v3660 = vmul.f32 %v3650, %v3560
  %v3661 = vmul.f32 %v3651, %v3561
  %v3662 = vmul.f32 %v3652, %v3562
  %v3663 = vmul.f32 %v3653, %v3563
  %v3664 = vmul.f32 %v3654, %v3564
  %v3665 = vmul.f32 %v3655, %v3565
  %v3666 = vmul.f32 %v3656, %v3566
  %v3667 = vmul.f32 %v3657, %v3567
  %v3668 = vmul.f32 %v3658, %v3568
  %v3669 = vadd.f32 %v3659, %v3660
  %v3670 = vadd.f32 %v3669, %v3661
  %v3671 = vadd.f32 %v3670, %v3662
  %v3672 = vadd.f32 %v3671, %v3663
  %v3673 = vadd.f32 %v3672, %v3664
  %v3674 = vadd.f32 %v3673, %v3665
  %v3675 = vadd.f32 %v3674, %v3666
  %v3676 = vadd.f32 %v3675, %v3667
  %v3677 = vadd.f32 %v3676, %v3668
  %v3678 = vpack.c.bf16 %v3677, %v3677
  %s3679 = smul.addr %s851, 8
  %s3680 = scalar_lea.vmem [#allocation4], %s3679
  %v3681 = vld [vmem:[%s3680] sm:$0xff]
  %v3682 = vld [vmem:[%s3680 + $0x8] sm:$0xff]
  %v3683 = vld [vmem:[%s3680 + $0x10] sm:$0xff]
  %v3684 = vld [vmem:[%s7] sm:$0xff]
  %v3685 = vld [vmem:[%s7 + $0x8] sm:$0xf]
  %v3686 = vld [vmem:[%s7 + $0xc] sm:$0xff]
  %v3687 = vld [vmem:[%s7 + $0x14] sm:$0xf]
  %v3688 = vld [vmem:[%s7 + $0x18] sm:$0xff]
  %v3689 = vld [vmem:[%s7 + $0x20] sm:$0xf]
  %v3690 = vld [vmem:[%s7 + $0x24] sm:$0xff]
  %v3691 = vld [vmem:[%s7 + $0x2c] sm:$0xf]
  %v3692 = vld [vmem:[%s7 + $0x30] sm:$0xff]
  %v3693 = vld [vmem:[%s7 + $0x38] sm:$0xf]
  %v3694 = vld [vmem:[%s7 + $0x3c] sm:$0xff]
  %v3695 = vld [vmem:[%s7 + $0x44] sm:$0xf]
  %v3696 = vld [vmem:[%s7 + $0x48] sm:$0xff]
  %v3697 = vld [vmem:[%s7 + $0x50] sm:$0xf]
  %v3698 = vld [vmem:[%s7 + $0x54] sm:$0xff]
  %v3699 = vld [vmem:[%s7 + $0x5c] sm:$0xf]
  %v3700 = vld [vmem:[%s7 + $0x60] sm:$0xff]
  %v3701 = vld [vmem:[%s7 + $0x68] sm:$0xf]
  %v3702 = vld [vmem:[%s7 + $0x6c] sm:$0xff]
  %v3703 = vld [vmem:[%s7 + $0x74] sm:$0xf]
  %v3704 = vld [vmem:[%s7 + $0x78] sm:$0xff]
  %v3705 = vld [vmem:[%s7 + $0x80] sm:$0xf]
  %v3706 = vld [vmem:[%s7 + $0x84] sm:$0xff]
  %v3707 = vld [vmem:[%s7 + $0x8c] sm:$0xf]
  %v3708 = vld [vmem:[%s7 + $0x90] sm:$0xff]
  %v3709 = vld [vmem:[%s7 + $0x98] sm:$0xf]
  %v3710 = vld [vmem:[%s7 + $0x9c] sm:$0xff]
  %v3711 = vld [vmem:[%s7 + $0xa4] sm:$0xf]
  %v3712 = vld [vmem:[%s7 + $0xa8] sm:$0xff]
  %v3713 = vld [vmem:[%s7 + $0xb0] sm:$0xf]
  %v3714 = vld [vmem:[%s7 + $0xb4] sm:$0xff]
  %v3715 = vld [vmem:[%s7 + $0xbc] sm:$0xf]
  %v3748 = vunpack.c.l.b16 %v3684
  %v3749 = vunpack.c.h.b16 %v3684
  %v3750 = vunpack.c.l.b16 %v3685
  %v3751 = vunpack.c.l.b16 %v3686
  %v3752 = vunpack.c.h.b16 %v3686
  %v3753 = vunpack.c.l.b16 %v3687
  %v3754 = vunpack.c.l.b16 %v3688
  %v3755 = vunpack.c.h.b16 %v3688
  %v3756 = vunpack.c.l.b16 %v3689
  %v3757 = vunpack.c.l.b16 %v3690
  %v3758 = vunpack.c.h.b16 %v3690
  %v3759 = vunpack.c.l.b16 %v3691
  %v3760 = vunpack.c.l.b16 %v3692
  %v3761 = vunpack.c.h.b16 %v3692
  %v3762 = vunpack.c.l.b16 %v3693
  %v3763 = vunpack.c.l.b16 %v3694
  %v3764 = vunpack.c.h.b16 %v3694
  %v3765 = vunpack.c.l.b16 %v3695
  %v3766 = vunpack.c.l.b16 %v3696
  %v3767 = vunpack.c.h.b16 %v3696
  %v3768 = vunpack.c.l.b16 %v3697
  %v3769 = vunpack.c.l.b16 %v3698
  %v3770 = vunpack.c.h.b16 %v3698
  %v3771 = vunpack.c.l.b16 %v3699
  %v3772 = vunpack.c.l.b16 %v3700
  %v3773 = vunpack.c.h.b16 %v3700
  %v3774 = vunpack.c.l.b16 %v3701
  %v3775 = vunpack.c.l.b16 %v3702
  %v3776 = vunpack.c.h.b16 %v3702
  %v3777 = vunpack.c.l.b16 %v3703
  %v3778 = vunpack.c.l.b16 %v3704
  %v3779 = vunpack.c.h.b16 %v3704
  %v3780 = vunpack.c.l.b16 %v3705
  %v3781 = vunpack.c.l.b16 %v3706
  %v3782 = vunpack.c.h.b16 %v3706
  %v3783 = vunpack.c.l.b16 %v3707
  %v3784 = vunpack.c.l.b16 %v3708
  %v3785 = vunpack.c.h.b16 %v3708
  %v3786 = vunpack.c.l.b16 %v3709
  %v3787 = vunpack.c.l.b16 %v3710
  %v3788 = vunpack.c.h.b16 %v3710
  %v3789 = vunpack.c.l.b16 %v3711
  %v3790 = vunpack.c.l.b16 %v3712
  %v3791 = vunpack.c.h.b16 %v3712
  %v3792 = vunpack.c.l.b16 %v3713
  %v3793 = vunpack.c.l.b16 %v3714
  %v3794 = vunpack.c.h.b16 %v3714
  %v3795 = vunpack.c.l.b16 %v3715
  %v3796 = vpack.c.b16 %v3751, %v3748
  %v3797 = vpack.c.b16 %v3752, %v3749
  %v3798 = vpack.c.b16 %v3753, %v3750
  %v3799 = vpack.c.b16 %v3757, %v3754
  %v3800 = vpack.c.b16 %v3758, %v3755
  %v3801 = vpack.c.b16 %v3759, %v3756
  %v3802 = vpack.c.b16 %v3763, %v3760
  %v3803 = vpack.c.b16 %v3764, %v3761
  %v3804 = vpack.c.b16 %v3765, %v3762
  %v3805 = vpack.c.b16 %v3769, %v3766
  %v3806 = vpack.c.b16 %v3770, %v3767
  %v3807 = vpack.c.b16 %v3771, %v3768
  %v3808 = vpack.c.b16 %v3775, %v3772
  %v3809 = vpack.c.b16 %v3776, %v3773
  %v3810 = vpack.c.b16 %v3777, %v3774
  %v3811 = vpack.c.b16 %v3781, %v3778
  %v3812 = vpack.c.b16 %v3782, %v3779
  %v3813 = vpack.c.b16 %v3783, %v3780
  %v3814 = vpack.c.b16 %v3787, %v3784
  %v3815 = vpack.c.b16 %v3788, %v3785
  %v3816 = vpack.c.b16 %v3789, %v3786
  %v3817 = vpack.c.b16 %v3793, %v3790
  %v3818 = vpack.c.b16 %v3794, %v3791
  %v3819 = vpack.c.b16 %v3795, %v3792
  %3844 = vmatprep.subr.bf16.mxu0 %v3797
  %3845 = vmatpush1.bf16.msra.mxu0 %v3796
  %3846 = vmatprep.subr.bf16.mxu0 %v3800
  %3847 = vmatpush1.bf16.msra.mxu0 %v3799
  %3848 = vmatprep.subr.bf16.mxu0 %v3803
  %3849 = vmatpush1.bf16.msra.mxu0 %v3802
  %3850 = vmatprep.subr.bf16.mxu0 %v3806
  %3851 = vmatpush1.bf16.msra.mxu0 %v3805
  %3852 = vmatprep.subr.bf16.mxu0 %v3809
  %3853 = vmatpush1.bf16.msra.mxu0 %v3808
  %3854 = vmatprep.subr.bf16.mxu0 %v3812
  %3855 = vmatpush1.bf16.msra.mxu0 %v3811
  %3856 = vmatprep.subr.bf16.mxu0 %v3815
  %3857 = vmatpush1.bf16.msra.mxu0 %v3814
  %3858 = vmatprep.subr.bf16.mxu0 %v3818
  %3859 = vmatpush1.bf16.msra.mxu0 %v3817
  %3860 = vmatprep.subr.bf16.mxu0 0
  %3861 = vmatpush1.bf16.msra.mxu0 0
  %3862 = vmatprep.subr.bf16.mxu0 0
  %3863 = vmatpush1.bf16.msra.mxu0 0
  %3864 = vmatprep.subr.bf16.mxu0 0
  %3865 = vmatpush1.bf16.msra.mxu0 0
  %3866 = vmatprep.subr.bf16.mxu0 0
  %3867 = vmatpush1.bf16.msra.mxu0 0
  %3868 = vmatprep.subr.bf16.mxu0 0
  %3869 = vmatpush1.bf16.msra.mxu0 0
  %3870 = vmatprep.subr.bf16.mxu0 0
  %3871 = vmatpush1.bf16.msra.mxu0 0
  %3872 = vmatprep.subr.bf16.mxu0 0
  %3873 = vmatpush1.bf16.msra.mxu0 0
  %3874 = vmatprep.subr.bf16.mxu0 0
  %3875 = vmatpush1.bf16.msra.mxu0 0
  %3876 = vmatprep.mubr.bf16.mxu0 0
  %3877 = vmatmul.mubr.bf16.gmra.mrb[0].mxu0 %v3678
  %v3878 = vpop.f32.mrb[0].mxu0
  %v3879 = vadd.f32 0.0, %v3878
  %v3880 = vpop.f32.mrb[0].mxu0
  %v3881 = vadd.f32 0.0, %v3880
  %v3882 = vpop.f32.mrb[0].mxu0
  %v3883 = vpop.f32.mrb[0].mxu0
  %3884 = vdwg.mxu0
  %3885 = vmatprep.subr.bf16.mxu0 0
  %3886 = vmatpush1.bf16.msra.mxu0 %v3798
  %3887 = vmatprep.subr.bf16.mxu0 0
  %3888 = vmatpush1.bf16.msra.mxu0 %v3801
  %3889 = vmatprep.subr.bf16.mxu0 0
  %3890 = vmatpush1.bf16.msra.mxu0 %v3804
  %3891 = vmatprep.subr.bf16.mxu0 0
  %3892 = vmatpush1.bf16.msra.mxu0 %v3807
  %3893 = vmatprep.subr.bf16.mxu0 0
  %3894 = vmatpush1.bf16.msra.mxu0 %v3810
  %3895 = vmatprep.subr.bf16.mxu0 0
  %3896 = vmatpush1.bf16.msra.mxu0 %v3813
  %3897 = vmatprep.subr.bf16.mxu0 0
  %3898 = vmatpush1.bf16.msra.mxu0 %v3816
  %3899 = vmatprep.subr.bf16.mxu0 0
  %3900 = vmatpush1.bf16.msra.mxu0 %v3819
  %3901 = vmatprep.subr.bf16.mxu0 0
  %3902 = vmatpush1.bf16.msra.mxu0 0
  %3903 = vmatprep.subr.bf16.mxu0 0
  %3904 = vmatpush1.bf16.msra.mxu0 0
  %3905 = vmatprep.subr.bf16.mxu0 0
  %3906 = vmatpush1.bf16.msra.mxu0 0
  %3907 = vmatprep.subr.bf16.mxu0 0
  %3908 = vmatpush1.bf16.msra.mxu0 0
  %3909 = vmatprep.subr.bf16.mxu0 0
  %3910 = vmatpush1.bf16.msra.mxu0 0
  %3911 = vmatprep.subr.bf16.mxu0 0
  %3912 = vmatpush1.bf16.msra.mxu0 0
  %3913 = vmatprep.subr.bf16.mxu0 0
  %3914 = vmatpush1.bf16.msra.mxu0 0
  %3915 = vmatprep.subr.bf16.mxu0 0
  %3916 = vmatpush1.bf16.msra.mxu0 0
  %3917 = vmatprep.mubr.bf16.mxu0 0
  %3918 = vmatmul.mubr.bf16.gmra.mrb[0].mxu0 %v3678
  %v3919 = vpop.f32.mrb[0].mxu0
  %v3920 = vadd.f32 0.0, %v3919
  %v3921 = vpop.f32.mrb[0].mxu0
  %v3922 = vpop.f32.mrb[0].mxu0
  %v3923 = vpop.f32.mrb[0].mxu0
  %3924 = vdwg.mxu0
  %v3925 = vadd.f32 %v3681, %v3879
  %v3926 = vadd.f32 %v3682, %v3881
  %v3927 = vadd.f32 %v3683, %v3920
  %v3928 = vld [vmem:[%s8] sm:$0xff]
  %v3929 = vld [vmem:[%s8 + $0x8] sm:$0xf]
  %v3930 = vld [vmem:[%s8 + $0xc] sm:$0xff]
  %v3931 = vld [vmem:[%s8 + $0x14] sm:$0xf]
  %v3932 = vld [vmem:[%s8 + $0x18] sm:$0xff]
  %v3933 = vld [vmem:[%s8 + $0x20] sm:$0xf]
  %v3934 = vld [vmem:[%s8 + $0x24] sm:$0xff]
  %v3935 = vld [vmem:[%s8 + $0x2c] sm:$0xf]
  %v3936 = vld [vmem:[%s8 + $0x30] sm:$0xff]
  %v3937 = vld [vmem:[%s8 + $0x38] sm:$0xf]
  %v3938 = vld [vmem:[%s8 + $0x3c] sm:$0xff]
  %v3939 = vld [vmem:[%s8 + $0x44] sm:$0xf]
  %v3940 = vld [vmem:[%s8 + $0x48] sm:$0xff]
  %v3941 = vld [vmem:[%s8 + $0x50] sm:$0xf]
  %v3942 = vld [vmem:[%s8 + $0x54] sm:$0xff]
  %v3943 = vld [vmem:[%s8 + $0x5c] sm:$0xf]
  %v3944 = vld [vmem:[%s8 + $0x60] sm:$0xff]
  %v3945 = vld [vmem:[%s8 + $0x68] sm:$0xf]
  %v3946 = vld [vmem:[%s8 + $0x6c] sm:$0xff]
  %v3947 = vld [vmem:[%s8 + $0x74] sm:$0xf]
  %v3948 = vld [vmem:[%s8 + $0x78] sm:$0xff]
  %v3949 = vld [vmem:[%s8 + $0x80] sm:$0xf]
  %v3950 = vld [vmem:[%s8 + $0x84] sm:$0xff]
  %v3951 = vld [vmem:[%s8 + $0x8c] sm:$0xf]
  %v3952 = vld [vmem:[%s8 + $0x90] sm:$0xff]
  %v3953 = vld [vmem:[%s8 + $0x98] sm:$0xf]
  %v3954 = vld [vmem:[%s8 + $0x9c] sm:$0xff]
  %v3955 = vld [vmem:[%s8 + $0xa4] sm:$0xf]
  %v3956 = vld [vmem:[%s8 + $0xa8] sm:$0xff]
  %v3957 = vld [vmem:[%s8 + $0xb0] sm:$0xf]
  %v3958 = vld [vmem:[%s8 + $0xb4] sm:$0xff]
  %v3959 = vld [vmem:[%s8 + $0xbc] sm:$0xf]
  %v3992 = vunpack.c.l.b16 %v3928
  %v3993 = vunpack.c.h.b16 %v3928
  %v3994 = vunpack.c.l.b16 %v3929
  %v3995 = vunpack.c.l.b16 %v3930
  %v3996 = vunpack.c.h.b16 %v3930
  %v3997 = vunpack.c.l.b16 %v3931
  %v3998 = vunpack.c.l.b16 %v3932
  %v3999 = vunpack.c.h.b16 %v3932
  %v4000 = vunpack.c.l.b16 %v3933
  %v4001 = vunpack.c.l.b16 %v3934
  %v4002 = vunpack.c.h.b16 %v3934
  %v4003 = vunpack.c.l.b16 %v3935
  %v4004 = vunpack.c.l.b16 %v3936
  %v4005 = vunpack.c.h.b16 %v3936
  %v4006 = vunpack.c.l.b16 %v3937
  %v4007 = vunpack.c.l.b16 %v3938
  %v4008 = vunpack.c.h.b16 %v3938
  %v4009 = vunpack.c.l.b16 %v3939
  %v4010 = vunpack.c.l.b16 %v3940
  %v4011 = vunpack.c.h.b16 %v3940
  %v4012 = vunpack.c.l.b16 %v3941
  %v4013 = vunpack.c.l.b16 %v3942
  %v4014 = vunpack.c.h.b16 %v3942
  %v4015 = vunpack.c.l.b16 %v3943
  %v4016 = vunpack.c.l.b16 %v3944
  %v4017 = vunpack.c.h.b16 %v3944
  %v4018 = vunpack.c.l.b16 %v3945
  %v4019 = vunpack.c.l.b16 %v3946
  %v4020 = vunpack.c.h.b16 %v3946
  %v4021 = vunpack.c.l.b16 %v3947
  %v4022 = vunpack.c.l.b16 %v3948
  %v4023 = vunpack.c.h.b16 %v3948
  %v4024 = vunpack.c.l.b16 %v3949
  %v4025 = vunpack.c.l.b16 %v3950
  %v4026 = vunpack.c.h.b16 %v3950
  %v4027 = vunpack.c.l.b16 %v3951
  %v4028 = vunpack.c.l.b16 %v3952
  %v4029 = vunpack.c.h.b16 %v3952
  %v4030 = vunpack.c.l.b16 %v3953
  %v4031 = vunpack.c.l.b16 %v3954
  %v4032 = vunpack.c.h.b16 %v3954
  %v4033 = vunpack.c.l.b16 %v3955
  %v4034 = vunpack.c.l.b16 %v3956
  %v4035 = vunpack.c.h.b16 %v3956
  %v4036 = vunpack.c.l.b16 %v3957
  %v4037 = vunpack.c.l.b16 %v3958
  %v4038 = vunpack.c.h.b16 %v3958
  %v4039 = vunpack.c.l.b16 %v3959
  %v4040 = vpack.c.b16 %v3995, %v3992
  %v4041 = vpack.c.b16 %v3996, %v3993
  %v4042 = vpack.c.b16 %v3997, %v3994
  %v4043 = vpack.c.b16 %v4001, %v3998
  %v4044 = vpack.c.b16 %v4002, %v3999
  %v4045 = vpack.c.b16 %v4003, %v4000
  %v4046 = vpack.c.b16 %v4007, %v4004
  %v4047 = vpack.c.b16 %v4008, %v4005
  %v4048 = vpack.c.b16 %v4009, %v4006
  %v4049 = vpack.c.b16 %v4013, %v4010
  %v4050 = vpack.c.b16 %v4014, %v4011
  %v4051 = vpack.c.b16 %v4015, %v4012
  %v4052 = vpack.c.b16 %v4019, %v4016
  %v4053 = vpack.c.b16 %v4020, %v4017
  %v4054 = vpack.c.b16 %v4021, %v4018
  %v4055 = vpack.c.b16 %v4025, %v4022
  %v4056 = vpack.c.b16 %v4026, %v4023
  %v4057 = vpack.c.b16 %v4027, %v4024
  %v4058 = vpack.c.b16 %v4031, %v4028
  %v4059 = vpack.c.b16 %v4032, %v4029
  %v4060 = vpack.c.b16 %v4033, %v4030
  %v4061 = vpack.c.b16 %v4037, %v4034
  %v4062 = vpack.c.b16 %v4038, %v4035
  %v4063 = vpack.c.b16 %v4039, %v4036
  %4088 = vmatprep.subr.bf16.mxu0 %v4041
  %4089 = vmatpush1.bf16.msra.mxu0 %v4040
  %4090 = vmatprep.subr.bf16.mxu0 %v4044
  %4091 = vmatpush1.bf16.msra.mxu0 %v4043
  %4092 = vmatprep.subr.bf16.mxu0 %v4047
  %4093 = vmatpush1.bf16.msra.mxu0 %v4046
  %4094 = vmatprep.subr.bf16.mxu0 %v4050
  %4095 = vmatpush1.bf16.msra.mxu0 %v4049
  %4096 = vmatprep.subr.bf16.mxu0 %v4053
  %4097 = vmatpush1.bf16.msra.mxu0 %v4052
  %4098 = vmatprep.subr.bf16.mxu0 %v4056
  %4099 = vmatpush1.bf16.msra.mxu0 %v4055
  %4100 = vmatprep.subr.bf16.mxu0 %v4059
  %4101 = vmatpush1.bf16.msra.mxu0 %v4058
  %4102 = vmatprep.subr.bf16.mxu0 %v4062
  %4103 = vmatpush1.bf16.msra.mxu0 %v4061
  %4104 = vmatprep.subr.bf16.mxu0 0
  %4105 = vmatpush1.bf16.msra.mxu0 0
  %4106 = vmatprep.subr.bf16.mxu0 0
  %4107 = vmatpush1.bf16.msra.mxu0 0
  %4108 = vmatprep.subr.bf16.mxu0 0
  %4109 = vmatpush1.bf16.msra.mxu0 0
  %4110 = vmatprep.subr.bf16.mxu0 0
  %4111 = vmatpush1.bf16.msra.mxu0 0
  %4112 = vmatprep.subr.bf16.mxu0 0
  %4113 = vmatpush1.bf16.msra.mxu0 0
  %4114 = vmatprep.subr.bf16.mxu0 0
  %4115 = vmatpush1.bf16.msra.mxu0 0
  %4116 = vmatprep.subr.bf16.mxu0 0
  %4117 = vmatpush1.bf16.msra.mxu0 0
  %4118 = vmatprep.subr.bf16.mxu0 0
  %4119 = vmatpush1.bf16.msra.mxu0 0
  %4120 = vmatprep.mubr.bf16.mxu0 0
  %4121 = vmatmul.mubr.bf16.gmra.mrb[0].mxu0 %v3569
  %v4122 = vpop.f32.mrb[0].mxu0
  %v4123 = vadd.f32 %v832, %v4122
  %v4124 = vpop.f32.mrb[0].mxu0
  %v4125 = vadd.f32 %v836, %v4124
  %v4126 = vpop.f32.mrb[0].mxu0
  %v4127 = vpop.f32.mrb[0].mxu0
  %4128 = vdwg.mxu0
  %4129 = vmatprep.subr.bf16.mxu0 0
  %4130 = vmatpush1.bf16.msra.mxu0 %v4042
  %4131 = vmatprep.subr.bf16.mxu0 0
  %4132 = vmatpush1.bf16.msra.mxu0 %v4045
  %4133 = vmatprep.subr.bf16.mxu0 0
  %4134 = vmatpush1.bf16.msra.mxu0 %v4048
  %4135 = vmatprep.subr.bf16.mxu0 0
  %4136 = vmatpush1.bf16.msra.mxu0 %v4051
  %4137 = vmatprep.subr.bf16.mxu0 0
  %4138 = vmatpush1.bf16.msra.mxu0 %v4054
  %4139 = vmatprep.subr.bf16.mxu0 0
  %4140 = vmatpush1.bf16.msra.mxu0 %v4057
  %4141 = vmatprep.subr.bf16.mxu0 0
  %4142 = vmatpush1.bf16.msra.mxu0 %v4060
  %4143 = vmatprep.subr.bf16.mxu0 0
  %4144 = vmatpush1.bf16.msra.mxu0 %v4063
  %4145 = vmatprep.subr.bf16.mxu0 0
  %4146 = vmatpush1.bf16.msra.mxu0 0
  %4147 = vmatprep.subr.bf16.mxu0 0
  %4148 = vmatpush1.bf16.msra.mxu0 0
  %4149 = vmatprep.subr.bf16.mxu0 0
  %4150 = vmatpush1.bf16.msra.mxu0 0
  %4151 = vmatprep.subr.bf16.mxu0 0
  %4152 = vmatpush1.bf16.msra.mxu0 0
  %4153 = vmatprep.subr.bf16.mxu0 0
  %4154 = vmatpush1.bf16.msra.mxu0 0
  %4155 = vmatprep.subr.bf16.mxu0 0
  %4156 = vmatpush1.bf16.msra.mxu0 0
  %4157 = vmatprep.subr.bf16.mxu0 0
  %4158 = vmatpush1.bf16.msra.mxu0 0
  %4159 = vmatprep.subr.bf16.mxu0 0
  %4160 = vmatpush1.bf16.msra.mxu0 0
  %4161 = vmatprep.mubr.bf16.mxu0 0
  %4162 = vmatmul.mubr.bf16.gmra.mrb[0].mxu0 %v3569
  %v4163 = vpop.f32.mrb[0].mxu0
  %v4164 = vadd.f32 %v840, %v4163
  %v4165 = vpop.f32.mrb[0].mxu0
  %v4166 = vpop.f32.mrb[0].mxu0
  %v4167 = vpop.f32.mrb[0].mxu0
  %4168 = vdwg.mxu0
  %v4169 = vadd.f32 %v3925, %v4123
  %v4170 = vxor.u32 %v4169, 2147483648
  %v4171 = vmul.f32 %v4170, 1.442695
  %v4172 = vpow.pop %v4171
  %v4173 = vadd.f32 %v4172, 1.0
  %v4174 = vrcp.pop %v4173
  %v4175 = vmul.f32 1.0, %v4174
  %v4176 = vadd.f32 %v3926, %v4125
  %v4177 = vxor.u32 %v4176, 2147483648
  %v4178 = vmul.f32 %v4177, 1.442695
  %v4179 = vpow.pop %v4178
  %v4180 = vadd.f32 %v4179, 1.0
  %v4181 = vrcp.pop %v4180
  %v4182 = vmul.f32 1.0, %v4181
  %v4183 = vmul.f32 %v4175, %v4164
  %v4184 = vadd.f32 %v3927, %v4183
  %v4185 = vtanh.pop %v4184
  %v4186 = vsub.f32 1.0, %v4182
  %v4187 = vmul.f32 %v4186, %v4185
  %v4188 = vmul.f32 %v4182, %v3556
  %v4189 = vadd.f32 %v4187, %v4188
  %v4190 = vpack.c.bf16 %v4189, %v4189
  %v4191 = vld [vmem:[%s11] sm:$0xf]
  %v4192 = vld [vmem:[%s11 + $0x4] sm:$0xf]
  %v4193 = vld [vmem:[%s11 + $0x8] sm:$0xf]
  %v4194 = vld [vmem:[%s11 + $0xc] sm:$0xf]
  %v4195 = vld [vmem:[%s11 + $0x10] sm:$0xf]
  %v4196 = vld [vmem:[%s11 + $0x14] sm:$0xf]
  %v4197 = vld [vmem:[%s11 + $0x18] sm:$0xf]
  %v4198 = vld [vmem:[%s11 + $0x1c] sm:$0xf]
  %v4199 = vld [vmem:[%s11 + $0x20] sm:$0xf]
  %v4200 = vld [vmem:[%s11 + $0x24] sm:$0xf]
  %v4201 = vld [vmem:[%s11 + $0x28] sm:$0xf]
  %v4202 = vld [vmem:[%s11 + $0x2c] sm:$0xf]
  %v4203 = vld [vmem:[%s11 + $0x30] sm:$0xf]
  %v4204 = vld [vmem:[%s11 + $0x34] sm:$0xf]
  %v4205 = vld [vmem:[%s11 + $0x38] sm:$0xf]
  %v4206 = vld [vmem:[%s11 + $0x3c] sm:$0xf]
  %v4207 = vld [vmem:[%s11 + $0x40] sm:$0xf]
  %v4208 = vld [vmem:[%s11 + $0x44] sm:$0xf]
  %v4209 = vld [vmem:[%s11 + $0x48] sm:$0xf]
  %v4210 = vld [vmem:[%s11 + $0x4c] sm:$0xf]
  %v4211 = vld [vmem:[%s11 + $0x50] sm:$0xf]
  %v4212 = vld [vmem:[%s11 + $0x54] sm:$0xf]
  %v4213 = vld [vmem:[%s11 + $0x58] sm:$0xf]
  %v4214 = vld [vmem:[%s11 + $0x5c] sm:$0xf]
  %v4215 = vld [vmem:[%s11 + $0x60] sm:$0xf]
  %v4216 = vld [vmem:[%s11 + $0x64] sm:$0xf]
  %v4217 = vld [vmem:[%s11 + $0x68] sm:$0xf]
  %v4218 = vld [vmem:[%s11 + $0x6c] sm:$0xf]
  %v4219 = vld [vmem:[%s11 + $0x70] sm:$0xf]
  %v4220 = vld [vmem:[%s11 + $0x74] sm:$0xf]
  %v4221 = vld [vmem:[%s11 + $0x78] sm:$0xf]
  %v4222 = vld [vmem:[%s11 + $0x7c] sm:$0xf]
  %v4255 = vunpack.c.l.b16 %v4191
  %v4256 = vunpack.c.l.b16 %v4192
  %v4257 = vunpack.c.l.b16 %v4193
  %v4258 = vunpack.c.l.b16 %v4194
  %v4259 = vunpack.c.l.b16 %v4195
  %v4260 = vunpack.c.l.b16 %v4196
  %v4261 = vunpack.c.l.b16 %v4197
  %v4262 = vunpack.c.l.b16 %v4198
  %v4263 = vunpack.c.l.b16 %v4199
  %v4264 = vunpack.c.l.b16 %v4200
  %v4265 = vunpack.c.l.b16 %v4201
  %v4266 = vunpack.c.l.b16 %v4202
  %v4267 = vunpack.c.l.b16 %v4203
  %v4268 = vunpack.c.l.b16 %v4204
  %v4269 = vunpack.c.l.b16 %v4205
  %v4270 = vunpack.c.l.b16 %v4206
  %v4271 = vunpack.c.l.b16 %v4207
  %v4272 = vunpack.c.l.b16 %v4208
  %v4273 = vunpack.c.l.b16 %v4209
  %v4274 = vunpack.c.l.b16 %v4210
  %v4275 = vunpack.c.l.b16 %v4211
  %v4276 = vunpack.c.l.b16 %v4212
  %v4277 = vunpack.c.l.b16 %v4213
  %v4278 = vunpack.c.l.b16 %v4214
  %v4279 = vunpack.c.l.b16 %v4215
  %v4280 = vunpack.c.l.b16 %v4216
  %v4281 = vunpack.c.l.b16 %v4217
  %v4282 = vunpack.c.l.b16 %v4218
  %v4283 = vunpack.c.l.b16 %v4219
  %v4284 = vunpack.c.l.b16 %v4220
  %v4285 = vunpack.c.l.b16 %v4221
  %v4286 = vunpack.c.l.b16 %v4222
  %v4287 = vpack.c.b16 %v4256, %v4255
  %v4288 = vpack.c.b16 %v4258, %v4257
  %v4289 = vpack.c.b16 %v4260, %v4259
  %v4290 = vpack.c.b16 %v4262, %v4261
  %v4291 = vpack.c.b16 %v4264, %v4263
  %v4292 = vpack.c.b16 %v4266, %v4265
  %v4293 = vpack.c.b16 %v4268, %v4267
  %v4294 = vpack.c.b16 %v4270, %v4269
  %v4295 = vpack.c.b16 %v4272, %v4271
  %v4296 = vpack.c.b16 %v4274, %v4273
  %v4297 = vpack.c.b16 %v4276, %v4275
  %v4298 = vpack.c.b16 %v4278, %v4277
  %v4299 = vpack.c.b16 %v4280, %v4279
  %v4300 = vpack.c.b16 %v4282, %v4281
  %v4301 = vpack.c.b16 %v4284, %v4283
  %v4302 = vpack.c.b16 %v4286, %v4285
  %4319 = vmatprep.subr.bf16.mxu0 0
  %4320 = vmatpush1.bf16.msra.mxu0 %v4287
  %4321 = vmatprep.subr.bf16.mxu0 0
  %4322 = vmatpush1.bf16.msra.mxu0 %v4288
  %4323 = vmatprep.subr.bf16.mxu0 0
  %4324 = vmatpush1.bf16.msra.mxu0 %v4289
  %4325 = vmatprep.subr.bf16.mxu0 0
  %4326 = vmatpush1.bf16.msra.mxu0 %v4290
  %4327 = vmatprep.subr.bf16.mxu0 0
  %4328 = vmatpush1.bf16.msra.mxu0 %v4291
  %4329 = vmatprep.subr.bf16.mxu0 0
  %4330 = vmatpush1.bf16.msra.mxu0 %v4292
  %4331 = vmatprep.subr.bf16.mxu0 0
  %4332 = vmatpush1.bf16.msra.mxu0 %v4293
  %4333 = vmatprep.subr.bf16.mxu0 0
  %4334 = vmatpush1.bf16.msra.mxu0 %v4294
  %4335 = vmatprep.subr.bf16.mxu0 0
  %4336 = vmatpush1.bf16.msra.mxu0 %v4295
  %4337 = vmatprep.subr.bf16.mxu0 0
  %4338 = vmatpush1.bf16.msra.mxu0 %v4296
  %4339 = vmatprep.subr.bf16.mxu0 0
  %4340 = vmatpush1.bf16.msra.mxu0 %v4297
  %4341 = vmatprep.subr.bf16.mxu0 0
  %4342 = vmatpush1.bf16.msra.mxu0 %v4298
  %4343 = vmatprep.subr.bf16.mxu0 0
  %4344 = vmatpush1.bf16.msra.mxu0 %v4299
  %4345 = vmatprep.subr.bf16.mxu0 0
  %4346 = vmatpush1.bf16.msra.mxu0 %v4300
  %4347 = vmatprep.subr.bf16.mxu0 0
  %4348 = vmatpush1.bf16.msra.mxu0 %v4301
  %4349 = vmatprep.subr.bf16.mxu0 0
  %4350 = vmatpush1.bf16.msra.mxu0 %v4302
  %4351 = vmatprep.mubr.bf16.mxu0 %v3678
  %4352 = vmatmul.mubr.bf16.gmra.mrb[0].mxu0 %v4190
  %v4353 = vpop.f32.mrb[0].mxu0
  %v4354 = vadd.f32 %v849, %v4353
  %v4355 = vpop.f32.mrb[0].mxu0
  %v4356 = vpop.f32.mrb[0].mxu0
  %v4357 = vpop.f32.mrb[0].mxu0
  %4358 = vdwg.mxu0
  %4359 = vst [vmem:[%s13] sm:$0xff] %v4354
  %v4360 = vmul.f32 %v3559, %v4189
  %v4361 = vmul.f32 %v3560, %v4189
  %v4362 = vmul.f32 %v3561, %v4189
  %v4363 = vmul.f32 %v3562, %v4189
  %v4364 = vmul.f32 %v3563, %v4189
  %v4365 = vmul.f32 %v3564, %v4189
  %v4366 = vmul.f32 %v3565, %v4189
  %v4367 = vmul.f32 %v3566, %v4189
  %v4368 = vmul.f32 %v3567, %v4189
  %v4369 = vmul.f32 %v3568, %v4189
  %4370 = vadd.xlane.f32.xlu0 %v4360
  %v4371 = vpop.xlane.xlu0 %4370
  %4372 = vadd.xlane.f32.xlu0 %v4361
  %v4373 = vpop.xlane.xlu0 %4372
  %4374 = vadd.xlane.f32.xlu0 %v4362
  %v4375 = vpop.xlane.xlu0 %4374
  %4376 = vadd.xlane.f32.xlu0 %v4363
  %v4377 = vpop.xlane.xlu0 %4376
  %4378 = vadd.xlane.f32.xlu0 %v4364
  %v4379 = vpop.xlane.xlu0 %4378
  %4380 = vadd.xlane.f32.xlu0 %v4365
  %v4381 = vpop.xlane.xlu0 %4380
  %4382 = vadd.xlane.f32.xlu0 %v4366
  %v4383 = vpop.xlane.xlu0 %4382
  %4384 = vadd.xlane.f32.xlu0 %v4367
  %v4385 = vpop.xlane.xlu0 %4384
  %4386 = vadd.xlane.f32.xlu0 %v4368
  %v4387 = vpop.xlane.xlu0 %4386
  %4388 = vadd.xlane.f32.xlu0 %v4369
  %v4389 = vpop.xlane.xlu0 %4388
  %v4390 = vmax.f32 %v4371, %v4379
  %v4391 = vmax.f32 %v4373, %v4381
  %v4392 = vmax.f32 %v4375, %v4383
  %v4393 = vmax.f32 %v4377, %v4385
  %v4394 = vmax.f32 %v4390, %v4387
  %v4395 = vmax.f32 %v4391, %v4389
  %v4396 = vmax.f32 %v4394, %v4395
  %v4397 = vmax.f32 %v4392, %v4393
  %v4398 = vmax.f32 %v4396, %v4397
  %v4399 = vsub.f32 %v4371, %v4398
  %v4400 = vsub.f32 %v4373, %v4398
  %v4401 = vsub.f32 %v4375, %v4398
  %v4402 = vsub.f32 %v4377, %v4398
  %v4403 = vsub.f32 %v4379, %v4398
  %v4404 = vsub.f32 %v4381, %v4398
  %v4405 = vsub.f32 %v4383, %v4398
  %v4406 = vsub.f32 %v4385, %v4398
  %v4407 = vsub.f32 %v4387, %v4398
  %v4408 = vsub.f32 %v4389, %v4398
  %v4409 = vmul.f32 %v4399, 1.442695
  %v4410 = vpow.pop %v4409
  %v4411 = vmul.f32 %v4400, 1.442695
  %v4412 = vpow.pop %v4411
  %v4413 = vmul.f32 %v4401, 1.442695
  %v4414 = vpow.pop %v4413
  %v4415 = vmul.f32 %v4402, 1.442695
  %v4416 = vpow.pop %v4415
  %v4417 = vmul.f32 %v4403, 1.442695
  %v4418 = vpow.pop %v4417
  %v4419 = vmul.f32 %v4404, 1.442695
  %v4420 = vpow.pop %v4419
  %v4421 = vmul.f32 %v4405, 1.442695
  %v4422 = vpow.pop %v4421
  %v4423 = vmul.f32 %v4406, 1.442695
  %v4424 = vpow.pop %v4423
  %v4425 = vmul.f32 %v4407, 1.442695
  %v4426 = vpow.pop %v4425
  %v4427 = vmul.f32 %v4408, 1.442695
  %v4428 = vpow.pop %v4427
  %v4429 = vadd.f32 %v4410, %v4412
  %v4430 = vadd.f32 %v4429, %v4414
  %v4431 = vadd.f32 %v4430, %v4416
  %v4432 = vadd.f32 %v4431, %v4418
  %v4433 = vadd.f32 %v4432, %v4420
  %v4434 = vadd.f32 %v4433, %v4422
  %v4435 = vadd.f32 %v4434, %v4424
  %v4436 = vadd.f32 %v4435, %v4426
  %v4437 = vadd.f32 %v4436, %v4428
  %v4438 = vrcp.pop %v4437
  %v4439 = vmul.f32 %v4410, %v4438
  %v4440 = vmul.f32 %v4412, %v4438
  %v4441 = vmul.f32 %v4414, %v4438
  %v4442 = vmul.f32 %v4416, %v4438
  %v4443 = vmul.f32 %v4418, %v4438
  %v4444 = vmul.f32 %v4420, %v4438
  %v4445 = vmul.f32 %v4422, %v4438
  %v4446 = vmul.f32 %v4424, %v4438
  %v4447 = vmul.f32 %v4426, %v4438
  %v4448 = vmul.f32 %v4428, %v4438
  %v4449 = vmul.f32 %v4439, %v3559
  %v4450 = vmul.f32 %v4440, %v3560
  %v4451 = vmul.f32 %v4441, %v3561
  %v4452 = vmul.f32 %v4442, %v3562
  %v4453 = vmul.f32 %v4443, %v3563
  %v4454 = vmul.f32 %v4444, %v3564
  %v4455 = vmul.f32 %v4445, %v3565
  %v4456 = vmul.f32 %v4446, %v3566
  %v4457 = vmul.f32 %v4447, %v3567
  %v4458 = vmul.f32 %v4448, %v3568
  %v4459 = vadd.f32 %v4449, %v4450
  %v4460 = vadd.f32 %v4459, %v4451
  %v4461 = vadd.f32 %v4460, %v4452
  %v4462 = vadd.f32 %v4461, %v4453
  %v4463 = vadd.f32 %v4462, %v4454
  %v4464 = vadd.f32 %v4463, %v4455
  %v4465 = vadd.f32 %v4464, %v4456
  %v4466 = vadd.f32 %v4465, %v4457
  %v4467 = vadd.f32 %v4466, %v4458
  %v4468 = vpack.c.bf16 %v4467, %v4467
  %s4469 = smul.addr %s1120, 8
  %s4470 = scalar_lea.vmem [#allocation4], %s4469
  %v4471 = vld [vmem:[%s4470] sm:$0xff]
  %v4472 = vld [vmem:[%s4470 + $0x8] sm:$0xff]
  %v4473 = vld [vmem:[%s4470 + $0x10] sm:$0xff]
  %v4474 = vld [vmem:[%s7] sm:$0xff]
  %v4475 = vld [vmem:[%s7 + $0x8] sm:$0xf]
  %v4476 = vld [vmem:[%s7 + $0xc] sm:$0xff]
  %v4477 = vld [vmem:[%s7 + $0x14] sm:$0xf]
  %v4478 = vld [vmem:[%s7 + $0x18] sm:$0xff]
  %v4479 = vld [vmem:[%s7 + $0x20] sm:$0xf]
  %v4480 = vld [vmem:[%s7 + $0x24] sm:$0xff]
  %v4481 = vld [vmem:[%s7 + $0x2c] sm:$0xf]
  %v4482 = vld [vmem:[%s7 + $0x30] sm:$0xff]
  %v4483 = vld [vmem:[%s7 + $0x38] sm:$0xf]
  %v4484 = vld [vmem:[%s7 + $0x3c] sm:$0xff]
  %v4485 = vld [vmem:[%s7 + $0x44] sm:$0xf]
  %v4486 = vld [vmem:[%s7 + $0x48] sm:$0xff]
  %v4487 = vld [vmem:[%s7 + $0x50] sm:$0xf]
  %v4488 = vld [vmem:[%s7 + $0x54] sm:$0xff]
  %v4489 = vld [vmem:[%s7 + $0x5c] sm:$0xf]
  %v4490 = vld [vmem:[%s7 + $0x60] sm:$0xff]
  %v4491 = vld [vmem:[%s7 + $0x68] sm:$0xf]
  %v4492 = vld [vmem:[%s7 + $0x6c] sm:$0xff]
  %v4493 = vld [vmem:[%s7 + $0x74] sm:$0xf]
  %v4494 = vld [vmem:[%s7 + $0x78] sm:$0xff]
  %v4495 = vld [vmem:[%s7 + $0x80] sm:$0xf]
  %v4496 = vld [vmem:[%s7 + $0x84] sm:$0xff]
  %v4497 = vld [vmem:[%s7 + $0x8c] sm:$0xf]
  %v4498 = vld [vmem:[%s7 + $0x90] sm:$0xff]
  %v4499 = vld [vmem:[%s7 + $0x98] sm:$0xf]
  %v4500 = vld [vmem:[%s7 + $0x9c] sm:$0xff]
  %v4501 = vld [vmem:[%s7 + $0xa4] sm:$0xf]
  %v4502 = vld [vmem:[%s7 + $0xa8] sm:$0xff]
  %v4503 = vld [vmem:[%s7 + $0xb0] sm:$0xf]
  %v4504 = vld [vmem:[%s7 + $0xb4] sm:$0xff]
  %v4505 = vld [vmem:[%s7 + $0xbc] sm:$0xf]
  %v4538 = vunpack.c.l.b16 %v4474
  %v4539 = vunpack.c.h.b16 %v4474
  %v4540 = vunpack.c.l.b16 %v4475
  %v4541 = vunpack.c.l.b16 %v4476
  %v4542 = vunpack.c.h.b16 %v4476
  %v4543 = vunpack.c.l.b16 %v4477
  %v4544 = vunpack.c.l.b16 %v4478
  %v4545 = vunpack.c.h.b16 %v4478
  %v4546 = vunpack.c.l.b16 %v4479
  %v4547 = vunpack.c.l.b16 %v4480
  %v4548 = vunpack.c.h.b16 %v4480
  %v4549 = vunpack.c.l.b16 %v4481
  %v4550 = vunpack.c.l.b16 %v4482
  %v4551 = vunpack.c.h.b16 %v4482
  %v4552 = vunpack.c.l.b16 %v4483
  %v4553 = vunpack.c.l.b16 %v4484
  %v4554 = vunpack.c.h.b16 %v4484
  %v4555 = vunpack.c.l.b16 %v4485
  %v4556 = vunpack.c.l.b16 %v4486
  %v4557 = vunpack.c.h.b16 %v4486
  %v4558 = vunpack.c.l.b16 %v4487
  %v4559 = vunpack.c.l.b16 %v4488
  %v4560 = vunpack.c.h.b16 %v4488
  %v4561 = vunpack.c.l.b16 %v4489
  %v4562 = vunpack.c.l.b16 %v4490
  %v4563 = vunpack.c.h.b16 %v4490
  %v4564 = vunpack.c.l.b16 %v4491
  %v4565 = vunpack.c.l.b16 %v4492
  %v4566 = vunpack.c.h.b16 %v4492
  %v4567 = vunpack.c.l.b16 %v4493
  %v4568 = vunpack.c.l.b16 %v4494
  %v4569 = vunpack.c.h.b16 %v4494
  %v4570 = vunpack.c.l.b16 %v4495
  %v4571 = vunpack.c.l.b16 %v4496
  %v4572 = vunpack.c.h.b16 %v4496
  %v4573 = vunpack.c.l.b16 %v4497
  %v4574 = vunpack.c.l.b16 %v4498
  %v4575 = vunpack.c.h.b16 %v4498
  %v4576 = vunpack.c.l.b16 %v4499
  %v4577 = vunpack.c.l.b16 %v4500
  %v4578 = vunpack.c.h.b16 %v4500
  %v4579 = vunpack.c.l.b16 %v4501
  %v4580 = vunpack.c.l.b16 %v4502
  %v4581 = vunpack.c.h.b16 %v4502
  %v4582 = vunpack.c.l.b16 %v4503
  %v4583 = vunpack.c.l.b16 %v4504
  %v4584 = vunpack.c.h.b16 %v4504
  %v4585 = vunpack.c.l.b16 %v4505
  %v4586 = vpack.c.b16 %v4541, %v4538
  %v4587 = vpack.c.b16 %v4542, %v4539
  %v4588 = vpack.c.b16 %v4543, %v4540
  %v4589 = vpack.c.b16 %v4547, %v4544
  %v4590 = vpack.c.b16 %v4548, %v4545
  %v4591 = vpack.c.b16 %v4549, %v4546
  %v4592 = vpack.c.b16 %v4553, %v4550
  %v4593 = vpack.c.b16 %v4554, %v4551
  %v4594 = vpack.c.b16 %v4555, %v4552
  %v4595 = vpack.c.b16 %v4559, %v4556
  %v4596 = vpack.c.b16 %v4560, %v4557
  %v4597 = vpack.c.b16 %v4561, %v4558
  %v4598 = vpack.c.b16 %v4565, %v4562
  %v4599 = vpack.c.b16 %v4566, %v4563
  %v4600 = vpack.c.b16 %v4567, %v4564
  %v4601 = vpack.c.b16 %v4571, %v4568
  %v4602 = vpack.c.b16 %v4572, %v4569
  %v4603 = vpack.c.b16 %v4573, %v4570
  %v4604 = vpack.c.b16 %v4577, %v4574
  %v4605 = vpack.c.b16 %v4578, %v4575
  %v4606 = vpack.c.b16 %v4579, %v4576
  %v4607 = vpack.c.b16 %v4583, %v4580
  %v4608 = vpack.c.b16 %v4584, %v4581
  %v4609 = vpack.c.b16 %v4585, %v4582
  %4634 = vmatprep.subr.bf16.mxu0 %v4587
  %4635 = vmatpush1.bf16.msra.mxu0 %v4586
  %4636 = vmatprep.subr.bf16.mxu0 %v4590
  %4637 = vmatpush1.bf16.msra.mxu0 %v4589
  %4638 = vmatprep.subr.bf16.mxu0 %v4593
  %4639 = vmatpush1.bf16.msra.mxu0 %v4592
  %4640 = vmatprep.subr.bf16.mxu0 %v4596
  %4641 = vmatpush1.bf16.msra.mxu0 %v4595
  %4642 = vmatprep.subr.bf16.mxu0 %v4599
  %4643 = vmatpush1.bf16.msra.mxu0 %v4598
  %4644 = vmatprep.subr.bf16.mxu0 %v4602
  %4645 = vmatpush1.bf16.msra.mxu0 %v4601
  %4646 = vmatprep.subr.bf16.mxu0 %v4605
  %4647 = vmatpush1.bf16.msra.mxu0 %v4604
  %4648 = vmatprep.subr.bf16.mxu0 %v4608
  %4649 = vmatpush1.bf16.msra.mxu0 %v4607
  %4650 = vmatprep.subr.bf16.mxu0 0
  %4651 = vmatpush1.bf16.msra.mxu0 0
  %4652 = vmatprep.subr.bf16.mxu0 0
  %4653 = vmatpush1.bf16.msra.mxu0 0
  %4654 = vmatprep.subr.bf16.mxu0 0
  %4655 = vmatpush1.bf16.msra.mxu0 0
  %4656 = vmatprep.subr.bf16.mxu0 0
  %4657 = vmatpush1.bf16.msra.mxu0 0
  %4658 = vmatprep.subr.bf16.mxu0 0
  %4659 = vmatpush1.bf16.msra.mxu0 0
  %4660 = vmatprep.subr.bf16.mxu0 0
  %4661 = vmatpush1.bf16.msra.mxu0 0
  %4662 = vmatprep.subr.bf16.mxu0 0
  %4663 = vmatpush1.bf16.msra.mxu0 0
  %4664 = vmatprep.subr.bf16.mxu0 0
  %4665 = vmatpush1.bf16.msra.mxu0 0
  %4666 = vmatprep.mubr.bf16.mxu0 0
  %4667 = vmatmul.mubr.bf16.gmra.mrb[0].mxu0 %v4468
  %v4668 = vpop.f32.mrb[0].mxu0
  %v4669 = vadd.f32 0.0, %v4668
  %v4670 = vpop.f32.mrb[0].mxu0
  %v4671 = vadd.f32 0.0, %v4670
  %v4672 = vpop.f32.mrb[0].mxu0
  %v4673 = vpop.f32.mrb[0].mxu0
  %4674 = vdwg.mxu0
  %4675 = vmatprep.subr.bf16.mxu0 0
  %4676 = vmatpush1.bf16.msra.mxu0 %v4588
  %4677 = vmatprep.subr.bf16.mxu0 0
  %4678 = vmatpush1.bf16.msra.mxu0 %v4591
  %4679 = vmatprep.subr.bf16.mxu0 0
  %4680 = vmatpush1.bf16.msra.mxu0 %v4594
  %4681 = vmatprep.subr.bf16.mxu0 0
  %4682 = vmatpush1.bf16.msra.mxu0 %v4597
  %4683 = vmatprep.subr.bf16.mxu0 0
  %4684 = vmatpush1.bf16.msra.mxu0 %v4600
  %4685 = vmatprep.subr.bf16.mxu0 0
  %4686 = vmatpush1.bf16.msra.mxu0 %v4603
  %4687 = vmatprep.subr.bf16.mxu0 0
  %4688 = vmatpush1.bf16.msra.mxu0 %v4606
  %4689 = vmatprep.subr.bf16.mxu0 0
  %4690 = vmatpush1.bf16.msra.mxu0 %v4609
  %4691 = vmatprep.subr.bf16.mxu0 0
  %4692 = vmatpush1.bf16.msra.mxu0 0
  %4693 = vmatprep.subr.bf16.mxu0 0
  %4694 = vmatpush1.bf16.msra.mxu0 0
  %4695 = vmatprep.subr.bf16.mxu0 0
  %4696 = vmatpush1.bf16.msra.mxu0 0
  %4697 = vmatprep.subr.bf16.mxu0 0
  %4698 = vmatpush1.bf16.msra.mxu0 0
  %4699 = vmatprep.subr.bf16.mxu0 0
  %4700 = vmatpush1.bf16.msra.mxu0 0
  %4701 = vmatprep.subr.bf16.mxu0 0
  %4702 = vmatpush1.bf16.msra.mxu0 0
  %4703 = vmatprep.subr.bf16.mxu0 0
  %4704 = vmatpush1.bf16.msra.mxu0 0
  %4705 = vmatprep.subr.bf16.mxu0 0
  %4706 = vmatpush1.bf16.msra.mxu0 0
  %4707 = vmatprep.mubr.bf16.mxu0 0
  %4708 = vmatmul.mubr.bf16.gmra.mrb[0].mxu0 %v4468
  %v4709 = vpop.f32.mrb[0].mxu0
  %v4710 = vadd.f32 0.0, %v4709
  %v4711 = vpop.f32.mrb[0].mxu0
  %v4712 = vpop.f32.mrb[0].mxu0
  %v4713 = vpop.f32.mrb[0].mxu0
  %4714 = vdwg.mxu0
  %v4715 = vadd.f32 %v4471, %v4669
  %v4716 = vadd.f32 %v4472, %v4671
  %v4717 = vadd.f32 %v4473, %v4710
  %v4718 = vld [vmem:[%s8] sm:$0xff]
  %v4719 = vld [vmem:[%s8 + $0x8] sm:$0xf]
  %v4720 = vld [vmem:[%s8 + $0xc] sm:$0xff]
  %v4721 = vld [vmem:[%s8 + $0x14] sm:$0xf]
  %v4722 = vld [vmem:[%s8 + $0x18] sm:$0xff]
  %v4723 = vld [vmem:[%s8 + $0x20] sm:$0xf]
  %v4724 = vld [vmem:[%s8 + $0x24] sm:$0xff]
  %v4725 = vld [vmem:[%s8 + $0x2c] sm:$0xf]
  %v4726 = vld [vmem:[%s8 + $0x30] sm:$0xff]
  %v4727 = vld [vmem:[%s8 + $0x38] sm:$0xf]
  %v4728 = vld [vmem:[%s8 + $0x3c] sm:$0xff]
  %v4729 = vld [vmem:[%s8 + $0x44] sm:$0xf]
  %v4730 = vld [vmem:[%s8 + $0x48] sm:$0xff]
  %v4731 = vld [vmem:[%s8 + $0x50] sm:$0xf]
  %v4732 = vld [vmem:[%s8 + $0x54] sm:$0xff]
  %v4733 = vld [vmem:[%s8 + $0x5c] sm:$0xf]
  %v4734 = vld [vmem:[%s8 + $0x60] sm:$0xff]
  %v4735 = vld [vmem:[%s8 + $0x68] sm:$0xf]
  %v4736 = vld [vmem:[%s8 + $0x6c] sm:$0xff]
  %v4737 = vld [vmem:[%s8 + $0x74] sm:$0xf]
  %v4738 = vld [vmem:[%s8 + $0x78] sm:$0xff]
  %v4739 = vld [vmem:[%s8 + $0x80] sm:$0xf]
  %v4740 = vld [vmem:[%s8 + $0x84] sm:$0xff]
  %v4741 = vld [vmem:[%s8 + $0x8c] sm:$0xf]
  %v4742 = vld [vmem:[%s8 + $0x90] sm:$0xff]
  %v4743 = vld [vmem:[%s8 + $0x98] sm:$0xf]
  %v4744 = vld [vmem:[%s8 + $0x9c] sm:$0xff]
  %v4745 = vld [vmem:[%s8 + $0xa4] sm:$0xf]
  %v4746 = vld [vmem:[%s8 + $0xa8] sm:$0xff]
  %v4747 = vld [vmem:[%s8 + $0xb0] sm:$0xf]
  %v4748 = vld [vmem:[%s8 + $0xb4] sm:$0xff]
  %v4749 = vld [vmem:[%s8 + $0xbc] sm:$0xf]
  %v4782 = vunpack.c.l.b16 %v4718
  %v4783 = vunpack.c.h.b16 %v4718
  %v4784 = vunpack.c.l.b16 %v4719
  %v4785 = vunpack.c.l.b16 %v4720
  %v4786 = vunpack.c.h.b16 %v4720
  %v4787 = vunpack.c.l.b16 %v4721
  %v4788 = vunpack.c.l.b16 %v4722
  %v4789 = vunpack.c.h.b16 %v4722
  %v4790 = vunpack.c.l.b16 %v4723
  %v4791 = vunpack.c.l.b16 %v4724
  %v4792 = vunpack.c.h.b16 %v4724
  %v4793 = vunpack.c.l.b16 %v4725
  %v4794 = vunpack.c.l.b16 %v4726
  %v4795 = vunpack.c.h.b16 %v4726
  %v4796 = vunpack.c.l.b16 %v4727
  %v4797 = vunpack.c.l.b16 %v4728
  %v4798 = vunpack.c.h.b16 %v4728
  %v4799 = vunpack.c.l.b16 %v4729
  %v4800 = vunpack.c.l.b16 %v4730
  %v4801 = vunpack.c.h.b16 %v4730
  %v4802 = vunpack.c.l.b16 %v4731
  %v4803 = vunpack.c.l.b16 %v4732
  %v4804 = vunpack.c.h.b16 %v4732
  %v4805 = vunpack.c.l.b16 %v4733
  %v4806 = vunpack.c.l.b16 %v4734
  %v4807 = vunpack.c.h.b16 %v4734
  %v4808 = vunpack.c.l.b16 %v4735
  %v4809 = vunpack.c.l.b16 %v4736
  %v4810 = vunpack.c.h.b16 %v4736
  %v4811 = vunpack.c.l.b16 %v4737
  %v4812 = vunpack.c.l.b16 %v4738
  %v4813 = vunpack.c.h.b16 %v4738
  %v4814 = vunpack.c.l.b16 %v4739
  %v4815 = vunpack.c.l.b16 %v4740
  %v4816 = vunpack.c.h.b16 %v4740
  %v4817 = vunpack.c.l.b16 %v4741
  %v4818 = vunpack.c.l.b16 %v4742
  %v4819 = vunpack.c.h.b16 %v4742
  %v4820 = vunpack.c.l.b16 %v4743
  %v4821 = vunpack.c.l.b16 %v4744
  %v4822 = vunpack.c.h.b16 %v4744
  %v4823 = vunpack.c.l.b16 %v4745
  %v4824 = vunpack.c.l.b16 %v4746
  %v4825 = vunpack.c.h.b16 %v4746
  %v4826 = vunpack.c.l.b16 %v4747
  %v4827 = vunpack.c.l.b16 %v4748
  %v4828 = vunpack.c.h.b16 %v4748
  %v4829 = vunpack.c.l.b16 %v4749
  %v4830 = vpack.c.b16 %v4785, %v4782
  %v4831 = vpack.c.b16 %v4786, %v4783
  %v4832 = vpack.c.b16 %v4787, %v4784
  %v4833 = vpack.c.b16 %v4791, %v4788
  %v4834 = vpack.c.b16 %v4792, %v4789
  %v4835 = vpack.c.b16 %v4793, %v4790
  %v4836 = vpack.c.b16 %v4797, %v4794
  %v4837 = vpack.c.b16 %v4798, %v4795
  %v4838 = vpack.c.b16 %v4799, %v4796
  %v4839 = vpack.c.b16 %v4803, %v4800
  %v4840 = vpack.c.b16 %v4804, %v4801
  %v4841 = vpack.c.b16 %v4805, %v4802
  %v4842 = vpack.c.b16 %v4809, %v4806
  %v4843 = vpack.c.b16 %v4810, %v4807
  %v4844 = vpack.c.b16 %v4811, %v4808
  %v4845 = vpack.c.b16 %v4815, %v4812
  %v4846 = vpack.c.b16 %v4816, %v4813
  %v4847 = vpack.c.b16 %v4817, %v4814
  %v4848 = vpack.c.b16 %v4821, %v4818
  %v4849 = vpack.c.b16 %v4822, %v4819
  %v4850 = vpack.c.b16 %v4823, %v4820
  %v4851 = vpack.c.b16 %v4827, %v4824
  %v4852 = vpack.c.b16 %v4828, %v4825
  %v4853 = vpack.c.b16 %v4829, %v4826
  %4878 = vmatprep.subr.bf16.mxu0 %v4831
  %4879 = vmatpush1.bf16.msra.mxu0 %v4830
  %4880 = vmatprep.subr.bf16.mxu0 %v4834
  %4881 = vmatpush1.bf16.msra.mxu0 %v4833
  %4882 = vmatprep.subr.bf16.mxu0 %v4837
  %4883 = vmatpush1.bf16.msra.mxu0 %v4836
  %4884 = vmatprep.subr.bf16.mxu0 %v4840
  %4885 = vmatpush1.bf16.msra.mxu0 %v4839
  %4886 = vmatprep.subr.bf16.mxu0 %v4843
  %4887 = vmatpush1.bf16.msra.mxu0 %v4842
  %4888 = vmatprep.subr.bf16.mxu0 %v4846
  %4889 = vmatpush1.bf16.msra.mxu0 %v4845
  %4890 = vmatprep.subr.bf16.mxu0 %v4849
  %4891 = vmatpush1.bf16.msra.mxu0 %v4848
  %4892 = vmatprep.subr.bf16.mxu0 %v4852
  %4893 = vmatpush1.bf16.msra.mxu0 %v4851
  %4894 = vmatprep.subr.bf16.mxu0 0
  %4895 = vmatpush1.bf16.msra.mxu0 0
  %4896 = vmatprep.subr.bf16.mxu0 0
  %4897 = vmatpush1.bf16.msra.mxu0 0
  %4898 = vmatprep.subr.bf16.mxu0 0
  %4899 = vmatpush1.bf16.msra.mxu0 0
  %4900 = vmatprep.subr.bf16.mxu0 0
  %4901 = vmatpush1.bf16.msra.mxu0 0
  %4902 = vmatprep.subr.bf16.mxu0 0
  %4903 = vmatpush1.bf16.msra.mxu0 0
  %4904 = vmatprep.subr.bf16.mxu0 0
  %4905 = vmatpush1.bf16.msra.mxu0 0
  %4906 = vmatprep.subr.bf16.mxu0 0
  %4907 = vmatpush1.bf16.msra.mxu0 0
  %4908 = vmatprep.subr.bf16.mxu0 0
  %4909 = vmatpush1.bf16.msra.mxu0 0
  %4910 = vmatprep.mubr.bf16.mxu0 0
  %4911 = vmatmul.mubr.bf16.gmra.mrb[0].mxu0 %v4190
  %v4912 = vpop.f32.mrb[0].mxu0
  %v4913 = vadd.f32 %v832, %v4912
  %v4914 = vpop.f32.mrb[0].mxu0
  %v4915 = vadd.f32 %v836, %v4914
  %v4916 = vpop.f32.mrb[0].mxu0
  %v4917 = vpop.f32.mrb[0].mxu0
  %4918 = vdwg.mxu0
  %4919 = vmatprep.subr.bf16.mxu0 0
  %4920 = vmatpush1.bf16.msra.mxu0 %v4832
  %4921 = vmatprep.subr.bf16.mxu0 0
  %4922 = vmatpush1.bf16.msra.mxu0 %v4835
  %4923 = vmatprep.subr.bf16.mxu0 0
  %4924 = vmatpush1.bf16.msra.mxu0 %v4838
  %4925 = vmatprep.subr.bf16.mxu0 0
  %4926 = vmatpush1.bf16.msra.mxu0 %v4841
  %4927 = vmatprep.subr.bf16.mxu0 0
  %4928 = vmatpush1.bf16.msra.mxu0 %v4844
  %4929 = vmatprep.subr.bf16.mxu0 0
  %4930 = vmatpush1.bf16.msra.mxu0 %v4847
  %4931 = vmatprep.subr.bf16.mxu0 0
  %4932 = vmatpush1.bf16.msra.mxu0 %v4850
  %4933 = vmatprep.subr.bf16.mxu0 0
  %4934 = vmatpush1.bf16.msra.mxu0 %v4853
  %4935 = vmatprep.subr.bf16.mxu0 0
  %4936 = vmatpush1.bf16.msra.mxu0 0
  %4937 = vmatprep.subr.bf16.mxu0 0
  %4938 = vmatpush1.bf16.msra.mxu0 0
  %4939 = vmatprep.subr.bf16.mxu0 0
  %4940 = vmatpush1.bf16.msra.mxu0 0
  %4941 = vmatprep.subr.bf16.mxu0 0
  %4942 = vmatpush1.bf16.msra.mxu0 0
  %4943 = vmatprep.subr.bf16.mxu0 0
  %4944 = vmatpush1.bf16.msra.mxu0 0
  %4945 = vmatprep.subr.bf16.mxu0 0
  %4946 = vmatpush1.bf16.msra.mxu0 0
  %4947 = vmatprep.subr.bf16.mxu0 0
  %4948 = vmatpush1.bf16.msra.mxu0 0
  %4949 = vmatprep.subr.bf16.mxu0 0
  %4950 = vmatpush1.bf16.msra.mxu0 0
  %4951 = vmatprep.mubr.bf16.mxu0 0
  %4952 = vmatmul.mubr.bf16.gmra.mrb[0].mxu0 %v4190
  %v4953 = vpop.f32.mrb[0].mxu0
  %v4954 = vadd.f32 %v840, %v4953
  %v4955 = vpop.f32.mrb[0].mxu0
  %v4956 = vpop.f32.mrb[0].mxu0
  %v4957 = vpop.f32.mrb[0].mxu0
  %4958 = vdwg.mxu0
  %v4959 = vadd.f32 %v4715, %v4913
  %v4960 = vxor.u32 %v4959, 2147483648
  %v4961 = vmul.f32 %v4960, 1.442695
  %v4962 = vpow.pop %v4961
  %v4963 = vadd.f32 %v4962, 1.0
  %v4964 = vrcp.pop %v4963
  %v4965 = vmul.f32 1.0, %v4964
  %v4966 = vadd.f32 %v4716, %v4915
  %v4967 = vxor.u32 %v4966, 2147483648
  %v4968 = vmul.f32 %v4967, 1.442695
  %v4969 = vpow.pop %v4968
  %v4970 = vadd.f32 %v4969, 1.0
  %v4971 = vrcp.pop %v4970
  %v4972 = vmul.f32 1.0, %v4971
  %v4973 = vmul.f32 %v4965, %v4954
  %v4974 = vadd.f32 %v4717, %v4973
  %v4975 = vtanh.pop %v4974
  %v4976 = vsub.f32 1.0, %v4972
  %v4977 = vmul.f32 %v4976, %v4975
  %v4978 = vmul.f32 %v4972, %v4189
  %v4979 = vadd.f32 %v4977, %v4978
  %v4980 = vpack.c.bf16 %v4979, %v4979
  %v4981 = vld [vmem:[%s11] sm:$0xf]
  %v4982 = vld [vmem:[%s11 + $0x4] sm:$0xf]
  %v4983 = vld [vmem:[%s11 + $0x8] sm:$0xf]
  %v4984 = vld [vmem:[%s11 + $0xc] sm:$0xf]
  %v4985 = vld [vmem:[%s11 + $0x10] sm:$0xf]
  %v4986 = vld [vmem:[%s11 + $0x14] sm:$0xf]
  %v4987 = vld [vmem:[%s11 + $0x18] sm:$0xf]
  %v4988 = vld [vmem:[%s11 + $0x1c] sm:$0xf]
  %v4989 = vld [vmem:[%s11 + $0x20] sm:$0xf]
  %v4990 = vld [vmem:[%s11 + $0x24] sm:$0xf]
  %v4991 = vld [vmem:[%s11 + $0x28] sm:$0xf]
  %v4992 = vld [vmem:[%s11 + $0x2c] sm:$0xf]
  %v4993 = vld [vmem:[%s11 + $0x30] sm:$0xf]
  %v4994 = vld [vmem:[%s11 + $0x34] sm:$0xf]
  %v4995 = vld [vmem:[%s11 + $0x38] sm:$0xf]
  %v4996 = vld [vmem:[%s11 + $0x3c] sm:$0xf]
  %v4997 = vld [vmem:[%s11 + $0x40] sm:$0xf]
  %v4998 = vld [vmem:[%s11 + $0x44] sm:$0xf]
  %v4999 = vld [vmem:[%s11 + $0x48] sm:$0xf]
  %v5000 = vld [vmem:[%s11 + $0x4c] sm:$0xf]
  %v5001 = vld [vmem:[%s11 + $0x50] sm:$0xf]
  %v5002 = vld [vmem:[%s11 + $0x54] sm:$0xf]
  %v5003 = vld [vmem:[%s11 + $0x58] sm:$0xf]
  %v5004 = vld [vmem:[%s11 + $0x5c] sm:$0xf]
  %v5005 = vld [vmem:[%s11 + $0x60] sm:$0xf]
  %v5006 = vld [vmem:[%s11 + $0x64] sm:$0xf]
  %v5007 = vld [vmem:[%s11 + $0x68] sm:$0xf]
  %v5008 = vld [vmem:[%s11 + $0x6c] sm:$0xf]
  %v5009 = vld [vmem:[%s11 + $0x70] sm:$0xf]
  %v5010 = vld [vmem:[%s11 + $0x74] sm:$0xf]
  %v5011 = vld [vmem:[%s11 + $0x78] sm:$0xf]
  %v5012 = vld [vmem:[%s11 + $0x7c] sm:$0xf]
  %v5045 = vunpack.c.l.b16 %v4981
  %v5046 = vunpack.c.l.b16 %v4982
  %v5047 = vunpack.c.l.b16 %v4983
  %v5048 = vunpack.c.l.b16 %v4984
  %v5049 = vunpack.c.l.b16 %v4985
  %v5050 = vunpack.c.l.b16 %v4986
  %v5051 = vunpack.c.l.b16 %v4987
  %v5052 = vunpack.c.l.b16 %v4988
  %v5053 = vunpack.c.l.b16 %v4989
  %v5054 = vunpack.c.l.b16 %v4990
  %v5055 = vunpack.c.l.b16 %v4991
  %v5056 = vunpack.c.l.b16 %v4992
  %v5057 = vunpack.c.l.b16 %v4993
  %v5058 = vunpack.c.l.b16 %v4994
  %v5059 = vunpack.c.l.b16 %v4995
  %v5060 = vunpack.c.l.b16 %v4996
  %v5061 = vunpack.c.l.b16 %v4997
  %v5062 = vunpack.c.l.b16 %v4998
  %v5063 = vunpack.c.l.b16 %v4999
  %v5064 = vunpack.c.l.b16 %v5000
  %v5065 = vunpack.c.l.b16 %v5001
  %v5066 = vunpack.c.l.b16 %v5002
  %v5067 = vunpack.c.l.b16 %v5003
  %v5068 = vunpack.c.l.b16 %v5004
  %v5069 = vunpack.c.l.b16 %v5005
  %v5070 = vunpack.c.l.b16 %v5006
  %v5071 = vunpack.c.l.b16 %v5007
  %v5072 = vunpack.c.l.b16 %v5008
  %v5073 = vunpack.c.l.b16 %v5009
  %v5074 = vunpack.c.l.b16 %v5010
  %v5075 = vunpack.c.l.b16 %v5011
  %v5076 = vunpack.c.l.b16 %v5012
  %v5077 = vpack.c.b16 %v5046, %v5045
  %v5078 = vpack.c.b16 %v5048, %v5047
  %v5079 = vpack.c.b16 %v5050, %v5049
  %v5080 = vpack.c.b16 %v5052, %v5051
  %v5081 = vpack.c.b16 %v5054, %v5053
  %v5082 = vpack.c.b16 %v5056, %v5055
  %v5083 = vpack.c.b16 %v5058, %v5057
  %v5084 = vpack.c.b16 %v5060, %v5059
  %v5085 = vpack.c.b16 %v5062, %v5061
  %v5086 = vpack.c.b16 %v5064, %v5063
  %v5087 = vpack.c.b16 %v5066, %v5065
  %v5088 = vpack.c.b16 %v5068, %v5067
  %v5089 = vpack.c.b16 %v5070, %v5069
  %v5090 = vpack.c.b16 %v5072, %v5071
  %v5091 = vpack.c.b16 %v5074, %v5073
  %v5092 = vpack.c.b16 %v5076, %v5075
  %5109 = vmatprep.subr.bf16.mxu0 0
  %5110 = vmatpush1.bf16.msra.mxu0 %v5077
  %5111 = vmatprep.subr.bf16.mxu0 0
  %5112 = vmatpush1.bf16.msra.mxu0 %v5078
  %5113 = vmatprep.subr.bf16.mxu0 0
  %5114 = vmatpush1.bf16.msra.mxu0 %v5079
  %5115 = vmatprep.subr.bf16.mxu0 0
  %5116 = vmatpush1.bf16.msra.mxu0 %v5080
  %5117 = vmatprep.subr.bf16.mxu0 0
  %5118 = vmatpush1.bf16.msra.mxu0 %v5081
  %5119 = vmatprep.subr.bf16.mxu0 0
  %5120 = vmatpush1.bf16.msra.mxu0 %v5082
  %5121 = vmatprep.subr.bf16.mxu0 0
  %5122 = vmatpush1.bf16.msra.mxu0 %v5083
  %5123 = vmatprep.subr.bf16.mxu0 0
  %5124 = vmatpush1.bf16.msra.mxu0 %v5084
  %5125 = vmatprep.subr.bf16.mxu0 0
  %5126 = vmatpush1.bf16.msra.mxu0 %v5085
  %5127 = vmatprep.subr.bf16.mxu0 0
  %5128 = vmatpush1.bf16.msra.mxu0 %v5086
  %5129 = vmatprep.subr.bf16.mxu0 0
  %5130 = vmatpush1.bf16.msra.mxu0 %v5087
  %5131 = vmatprep.subr.bf16.mxu0 0
  %5132 = vmatpush1.bf16.msra.mxu0 %v5088
  %5133 = vmatprep.subr.bf16.mxu0 0
  %5134 = vmatpush1.bf16.msra.mxu0 %v5089
  %5135 = vmatprep.subr.bf16.mxu0 0
  %5136 = vmatpush1.bf16.msra.mxu0 %v5090
  %5137 = vmatprep.subr.bf16.mxu0 0
  %5138 = vmatpush1.bf16.msra.mxu0 %v5091
  %5139 = vmatprep.subr.bf16.mxu0 0
  %5140 = vmatpush1.bf16.msra.mxu0 %v5092
  %5141 = vmatprep.mubr.bf16.mxu0 %v4468
  %5142 = vmatmul.mubr.bf16.gmra.mrb[0].mxu0 %v4980
  %v5143 = vpop.f32.mrb[0].mxu0
  %v5144 = vadd.f32 %v849, %v5143
  %v5145 = vpop.f32.mrb[0].mxu0
  %v5146 = vpop.f32.mrb[0].mxu0
  %v5147 = vpop.f32.mrb[0].mxu0
  %5148 = vdwg.mxu0
  %s5149 = scalar_lea.vmem %s13, 8
  %5150 = vst [vmem:[%s5149] sm:$0xff] %v5144
  %v5151 = vmul.f32 %v3559, %v4979
  %v5152 = vmul.f32 %v3560, %v4979
  %v5153 = vmul.f32 %v3561, %v4979
  %v5154 = vmul.f32 %v3562, %v4979
  %v5155 = vmul.f32 %v3563, %v4979
  %v5156 = vmul.f32 %v3564, %v4979
  %v5157 = vmul.f32 %v3565, %v4979
  %v5158 = vmul.f32 %v3566, %v4979
  %v5159 = vmul.f32 %v3567, %v4979
  %v5160 = vmul.f32 %v3568, %v4979
  %5161 = vadd.xlane.f32.xlu0 %v5151
  %v5162 = vpop.xlane.xlu0 %5161
  %5163 = vadd.xlane.f32.xlu0 %v5152
  %v5164 = vpop.xlane.xlu0 %5163
  %5165 = vadd.xlane.f32.xlu0 %v5153
  %v5166 = vpop.xlane.xlu0 %5165
  %5167 = vadd.xlane.f32.xlu0 %v5154
  %v5168 = vpop.xlane.xlu0 %5167
  %5169 = vadd.xlane.f32.xlu0 %v5155
  %v5170 = vpop.xlane.xlu0 %5169
  %5171 = vadd.xlane.f32.xlu0 %v5156
  %v5172 = vpop.xlane.xlu0 %5171
  %5173 = vadd.xlane.f32.xlu0 %v5157
  %v5174 = vpop.xlane.xlu0 %5173
  %5175 = vadd.xlane.f32.xlu0 %v5158
  %v5176 = vpop.xlane.xlu0 %5175
  %5177 = vadd.xlane.f32.xlu0 %v5159
  %v5178 = vpop.xlane.xlu0 %5177
  %5179 = vadd.xlane.f32.xlu0 %v5160
  %v5180 = vpop.xlane.xlu0 %5179
  %v5181 = vmax.f32 %v5162, %v5170
  %v5182 = vmax.f32 %v5164, %v5172
  %v5183 = vmax.f32 %v5166, %v5174
  %v5184 = vmax.f32 %v5168, %v5176
  %v5185 = vmax.f32 %v5181, %v5178
  %v5186 = vmax.f32 %v5182, %v5180
  %v5187 = vmax.f32 %v5185, %v5186
  %v5188 = vmax.f32 %v5183, %v5184
  %v5189 = vmax.f32 %v5187, %v5188
  %v5190 = vsub.f32 %v5162, %v5189
  %v5191 = vsub.f32 %v5164, %v5189
  %v5192 = vsub.f32 %v5166, %v5189
  %v5193 = vsub.f32 %v5168, %v5189
  %v5194 = vsub.f32 %v5170, %v5189
  %v5195 = vsub.f32 %v5172, %v5189
  %v5196 = vsub.f32 %v5174, %v5189
  %v5197 = vsub.f32 %v5176, %v5189
  %v5198 = vsub.f32 %v5178, %v5189
  %v5199 = vsub.f32 %v5180, %v5189
  %v5200 = vmul.f32 %v5190, 1.442695
  %v5201 = vpow.pop %v5200
  %v5202 = vmul.f32 %v5191, 1.442695
  %v5203 = vpow.pop %v5202
  %v5204 = vmul.f32 %v5192, 1.442695
  %v5205 = vpow.pop %v5204
  %v5206 = vmul.f32 %v5193, 1.442695
  %v5207 = vpow.pop %v5206
  %v5208 = vmul.f32 %v5194, 1.442695
  %v5209 = vpow.pop %v5208
  %v5210 = vmul.f32 %v5195, 1.442695
  %v5211 = vpow.pop %v5210
  %v5212 = vmul.f32 %v5196, 1.442695
  %v5213 = vpow.pop %v5212
  %v5214 = vmul.f32 %v5197, 1.442695
  %v5215 = vpow.pop %v5214
  %v5216 = vmul.f32 %v5198, 1.442695
  %v5217 = vpow.pop %v5216
  %v5218 = vmul.f32 %v5199, 1.442695
  %v5219 = vpow.pop %v5218
  %v5220 = vadd.f32 %v5201, %v5203
  %v5221 = vadd.f32 %v5220, %v5205
  %v5222 = vadd.f32 %v5221, %v5207
  %v5223 = vadd.f32 %v5222, %v5209
  %v5224 = vadd.f32 %v5223, %v5211
  %v5225 = vadd.f32 %v5224, %v5213
  %v5226 = vadd.f32 %v5225, %v5215
  %v5227 = vadd.f32 %v5226, %v5217
  %v5228 = vadd.f32 %v5227, %v5219
  %v5229 = vrcp.pop %v5228
  %v5230 = vmul.f32 %v5201, %v5229
  %v5231 = vmul.f32 %v5203, %v5229
  %v5232 = vmul.f32 %v5205, %v5229
  %v5233 = vmul.f32 %v5207, %v5229
  %v5234 = vmul.f32 %v5209, %v5229
  %v5235 = vmul.f32 %v5211, %v5229
  %v5236 = vmul.f32 %v5213, %v5229
  %v5237 = vmul.f32 %v5215, %v5229
  %v5238 = vmul.f32 %v5217, %v5229
  %v5239 = vmul.f32 %v5219, %v5229
  %v5240 = vmul.f32 %v5230, %v3559
  %v5241 = vmul.f32 %v5231, %v3560
  %v5242 = vmul.f32 %v5232, %v3561
  %v5243 = vmul.f32 %v5233, %v3562
  %v5244 = vmul.f32 %v5234, %v3563
  %v5245 = vmul.f32 %v5235, %v3564
  %v5246 = vmul.f32 %v5236, %v3565
  %v5247 = vmul.f32 %v5237, %v3566
  %v5248 = vmul.f32 %v5238, %v3567
  %v5249 = vmul.f32 %v5239, %v3568
  %v5250 = vadd.f32 %v5240, %v5241
  %v5251 = vadd.f32 %v5250, %v5242
  %v5252 = vadd.f32 %v5251, %v5243
  %v5253 = vadd.f32 %v5252, %v5244
  %v5254 = vadd.f32 %v5253, %v5245
  %v5255 = vadd.f32 %v5254, %v5246
  %v5256 = vadd.f32 %v5255, %v5247
  %v5257 = vadd.f32 %v5256, %v5248
  %v5258 = vadd.f32 %v5257, %v5249
  %v5259 = vpack.c.bf16 %v5258, %v5258
  %s5260 = smul.addr %s1391, 8
  %s5261 = scalar_lea.vmem [#allocation4], %s5260
  %v5262 = vld [vmem:[%s5261] sm:$0xff]
  %v5263 = vld [vmem:[%s5261 + $0x8] sm:$0xff]
  %v5264 = vld [vmem:[%s5261 + $0x10] sm:$0xff]
  %v5265 = vld [vmem:[%s7] sm:$0xff]
  %v5266 = vld [vmem:[%s7 + $0x8] sm:$0xf]
  %v5267 = vld [vmem:[%s7 + $0xc] sm:$0xff]
  %v5268 = vld [vmem:[%s7 + $0x14] sm:$0xf]
  %v5269 = vld [vmem:[%s7 + $0x18] sm:$0xff]
  %v5270 = vld [vmem:[%s7 + $0x20] sm:$0xf]
  %v5271 = vld [vmem:[%s7 + $0x24] sm:$0xff]
  %v5272 = vld [vmem:[%s7 + $0x2c] sm:$0xf]
  %v5273 = vld [vmem:[%s7 + $0x30] sm:$0xff]
  %v5274 = vld [vmem:[%s7 + $0x38] sm:$0xf]
  %v5275 = vld [vmem:[%s7 + $0x3c] sm:$0xff]
  %v5276 = vld [vmem:[%s7 + $0x44] sm:$0xf]
  %v5277 = vld [vmem:[%s7 + $0x48] sm:$0xff]
  %v5278 = vld [vmem:[%s7 + $0x50] sm:$0xf]
  %v5279 = vld [vmem:[%s7 + $0x54] sm:$0xff]
  %v5280 = vld [vmem:[%s7 + $0x5c] sm:$0xf]
  %v5281 = vld [vmem:[%s7 + $0x60] sm:$0xff]
  %v5282 = vld [vmem:[%s7 + $0x68] sm:$0xf]
  %v5283 = vld [vmem:[%s7 + $0x6c] sm:$0xff]
  %v5284 = vld [vmem:[%s7 + $0x74] sm:$0xf]
  %v5285 = vld [vmem:[%s7 + $0x78] sm:$0xff]
  %v5286 = vld [vmem:[%s7 + $0x80] sm:$0xf]
  %v5287 = vld [vmem:[%s7 + $0x84] sm:$0xff]
  %v5288 = vld [vmem:[%s7 + $0x8c] sm:$0xf]
  %v5289 = vld [vmem:[%s7 + $0x90] sm:$0xff]
  %v5290 = vld [vmem:[%s7 + $0x98] sm:$0xf]
  %v5291 = vld [vmem:[%s7 + $0x9c] sm:$0xff]
  %v5292 = vld [vmem:[%s7 + $0xa4] sm:$0xf]
  %v5293 = vld [vmem:[%s7 + $0xa8] sm:$0xff]
  %v5294 = vld [vmem:[%s7 + $0xb0] sm:$0xf]
  %v5295 = vld [vmem:[%s7 + $0xb4] sm:$0xff]
  %v5296 = vld [vmem:[%s7 + $0xbc] sm:$0xf]
  %v5329 = vunpack.c.l.b16 %v5265
  %v5330 = vunpack.c.h.b16 %v5265
  %v5331 = vunpack.c.l.b16 %v5266
  %v5332 = vunpack.c.l.b16 %v5267
  %v5333 = vunpack.c.h.b16 %v5267
  %v5334 = vunpack.c.l.b16 %v5268
  %v5335 = vunpack.c.l.b16 %v5269
  %v5336 = vunpack.c.h.b16 %v5269
  %v5337 = vunpack.c.l.b16 %v5270
  %v5338 = vunpack.c.l.b16 %v5271
  %v5339 = vunpack.c.h.b16 %v5271
  %v5340 = vunpack.c.l.b16 %v5272
  %v5341 = vunpack.c.l.b16 %v5273
  %v5342 = vunpack.c.h.b16 %v5273
  %v5343 = vunpack.c.l.b16 %v5274
  %v5344 = vunpack.c.l.b16 %v5275
  %v5345 = vunpack.c.h.b16 %v5275
  %v5346 = vunpack.c.l.b16 %v5276
  %v5347 = vunpack.c.l.b16 %v5277
  %v5348 = vunpack.c.h.b16 %v5277
  %v5349 = vunpack.c.l.b16 %v5278
  %v5350 = vunpack.c.l.b16 %v5279
  %v5351 = vunpack.c.h.b16 %v5279
  %v5352 = vunpack.c.l.b16 %v5280
  %v5353 = vunpack.c.l.b16 %v5281
  %v5354 = vunpack.c.h.b16 %v5281
  %v5355 = vunpack.c.l.b16 %v5282
  %v5356 = vunpack.c.l.b16 %v5283
  %v5357 = vunpack.c.h.b16 %v5283
  %v5358 = vunpack.c.l.b16 %v5284
  %v5359 = vunpack.c.l.b16 %v5285
  %v5360 = vunpack.c.h.b16 %v5285
  %v5361 = vunpack.c.l.b16 %v5286
  %v5362 = vunpack.c.l.b16 %v5287
  %v5363 = vunpack.c.h.b16 %v5287
  %v5364 = vunpack.c.l.b16 %v5288
  %v5365 = vunpack.c.l.b16 %v5289
  %v5366 = vunpack.c.h.b16 %v5289
  %v5367 = vunpack.c.l.b16 %v5290
  %v5368 = vunpack.c.l.b16 %v5291
  %v5369 = vunpack.c.h.b16 %v5291
  %v5370 = vunpack.c.l.b16 %v5292
  %v5371 = vunpack.c.l.b16 %v5293
  %v5372 = vunpack.c.h.b16 %v5293
  %v5373 = vunpack.c.l.b16 %v5294
  %v5374 = vunpack.c.l.b16 %v5295
  %v5375 = vunpack.c.h.b16 %v5295
  %v5376 = vunpack.c.l.b16 %v5296
  %v5377 = vpack.c.b16 %v5332, %v5329
  %v5378 = vpack.c.b16 %v5333, %v5330
  %v5379 = vpack.c.b16 %v5334, %v5331
  %v5380 = vpack.c.b16 %v5338, %v5335
  %v5381 = vpack.c.b16 %v5339, %v5336
  %v5382 = vpack.c.b16 %v5340, %v5337
  %v5383 = vpack.c.b16 %v5344, %v5341
  %v5384 = vpack.c.b16 %v5345, %v5342
  %v5385 = vpack.c.b16 %v5346, %v5343
  %v5386 = vpack.c.b16 %v5350, %v5347
  %v5387 = vpack.c.b16 %v5351, %v5348
  %v5388 = vpack.c.b16 %v5352, %v5349
  %v5389 = vpack.c.b16 %v5356, %v5353
  %v5390 = vpack.c.b16 %v5357, %v5354
  %v5391 = vpack.c.b16 %v5358, %v5355
  %v5392 = vpack.c.b16 %v5362, %v5359
  %v5393 = vpack.c.b16 %v5363, %v5360
  %v5394 = vpack.c.b16 %v5364, %v5361
  %v5395 = vpack.c.b16 %v5368, %v5365
  %v5396 = vpack.c.b16 %v5369, %v5366
  %v5397 = vpack.c.b16 %v5370, %v5367
  %v5398 = vpack.c.b16 %v5374, %v5371
  %v5399 = vpack.c.b16 %v5375, %v5372
  %v5400 = vpack.c.b16 %v5376, %v5373
  %5425 = vmatprep.subr.bf16.mxu0 %v5378
  %5426 = vmatpush1.bf16.msra.mxu0 %v5377
  %5427 = vmatprep.subr.bf16.mxu0 %v5381
  %5428 = vmatpush1.bf16.msra.mxu0 %v5380
  %5429 = vmatprep.subr.bf16.mxu0 %v5384
  %5430 = vmatpush1.bf16.msra.mxu0 %v5383
  %5431 = vmatprep.subr.bf16.mxu0 %v5387
  %5432 = vmatpush1.bf16.msra.mxu0 %v5386
  %5433 = vmatprep.subr.bf16.mxu0 %v5390
  %5434 = vmatpush1.bf16.msra.mxu0 %v5389
  %5435 = vmatprep.subr.bf16.mxu0 %v5393
  %5436 = vmatpush1.bf16.msra.mxu0 %v5392
  %5437 = vmatprep.subr.bf16.mxu0 %v5396
  %5438 = vmatpush1.bf16.msra.mxu0 %v5395
  %5439 = vmatprep.subr.bf16.mxu0 %v5399
  %5440 = vmatpush1.bf16.msra.mxu0 %v5398
  %5441 = vmatprep.subr.bf16.mxu0 0
  %5442 = vmatpush1.bf16.msra.mxu0 0
  %5443 = vmatprep.subr.bf16.mxu0 0
  %5444 = vmatpush1.bf16.msra.mxu0 0
  %5445 = vmatprep.subr.bf16.mxu0 0
  %5446 = vmatpush1.bf16.msra.mxu0 0
  %5447 = vmatprep.subr.bf16.mxu0 0
  %5448 = vmatpush1.bf16.msra.mxu0 0
  %5449 = vmatprep.subr.bf16.mxu0 0
  %5450 = vmatpush1.bf16.msra.mxu0 0
  %5451 = vmatprep.subr.bf16.mxu0 0
  %5452 = vmatpush1.bf16.msra.mxu0 0
  %5453 = vmatprep.subr.bf16.mxu0 0
  %5454 = vmatpush1.bf16.msra.mxu0 0
  %5455 = vmatprep.subr.bf16.mxu0 0
  %5456 = vmatpush1.bf16.msra.mxu0 0
  %5457 = vmatprep.mubr.bf16.mxu0 0
  %5458 = vmatmul.mubr.bf16.gmra.mrb[0].mxu0 %v5259
  %v5459 = vpop.f32.mrb[0].mxu0
  %v5460 = vadd.f32 0.0, %v5459
  %v5461 = vpop.f32.mrb[0].mxu0
  %v5462 = vadd.f32 0.0, %v5461
  %v5463 = vpop.f32.mrb[0].mxu0
  %v5464 = vpop.f32.mrb[0].mxu0
  %5465 = vdwg.mxu0
  %5466 = vmatprep.subr.bf16.mxu0 0
  %5467 = vmatpush1.bf16.msra.mxu0 %v5379
  %5468 = vmatprep.subr.bf16.mxu0 0
  %5469 = vmatpush1.bf16.msra.mxu0 %v5382
  %5470 = vmatprep.subr.bf16.mxu0 0
  %5471 = vmatpush1.bf16.msra.mxu0 %v5385
  %5472 = vmatprep.subr.bf16.mxu0 0
  %5473 = vmatpush1.bf16.msra.mxu0 %v5388
  %5474 = vmatprep.subr.bf16.mxu0 0
  %5475 = vmatpush1.bf16.msra.mxu0 %v5391
  %5476 = vmatprep.subr.bf16.mxu0 0
  %5477 = vmatpush1.bf16.msra.mxu0 %v5394
  %5478 = vmatprep.subr.bf16.mxu0 0
  %5479 = vmatpush1.bf16.msra.mxu0 %v5397
  %5480 = vmatprep.subr.bf16.mxu0 0
  %5481 = vmatpush1.bf16.msra.mxu0 %v5400
  %5482 = vmatprep.subr.bf16.mxu0 0
  %5483 = vmatpush1.bf16.msra.mxu0 0
  %5484 = vmatprep.subr.bf16.mxu0 0
  %5485 = vmatpush1.bf16.msra.mxu0 0
  %5486 = vmatprep.subr.bf16.mxu0 0
  %5487 = vmatpush1.bf16.msra.mxu0 0
  %5488 = vmatprep.subr.bf16.mxu0 0
  %5489 = vmatpush1.bf16.msra.mxu0 0
  %5490 = vmatprep.subr.bf16.mxu0 0
  %5491 = vmatpush1.bf16.msra.mxu0 0
  %5492 = vmatprep.subr.bf16.mxu0 0
  %5493 = vmatpush1.bf16.msra.mxu0 0
  %5494 = vmatprep.subr.bf16.mxu0 0
  %5495 = vmatpush1.bf16.msra.mxu0 0
  %5496 = vmatprep.subr.bf16.mxu0 0
  %5497 = vmatpush1.bf16.msra.mxu0 0
  %5498 = vmatprep.mubr.bf16.mxu0 0
  %5499 = vmatmul.mubr.bf16.gmra.mrb[0].mxu0 %v5259
  %v5500 = vpop.f32.mrb[0].mxu0
  %v5501 = vadd.f32 0.0, %v5500
  %v5502 = vpop.f32.mrb[0].mxu0
  %v5503 = vpop.f32.mrb[0].mxu0
  %v5504 = vpop.f32.mrb[0].mxu0
  %5505 = vdwg.mxu0
  %v5506 = vadd.f32 %v5262, %v5460
  %v5507 = vadd.f32 %v5263, %v5462
  %v5508 = vadd.f32 %v5264, %v5501
  %v5509 = vld [vmem:[%s8] sm:$0xff]
  %v5510 = vld [vmem:[%s8 + $0x8] sm:$0xf]
  %v5511 = vld [vmem:[%s8 + $0xc] sm:$0xff]
  %v5512 = vld [vmem:[%s8 + $0x14] sm:$0xf]
  %v5513 = vld [vmem:[%s8 + $0x18] sm:$0xff]
  %v5514 = vld [vmem:[%s8 + $0x20] sm:$0xf]
  %v5515 = vld [vmem:[%s8 + $0x24] sm:$0xff]
  %v5516 = vld [vmem:[%s8 + $0x2c] sm:$0xf]
  %v5517 = vld [vmem:[%s8 + $0x30] sm:$0xff]
  %v5518 = vld [vmem:[%s8 + $0x38] sm:$0xf]
  %v5519 = vld [vmem:[%s8 + $0x3c] sm:$0xff]
  %v5520 = vld [vmem:[%s8 + $0x44] sm:$0xf]
  %v5521 = vld [vmem:[%s8 + $0x48] sm:$0xff]
  %v5522 = vld [vmem:[%s8 + $0x50] sm:$0xf]
  %v5523 = vld [vmem:[%s8 + $0x54] sm:$0xff]
  %v5524 = vld [vmem:[%s8 + $0x5c] sm:$0xf]
  %v5525 = vld [vmem:[%s8 + $0x60] sm:$0xff]
  %v5526 = vld [vmem:[%s8 + $0x68] sm:$0xf]
  %v5527 = vld [vmem:[%s8 + $0x6c] sm:$0xff]
  %v5528 = vld [vmem:[%s8 + $0x74] sm:$0xf]
  %v5529 = vld [vmem:[%s8 + $0x78] sm:$0xff]
  %v5530 = vld [vmem:[%s8 + $0x80] sm:$0xf]
  %v5531 = vld [vmem:[%s8 + $0x84] sm:$0xff]
  %v5532 = vld [vmem:[%s8 + $0x8c] sm:$0xf]
  %v5533 = vld [vmem:[%s8 + $0x90] sm:$0xff]
  %v5534 = vld [vmem:[%s8 + $0x98] sm:$0xf]
  %v5535 = vld [vmem:[%s8 + $0x9c] sm:$0xff]
  %v5536 = vld [vmem:[%s8 + $0xa4] sm:$0xf]
  %v5537 = vld [vmem:[%s8 + $0xa8] sm:$0xff]
  %v5538 = vld [vmem:[%s8 + $0xb0] sm:$0xf]
  %v5539 = vld [vmem:[%s8 + $0xb4] sm:$0xff]
  %v5540 = vld [vmem:[%s8 + $0xbc] sm:$0xf]
  %v5573 = vunpack.c.l.b16 %v5509
  %v5574 = vunpack.c.h.b16 %v5509
  %v5575 = vunpack.c.l.b16 %v5510
  %v5576 = vunpack.c.l.b16 %v5511
  %v5577 = vunpack.c.h.b16 %v5511
  %v5578 = vunpack.c.l.b16 %v5512
  %v5579 = vunpack.c.l.b16 %v5513
  %v5580 = vunpack.c.h.b16 %v5513
  %v5581 = vunpack.c.l.b16 %v5514
  %v5582 = vunpack.c.l.b16 %v5515
  %v5583 = vunpack.c.h.b16 %v5515
  %v5584 = vunpack.c.l.b16 %v5516
  %v5585 = vunpack.c.l.b16 %v5517
  %v5586 = vunpack.c.h.b16 %v5517
  %v5587 = vunpack.c.l.b16 %v5518
  %v5588 = vunpack.c.l.b16 %v5519
  %v5589 = vunpack.c.h.b16 %v5519
  %v5590 = vunpack.c.l.b16 %v5520
  %v5591 = vunpack.c.l.b16 %v5521
  %v5592 = vunpack.c.h.b16 %v5521
  %v5593 = vunpack.c.l.b16 %v5522
  %v5594 = vunpack.c.l.b16 %v5523
  %v5595 = vunpack.c.h.b16 %v5523
  %v5596 = vunpack.c.l.b16 %v5524
  %v5597 = vunpack.c.l.b16 %v5525
  %v5598 = vunpack.c.h.b16 %v5525
  %v5599 = vunpack.c.l.b16 %v5526
  %v5600 = vunpack.c.l.b16 %v5527
  %v5601 = vunpack.c.h.b16 %v5527
  %v5602 = vunpack.c.l.b16 %v5528
  %v5603 = vunpack.c.l.b16 %v5529
  %v5604 = vunpack.c.h.b16 %v5529
  %v5605 = vunpack.c.l.b16 %v5530
  %v5606 = vunpack.c.l.b16 %v5531
  %v5607 = vunpack.c.h.b16 %v5531
  %v5608 = vunpack.c.l.b16 %v5532
  %v5609 = vunpack.c.l.b16 %v5533
  %v5610 = vunpack.c.h.b16 %v5533
  %v5611 = vunpack.c.l.b16 %v5534
  %v5612 = vunpack.c.l.b16 %v5535
  %v5613 = vunpack.c.h.b16 %v5535
  %v5614 = vunpack.c.l.b16 %v5536
  %v5615 = vunpack.c.l.b16 %v5537
  %v5616 = vunpack.c.h.b16 %v5537
  %v5617 = vunpack.c.l.b16 %v5538
  %v5618 = vunpack.c.l.b16 %v5539
  %v5619 = vunpack.c.h.b16 %v5539
  %v5620 = vunpack.c.l.b16 %v5540
  %v5621 = vpack.c.b16 %v5576, %v5573
  %v5622 = vpack.c.b16 %v5577, %v5574
  %v5623 = vpack.c.b16 %v5578, %v5575
  %v5624 = vpack.c.b16 %v5582, %v5579
  %v5625 = vpack.c.b16 %v5583, %v5580
  %v5626 = vpack.c.b16 %v5584, %v5581
  %v5627 = vpack.c.b16 %v5588, %v5585
  %v5628 = vpack.c.b16 %v5589, %v5586
  %v5629 = vpack.c.b16 %v5590, %v5587
  %v5630 = vpack.c.b16 %v5594, %v5591
  %v5631 = vpack.c.b16 %v5595, %v5592
  %v5632 = vpack.c.b16 %v5596, %v5593
  %v5633 = vpack.c.b16 %v5600, %v5597
  %v5634 = vpack.c.b16 %v5601, %v5598
  %v5635 = vpack.c.b16 %v5602, %v5599
  %v5636 = vpack.c.b16 %v5606, %v5603
  %v5637 = vpack.c.b16 %v5607, %v5604
  %v5638 = vpack.c.b16 %v5608, %v5605
  %v5639 = vpack.c.b16 %v5612, %v5609
  %v5640 = vpack.c.b16 %v5613, %v5610
  %v5641 = vpack.c.b16 %v5614, %v5611
  %v5642 = vpack.c.b16 %v5618, %v5615
  %v5643 = vpack.c.b16 %v5619, %v5616
  %v5644 = vpack.c.b16 %v5620, %v5617
  %5669 = vmatprep.subr.bf16.mxu0 %v5622
  %5670 = vmatpush1.bf16.msra.mxu0 %v5621
  %5671 = vmatprep.subr.bf16.mxu0 %v5625
  %5672 = vmatpush1.bf16.msra.mxu0 %v5624
  %5673 = vmatprep.subr.bf16.mxu0 %v5628
  %5674 = vmatpush1.bf16.msra.mxu0 %v5627
  %5675 = vmatprep.subr.bf16.mxu0 %v5631
  %5676 = vmatpush1.bf16.msra.mxu0 %v5630
  %5677 = vmatprep.subr.bf16.mxu0 %v5634
  %5678 = vmatpush1.bf16.msra.mxu0 %v5633
  %5679 = vmatprep.subr.bf16.mxu0 %v5637
  %5680 = vmatpush1.bf16.msra.mxu0 %v5636
  %5681 = vmatprep.subr.bf16.mxu0 %v5640
  %5682 = vmatpush1.bf16.msra.mxu0 %v5639
  %5683 = vmatprep.subr.bf16.mxu0 %v5643
  %5684 = vmatpush1.bf16.msra.mxu0 %v5642
  %5685 = vmatprep.subr.bf16.mxu0 0
  %5686 = vmatpush1.bf16.msra.mxu0 0
  %5687 = vmatprep.subr.bf16.mxu0 0
  %5688 = vmatpush1.bf16.msra.mxu0 0
  %5689 = vmatprep.subr.bf16.mxu0 0
  %5690 = vmatpush1.bf16.msra.mxu0 0
  %5691 = vmatprep.subr.bf16.mxu0 0
  %5692 = vmatpush1.bf16.msra.mxu0 0
  %5693 = vmatprep.subr.bf16.mxu0 0
  %5694 = vmatpush1.bf16.msra.mxu0 0
  %5695 = vmatprep.subr.bf16.mxu0 0
  %5696 = vmatpush1.bf16.msra.mxu0 0
  %5697 = vmatprep.subr.bf16.mxu0 0
  %5698 = vmatpush1.bf16.msra.mxu0 0
  %5699 = vmatprep.subr.bf16.mxu0 0
  %5700 = vmatpush1.bf16.msra.mxu0 0
  %5701 = vmatprep.mubr.bf16.mxu0 0
  %5702 = vmatmul.mubr.bf16.gmra.mrb[0].mxu0 %v4980
  %v5703 = vpop.f32.mrb[0].mxu0
  %v5704 = vadd.f32 %v832, %v5703
  %v5705 = vpop.f32.mrb[0].mxu0
  %v5706 = vadd.f32 %v836, %v5705
  %v5707 = vpop.f32.mrb[0].mxu0
  %v5708 = vpop.f32.mrb[0].mxu0
  %5709 = vdwg.mxu0
  %5710 = vmatprep.subr.bf16.mxu0 0
  %5711 = vmatpush1.bf16.msra.mxu0 %v5623
  %5712 = vmatprep.subr.bf16.mxu0 0
  %5713 = vmatpush1.bf16.msra.mxu0 %v5626
  %5714 = vmatprep.subr.bf16.mxu0 0
  %5715 = vmatpush1.bf16.msra.mxu0 %v5629
  %5716 = vmatprep.subr.bf16.mxu0 0
  %5717 = vmatpush1.bf16.msra.mxu0 %v5632
  %5718 = vmatprep.subr.bf16.mxu0 0
  %5719 = vmatpush1.bf16.msra.mxu0 %v5635
  %5720 = vmatprep.subr.bf16.mxu0 0
  %5721 = vmatpush1.bf16.msra.mxu0 %v5638
  %5722 = vmatprep.subr.bf16.mxu0 0
  %5723 = vmatpush1.bf16.msra.mxu0 %v5641
  %5724 = vmatprep.subr.bf16.mxu0 0
  %5725 = vmatpush1.bf16.msra.mxu0 %v5644
  %5726 = vmatprep.subr.bf16.mxu0 0
  %5727 = vmatpush1.bf16.msra.mxu0 0
  %5728 = vmatprep.subr.bf16.mxu0 0
  %5729 = vmatpush1.bf16.msra.mxu0 0
  %5730 = vmatprep.subr.bf16.mxu0 0
  %5731 = vmatpush1.bf16.msra.mxu0 0
  %5732 = vmatprep.subr.bf16.mxu0 0
  %5733 = vmatpush1.bf16.msra.mxu0 0
  %5734 = vmatprep.subr.bf16.mxu0 0
  %5735 = vmatpush1.bf16.msra.mxu0 0
  %5736 = vmatprep.subr.bf16.mxu0 0
  %5737 = vmatpush1.bf16.msra.mxu0 0
  %5738 = vmatprep.subr.bf16.mxu0 0
  %5739 = vmatpush1.bf16.msra.mxu0 0
  %5740 = vmatprep.subr.bf16.mxu0 0
  %5741 = vmatpush1.bf16.msra.mxu0 0
  %5742 = vmatprep.mubr.bf16.mxu0 0
  %5743 = vmatmul.mubr.bf16.gmra.mrb[0].mxu0 %v4980
  %v5744 = vpop.f32.mrb[0].mxu0
  %v5745 = vadd.f32 %v840, %v5744
  %v5746 = vpop.f32.mrb[0].mxu0
  %v5747 = vpop.f32.mrb[0].mxu0
  %v5748 = vpop.f32.mrb[0].mxu0
  %5749 = vdwg.mxu0
  %v5750 = vadd.f32 %v5506, %v5704
  %v5751 = vxor.u32 %v5750, 2147483648
  %v5752 = vmul.f32 %v5751, 1.442695
  %v5753 = vpow.pop %v5752
  %v5754 = vadd.f32 %v5753, 1.0
  %v5755 = vrcp.pop %v5754
  %v5756 = vmul.f32 1.0, %v5755
  %v5757 = vadd.f32 %v5507, %v5706
  %v5758 = vxor.u32 %v5757, 2147483648
  %v5759 = vmul.f32 %v5758, 1.442695
  %v5760 = vpow.pop %v5759
  %v5761 = vadd.f32 %v5760, 1.0
  %v5762 = vrcp.pop %v5761
  %v5763 = vmul.f32 1.0, %v5762
  %v5764 = vmul.f32 %v5756, %v5745
  %v5765 = vadd.f32 %v5508, %v5764
  %v5766 = vtanh.pop %v5765
  %v5767 = vsub.f32 1.0, %v5763
  %v5768 = vmul.f32 %v5767, %v5766
  %v5769 = vmul.f32 %v5763, %v4979
  %v5770 = vadd.f32 %v5768, %v5769
  %v5771 = vpack.c.bf16 %v5770, %v5770
  %v5772 = vld [vmem:[%s11] sm:$0xf]
  %v5773 = vld [vmem:[%s11 + $0x4] sm:$0xf]
  %v5774 = vld [vmem:[%s11 + $0x8] sm:$0xf]
  %v5775 = vld [vmem:[%s11 + $0xc] sm:$0xf]
  %v5776 = vld [vmem:[%s11 + $0x10] sm:$0xf]
  %v5777 = vld [vmem:[%s11 + $0x14] sm:$0xf]
  %v5778 = vld [vmem:[%s11 + $0x18] sm:$0xf]
  %v5779 = vld [vmem:[%s11 + $0x1c] sm:$0xf]
  %v5780 = vld [vmem:[%s11 + $0x20] sm:$0xf]
  %v5781 = vld [vmem:[%s11 + $0x24] sm:$0xf]
  %v5782 = vld [vmem:[%s11 + $0x28] sm:$0xf]
  %v5783 = vld [vmem:[%s11 + $0x2c] sm:$0xf]
  %v5784 = vld [vmem:[%s11 + $0x30] sm:$0xf]
  %v5785 = vld [vmem:[%s11 + $0x34] sm:$0xf]
  %v5786 = vld [vmem:[%s11 + $0x38] sm:$0xf]
  %v5787 = vld [vmem:[%s11 + $0x3c] sm:$0xf]
  %v5788 = vld [vmem:[%s11 + $0x40] sm:$0xf]
  %v5789 = vld [vmem:[%s11 + $0x44] sm:$0xf]
  %v5790 = vld [vmem:[%s11 + $0x48] sm:$0xf]
  %v5791 = vld [vmem:[%s11 + $0x4c] sm:$0xf]
  %v5792 = vld [vmem:[%s11 + $0x50] sm:$0xf]
  %v5793 = vld [vmem:[%s11 + $0x54] sm:$0xf]
  %v5794 = vld [vmem:[%s11 + $0x58] sm:$0xf]
  %v5795 = vld [vmem:[%s11 + $0x5c] sm:$0xf]
  %v5796 = vld [vmem:[%s11 + $0x60] sm:$0xf]
  %v5797 = vld [vmem:[%s11 + $0x64] sm:$0xf]
  %v5798 = vld [vmem:[%s11 + $0x68] sm:$0xf]
  %v5799 = vld [vmem:[%s11 + $0x6c] sm:$0xf]
  %v5800 = vld [vmem:[%s11 + $0x70] sm:$0xf]
  %v5801 = vld [vmem:[%s11 + $0x74] sm:$0xf]
  %v5802 = vld [vmem:[%s11 + $0x78] sm:$0xf]
  %v5803 = vld [vmem:[%s11 + $0x7c] sm:$0xf]
  %v5836 = vunpack.c.l.b16 %v5772
  %v5837 = vunpack.c.l.b16 %v5773
  %v5838 = vunpack.c.l.b16 %v5774
  %v5839 = vunpack.c.l.b16 %v5775
  %v5840 = vunpack.c.l.b16 %v5776
  %v5841 = vunpack.c.l.b16 %v5777
  %v5842 = vunpack.c.l.b16 %v5778
  %v5843 = vunpack.c.l.b16 %v5779
  %v5844 = vunpack.c.l.b16 %v5780
  %v5845 = vunpack.c.l.b16 %v5781
  %v5846 = vunpack.c.l.b16 %v5782
  %v5847 = vunpack.c.l.b16 %v5783
  %v5848 = vunpack.c.l.b16 %v5784
  %v5849 = vunpack.c.l.b16 %v5785
  %v5850 = vunpack.c.l.b16 %v5786
  %v5851 = vunpack.c.l.b16 %v5787
  %v5852 = vunpack.c.l.b16 %v5788
  %v5853 = vunpack.c.l.b16 %v5789
  %v5854 = vunpack.c.l.b16 %v5790
  %v5855 = vunpack.c.l.b16 %v5791
  %v5856 = vunpack.c.l.b16 %v5792
  %v5857 = vunpack.c.l.b16 %v5793
  %v5858 = vunpack.c.l.b16 %v5794
  %v5859 = vunpack.c.l.b16 %v5795
  %v5860 = vunpack.c.l.b16 %v5796
  %v5861 = vunpack.c.l.b16 %v5797
  %v5862 = vunpack.c.l.b16 %v5798
  %v5863 = vunpack.c.l.b16 %v5799
  %v5864 = vunpack.c.l.b16 %v5800
  %v5865 = vunpack.c.l.b16 %v5801
  %v5866 = vunpack.c.l.b16 %v5802
  %v5867 = vunpack.c.l.b16 %v5803
  %v5868 = vpack.c.b16 %v5837, %v5836
  %v5869 = vpack.c.b16 %v5839, %v5838
  %v5870 = vpack.c.b16 %v5841, %v5840
  %v5871 = vpack.c.b16 %v5843, %v5842
  %v5872 = vpack.c.b16 %v5845, %v5844
  %v5873 = vpack.c.b16 %v5847, %v5846
  %v5874 = vpack.c.b16 %v5849, %v5848
  %v5875 = vpack.c.b16 %v5851, %v5850
  %v5876 = vpack.c.b16 %v5853, %v5852
  %v5877 = vpack.c.b16 %v5855, %v5854
  %v5878 = vpack.c.b16 %v5857, %v5856
  %v5879 = vpack.c.b16 %v5859, %v5858
  %v5880 = vpack.c.b16 %v5861, %v5860
  %v5881 = vpack.c.b16 %v5863, %v5862
  %v5882 = vpack.c.b16 %v5865, %v5864
  %v5883 = vpack.c.b16 %v5867, %v5866
  %5900 = vmatprep.subr.bf16.mxu0 0
  %5901 = vmatpush1.bf16.msra.mxu0 %v5868
  %5902 = vmatprep.subr.bf16.mxu0 0
  %5903 = vmatpush1.bf16.msra.mxu0 %v5869
  %5904 = vmatprep.subr.bf16.mxu0 0
  %5905 = vmatpush1.bf16.msra.mxu0 %v5870
  %5906 = vmatprep.subr.bf16.mxu0 0
  %5907 = vmatpush1.bf16.msra.mxu0 %v5871
  %5908 = vmatprep.subr.bf16.mxu0 0
  %5909 = vmatpush1.bf16.msra.mxu0 %v5872
  %5910 = vmatprep.subr.bf16.mxu0 0
  %5911 = vmatpush1.bf16.msra.mxu0 %v5873
  %5912 = vmatprep.subr.bf16.mxu0 0
  %5913 = vmatpush1.bf16.msra.mxu0 %v5874
  %5914 = vmatprep.subr.bf16.mxu0 0
  %5915 = vmatpush1.bf16.msra.mxu0 %v5875
  %5916 = vmatprep.subr.bf16.mxu0 0
  %5917 = vmatpush1.bf16.msra.mxu0 %v5876
  %5918 = vmatprep.subr.bf16.mxu0 0
  %5919 = vmatpush1.bf16.msra.mxu0 %v5877
  %5920 = vmatprep.subr.bf16.mxu0 0
  %5921 = vmatpush1.bf16.msra.mxu0 %v5878
  %5922 = vmatprep.subr.bf16.mxu0 0
  %5923 = vmatpush1.bf16.msra.mxu0 %v5879
  %5924 = vmatprep.subr.bf16.mxu0 0
  %5925 = vmatpush1.bf16.msra.mxu0 %v5880
  %5926 = vmatprep.subr.bf16.mxu0 0
  %5927 = vmatpush1.bf16.msra.mxu0 %v5881
  %5928 = vmatprep.subr.bf16.mxu0 0
  %5929 = vmatpush1.bf16.msra.mxu0 %v5882
  %5930 = vmatprep.subr.bf16.mxu0 0
  %5931 = vmatpush1.bf16.msra.mxu0 %v5883
  %5932 = vmatprep.mubr.bf16.mxu0 %v5259
  %5933 = vmatmul.mubr.bf16.gmra.mrb[0].mxu0 %v5771
  %v5934 = vpop.f32.mrb[0].mxu0
  %v5935 = vadd.f32 %v849, %v5934
  %v5936 = vpop.f32.mrb[0].mxu0
  %v5937 = vpop.f32.mrb[0].mxu0
  %v5938 = vpop.f32.mrb[0].mxu0
  %5939 = vdwg.mxu0
  %s5940 = scalar_lea.vmem %s13, 16
  %5941 = vst [vmem:[%s5940] sm:$0xff] %v5935
  %v5942 = vmul.f32 %v3559, %v5770
  %v5943 = vmul.f32 %v3560, %v5770
  %v5944 = vmul.f32 %v3561, %v5770
  %v5945 = vmul.f32 %v3562, %v5770
  %v5946 = vmul.f32 %v3563, %v5770
  %v5947 = vmul.f32 %v3564, %v5770
  %v5948 = vmul.f32 %v3565, %v5770
  %v5949 = vmul.f32 %v3566, %v5770
  %v5950 = vmul.f32 %v3567, %v5770
  %v5951 = vmul.f32 %v3568, %v5770
  %5952 = vadd.xlane.f32.xlu0 %v5942
  %v5953 = vpop.xlane.xlu0 %5952
  %5954 = vadd.xlane.f32.xlu0 %v5943
  %v5955 = vpop.xlane.xlu0 %5954
  %5956 = vadd.xlane.f32.xlu0 %v5944
  %v5957 = vpop.xlane.xlu0 %5956
  %5958 = vadd.xlane.f32.xlu0 %v5945
  %v5959 = vpop.xlane.xlu0 %5958
  %5960 = vadd.xlane.f32.xlu0 %v5946
  %v5961 = vpop.xlane.xlu0 %5960
  %5962 = vadd.xlane.f32.xlu0 %v5947
  %v5963 = vpop.xlane.xlu0 %5962
  %5964 = vadd.xlane.f32.xlu0 %v5948
  %v5965 = vpop.xlane.xlu0 %5964
  %5966 = vadd.xlane.f32.xlu0 %v5949
  %v5967 = vpop.xlane.xlu0 %5966
  %5968 = vadd.xlane.f32.xlu0 %v5950
  %v5969 = vpop.xlane.xlu0 %5968
  %5970 = vadd.xlane.f32.xlu0 %v5951
  %v5971 = vpop.xlane.xlu0 %5970
  %v5972 = vmax.f32 %v5953, %v5961
  %v5973 = vmax.f32 %v5955, %v5963
  %v5974 = vmax.f32 %v5957, %v5965
  %v5975 = vmax.f32 %v5959, %v5967
  %v5976 = vmax.f32 %v5972, %v5969
  %v5977 = vmax.f32 %v5973, %v5971
  %v5978 = vmax.f32 %v5976, %v5977
  %v5979 = vmax.f32 %v5974, %v5975
  %v5980 = vmax.f32 %v5978, %v5979
  %v5981 = vsub.f32 %v5953, %v5980
  %v5982 = vsub.f32 %v5955, %v5980
  %v5983 = vsub.f32 %v5957, %v5980
  %v5984 = vsub.f32 %v5959, %v5980
  %v5985 = vsub.f32 %v5961, %v5980
  %v5986 = vsub.f32 %v5963, %v5980
  %v5987 = vsub.f32 %v5965, %v5980
  %v5988 = vsub.f32 %v5967, %v5980
  %v5989 = vsub.f32 %v5969, %v5980
  %v5990 = vsub.f32 %v5971, %v5980
  %v5991 = vmul.f32 %v5981, 1.442695
  %v5992 = vpow.pop %v5991
  %v5993 = vmul.f32 %v5982, 1.442695
  %v5994 = vpow.pop %v5993
  %v5995 = vmul.f32 %v5983, 1.442695
  %v5996 = vpow.pop %v5995
  %v5997 = vmul.f32 %v5984, 1.442695
  %v5998 = vpow.pop %v5997
  %v5999 = vmul.f32 %v5985, 1.442695
  %v6000 = vpow.pop %v5999
  %v6001 = vmul.f32 %v5986, 1.442695
  %v6002 = vpow.pop %v6001
  %v6003 = vmul.f32 %v5987, 1.442695
  %v6004 = vpow.pop %v6003
  %v6005 = vmul.f32 %v5988, 1.442695
  %v6006 = vpow.pop %v6005
  %v6007 = vmul.f32 %v5989, 1.442695
  %v6008 = vpow.pop %v6007
  %v6009 = vmul.f32 %v5990, 1.442695
  %v6010 = vpow.pop %v6009
  %v6011 = vadd.f32 %v5992, %v5994
  %v6012 = vadd.f32 %v6011, %v5996
  %v6013 = vadd.f32 %v6012, %v5998
  %v6014 = vadd.f32 %v6013, %v6000
  %v6015 = vadd.f32 %v6014, %v6002
  %v6016 = vadd.f32 %v6015, %v6004
  %v6017 = vadd.f32 %v6016, %v6006
  %v6018 = vadd.f32 %v6017, %v6008
  %v6019 = vadd.f32 %v6018, %v6010
  %v6020 = vrcp.pop %v6019
  %v6021 = vmul.f32 %v5992, %v6020
  %v6022 = vmul.f32 %v5994, %v6020
  %v6023 = vmul.f32 %v5996, %v6020
  %v6024 = vmul.f32 %v5998, %v6020
  %v6025 = vmul.f32 %v6000, %v6020
  %v6026 = vmul.f32 %v6002, %v6020
  %v6027 = vmul.f32 %v6004, %v6020
  %v6028 = vmul.f32 %v6006, %v6020
  %v6029 = vmul.f32 %v6008, %v6020
  %v6030 = vmul.f32 %v6010, %v6020
  %v6031 = vmul.f32 %v6021, %v3559
  %v6032 = vmul.f32 %v6022, %v3560
  %v6033 = vmul.f32 %v6023, %v3561
  %v6034 = vmul.f32 %v6024, %v3562
  %v6035 = vmul.f32 %v6025, %v3563
  %v6036 = vmul.f32 %v6026, %v3564
  %v6037 = vmul.f32 %v6027, %v3565
  %v6038 = vmul.f32 %v6028, %v3566
  %v6039 = vmul.f32 %v6029, %v3567
  %v6040 = vmul.f32 %v6030, %v3568
  %v6041 = vadd.f32 %v6031, %v6032
  %v6042 = vadd.f32 %v6041, %v6033
  %v6043 = vadd.f32 %v6042, %v6034
  %v6044 = vadd.f32 %v6043, %v6035
  %v6045 = vadd.f32 %v6044, %v6036
  %v6046 = vadd.f32 %v6045, %v6037
  %v6047 = vadd.f32 %v6046, %v6038
  %v6048 = vadd.f32 %v6047, %v6039
  %v6049 = vadd.f32 %v6048, %v6040
  %v6050 = vpack.c.bf16 %v6049, %v6049
  %s6051 = smul.addr %s1662, 8
  %s6052 = scalar_lea.vmem [#allocation4], %s6051
  %v6053 = vld [vmem:[%s6052] sm:$0xff]
  %v6054 = vld [vmem:[%s6052 + $0x8] sm:$0xff]
  %v6055 = vld [vmem:[%s6052 + $0x10] sm:$0xff]
  %v6056 = vld [vmem:[%s7] sm:$0xff]
  %v6057 = vld [vmem:[%s7 + $0x8] sm:$0xf]
  %v6058 = vld [vmem:[%s7 + $0xc] sm:$0xff]
  %v6059 = vld [vmem:[%s7 + $0x14] sm:$0xf]
  %v6060 = vld [vmem:[%s7 + $0x18] sm:$0xff]
  %v6061 = vld [vmem:[%s7 + $0x20] sm:$0xf]
  %v6062 = vld [vmem:[%s7 + $0x24] sm:$0xff]
  %v6063 = vld [vmem:[%s7 + $0x2c] sm:$0xf]
  %v6064 = vld [vmem:[%s7 + $0x30] sm:$0xff]
  %v6065 = vld [vmem:[%s7 + $0x38] sm:$0xf]
  %v6066 = vld [vmem:[%s7 + $0x3c] sm:$0xff]
  %v6067 = vld [vmem:[%s7 + $0x44] sm:$0xf]
  %v6068 = vld [vmem:[%s7 + $0x48] sm:$0xff]
  %v6069 = vld [vmem:[%s7 + $0x50] sm:$0xf]
  %v6070 = vld [vmem:[%s7 + $0x54] sm:$0xff]
  %v6071 = vld [vmem:[%s7 + $0x5c] sm:$0xf]
  %v6072 = vld [vmem:[%s7 + $0x60] sm:$0xff]
  %v6073 = vld [vmem:[%s7 + $0x68] sm:$0xf]
  %v6074 = vld [vmem:[%s7 + $0x6c] sm:$0xff]
  %v6075 = vld [vmem:[%s7 + $0x74] sm:$0xf]
  %v6076 = vld [vmem:[%s7 + $0x78] sm:$0xff]
  %v6077 = vld [vmem:[%s7 + $0x80] sm:$0xf]
  %v6078 = vld [vmem:[%s7 + $0x84] sm:$0xff]
  %v6079 = vld [vmem:[%s7 + $0x8c] sm:$0xf]
  %v6080 = vld [vmem:[%s7 + $0x90] sm:$0xff]
  %v6081 = vld [vmem:[%s7 + $0x98] sm:$0xf]
  %v6082 = vld [vmem:[%s7 + $0x9c] sm:$0xff]
  %v6083 = vld [vmem:[%s7 + $0xa4] sm:$0xf]
  %v6084 = vld [vmem:[%s7 + $0xa8] sm:$0xff]
  %v6085 = vld [vmem:[%s7 + $0xb0] sm:$0xf]
  %v6086 = vld [vmem:[%s7 + $0xb4] sm:$0xff]
  %v6087 = vld [vmem:[%s7 + $0xbc] sm:$0xf]
  %v6120 = vunpack.c.l.b16 %v6056
  %v6121 = vunpack.c.h.b16 %v6056
  %v6122 = vunpack.c.l.b16 %v6057
  %v6123 = vunpack.c.l.b16 %v6058
  %v6124 = vunpack.c.h.b16 %v6058
  %v6125 = vunpack.c.l.b16 %v6059
  %v6126 = vunpack.c.l.b16 %v6060
  %v6127 = vunpack.c.h.b16 %v6060
  %v6128 = vunpack.c.l.b16 %v6061
  %v6129 = vunpack.c.l.b16 %v6062
  %v6130 = vunpack.c.h.b16 %v6062
  %v6131 = vunpack.c.l.b16 %v6063
  %v6132 = vunpack.c.l.b16 %v6064
  %v6133 = vunpack.c.h.b16 %v6064
  %v6134 = vunpack.c.l.b16 %v6065
  %v6135 = vunpack.c.l.b16 %v6066
  %v6136 = vunpack.c.h.b16 %v6066
  %v6137 = vunpack.c.l.b16 %v6067
  %v6138 = vunpack.c.l.b16 %v6068
  %v6139 = vunpack.c.h.b16 %v6068
  %v6140 = vunpack.c.l.b16 %v6069
  %v6141 = vunpack.c.l.b16 %v6070
  %v6142 = vunpack.c.h.b16 %v6070
  %v6143 = vunpack.c.l.b16 %v6071
  %v6144 = vunpack.c.l.b16 %v6072
  %v6145 = vunpack.c.h.b16 %v6072
  %v6146 = vunpack.c.l.b16 %v6073
  %v6147 = vunpack.c.l.b16 %v6074
  %v6148 = vunpack.c.h.b16 %v6074
  %v6149 = vunpack.c.l.b16 %v6075
  %v6150 = vunpack.c.l.b16 %v6076
  %v6151 = vunpack.c.h.b16 %v6076
  %v6152 = vunpack.c.l.b16 %v6077
  %v6153 = vunpack.c.l.b16 %v6078
  %v6154 = vunpack.c.h.b16 %v6078
  %v6155 = vunpack.c.l.b16 %v6079
  %v6156 = vunpack.c.l.b16 %v6080
  %v6157 = vunpack.c.h.b16 %v6080
  %v6158 = vunpack.c.l.b16 %v6081
  %v6159 = vunpack.c.l.b16 %v6082
  %v6160 = vunpack.c.h.b16 %v6082
  %v6161 = vunpack.c.l.b16 %v6083
  %v6162 = vunpack.c.l.b16 %v6084
  %v6163 = vunpack.c.h.b16 %v6084
  %v6164 = vunpack.c.l.b16 %v6085
  %v6165 = vunpack.c.l.b16 %v6086
  %v6166 = vunpack.c.h.b16 %v6086
  %v6167 = vunpack.c.l.b16 %v6087
  %v6168 = vpack.c.b16 %v6123, %v6120
  %v6169 = vpack.c.b16 %v6124, %v6121
  %v6170 = vpack.c.b16 %v6125, %v6122
  %v6171 = vpack.c.b16 %v6129, %v6126
  %v6172 = vpack.c.b16 %v6130, %v6127
  %v6173 = vpack.c.b16 %v6131, %v6128
  %v6174 = vpack.c.b16 %v6135, %v6132
  %v6175 = vpack.c.b16 %v6136, %v6133
  %v6176 = vpack.c.b16 %v6137, %v6134
  %v6177 = vpack.c.b16 %v6141, %v6138
  %v6178 = vpack.c.b16 %v6142, %v6139
  %v6179 = vpack.c.b16 %v6143, %v6140
  %v6180 = vpack.c.b16 %v6147, %v6144
  %v6181 = vpack.c.b16 %v6148, %v6145
  %v6182 = vpack.c.b16 %v6149, %v6146
  %v6183 = vpack.c.b16 %v6153, %v6150
  %v6184 = vpack.c.b16 %v6154, %v6151
  %v6185 = vpack.c.b16 %v6155, %v6152
  %v6186 = vpack.c.b16 %v6159, %v6156
  %v6187 = vpack.c.b16 %v6160, %v6157
  %v6188 = vpack.c.b16 %v6161, %v6158
  %v6189 = vpack.c.b16 %v6165, %v6162
  %v6190 = vpack.c.b16 %v6166, %v6163
  %v6191 = vpack.c.b16 %v6167, %v6164
  %6216 = vmatprep.subr.bf16.mxu0 %v6169
  %6217 = vmatpush1.bf16.msra.mxu0 %v6168
  %6218 = vmatprep.subr.bf16.mxu0 %v6172
  %6219 = vmatpush1.bf16.msra.mxu0 %v6171
  %6220 = vmatprep.subr.bf16.mxu0 %v6175
  %6221 = vmatpush1.bf16.msra.mxu0 %v6174
  %6222 = vmatprep.subr.bf16.mxu0 %v6178
  %6223 = vmatpush1.bf16.msra.mxu0 %v6177
  %6224 = vmatprep.subr.bf16.mxu0 %v6181
  %6225 = vmatpush1.bf16.msra.mxu0 %v6180
  %6226 = vmatprep.subr.bf16.mxu0 %v6184
  %6227 = vmatpush1.bf16.msra.mxu0 %v6183
  %6228 = vmatprep.subr.bf16.mxu0 %v6187
  %6229 = vmatpush1.bf16.msra.mxu0 %v6186
  %6230 = vmatprep.subr.bf16.mxu0 %v6190
  %6231 = vmatpush1.bf16.msra.mxu0 %v6189
  %6232 = vmatprep.subr.bf16.mxu0 0
  %6233 = vmatpush1.bf16.msra.mxu0 0
  %6234 = vmatprep.subr.bf16.mxu0 0
  %6235 = vmatpush1.bf16.msra.mxu0 0
  %6236 = vmatprep.subr.bf16.mxu0 0
  %6237 = vmatpush1.bf16.msra.mxu0 0
  %6238 = vmatprep.subr.bf16.mxu0 0
  %6239 = vmatpush1.bf16.msra.mxu0 0
  %6240 = vmatprep.subr.bf16.mxu0 0
  %6241 = vmatpush1.bf16.msra.mxu0 0
  %6242 = vmatprep.subr.bf16.mxu0 0
  %6243 = vmatpush1.bf16.msra.mxu0 0
  %6244 = vmatprep.subr.bf16.mxu0 0
  %6245 = vmatpush1.bf16.msra.mxu0 0
  %6246 = vmatprep.subr.bf16.mxu0 0
  %6247 = vmatpush1.bf16.msra.mxu0 0
  %6248 = vmatprep.mubr.bf16.mxu0 0
  %6249 = vmatmul.mubr.bf16.gmra.mrb[0].mxu0 %v6050
  %v6250 = vpop.f32.mrb[0].mxu0
  %v6251 = vadd.f32 0.0, %v6250
  %v6252 = vpop.f32.mrb[0].mxu0
  %v6253 = vadd.f32 0.0, %v6252
  %v6254 = vpop.f32.mrb[0].mxu0
  %v6255 = vpop.f32.mrb[0].mxu0
  %6256 = vdwg.mxu0
  %6257 = vmatprep.subr.bf16.mxu0 0
  %6258 = vmatpush1.bf16.msra.mxu0 %v6170
  %6259 = vmatprep.subr.bf16.mxu0 0
  %6260 = vmatpush1.bf16.msra.mxu0 %v6173
  %6261 = vmatprep.subr.bf16.mxu0 0
  %6262 = vmatpush1.bf16.msra.mxu0 %v6176
  %6263 = vmatprep.subr.bf16.mxu0 0
  %6264 = vmatpush1.bf16.msra.mxu0 %v6179
  %6265 = vmatprep.subr.bf16.mxu0 0
  %6266 = vmatpush1.bf16.msra.mxu0 %v6182
  %6267 = vmatprep.subr.bf16.mxu0 0
  %6268 = vmatpush1.bf16.msra.mxu0 %v6185
  %6269 = vmatprep.subr.bf16.mxu0 0
  %6270 = vmatpush1.bf16.msra.mxu0 %v6188
  %6271 = vmatprep.subr.bf16.mxu0 0
  %6272 = vmatpush1.bf16.msra.mxu0 %v6191
  %6273 = vmatprep.subr.bf16.mxu0 0
  %6274 = vmatpush1.bf16.msra.mxu0 0
  %6275 = vmatprep.subr.bf16.mxu0 0
  %6276 = vmatpush1.bf16.msra.mxu0 0
  %6277 = vmatprep.subr.bf16.mxu0 0
  %6278 = vmatpush1.bf16.msra.mxu0 0
  %6279 = vmatprep.subr.bf16.mxu0 0
  %6280 = vmatpush1.bf16.msra.mxu0 0
  %6281 = vmatprep.subr.bf16.mxu0 0
  %6282 = vmatpush1.bf16.msra.mxu0 0
  %6283 = vmatprep.subr.bf16.mxu0 0
  %6284 = vmatpush1.bf16.msra.mxu0 0
  %6285 = vmatprep.subr.bf16.mxu0 0
  %6286 = vmatpush1.bf16.msra.mxu0 0
  %6287 = vmatprep.subr.bf16.mxu0 0
  %6288 = vmatpush1.bf16.msra.mxu0 0
  %6289 = vmatprep.mubr.bf16.mxu0 0
  %6290 = vmatmul.mubr.bf16.gmra.mrb[0].mxu0 %v6050
  %v6291 = vpop.f32.mrb[0].mxu0
  %v6292 = vadd.f32 0.0, %v6291
  %v6293 = vpop.f32.mrb[0].mxu0
  %v6294 = vpop.f32.mrb[0].mxu0
  %v6295 = vpop.f32.mrb[0].mxu0
  %6296 = vdwg.mxu0
  %v6297 = vadd.f32 %v6053, %v6251
  %v6298 = vadd.f32 %v6054, %v6253
  %v6299 = vadd.f32 %v6055, %v6292
  %v6300 = vld [vmem:[%s8] sm:$0xff]
  %v6301 = vld [vmem:[%s8 + $0x8] sm:$0xf]
  %v6302 = vld [vmem:[%s8 + $0xc] sm:$0xff]
  %v6303 = vld [vmem:[%s8 + $0x14] sm:$0xf]
  %v6304 = vld [vmem:[%s8 + $0x18] sm:$0xff]
  %v6305 = vld [vmem:[%s8 + $0x20] sm:$0xf]
  %v6306 = vld [vmem:[%s8 + $0x24] sm:$0xff]
  %v6307 = vld [vmem:[%s8 + $0x2c] sm:$0xf]
  %v6308 = vld [vmem:[%s8 + $0x30] sm:$0xff]
  %v6309 = vld [vmem:[%s8 + $0x38] sm:$0xf]
  %v6310 = vld [vmem:[%s8 + $0x3c] sm:$0xff]
  %v6311 = vld [vmem:[%s8 + $0x44] sm:$0xf]
  %v6312 = vld [vmem:[%s8 + $0x48] sm:$0xff]
  %v6313 = vld [vmem:[%s8 + $0x50] sm:$0xf]
  %v6314 = vld [vmem:[%s8 + $0x54] sm:$0xff]
  %v6315 = vld [vmem:[%s8 + $0x5c] sm:$0xf]
  %v6316 = vld [vmem:[%s8 + $0x60] sm:$0xff]
  %v6317 = vld [vmem:[%s8 + $0x68] sm:$0xf]
  %v6318 = vld [vmem:[%s8 + $0x6c] sm:$0xff]
  %v6319 = vld [vmem:[%s8 + $0x74] sm:$0xf]
  %v6320 = vld [vmem:[%s8 + $0x78] sm:$0xff]
  %v6321 = vld [vmem:[%s8 + $0x80] sm:$0xf]
  %v6322 = vld [vmem:[%s8 + $0x84] sm:$0xff]
  %v6323 = vld [vmem:[%s8 + $0x8c] sm:$0xf]
  %v6324 = vld [vmem:[%s8 + $0x90] sm:$0xff]
  %v6325 = vld [vmem:[%s8 + $0x98] sm:$0xf]
  %v6326 = vld [vmem:[%s8 + $0x9c] sm:$0xff]
  %v6327 = vld [vmem:[%s8 + $0xa4] sm:$0xf]
  %v6328 = vld [vmem:[%s8 + $0xa8] sm:$0xff]
  %v6329 = vld [vmem:[%s8 + $0xb0] sm:$0xf]
  %v6330 = vld [vmem:[%s8 + $0xb4] sm:$0xff]
  %v6331 = vld [vmem:[%s8 + $0xbc] sm:$0xf]
  %v6364 = vunpack.c.l.b16 %v6300
  %v6365 = vunpack.c.h.b16 %v6300
  %v6366 = vunpack.c.l.b16 %v6301
  %v6367 = vunpack.c.l.b16 %v6302
  %v6368 = vunpack.c.h.b16 %v6302
  %v6369 = vunpack.c.l.b16 %v6303
  %v6370 = vunpack.c.l.b16 %v6304
  %v6371 = vunpack.c.h.b16 %v6304
  %v6372 = vunpack.c.l.b16 %v6305
  %v6373 = vunpack.c.l.b16 %v6306
  %v6374 = vunpack.c.h.b16 %v6306
  %v6375 = vunpack.c.l.b16 %v6307
  %v6376 = vunpack.c.l.b16 %v6308
  %v6377 = vunpack.c.h.b16 %v6308
  %v6378 = vunpack.c.l.b16 %v6309
  %v6379 = vunpack.c.l.b16 %v6310
  %v6380 = vunpack.c.h.b16 %v6310
  %v6381 = vunpack.c.l.b16 %v6311
  %v6382 = vunpack.c.l.b16 %v6312
  %v6383 = vunpack.c.h.b16 %v6312
  %v6384 = vunpack.c.l.b16 %v6313
  %v6385 = vunpack.c.l.b16 %v6314
  %v6386 = vunpack.c.h.b16 %v6314
  %v6387 = vunpack.c.l.b16 %v6315
  %v6388 = vunpack.c.l.b16 %v6316
  %v6389 = vunpack.c.h.b16 %v6316
  %v6390 = vunpack.c.l.b16 %v6317
  %v6391 = vunpack.c.l.b16 %v6318
  %v6392 = vunpack.c.h.b16 %v6318
  %v6393 = vunpack.c.l.b16 %v6319
  %v6394 = vunpack.c.l.b16 %v6320
  %v6395 = vunpack.c.h.b16 %v6320
  %v6396 = vunpack.c.l.b16 %v6321
  %v6397 = vunpack.c.l.b16 %v6322
  %v6398 = vunpack.c.h.b16 %v6322
  %v6399 = vunpack.c.l.b16 %v6323
  %v6400 = vunpack.c.l.b16 %v6324
  %v6401 = vunpack.c.h.b16 %v6324
  %v6402 = vunpack.c.l.b16 %v6325
  %v6403 = vunpack.c.l.b16 %v6326
  %v6404 = vunpack.c.h.b16 %v6326
  %v6405 = vunpack.c.l.b16 %v6327
  %v6406 = vunpack.c.l.b16 %v6328
  %v6407 = vunpack.c.h.b16 %v6328
  %v6408 = vunpack.c.l.b16 %v6329
  %v6409 = vunpack.c.l.b16 %v6330
  %v6410 = vunpack.c.h.b16 %v6330
  %v6411 = vunpack.c.l.b16 %v6331
  %v6412 = vpack.c.b16 %v6367, %v6364
  %v6413 = vpack.c.b16 %v6368, %v6365
  %v6414 = vpack.c.b16 %v6369, %v6366
  %v6415 = vpack.c.b16 %v6373, %v6370
  %v6416 = vpack.c.b16 %v6374, %v6371
  %v6417 = vpack.c.b16 %v6375, %v6372
  %v6418 = vpack.c.b16 %v6379, %v6376
  %v6419 = vpack.c.b16 %v6380, %v6377
  %v6420 = vpack.c.b16 %v6381, %v6378
  %v6421 = vpack.c.b16 %v6385, %v6382
  %v6422 = vpack.c.b16 %v6386, %v6383
  %v6423 = vpack.c.b16 %v6387, %v6384
  %v6424 = vpack.c.b16 %v6391, %v6388
  %v6425 = vpack.c.b16 %v6392, %v6389
  %v6426 = vpack.c.b16 %v6393, %v6390
  %v6427 = vpack.c.b16 %v6397, %v6394
  %v6428 = vpack.c.b16 %v6398, %v6395
  %v6429 = vpack.c.b16 %v6399, %v6396
  %v6430 = vpack.c.b16 %v6403, %v6400
  %v6431 = vpack.c.b16 %v6404, %v6401
  %v6432 = vpack.c.b16 %v6405, %v6402
  %v6433 = vpack.c.b16 %v6409, %v6406
  %v6434 = vpack.c.b16 %v6410, %v6407
  %v6435 = vpack.c.b16 %v6411, %v6408
  %6460 = vmatprep.subr.bf16.mxu0 %v6413
  %6461 = vmatpush1.bf16.msra.mxu0 %v6412
  %6462 = vmatprep.subr.bf16.mxu0 %v6416
  %6463 = vmatpush1.bf16.msra.mxu0 %v6415
  %6464 = vmatprep.subr.bf16.mxu0 %v6419
  %6465 = vmatpush1.bf16.msra.mxu0 %v6418
  %6466 = vmatprep.subr.bf16.mxu0 %v6422
  %6467 = vmatpush1.bf16.msra.mxu0 %v6421
  %6468 = vmatprep.subr.bf16.mxu0 %v6425
  %6469 = vmatpush1.bf16.msra.mxu0 %v6424
  %6470 = vmatprep.subr.bf16.mxu0 %v6428
  %6471 = vmatpush1.bf16.msra.mxu0 %v6427
  %6472 = vmatprep.subr.bf16.mxu0 %v6431
  %6473 = vmatpush1.bf16.msra.mxu0 %v6430
  %6474 = vmatprep.subr.bf16.mxu0 %v6434
  %6475 = vmatpush1.bf16.msra.mxu0 %v6433
  %6476 = vmatprep.subr.bf16.mxu0 0
  %6477 = vmatpush1.bf16.msra.mxu0 0
  %6478 = vmatprep.subr.bf16.mxu0 0
  %6479 = vmatpush1.bf16.msra.mxu0 0
  %6480 = vmatprep.subr.bf16.mxu0 0
  %6481 = vmatpush1.bf16.msra.mxu0 0
  %6482 = vmatprep.subr.bf16.mxu0 0
  %6483 = vmatpush1.bf16.msra.mxu0 0
  %6484 = vmatprep.subr.bf16.mxu0 0
  %6485 = vmatpush1.bf16.msra.mxu0 0
  %6486 = vmatprep.subr.bf16.mxu0 0
  %6487 = vmatpush1.bf16.msra.mxu0 0
  %6488 = vmatprep.subr.bf16.mxu0 0
  %6489 = vmatpush1.bf16.msra.mxu0 0
  %6490 = vmatprep.subr.bf16.mxu0 0
  %6491 = vmatpush1.bf16.msra.mxu0 0
  %6492 = vmatprep.mubr.bf16.mxu0 0
  %6493 = vmatmul.mubr.bf16.gmra.mrb[0].mxu0 %v5771
  %v6494 = vpop.f32.mrb[0].mxu0
  %v6495 = vadd.f32 %v832, %v6494
  %v6496 = vpop.f32.mrb[0].mxu0
  %v6497 = vadd.f32 %v836, %v6496
  %v6498 = vpop.f32.mrb[0].mxu0
  %v6499 = vpop.f32.mrb[0].mxu0
  %6500 = vdwg.mxu0
  %6501 = vmatprep.subr.bf16.mxu0 0
  %6502 = vmatpush1.bf16.msra.mxu0 %v6414
  %6503 = vmatprep.subr.bf16.mxu0 0
  %6504 = vmatpush1.bf16.msra.mxu0 %v6417
  %6505 = vmatprep.subr.bf16.mxu0 0
  %6506 = vmatpush1.bf16.msra.mxu0 %v6420
  %6507 = vmatprep.subr.bf16.mxu0 0
  %6508 = vmatpush1.bf16.msra.mxu0 %v6423
  %6509 = vmatprep.subr.bf16.mxu0 0
  %6510 = vmatpush1.bf16.msra.mxu0 %v6426
  %6511 = vmatprep.subr.bf16.mxu0 0
  %6512 = vmatpush1.bf16.msra.mxu0 %v6429
  %6513 = vmatprep.subr.bf16.mxu0 0
  %6514 = vmatpush1.bf16.msra.mxu0 %v6432
  %6515 = vmatprep.subr.bf16.mxu0 0
  %6516 = vmatpush1.bf16.msra.mxu0 %v6435
  %6517 = vmatprep.subr.bf16.mxu0 0
  %6518 = vmatpush1.bf16.msra.mxu0 0
  %6519 = vmatprep.subr.bf16.mxu0 0
  %6520 = vmatpush1.bf16.msra.mxu0 0
  %6521 = vmatprep.subr.bf16.mxu0 0
  %6522 = vmatpush1.bf16.msra.mxu0 0
  %6523 = vmatprep.subr.bf16.mxu0 0
  %6524 = vmatpush1.bf16.msra.mxu0 0
  %6525 = vmatprep.subr.bf16.mxu0 0
  %6526 = vmatpush1.bf16.msra.mxu0 0
  %6527 = vmatprep.subr.bf16.mxu0 0
  %6528 = vmatpush1.bf16.msra.mxu0 0
  %6529 = vmatprep.subr.bf16.mxu0 0
  %6530 = vmatpush1.bf16.msra.mxu0 0
  %6531 = vmatprep.subr.bf16.mxu0 0
  %6532 = vmatpush1.bf16.msra.mxu0 0
  %6533 = vmatprep.mubr.bf16.mxu0 0
  %6534 = vmatmul.mubr.bf16.gmra.mrb[0].mxu0 %v5771
  %v6535 = vpop.f32.mrb[0].mxu0
  %v6536 = vadd.f32 %v840, %v6535
  %v6537 = vpop.f32.mrb[0].mxu0
  %v6538 = vpop.f32.mrb[0].mxu0
  %v6539 = vpop.f32.mrb[0].mxu0
  %6540 = vdwg.mxu0
  %v6541 = vadd.f32 %v6297, %v6495
  %v6542 = vxor.u32 %v6541, 2147483648
  %v6543 = vmul.f32 %v6542, 1.442695
  %v6544 = vpow.pop %v6543
  %v6545 = vadd.f32 %v6544, 1.0
  %v6546 = vrcp.pop %v6545
  %v6547 = vmul.f32 1.0, %v6546
  %v6548 = vadd.f32 %v6298, %v6497
  %v6549 = vxor.u32 %v6548, 2147483648
  %v6550 = vmul.f32 %v6549, 1.442695
  %v6551 = vpow.pop %v6550
  %v6552 = vadd.f32 %v6551, 1.0
  %v6553 = vrcp.pop %v6552
  %v6554 = vmul.f32 1.0, %v6553
  %v6555 = vmul.f32 %v6547, %v6536
  %v6556 = vadd.f32 %v6299, %v6555
  %v6557 = vtanh.pop %v6556
  %v6558 = vsub.f32 1.0, %v6554
  %v6559 = vmul.f32 %v6558, %v6557
  %v6560 = vmul.f32 %v6554, %v5770
  %v6561 = vadd.f32 %v6559, %v6560
  %v6562 = vpack.c.bf16 %v6561, %v6561
  %v6563 = vld [vmem:[%s11] sm:$0xf]
  %v6564 = vld [vmem:[%s11 + $0x4] sm:$0xf]
  %v6565 = vld [vmem:[%s11 + $0x8] sm:$0xf]
  %v6566 = vld [vmem:[%s11 + $0xc] sm:$0xf]
  %v6567 = vld [vmem:[%s11 + $0x10] sm:$0xf]
  %v6568 = vld [vmem:[%s11 + $0x14] sm:$0xf]
  %v6569 = vld [vmem:[%s11 + $0x18] sm:$0xf]
  %v6570 = vld [vmem:[%s11 + $0x1c] sm:$0xf]
  %v6571 = vld [vmem:[%s11 + $0x20] sm:$0xf]
  %v6572 = vld [vmem:[%s11 + $0x24] sm:$0xf]
  %v6573 = vld [vmem:[%s11 + $0x28] sm:$0xf]
  %v6574 = vld [vmem:[%s11 + $0x2c] sm:$0xf]
  %v6575 = vld [vmem:[%s11 + $0x30] sm:$0xf]
  %v6576 = vld [vmem:[%s11 + $0x34] sm:$0xf]
  %v6577 = vld [vmem:[%s11 + $0x38] sm:$0xf]
  %v6578 = vld [vmem:[%s11 + $0x3c] sm:$0xf]
  %v6579 = vld [vmem:[%s11 + $0x40] sm:$0xf]
  %v6580 = vld [vmem:[%s11 + $0x44] sm:$0xf]
  %v6581 = vld [vmem:[%s11 + $0x48] sm:$0xf]
  %v6582 = vld [vmem:[%s11 + $0x4c] sm:$0xf]
  %v6583 = vld [vmem:[%s11 + $0x50] sm:$0xf]
  %v6584 = vld [vmem:[%s11 + $0x54] sm:$0xf]
  %v6585 = vld [vmem:[%s11 + $0x58] sm:$0xf]
  %v6586 = vld [vmem:[%s11 + $0x5c] sm:$0xf]
  %v6587 = vld [vmem:[%s11 + $0x60] sm:$0xf]
  %v6588 = vld [vmem:[%s11 + $0x64] sm:$0xf]
  %v6589 = vld [vmem:[%s11 + $0x68] sm:$0xf]
  %v6590 = vld [vmem:[%s11 + $0x6c] sm:$0xf]
  %v6591 = vld [vmem:[%s11 + $0x70] sm:$0xf]
  %v6592 = vld [vmem:[%s11 + $0x74] sm:$0xf]
  %v6593 = vld [vmem:[%s11 + $0x78] sm:$0xf]
  %v6594 = vld [vmem:[%s11 + $0x7c] sm:$0xf]
  %v6627 = vunpack.c.l.b16 %v6563
  %v6628 = vunpack.c.l.b16 %v6564
  %v6629 = vunpack.c.l.b16 %v6565
  %v6630 = vunpack.c.l.b16 %v6566
  %v6631 = vunpack.c.l.b16 %v6567
  %v6632 = vunpack.c.l.b16 %v6568
  %v6633 = vunpack.c.l.b16 %v6569
  %v6634 = vunpack.c.l.b16 %v6570
  %v6635 = vunpack.c.l.b16 %v6571
  %v6636 = vunpack.c.l.b16 %v6572
  %v6637 = vunpack.c.l.b16 %v6573
  %v6638 = vunpack.c.l.b16 %v6574
  %v6639 = vunpack.c.l.b16 %v6575
  %v6640 = vunpack.c.l.b16 %v6576
  %v6641 = vunpack.c.l.b16 %v6577
  %v6642 = vunpack.c.l.b16 %v6578
  %v6643 = vunpack.c.l.b16 %v6579
  %v6644 = vunpack.c.l.b16 %v6580
  %v6645 = vunpack.c.l.b16 %v6581
  %v6646 = vunpack.c.l.b16 %v6582
  %v6647 = vunpack.c.l.b16 %v6583
  %v6648 = vunpack.c.l.b16 %v6584
  %v6649 = vunpack.c.l.b16 %v6585
  %v6650 = vunpack.c.l.b16 %v6586
  %v6651 = vunpack.c.l.b16 %v6587
  %v6652 = vunpack.c.l.b16 %v6588
  %v6653 = vunpack.c.l.b16 %v6589
  %v6654 = vunpack.c.l.b16 %v6590
  %v6655 = vunpack.c.l.b16 %v6591
  %v6656 = vunpack.c.l.b16 %v6592
  %v6657 = vunpack.c.l.b16 %v6593
  %v6658 = vunpack.c.l.b16 %v6594
  %v6659 = vpack.c.b16 %v6628, %v6627
  %v6660 = vpack.c.b16 %v6630, %v6629
  %v6661 = vpack.c.b16 %v6632, %v6631
  %v6662 = vpack.c.b16 %v6634, %v6633
  %v6663 = vpack.c.b16 %v6636, %v6635
  %v6664 = vpack.c.b16 %v6638, %v6637
  %v6665 = vpack.c.b16 %v6640, %v6639
  %v6666 = vpack.c.b16 %v6642, %v6641
  %v6667 = vpack.c.b16 %v6644, %v6643
  %v6668 = vpack.c.b16 %v6646, %v6645
  %v6669 = vpack.c.b16 %v6648, %v6647
  %v6670 = vpack.c.b16 %v6650, %v6649
  %v6671 = vpack.c.b16 %v6652, %v6651
  %v6672 = vpack.c.b16 %v6654, %v6653
  %v6673 = vpack.c.b16 %v6656, %v6655
  %v6674 = vpack.c.b16 %v6658, %v6657
  %6691 = vmatprep.subr.bf16.mxu0 0
  %6692 = vmatpush1.bf16.msra.mxu0 %v6659
  %6693 = vmatprep.subr.bf16.mxu0 0
  %6694 = vmatpush1.bf16.msra.mxu0 %v6660
  %6695 = vmatprep.subr.bf16.mxu0 0
  %6696 = vmatpush1.bf16.msra.mxu0 %v6661
  %6697 = vmatprep.subr.bf16.mxu0 0
  %6698 = vmatpush1.bf16.msra.mxu0 %v6662
  %6699 = vmatprep.subr.bf16.mxu0 0
  %6700 = vmatpush1.bf16.msra.mxu0 %v6663
  %6701 = vmatprep.subr.bf16.mxu0 0
  %6702 = vmatpush1.bf16.msra.mxu0 %v6664
  %6703 = vmatprep.subr.bf16.mxu0 0
  %6704 = vmatpush1.bf16.msra.mxu0 %v6665
  %6705 = vmatprep.subr.bf16.mxu0 0
  %6706 = vmatpush1.bf16.msra.mxu0 %v6666
  %6707 = vmatprep.subr.bf16.mxu0 0
  %6708 = vmatpush1.bf16.msra.mxu0 %v6667
  %6709 = vmatprep.subr.bf16.mxu0 0
  %6710 = vmatpush1.bf16.msra.mxu0 %v6668
  %6711 = vmatprep.subr.bf16.mxu0 0
  %6712 = vmatpush1.bf16.msra.mxu0 %v6669
  %6713 = vmatprep.subr.bf16.mxu0 0
  %6714 = vmatpush1.bf16.msra.mxu0 %v6670
  %6715 = vmatprep.subr.bf16.mxu0 0
  %6716 = vmatpush1.bf16.msra.mxu0 %v6671
  %6717 = vmatprep.subr.bf16.mxu0 0
  %6718 = vmatpush1.bf16.msra.mxu0 %v6672
  %6719 = vmatprep.subr.bf16.mxu0 0
  %6720 = vmatpush1.bf16.msra.mxu0 %v6673
  %6721 = vmatprep.subr.bf16.mxu0 0
  %6722 = vmatpush1.bf16.msra.mxu0 %v6674
  %6723 = vmatprep.mubr.bf16.mxu0 %v6050
  %6724 = vmatmul.mubr.bf16.gmra.mrb[0].mxu0 %v6562
  %v6725 = vpop.f32.mrb[0].mxu0
  %v6726 = vadd.f32 %v849, %v6725
  %v6727 = vpop.f32.mrb[0].mxu0
  %v6728 = vpop.f32.mrb[0].mxu0
  %v6729 = vpop.f32.mrb[0].mxu0
  %6730 = vdwg.mxu0
  %s6731 = scalar_lea.vmem %s13, 24
  %6732 = vst [vmem:[%s6731] sm:$0xff] %v6726
  %v6733 = vmul.f32 %v3559, %v6561
  %v6734 = vmul.f32 %v3560, %v6561
  %v6735 = vmul.f32 %v3561, %v6561
  %v6736 = vmul.f32 %v3562, %v6561
  %v6737 = vmul.f32 %v3563, %v6561
  %v6738 = vmul.f32 %v3564, %v6561
  %v6739 = vmul.f32 %v3565, %v6561
  %v6740 = vmul.f32 %v3566, %v6561
  %v6741 = vmul.f32 %v3567, %v6561
  %v6742 = vmul.f32 %v3568, %v6561
  %6743 = vadd.xlane.f32.xlu0 %v6733
  %v6744 = vpop.xlane.xlu0 %6743
  %6745 = vadd.xlane.f32.xlu0 %v6734
  %v6746 = vpop.xlane.xlu0 %6745
  %6747 = vadd.xlane.f32.xlu0 %v6735
  %v6748 = vpop.xlane.xlu0 %6747
  %6749 = vadd.xlane.f32.xlu0 %v6736
  %v6750 = vpop.xlane.xlu0 %6749
  %6751 = vadd.xlane.f32.xlu0 %v6737
  %v6752 = vpop.xlane.xlu0 %6751
  %6753 = vadd.xlane.f32.xlu0 %v6738
  %v6754 = vpop.xlane.xlu0 %6753
  %6755 = vadd.xlane.f32.xlu0 %v6739
  %v6756 = vpop.xlane.xlu0 %6755
  %6757 = vadd.xlane.f32.xlu0 %v6740
  %v6758 = vpop.xlane.xlu0 %6757
  %6759 = vadd.xlane.f32.xlu0 %v6741
  %v6760 = vpop.xlane.xlu0 %6759
  %6761 = vadd.xlane.f32.xlu0 %v6742
  %v6762 = vpop.xlane.xlu0 %6761
  %v6763 = vmax.f32 %v6744, %v6752
  %v6764 = vmax.f32 %v6746, %v6754
  %v6765 = vmax.f32 %v6748, %v6756
  %v6766 = vmax.f32 %v6750, %v6758
  %v6767 = vmax.f32 %v6763, %v6760
  %v6768 = vmax.f32 %v6764, %v6762
  %v6769 = vmax.f32 %v6767, %v6768
  %v6770 = vmax.f32 %v6765, %v6766
  %v6771 = vmax.f32 %v6769, %v6770
  %v6772 = vsub.f32 %v6744, %v6771
  %v6773 = vsub.f32 %v6746, %v6771
  %v6774 = vsub.f32 %v6748, %v6771
  %v6775 = vsub.f32 %v6750, %v6771
  %v6776 = vsub.f32 %v6752, %v6771
  %v6777 = vsub.f32 %v6754, %v6771
  %v6778 = vsub.f32 %v6756, %v6771
  %v6779 = vsub.f32 %v6758, %v6771
  %v6780 = vsub.f32 %v6760, %v6771
  %v6781 = vsub.f32 %v6762, %v6771
  %v6782 = vmul.f32 %v6772, 1.442695
  %v6783 = vpow.pop %v6782
  %v6784 = vmul.f32 %v6773, 1.442695
  %v6785 = vpow.pop %v6784
  %v6786 = vmul.f32 %v6774, 1.442695
  %v6787 = vpow.pop %v6786
  %v6788 = vmul.f32 %v6775, 1.442695
  %v6789 = vpow.pop %v6788
  %v6790 = vmul.f32 %v6776, 1.442695
  %v6791 = vpow.pop %v6790
  %v6792 = vmul.f32 %v6777, 1.442695
  %v6793 = vpow.pop %v6792
  %v6794 = vmul.f32 %v6778, 1.442695
  %v6795 = vpow.pop %v6794
  %v6796 = vmul.f32 %v6779, 1.442695
  %v6797 = vpow.pop %v6796
  %v6798 = vmul.f32 %v6780, 1.442695
  %v6799 = vpow.pop %v6798
  %v6800 = vmul.f32 %v6781, 1.442695
  %v6801 = vpow.pop %v6800
  %v6802 = vadd.f32 %v6783, %v6785
  %v6803 = vadd.f32 %v6802, %v6787
  %v6804 = vadd.f32 %v6803, %v6789
  %v6805 = vadd.f32 %v6804, %v6791
  %v6806 = vadd.f32 %v6805, %v6793
  %v6807 = vadd.f32 %v6806, %v6795
  %v6808 = vadd.f32 %v6807, %v6797
  %v6809 = vadd.f32 %v6808, %v6799
  %v6810 = vadd.f32 %v6809, %v6801
  %v6811 = vrcp.pop %v6810
  %v6812 = vmul.f32 %v6783, %v6811
  %v6813 = vmul.f32 %v6785, %v6811
  %v6814 = vmul.f32 %v6787, %v6811
  %v6815 = vmul.f32 %v6789, %v6811
  %v6816 = vmul.f32 %v6791, %v6811
  %v6817 = vmul.f32 %v6793, %v6811
  %v6818 = vmul.f32 %v6795, %v6811
  %v6819 = vmul.f32 %v6797, %v6811
  %v6820 = vmul.f32 %v6799, %v6811
  %v6821 = vmul.f32 %v6801, %v6811
  %v6822 = vmul.f32 %v6812, %v3559
  %v6823 = vmul.f32 %v6813, %v3560
  %v6824 = vmul.f32 %v6814, %v3561
  %v6825 = vmul.f32 %v6815, %v3562
  %v6826 = vmul.f32 %v6816, %v3563
  %v6827 = vmul.f32 %v6817, %v3564
  %v6828 = vmul.f32 %v6818, %v3565
  %v6829 = vmul.f32 %v6819, %v3566
  %v6830 = vmul.f32 %v6820, %v3567
  %v6831 = vmul.f32 %v6821, %v3568
  %v6832 = vadd.f32 %v6822, %v6823
  %v6833 = vadd.f32 %v6832, %v6824
  %v6834 = vadd.f32 %v6833, %v6825
  %v6835 = vadd.f32 %v6834, %v6826
  %v6836 = vadd.f32 %v6835, %v6827
  %v6837 = vadd.f32 %v6836, %v6828
  %v6838 = vadd.f32 %v6837, %v6829
  %v6839 = vadd.f32 %v6838, %v6830
  %v6840 = vadd.f32 %v6839, %v6831
  %v6841 = vpack.c.bf16 %v6840, %v6840
  %s6842 = smul.addr %s1933, 8
  %s6843 = scalar_lea.vmem [#allocation4], %s6842
  %v6844 = vld [vmem:[%s6843] sm:$0xff]
  %v6845 = vld [vmem:[%s6843 + $0x8] sm:$0xff]
  %v6846 = vld [vmem:[%s6843 + $0x10] sm:$0xff]
  %v6847 = vld [vmem:[%s7] sm:$0xff]
  %v6848 = vld [vmem:[%s7 + $0x8] sm:$0xf]
  %v6849 = vld [vmem:[%s7 + $0xc] sm:$0xff]
  %v6850 = vld [vmem:[%s7 + $0x14] sm:$0xf]
  %v6851 = vld [vmem:[%s7 + $0x18] sm:$0xff]
  %v6852 = vld [vmem:[%s7 + $0x20] sm:$0xf]
  %v6853 = vld [vmem:[%s7 + $0x24] sm:$0xff]
  %v6854 = vld [vmem:[%s7 + $0x2c] sm:$0xf]
  %v6855 = vld [vmem:[%s7 + $0x30] sm:$0xff]
  %v6856 = vld [vmem:[%s7 + $0x38] sm:$0xf]
  %v6857 = vld [vmem:[%s7 + $0x3c] sm:$0xff]
  %v6858 = vld [vmem:[%s7 + $0x44] sm:$0xf]
  %v6859 = vld [vmem:[%s7 + $0x48] sm:$0xff]
  %v6860 = vld [vmem:[%s7 + $0x50] sm:$0xf]
  %v6861 = vld [vmem:[%s7 + $0x54] sm:$0xff]
  %v6862 = vld [vmem:[%s7 + $0x5c] sm:$0xf]
  %v6863 = vld [vmem:[%s7 + $0x60] sm:$0xff]
  %v6864 = vld [vmem:[%s7 + $0x68] sm:$0xf]
  %v6865 = vld [vmem:[%s7 + $0x6c] sm:$0xff]
  %v6866 = vld [vmem:[%s7 + $0x74] sm:$0xf]
  %v6867 = vld [vmem:[%s7 + $0x78] sm:$0xff]
  %v6868 = vld [vmem:[%s7 + $0x80] sm:$0xf]
  %v6869 = vld [vmem:[%s7 + $0x84] sm:$0xff]
  %v6870 = vld [vmem:[%s7 + $0x8c] sm:$0xf]
  %v6871 = vld [vmem:[%s7 + $0x90] sm:$0xff]
  %v6872 = vld [vmem:[%s7 + $0x98] sm:$0xf]
  %v6873 = vld [vmem:[%s7 + $0x9c] sm:$0xff]
  %v6874 = vld [vmem:[%s7 + $0xa4] sm:$0xf]
  %v6875 = vld [vmem:[%s7 + $0xa8] sm:$0xff]
  %v6876 = vld [vmem:[%s7 + $0xb0] sm:$0xf]
  %v6877 = vld [vmem:[%s7 + $0xb4] sm:$0xff]
  %v6878 = vld [vmem:[%s7 + $0xbc] sm:$0xf]
  %v6911 = vunpack.c.l.b16 %v6847
  %v6912 = vunpack.c.h.b16 %v6847
  %v6913 = vunpack.c.l.b16 %v6848
  %v6914 = vunpack.c.l.b16 %v6849
  %v6915 = vunpack.c.h.b16 %v6849
  %v6916 = vunpack.c.l.b16 %v6850
  %v6917 = vunpack.c.l.b16 %v6851
  %v6918 = vunpack.c.h.b16 %v6851
  %v6919 = vunpack.c.l.b16 %v6852
  %v6920 = vunpack.c.l.b16 %v6853
  %v6921 = vunpack.c.h.b16 %v6853
  %v6922 = vunpack.c.l.b16 %v6854
  %v6923 = vunpack.c.l.b16 %v6855
  %v6924 = vunpack.c.h.b16 %v6855
  %v6925 = vunpack.c.l.b16 %v6856
  %v6926 = vunpack.c.l.b16 %v6857
  %v6927 = vunpack.c.h.b16 %v6857
  %v6928 = vunpack.c.l.b16 %v6858
  %v6929 = vunpack.c.l.b16 %v6859
  %v6930 = vunpack.c.h.b16 %v6859
  %v6931 = vunpack.c.l.b16 %v6860
  %v6932 = vunpack.c.l.b16 %v6861
  %v6933 = vunpack.c.h.b16 %v6861
  %v6934 = vunpack.c.l.b16 %v6862
  %v6935 = vunpack.c.l.b16 %v6863
  %v6936 = vunpack.c.h.b16 %v6863
  %v6937 = vunpack.c.l.b16 %v6864
  %v6938 = vunpack.c.l.b16 %v6865
  %v6939 = vunpack.c.h.b16 %v6865
  %v6940 = vunpack.c.l.b16 %v6866
  %v6941 = vunpack.c.l.b16 %v6867
  %v6942 = vunpack.c.h.b16 %v6867
  %v6943 = vunpack.c.l.b16 %v6868
  %v6944 = vunpack.c.l.b16 %v6869
  %v6945 = vunpack.c.h.b16 %v6869
  %v6946 = vunpack.c.l.b16 %v6870
  %v6947 = vunpack.c.l.b16 %v6871
  %v6948 = vunpack.c.h.b16 %v6871
  %v6949 = vunpack.c.l.b16 %v6872
  %v6950 = vunpack.c.l.b16 %v6873
  %v6951 = vunpack.c.h.b16 %v6873
  %v6952 = vunpack.c.l.b16 %v6874
  %v6953 = vunpack.c.l.b16 %v6875
  %v6954 = vunpack.c.h.b16 %v6875
  %v6955 = vunpack.c.l.b16 %v6876
  %v6956 = vunpack.c.l.b16 %v6877
  %v6957 = vunpack.c.h.b16 %v6877
  %v6958 = vunpack.c.l.b16 %v6878
  %v6959 = vpack.c.b16 %v6914, %v6911
  %v6960 = vpack.c.b16 %v6915, %v6912
  %v6961 = vpack.c.b16 %v6916, %v6913
  %v6962 = vpack.c.b16 %v6920, %v6917
  %v6963 = vpack.c.b16 %v6921, %v6918
  %v6964 = vpack.c.b16 %v6922, %v6919
  %v6965 = vpack.c.b16 %v6926, %v6923
  %v6966 = vpack.c.b16 %v6927, %v6924
  %v6967 = vpack.c.b16 %v6928, %v6925
  %v6968 = vpack.c.b16 %v6932, %v6929
  %v6969 = vpack.c.b16 %v6933, %v6930
  %v6970 = vpack.c.b16 %v6934, %v6931
  %v6971 = vpack.c.b16 %v6938, %v6935
  %v6972 = vpack.c.b16 %v6939, %v6936
  %v6973 = vpack.c.b16 %v6940, %v6937
  %v6974 = vpack.c.b16 %v6944, %v6941
  %v6975 = vpack.c.b16 %v6945, %v6942
  %v6976 = vpack.c.b16 %v6946, %v6943
  %v6977 = vpack.c.b16 %v6950, %v6947
  %v6978 = vpack.c.b16 %v6951, %v6948
  %v6979 = vpack.c.b16 %v6952, %v6949
  %v6980 = vpack.c.b16 %v6956, %v6953
  %v6981 = vpack.c.b16 %v6957, %v6954
  %v6982 = vpack.c.b16 %v6958, %v6955
  %7007 = vmatprep.subr.bf16.mxu0 %v6960
  %7008 = vmatpush1.bf16.msra.mxu0 %v6959
  %7009 = vmatprep.subr.bf16.mxu0 %v6963
  %7010 = vmatpush1.bf16.msra.mxu0 %v6962
  %7011 = vmatprep.subr.bf16.mxu0 %v6966
  %7012 = vmatpush1.bf16.msra.mxu0 %v6965
  %7013 = vmatprep.subr.bf16.mxu0 %v6969
  %7014 = vmatpush1.bf16.msra.mxu0 %v6968
  %7015 = vmatprep.subr.bf16.mxu0 %v6972
  %7016 = vmatpush1.bf16.msra.mxu0 %v6971
  %7017 = vmatprep.subr.bf16.mxu0 %v6975
  %7018 = vmatpush1.bf16.msra.mxu0 %v6974
  %7019 = vmatprep.subr.bf16.mxu0 %v6978
  %7020 = vmatpush1.bf16.msra.mxu0 %v6977
  %7021 = vmatprep.subr.bf16.mxu0 %v6981
  %7022 = vmatpush1.bf16.msra.mxu0 %v6980
  %7023 = vmatprep.subr.bf16.mxu0 0
  %7024 = vmatpush1.bf16.msra.mxu0 0
  %7025 = vmatprep.subr.bf16.mxu0 0
  %7026 = vmatpush1.bf16.msra.mxu0 0
  %7027 = vmatprep.subr.bf16.mxu0 0
  %7028 = vmatpush1.bf16.msra.mxu0 0
  %7029 = vmatprep.subr.bf16.mxu0 0
  %7030 = vmatpush1.bf16.msra.mxu0 0
  %7031 = vmatprep.subr.bf16.mxu0 0
  %7032 = vmatpush1.bf16.msra.mxu0 0
  %7033 = vmatprep.subr.bf16.mxu0 0
  %7034 = vmatpush1.bf16.msra.mxu0 0
  %7035 = vmatprep.subr.bf16.mxu0 0
  %7036 = vmatpush1.bf16.msra.mxu0 0
  %7037 = vmatprep.subr.bf16.mxu0 0
  %7038 = vmatpush1.bf16.msra.mxu0 0
  %7039 = vmatprep.mubr.bf16.mxu0 0
  %7040 = vmatmul.mubr.bf16.gmra.mrb[0].mxu0 %v6841
  %v7041 = vpop.f32.mrb[0].mxu0
  %v7042 = vadd.f32 0.0, %v7041
  %v7043 = vpop.f32.mrb[0].mxu0
  %v7044 = vadd.f32 0.0, %v7043
  %v7045 = vpop.f32.mrb[0].mxu0
  %v7046 = vpop.f32.mrb[0].mxu0
  %7047 = vdwg.mxu0
  %7048 = vmatprep.subr.bf16.mxu0 0
  %7049 = vmatpush1.bf16.msra.mxu0 %v6961
  %7050 = vmatprep.subr.bf16.mxu0 0
  %7051 = vmatpush1.bf16.msra.mxu0 %v6964
  %7052 = vmatprep.subr.bf16.mxu0 0
  %7053 = vmatpush1.bf16.msra.mxu0 %v6967
  %7054 = vmatprep.subr.bf16.mxu0 0
  %7055 = vmatpush1.bf16.msra.mxu0 %v6970
  %7056 = vmatprep.subr.bf16.mxu0 0
  %7057 = vmatpush1.bf16.msra.mxu0 %v6973
  %7058 = vmatprep.subr.bf16.mxu0 0
  %7059 = vmatpush1.bf16.msra.mxu0 %v6976
  %7060 = vmatprep.subr.bf16.mxu0 0
  %7061 = vmatpush1.bf16.msra.mxu0 %v6979
  %7062 = vmatprep.subr.bf16.mxu0 0
  %7063 = vmatpush1.bf16.msra.mxu0 %v6982
  %7064 = vmatprep.subr.bf16.mxu0 0
  %7065 = vmatpush1.bf16.msra.mxu0 0
  %7066 = vmatprep.subr.bf16.mxu0 0
  %7067 = vmatpush1.bf16.msra.mxu0 0
  %7068 = vmatprep.subr.bf16.mxu0 0
  %7069 = vmatpush1.bf16.msra.mxu0 0
  %7070 = vmatprep.subr.bf16.mxu0 0
  %7071 = vmatpush1.bf16.msra.mxu0 0
  %7072 = vmatprep.subr.bf16.mxu0 0
  %7073 = vmatpush1.bf16.msra.mxu0 0
  %7074 = vmatprep.subr.bf16.mxu0 0
  %7075 = vmatpush1.bf16.msra.mxu0 0
  %7076 = vmatprep.subr.bf16.mxu0 0
  %7077 = vmatpush1.bf16.msra.mxu0 0
  %7078 = vmatprep.subr.bf16.mxu0 0
  %7079 = vmatpush1.bf16.msra.mxu0 0
  %7080 = vmatprep.mubr.bf16.mxu0 0
  %7081 = vmatmul.mubr.bf16.gmra.mrb[0].mxu0 %v6841
  %v7082 = vpop.f32.mrb[0].mxu0
  %v7083 = vadd.f32 0.0, %v7082
  %v7084 = vpop.f32.mrb[0].mxu0
  %v7085 = vpop.f32.mrb[0].mxu0
  %v7086 = vpop.f32.mrb[0].mxu0
  %7087 = vdwg.mxu0
  %v7088 = vadd.f32 %v6844, %v7042
  %v7089 = vadd.f32 %v6845, %v7044
  %v7090 = vadd.f32 %v6846, %v7083
  %v7091 = vld [vmem:[%s8] sm:$0xff]
  %v7092 = vld [vmem:[%s8 + $0x8] sm:$0xf]
  %v7093 = vld [vmem:[%s8 + $0xc] sm:$0xff]
  %v7094 = vld [vmem:[%s8 + $0x14] sm:$0xf]
  %v7095 = vld [vmem:[%s8 + $0x18] sm:$0xff]
  %v7096 = vld [vmem:[%s8 + $0x20] sm:$0xf]
  %v7097 = vld [vmem:[%s8 + $0x24] sm:$0xff]
  %v7098 = vld [vmem:[%s8 + $0x2c] sm:$0xf]
  %v7099 = vld [vmem:[%s8 + $0x30] sm:$0xff]
  %v7100 = vld [vmem:[%s8 + $0x38] sm:$0xf]
  %v7101 = vld [vmem:[%s8 + $0x3c] sm:$0xff]
  %v7102 = vld [vmem:[%s8 + $0x44] sm:$0xf]
  %v7103 = vld [vmem:[%s8 + $0x48] sm:$0xff]
  %v7104 = vld [vmem:[%s8 + $0x50] sm:$0xf]
  %v7105 = vld [vmem:[%s8 + $0x54] sm:$0xff]
  %v7106 = vld [vmem:[%s8 + $0x5c] sm:$0xf]
  %v7107 = vld [vmem:[%s8 + $0x60] sm:$0xff]
  %v7108 = vld [vmem:[%s8 + $0x68] sm:$0xf]
  %v7109 = vld [vmem:[%s8 + $0x6c] sm:$0xff]
  %v7110 = vld [vmem:[%s8 + $0x74] sm:$0xf]
  %v7111 = vld [vmem:[%s8 + $0x78] sm:$0xff]
  %v7112 = vld [vmem:[%s8 + $0x80] sm:$0xf]
  %v7113 = vld [vmem:[%s8 + $0x84] sm:$0xff]
  %v7114 = vld [vmem:[%s8 + $0x8c] sm:$0xf]
  %v7115 = vld [vmem:[%s8 + $0x90] sm:$0xff]
  %v7116 = vld [vmem:[%s8 + $0x98] sm:$0xf]
  %v7117 = vld [vmem:[%s8 + $0x9c] sm:$0xff]
  %v7118 = vld [vmem:[%s8 + $0xa4] sm:$0xf]
  %v7119 = vld [vmem:[%s8 + $0xa8] sm:$0xff]
  %v7120 = vld [vmem:[%s8 + $0xb0] sm:$0xf]
  %v7121 = vld [vmem:[%s8 + $0xb4] sm:$0xff]
  %v7122 = vld [vmem:[%s8 + $0xbc] sm:$0xf]
  %v7155 = vunpack.c.l.b16 %v7091
  %v7156 = vunpack.c.h.b16 %v7091
  %v7157 = vunpack.c.l.b16 %v7092
  %v7158 = vunpack.c.l.b16 %v7093
  %v7159 = vunpack.c.h.b16 %v7093
  %v7160 = vunpack.c.l.b16 %v7094
  %v7161 = vunpack.c.l.b16 %v7095
  %v7162 = vunpack.c.h.b16 %v7095
  %v7163 = vunpack.c.l.b16 %v7096
  %v7164 = vunpack.c.l.b16 %v7097
  %v7165 = vunpack.c.h.b16 %v7097
  %v7166 = vunpack.c.l.b16 %v7098
  %v7167 = vunpack.c.l.b16 %v7099
  %v7168 = vunpack.c.h.b16 %v7099
  %v7169 = vunpack.c.l.b16 %v7100
  %v7170 = vunpack.c.l.b16 %v7101
  %v7171 = vunpack.c.h.b16 %v7101
  %v7172 = vunpack.c.l.b16 %v7102
  %v7173 = vunpack.c.l.b16 %v7103
  %v7174 = vunpack.c.h.b16 %v7103
  %v7175 = vunpack.c.l.b16 %v7104
  %v7176 = vunpack.c.l.b16 %v7105
  %v7177 = vunpack.c.h.b16 %v7105
  %v7178 = vunpack.c.l.b16 %v7106
  %v7179 = vunpack.c.l.b16 %v7107
  %v7180 = vunpack.c.h.b16 %v7107
  %v7181 = vunpack.c.l.b16 %v7108
  %v7182 = vunpack.c.l.b16 %v7109
  %v7183 = vunpack.c.h.b16 %v7109
  %v7184 = vunpack.c.l.b16 %v7110
  %v7185 = vunpack.c.l.b16 %v7111
  %v7186 = vunpack.c.h.b16 %v7111
  %v7187 = vunpack.c.l.b16 %v7112
  %v7188 = vunpack.c.l.b16 %v7113
  %v7189 = vunpack.c.h.b16 %v7113
  %v7190 = vunpack.c.l.b16 %v7114
  %v7191 = vunpack.c.l.b16 %v7115
  %v7192 = vunpack.c.h.b16 %v7115
  %v7193 = vunpack.c.l.b16 %v7116
  %v7194 = vunpack.c.l.b16 %v7117
  %v7195 = vunpack.c.h.b16 %v7117
  %v7196 = vunpack.c.l.b16 %v7118
  %v7197 = vunpack.c.l.b16 %v7119
  %v7198 = vunpack.c.h.b16 %v7119
  %v7199 = vunpack.c.l.b16 %v7120
  %v7200 = vunpack.c.l.b16 %v7121
  %v7201 = vunpack.c.h.b16 %v7121
  %v7202 = vunpack.c.l.b16 %v7122
  %v7203 = vpack.c.b16 %v7158, %v7155
  %v7204 = vpack.c.b16 %v7159, %v7156
  %v7205 = vpack.c.b16 %v7160, %v7157
  %v7206 = vpack.c.b16 %v7164, %v7161
  %v7207 = vpack.c.b16 %v7165, %v7162
  %v7208 = vpack.c.b16 %v7166, %v7163
  %v7209 = vpack.c.b16 %v7170, %v7167
  %v7210 = vpack.c.b16 %v7171, %v7168
  %v7211 = vpack.c.b16 %v7172, %v7169
  %v7212 = vpack.c.b16 %v7176, %v7173
  %v7213 = vpack.c.b16 %v7177, %v7174
  %v7214 = vpack.c.b16 %v7178, %v7175
  %v7215 = vpack.c.b16 %v7182, %v7179
  %v7216 = vpack.c.b16 %v7183, %v7180
  %v7217 = vpack.c.b16 %v7184, %v7181
  %v7218 = vpack.c.b16 %v7188, %v7185
  %v7219 = vpack.c.b16 %v7189, %v7186
  %v7220 = vpack.c.b16 %v7190, %v7187
  %v7221 = vpack.c.b16 %v7194, %v7191
  %v7222 = vpack.c.b16 %v7195, %v7192
  %v7223 = vpack.c.b16 %v7196, %v7193
  %v7224 = vpack.c.b16 %v7200, %v7197
  %v7225 = vpack.c.b16 %v7201, %v7198
  %v7226 = vpack.c.b16 %v7202, %v7199
  %7251 = vmatprep.subr.bf16.mxu0 %v7204
  %7252 = vmatpush1.bf16.msra.mxu0 %v7203
  %7253 = vmatprep.subr.bf16.mxu0 %v7207
  %7254 = vmatpush1.bf16.msra.mxu0 %v7206
  %7255 = vmatprep.subr.bf16.mxu0 %v7210
  %7256 = vmatpush1.bf16.msra.mxu0 %v7209
  %7257 = vmatprep.subr.bf16.mxu0 %v7213
  %7258 = vmatpush1.bf16.msra.mxu0 %v7212
  %7259 = vmatprep.subr.bf16.mxu0 %v7216
  %7260 = vmatpush1.bf16.msra.mxu0 %v7215
  %7261 = vmatprep.subr.bf16.mxu0 %v7219
  %7262 = vmatpush1.bf16.msra.mxu0 %v7218
  %7263 = vmatprep.subr.bf16.mxu0 %v7222
  %7264 = vmatpush1.bf16.msra.mxu0 %v7221
  %7265 = vmatprep.subr.bf16.mxu0 %v7225
  %7266 = vmatpush1.bf16.msra.mxu0 %v7224
  %7267 = vmatprep.subr.bf16.mxu0 0
  %7268 = vmatpush1.bf16.msra.mxu0 0
  %7269 = vmatprep.subr.bf16.mxu0 0
  %7270 = vmatpush1.bf16.msra.mxu0 0
  %7271 = vmatprep.subr.bf16.mxu0 0
  %7272 = vmatpush1.bf16.msra.mxu0 0
  %7273 = vmatprep.subr.bf16.mxu0 0
  %7274 = vmatpush1.bf16.msra.mxu0 0
  %7275 = vmatprep.subr.bf16.mxu0 0
  %7276 = vmatpush1.bf16.msra.mxu0 0
  %7277 = vmatprep.subr.bf16.mxu0 0
  %7278 = vmatpush1.bf16.msra.mxu0 0
  %7279 = vmatprep.subr.bf16.mxu0 0
  %7280 = vmatpush1.bf16.msra.mxu0 0
  %7281 = vmatprep.subr.bf16.mxu0 0
  %7282 = vmatpush1.bf16.msra.mxu0 0
  %7283 = vmatprep.mubr.bf16.mxu0 0
  %7284 = vmatmul.mubr.bf16.gmra.mrb[0].mxu0 %v6562
  %v7285 = vpop.f32.mrb[0].mxu0
  %v7286 = vadd.f32 %v832, %v7285
  %v7287 = vpop.f32.mrb[0].mxu0
  %v7288 = vadd.f32 %v836, %v7287
  %v7289 = vpop.f32.mrb[0].mxu0
  %v7290 = vpop.f32.mrb[0].mxu0
  %7291 = vdwg.mxu0
  %7292 = vmatprep.subr.bf16.mxu0 0
  %7293 = vmatpush1.bf16.msra.mxu0 %v7205
  %7294 = vmatprep.subr.bf16.mxu0 0
  %7295 = vmatpush1.bf16.msra.mxu0 %v7208
  %7296 = vmatprep.subr.bf16.mxu0 0
  %7297 = vmatpush1.bf16.msra.mxu0 %v7211
  %7298 = vmatprep.subr.bf16.mxu0 0
  %7299 = vmatpush1.bf16.msra.mxu0 %v7214
  %7300 = vmatprep.subr.bf16.mxu0 0
  %7301 = vmatpush1.bf16.msra.mxu0 %v7217
  %7302 = vmatprep.subr.bf16.mxu0 0
  %7303 = vmatpush1.bf16.msra.mxu0 %v7220
  %7304 = vmatprep.subr.bf16.mxu0 0
  %7305 = vmatpush1.bf16.msra.mxu0 %v7223
  %7306 = vmatprep.subr.bf16.mxu0 0
  %7307 = vmatpush1.bf16.msra.mxu0 %v7226
  %7308 = vmatprep.subr.bf16.mxu0 0
  %7309 = vmatpush1.bf16.msra.mxu0 0
  %7310 = vmatprep.subr.bf16.mxu0 0
  %7311 = vmatpush1.bf16.msra.mxu0 0
  %7312 = vmatprep.subr.bf16.mxu0 0
  %7313 = vmatpush1.bf16.msra.mxu0 0
  %7314 = vmatprep.subr.bf16.mxu0 0
  %7315 = vmatpush1.bf16.msra.mxu0 0
  %7316 = vmatprep.subr.bf16.mxu0 0
  %7317 = vmatpush1.bf16.msra.mxu0 0
  %7318 = vmatprep.subr.bf16.mxu0 0
  %7319 = vmatpush1.bf16.msra.mxu0 0
  %7320 = vmatprep.subr.bf16.mxu0 0
  %7321 = vmatpush1.bf16.msra.mxu0 0
  %7322 = vmatprep.subr.bf16.mxu0 0
  %7323 = vmatpush1.bf16.msra.mxu0 0
  %7324 = vmatprep.mubr.bf16.mxu0 0
  %7325 = vmatmul.mubr.bf16.gmra.mrb[0].mxu0 %v6562
  %v7326 = vpop.f32.mrb[0].mxu0
  %v7327 = vadd.f32 %v840, %v7326
  %v7328 = vpop.f32.mrb[0].mxu0
  %v7329 = vpop.f32.mrb[0].mxu0
  %v7330 = vpop.f32.mrb[0].mxu0
  %7331 = vdwg.mxu0
  %v7332 = vadd.f32 %v7088, %v7286
  %v7333 = vxor.u32 %v7332, 2147483648
  %v7334 = vmul.f32 %v7333, 1.442695
  %v7335 = vpow.pop %v7334
  %v7336 = vadd.f32 %v7335, 1.0
  %v7337 = vrcp.pop %v7336
  %v7338 = vmul.f32 1.0, %v7337
  %v7339 = vadd.f32 %v7089, %v7288
  %v7340 = vxor.u32 %v7339, 2147483648
  %v7341 = vmul.f32 %v7340, 1.442695
  %v7342 = vpow.pop %v7341
  %v7343 = vadd.f32 %v7342, 1.0
  %v7344 = vrcp.pop %v7343
  %v7345 = vmul.f32 1.0, %v7344
  %v7346 = vmul.f32 %v7338, %v7327
  %v7347 = vadd.f32 %v7090, %v7346
  %v7348 = vtanh.pop %v7347
  %v7349 = vsub.f32 1.0, %v7345
  %v7350 = vmul.f32 %v7349, %v7348
  %v7351 = vmul.f32 %v7345, %v6561
  %v7352 = vadd.f32 %v7350, %v7351
  %v7353 = vpack.c.bf16 %v7352, %v7352
  %v7354 = vld [vmem:[%s11] sm:$0xf]
  %v7355 = vld [vmem:[%s11 + $0x4] sm:$0xf]
  %v7356 = vld [vmem:[%s11 + $0x8] sm:$0xf]
  %v7357 = vld [vmem:[%s11 + $0xc] sm:$0xf]
  %v7358 = vld [vmem:[%s11 + $0x10] sm:$0xf]
  %v7359 = vld [vmem:[%s11 + $0x14] sm:$0xf]
  %v7360 = vld [vmem:[%s11 + $0x18] sm:$0xf]
  %v7361 = vld [vmem:[%s11 + $0x1c] sm:$0xf]
  %v7362 = vld [vmem:[%s11 + $0x20] sm:$0xf]
  %v7363 = vld [vmem:[%s11 + $0x24] sm:$0xf]
  %v7364 = vld [vmem:[%s11 + $0x28] sm:$0xf]
  %v7365 = vld [vmem:[%s11 + $0x2c] sm:$0xf]
  %v7366 = vld [vmem:[%s11 + $0x30] sm:$0xf]
  %v7367 = vld [vmem:[%s11 + $0x34] sm:$0xf]
  %v7368 = vld [vmem:[%s11 + $0x38] sm:$0xf]
  %v7369 = vld [vmem:[%s11 + $0x3c] sm:$0xf]
  %v7370 = vld [vmem:[%s11 + $0x40] sm:$0xf]
  %v7371 = vld [vmem:[%s11 + $0x44] sm:$0xf]
  %v7372 = vld [vmem:[%s11 + $0x48] sm:$0xf]
  %v7373 = vld [vmem:[%s11 + $0x4c] sm:$0xf]
  %v7374 = vld [vmem:[%s11 + $0x50] sm:$0xf]
  %v7375 = vld [vmem:[%s11 + $0x54] sm:$0xf]
  %v7376 = vld [vmem:[%s11 + $0x58] sm:$0xf]
  %v7377 = vld [vmem:[%s11 + $0x5c] sm:$0xf]
  %v7378 = vld [vmem:[%s11 + $0x60] sm:$0xf]
  %v7379 = vld [vmem:[%s11 + $0x64] sm:$0xf]
  %v7380 = vld [vmem:[%s11 + $0x68] sm:$0xf]
  %v7381 = vld [vmem:[%s11 + $0x6c] sm:$0xf]
  %v7382 = vld [vmem:[%s11 + $0x70] sm:$0xf]
  %v7383 = vld [vmem:[%s11 + $0x74] sm:$0xf]
  %v7384 = vld [vmem:[%s11 + $0x78] sm:$0xf]
  %v7385 = vld [vmem:[%s11 + $0x7c] sm:$0xf]
  %v7418 = vunpack.c.l.b16 %v7354
  %v7419 = vunpack.c.l.b16 %v7355
  %v7420 = vunpack.c.l.b16 %v7356
  %v7421 = vunpack.c.l.b16 %v7357
  %v7422 = vunpack.c.l.b16 %v7358
  %v7423 = vunpack.c.l.b16 %v7359
  %v7424 = vunpack.c.l.b16 %v7360
  %v7425 = vunpack.c.l.b16 %v7361
  %v7426 = vunpack.c.l.b16 %v7362
  %v7427 = vunpack.c.l.b16 %v7363
  %v7428 = vunpack.c.l.b16 %v7364
  %v7429 = vunpack.c.l.b16 %v7365
  %v7430 = vunpack.c.l.b16 %v7366
  %v7431 = vunpack.c.l.b16 %v7367
  %v7432 = vunpack.c.l.b16 %v7368
  %v7433 = vunpack.c.l.b16 %v7369
  %v7434 = vunpack.c.l.b16 %v7370
  %v7435 = vunpack.c.l.b16 %v7371
  %v7436 = vunpack.c.l.b16 %v7372
  %v7437 = vunpack.c.l.b16 %v7373
  %v7438 = vunpack.c.l.b16 %v7374
  %v7439 = vunpack.c.l.b16 %v7375
  %v7440 = vunpack.c.l.b16 %v7376
  %v7441 = vunpack.c.l.b16 %v7377
  %v7442 = vunpack.c.l.b16 %v7378
  %v7443 = vunpack.c.l.b16 %v7379
  %v7444 = vunpack.c.l.b16 %v7380
  %v7445 = vunpack.c.l.b16 %v7381
  %v7446 = vunpack.c.l.b16 %v7382
  %v7447 = vunpack.c.l.b16 %v7383
  %v7448 = vunpack.c.l.b16 %v7384
  %v7449 = vunpack.c.l.b16 %v7385
  %v7450 = vpack.c.b16 %v7419, %v7418
  %v7451 = vpack.c.b16 %v7421, %v7420
  %v7452 = vpack.c.b16 %v7423, %v7422
  %v7453 = vpack.c.b16 %v7425, %v7424
  %v7454 = vpack.c.b16 %v7427, %v7426
  %v7455 = vpack.c.b16 %v7429, %v7428
  %v7456 = vpack.c.b16 %v7431, %v7430
  %v7457 = vpack.c.b16 %v7433, %v7432
  %v7458 = vpack.c.b16 %v7435, %v7434
  %v7459 = vpack.c.b16 %v7437, %v7436
  %v7460 = vpack.c.b16 %v7439, %v7438
  %v7461 = vpack.c.b16 %v7441, %v7440
  %v7462 = vpack.c.b16 %v7443, %v7442
  %v7463 = vpack.c.b16 %v7445, %v7444
  %v7464 = vpack.c.b16 %v7447, %v7446
  %v7465 = vpack.c.b16 %v7449, %v7448
  %7482 = vmatprep.subr.bf16.mxu0 0
  %7483 = vmatpush1.bf16.msra.mxu0 %v7450
  %7484 = vmatprep.subr.bf16.mxu0 0
  %7485 = vmatpush1.bf16.msra.mxu0 %v7451
  %7486 = vmatprep.subr.bf16.mxu0 0
  %7487 = vmatpush1.bf16.msra.mxu0 %v7452
  %7488 = vmatprep.subr.bf16.mxu0 0
  %7489 = vmatpush1.bf16.msra.mxu0 %v7453
  %7490 = vmatprep.subr.bf16.mxu0 0
  %7491 = vmatpush1.bf16.msra.mxu0 %v7454
  %7492 = vmatprep.subr.bf16.mxu0 0
  %7493 = vmatpush1.bf16.msra.mxu0 %v7455
  %7494 = vmatprep.subr.bf16.mxu0 0
  %7495 = vmatpush1.bf16.msra.mxu0 %v7456
  %7496 = vmatprep.subr.bf16.mxu0 0
  %7497 = vmatpush1.bf16.msra.mxu0 %v7457
  %7498 = vmatprep.subr.bf16.mxu0 0
  %7499 = vmatpush1.bf16.msra.mxu0 %v7458
  %7500 = vmatprep.subr.bf16.mxu0 0
  %7501 = vmatpush1.bf16.msra.mxu0 %v7459
  %7502 = vmatprep.subr.bf16.mxu0 0
  %7503 = vmatpush1.bf16.msra.mxu0 %v7460
  %7504 = vmatprep.subr.bf16.mxu0 0
  %7505 = vmatpush1.bf16.msra.mxu0 %v7461
  %7506 = vmatprep.subr.bf16.mxu0 0
  %7507 = vmatpush1.bf16.msra.mxu0 %v7462
  %7508 = vmatprep.subr.bf16.mxu0 0
  %7509 = vmatpush1.bf16.msra.mxu0 %v7463
  %7510 = vmatprep.subr.bf16.mxu0 0
  %7511 = vmatpush1.bf16.msra.mxu0 %v7464
  %7512 = vmatprep.subr.bf16.mxu0 0
  %7513 = vmatpush1.bf16.msra.mxu0 %v7465
  %7514 = vmatprep.mubr.bf16.mxu0 %v6841
  %7515 = vmatmul.mubr.bf16.gmra.mrb[0].mxu0 %v7353
  %v7516 = vpop.f32.mrb[0].mxu0
  %v7517 = vadd.f32 %v849, %v7516
  %v7518 = vpop.f32.mrb[0].mxu0
  %v7519 = vpop.f32.mrb[0].mxu0
  %v7520 = vpop.f32.mrb[0].mxu0
  %7521 = vdwg.mxu0
  %s7522 = scalar_lea.vmem %s13, 32
  %7523 = vst [vmem:[%s7522] sm:$0xff] %v7517
  %v7524 = vmul.f32 %v3559, %v7352
  %v7525 = vmul.f32 %v3560, %v7352
  %v7526 = vmul.f32 %v3561, %v7352
  %v7527 = vmul.f32 %v3562, %v7352
  %v7528 = vmul.f32 %v3563, %v7352
  %v7529 = vmul.f32 %v3564, %v7352
  %v7530 = vmul.f32 %v3565, %v7352
  %v7531 = vmul.f32 %v3566, %v7352
  %v7532 = vmul.f32 %v3567, %v7352
  %v7533 = vmul.f32 %v3568, %v7352
  %7534 = vadd.xlane.f32.xlu0 %v7524
  %v7535 = vpop.xlane.xlu0 %7534
  %7536 = vadd.xlane.f32.xlu0 %v7525
  %v7537 = vpop.xlane.xlu0 %7536
  %7538 = vadd.xlane.f32.xlu0 %v7526
  %v7539 = vpop.xlane.xlu0 %7538
  %7540 = vadd.xlane.f32.xlu0 %v7527
  %v7541 = vpop.xlane.xlu0 %7540
  %7542 = vadd.xlane.f32.xlu0 %v7528
  %v7543 = vpop.xlane.xlu0 %7542
  %7544 = vadd.xlane.f32.xlu0 %v7529
  %v7545 = vpop.xlane.xlu0 %7544
  %7546 = vadd.xlane.f32.xlu0 %v7530
  %v7547 = vpop.xlane.xlu0 %7546
  %7548 = vadd.xlane.f32.xlu0 %v7531
  %v7549 = vpop.xlane.xlu0 %7548
  %7550 = vadd.xlane.f32.xlu0 %v7532
  %v7551 = vpop.xlane.xlu0 %7550
  %7552 = vadd.xlane.f32.xlu0 %v7533
  %v7553 = vpop.xlane.xlu0 %7552
  %v7554 = vmax.f32 %v7535, %v7543
  %v7555 = vmax.f32 %v7537, %v7545
  %v7556 = vmax.f32 %v7539, %v7547
  %v7557 = vmax.f32 %v7541, %v7549
  %v7558 = vmax.f32 %v7554, %v7551
  %v7559 = vmax.f32 %v7555, %v7553
  %v7560 = vmax.f32 %v7558, %v7559
  %v7561 = vmax.f32 %v7556, %v7557
  %v7562 = vmax.f32 %v7560, %v7561
  %v7563 = vsub.f32 %v7535, %v7562
  %v7564 = vsub.f32 %v7537, %v7562
  %v7565 = vsub.f32 %v7539, %v7562
  %v7566 = vsub.f32 %v7541, %v7562
  %v7567 = vsub.f32 %v7543, %v7562
  %v7568 = vsub.f32 %v7545, %v7562
  %v7569 = vsub.f32 %v7547, %v7562
  %v7570 = vsub.f32 %v7549, %v7562
  %v7571 = vsub.f32 %v7551, %v7562
  %v7572 = vsub.f32 %v7553, %v7562
  %v7573 = vmul.f32 %v7563, 1.442695
  %v7574 = vpow.pop %v7573
  %v7575 = vmul.f32 %v7564, 1.442695
  %v7576 = vpow.pop %v7575
  %v7577 = vmul.f32 %v7565, 1.442695
  %v7578 = vpow.pop %v7577
  %v7579 = vmul.f32 %v7566, 1.442695
  %v7580 = vpow.pop %v7579
  %v7581 = vmul.f32 %v7567, 1.442695
  %v7582 = vpow.pop %v7581
  %v7583 = vmul.f32 %v7568, 1.442695
  %v7584 = vpow.pop %v7583
  %v7585 = vmul.f32 %v7569, 1.442695
  %v7586 = vpow.pop %v7585
  %v7587 = vmul.f32 %v7570, 1.442695
  %v7588 = vpow.pop %v7587
  %v7589 = vmul.f32 %v7571, 1.442695
  %v7590 = vpow.pop %v7589
  %v7591 = vmul.f32 %v7572, 1.442695
  %v7592 = vpow.pop %v7591
  %v7593 = vadd.f32 %v7574, %v7576
  %v7594 = vadd.f32 %v7593, %v7578
  %v7595 = vadd.f32 %v7594, %v7580
  %v7596 = vadd.f32 %v7595, %v7582
  %v7597 = vadd.f32 %v7596, %v7584
  %v7598 = vadd.f32 %v7597, %v7586
  %v7599 = vadd.f32 %v7598, %v7588
  %v7600 = vadd.f32 %v7599, %v7590
  %v7601 = vadd.f32 %v7600, %v7592
  %v7602 = vrcp.pop %v7601
  %v7603 = vmul.f32 %v7574, %v7602
  %v7604 = vmul.f32 %v7576, %v7602
  %v7605 = vmul.f32 %v7578, %v7602
  %v7606 = vmul.f32 %v7580, %v7602
  %v7607 = vmul.f32 %v7582, %v7602
  %v7608 = vmul.f32 %v7584, %v7602
  %v7609 = vmul.f32 %v7586, %v7602
  %v7610 = vmul.f32 %v7588, %v7602
  %v7611 = vmul.f32 %v7590, %v7602
  %v7612 = vmul.f32 %v7592, %v7602
  %v7613 = vmul.f32 %v7603, %v3559
  %v7614 = vmul.f32 %v7604, %v3560
  %v7615 = vmul.f32 %v7605, %v3561
  %v7616 = vmul.f32 %v7606, %v3562
  %v7617 = vmul.f32 %v7607, %v3563
  %v7618 = vmul.f32 %v7608, %v3564
  %v7619 = vmul.f32 %v7609, %v3565
  %v7620 = vmul.f32 %v7610, %v3566
  %v7621 = vmul.f32 %v7611, %v3567
  %v7622 = vmul.f32 %v7612, %v3568
  %v7623 = vadd.f32 %v7613, %v7614
  %v7624 = vadd.f32 %v7623, %v7615
  %v7625 = vadd.f32 %v7624, %v7616
  %v7626 = vadd.f32 %v7625, %v7617
  %v7627 = vadd.f32 %v7626, %v7618
  %v7628 = vadd.f32 %v7627, %v7619
  %v7629 = vadd.f32 %v7628, %v7620
  %v7630 = vadd.f32 %v7629, %v7621
  %v7631 = vadd.f32 %v7630, %v7622
  %v7632 = vpack.c.bf16 %v7631, %v7631
  %s7633 = smul.addr %s2204, 8
  %s7634 = scalar_lea.vmem [#allocation4], %s7633
  %v7635 = vld [vmem:[%s7634] sm:$0xff]
  %v7636 = vld [vmem:[%s7634 + $0x8] sm:$0xff]
  %v7637 = vld [vmem:[%s7634 + $0x10] sm:$0xff]
  %v7638 = vld [vmem:[%s7] sm:$0xff]
  %v7639 = vld [vmem:[%s7 + $0x8] sm:$0xf]
  %v7640 = vld [vmem:[%s7 + $0xc] sm:$0xff]
  %v7641 = vld [vmem:[%s7 + $0x14] sm:$0xf]
  %v7642 = vld [vmem:[%s7 + $0x18] sm:$0xff]
  %v7643 = vld [vmem:[%s7 + $0x20] sm:$0xf]
  %v7644 = vld [vmem:[%s7 + $0x24] sm:$0xff]
  %v7645 = vld [vmem:[%s7 + $0x2c] sm:$0xf]
  %v7646 = vld [vmem:[%s7 + $0x30] sm:$0xff]
  %v7647 = vld [vmem:[%s7 + $0x38] sm:$0xf]
  %v7648 = vld [vmem:[%s7 + $0x3c] sm:$0xff]
  %v7649 = vld [vmem:[%s7 + $0x44] sm:$0xf]
  %v7650 = vld [vmem:[%s7 + $0x48] sm:$0xff]
  %v7651 = vld [vmem:[%s7 + $0x50] sm:$0xf]
  %v7652 = vld [vmem:[%s7 + $0x54] sm:$0xff]
  %v7653 = vld [vmem:[%s7 + $0x5c] sm:$0xf]
  %v7654 = vld [vmem:[%s7 + $0x60] sm:$0xff]
  %v7655 = vld [vmem:[%s7 + $0x68] sm:$0xf]
  %v7656 = vld [vmem:[%s7 + $0x6c] sm:$0xff]
  %v7657 = vld [vmem:[%s7 + $0x74] sm:$0xf]
  %v7658 = vld [vmem:[%s7 + $0x78] sm:$0xff]
  %v7659 = vld [vmem:[%s7 + $0x80] sm:$0xf]
  %v7660 = vld [vmem:[%s7 + $0x84] sm:$0xff]
  %v7661 = vld [vmem:[%s7 + $0x8c] sm:$0xf]
  %v7662 = vld [vmem:[%s7 + $0x90] sm:$0xff]
  %v7663 = vld [vmem:[%s7 + $0x98] sm:$0xf]
  %v7664 = vld [vmem:[%s7 + $0x9c] sm:$0xff]
  %v7665 = vld [vmem:[%s7 + $0xa4] sm:$0xf]
  %v7666 = vld [vmem:[%s7 + $0xa8] sm:$0xff]
  %v7667 = vld [vmem:[%s7 + $0xb0] sm:$0xf]
  %v7668 = vld [vmem:[%s7 + $0xb4] sm:$0xff]
  %v7669 = vld [vmem:[%s7 + $0xbc] sm:$0xf]
  %v7702 = vunpack.c.l.b16 %v7638
  %v7703 = vunpack.c.h.b16 %v7638
  %v7704 = vunpack.c.l.b16 %v7639
  %v7705 = vunpack.c.l.b16 %v7640
  %v7706 = vunpack.c.h.b16 %v7640
  %v7707 = vunpack.c.l.b16 %v7641
  %v7708 = vunpack.c.l.b16 %v7642
  %v7709 = vunpack.c.h.b16 %v7642
  %v7710 = vunpack.c.l.b16 %v7643
  %v7711 = vunpack.c.l.b16 %v7644
  %v7712 = vunpack.c.h.b16 %v7644
  %v7713 = vunpack.c.l.b16 %v7645
  %v7714 = vunpack.c.l.b16 %v7646
  %v7715 = vunpack.c.h.b16 %v7646
  %v7716 = vunpack.c.l.b16 %v7647
  %v7717 = vunpack.c.l.b16 %v7648
  %v7718 = vunpack.c.h.b16 %v7648
  %v7719 = vunpack.c.l.b16 %v7649
  %v7720 = vunpack.c.l.b16 %v7650
  %v7721 = vunpack.c.h.b16 %v7650
  %v7722 = vunpack.c.l.b16 %v7651
  %v7723 = vunpack.c.l.b16 %v7652
  %v7724 = vunpack.c.h.b16 %v7652
  %v7725 = vunpack.c.l.b16 %v7653
  %v7726 = vunpack.c.l.b16 %v7654
  %v7727 = vunpack.c.h.b16 %v7654
  %v7728 = vunpack.c.l.b16 %v7655
  %v7729 = vunpack.c.l.b16 %v7656
  %v7730 = vunpack.c.h.b16 %v7656
  %v7731 = vunpack.c.l.b16 %v7657
  %v7732 = vunpack.c.l.b16 %v7658
  %v7733 = vunpack.c.h.b16 %v7658
  %v7734 = vunpack.c.l.b16 %v7659
  %v7735 = vunpack.c.l.b16 %v7660
  %v7736 = vunpack.c.h.b16 %v7660
  %v7737 = vunpack.c.l.b16 %v7661
  %v7738 = vunpack.c.l.b16 %v7662
  %v7739 = vunpack.c.h.b16 %v7662
  %v7740 = vunpack.c.l.b16 %v7663
  %v7741 = vunpack.c.l.b16 %v7664
  %v7742 = vunpack.c.h.b16 %v7664
  %v7743 = vunpack.c.l.b16 %v7665
  %v7744 = vunpack.c.l.b16 %v7666
  %v7745 = vunpack.c.h.b16 %v7666
  %v7746 = vunpack.c.l.b16 %v7667
  %v7747 = vunpack.c.l.b16 %v7668
  %v7748 = vunpack.c.h.b16 %v7668
  %v7749 = vunpack.c.l.b16 %v7669
  %v7750 = vpack.c.b16 %v7705, %v7702
  %v7751 = vpack.c.b16 %v7706, %v7703
  %v7752 = vpack.c.b16 %v7707, %v7704
  %v7753 = vpack.c.b16 %v7711, %v7708
  %v7754 = vpack.c.b16 %v7712, %v7709
  %v7755 = vpack.c.b16 %v7713, %v7710
  %v7756 = vpack.c.b16 %v7717, %v7714
  %v7757 = vpack.c.b16 %v7718, %v7715
  %v7758 = vpack.c.b16 %v7719, %v7716
  %v7759 = vpack.c.b16 %v7723, %v7720
  %v7760 = vpack.c.b16 %v7724, %v7721
  %v7761 = vpack.c.b16 %v7725, %v7722
  %v7762 = vpack.c.b16 %v7729, %v7726
  %v7763 = vpack.c.b16 %v7730, %v7727
  %v7764 = vpack.c.b16 %v7731, %v7728
  %v7765 = vpack.c.b16 %v7735, %v7732
  %v7766 = vpack.c.b16 %v7736, %v7733
  %v7767 = vpack.c.b16 %v7737, %v7734
  %v7768 = vpack.c.b16 %v7741, %v7738
  %v7769 = vpack.c.b16 %v7742, %v7739
  %v7770 = vpack.c.b16 %v7743, %v7740
  %v7771 = vpack.c.b16 %v7747, %v7744
  %v7772 = vpack.c.b16 %v7748, %v7745
  %v7773 = vpack.c.b16 %v7749, %v7746
  %7798 = vmatprep.subr.bf16.mxu0 %v7751
  %7799 = vmatpush1.bf16.msra.mxu0 %v7750
  %7800 = vmatprep.subr.bf16.mxu0 %v7754
  %7801 = vmatpush1.bf16.msra.mxu0 %v7753
  %7802 = vmatprep.subr.bf16.mxu0 %v7757
  %7803 = vmatpush1.bf16.msra.mxu0 %v7756
  %7804 = vmatprep.subr.bf16.mxu0 %v7760
  %7805 = vmatpush1.bf16.msra.mxu0 %v7759
  %7806 = vmatprep.subr.bf16.mxu0 %v7763
  %7807 = vmatpush1.bf16.msra.mxu0 %v7762
  %7808 = vmatprep.subr.bf16.mxu0 %v7766
  %7809 = vmatpush1.bf16.msra.mxu0 %v7765
  %7810 = vmatprep.subr.bf16.mxu0 %v7769
  %7811 = vmatpush1.bf16.msra.mxu0 %v7768
  %7812 = vmatprep.subr.bf16.mxu0 %v7772
  %7813 = vmatpush1.bf16.msra.mxu0 %v7771
  %7814 = vmatprep.subr.bf16.mxu0 0
  %7815 = vmatpush1.bf16.msra.mxu0 0
  %7816 = vmatprep.subr.bf16.mxu0 0
  %7817 = vmatpush1.bf16.msra.mxu0 0
  %7818 = vmatprep.subr.bf16.mxu0 0
  %7819 = vmatpush1.bf16.msra.mxu0 0
  %7820 = vmatprep.subr.bf16.mxu0 0
  %7821 = vmatpush1.bf16.msra.mxu0 0
  %7822 = vmatprep.subr.bf16.mxu0 0
  %7823 = vmatpush1.bf16.msra.mxu0 0
  %7824 = vmatprep.subr.bf16.mxu0 0
  %7825 = vmatpush1.bf16.msra.mxu0 0
  %7826 = vmatprep.subr.bf16.mxu0 0
  %7827 = vmatpush1.bf16.msra.mxu0 0
  %7828 = vmatprep.subr.bf16.mxu0 0
  %7829 = vmatpush1.bf16.msra.mxu0 0
  %7830 = vmatprep.mubr.bf16.mxu0 0
  %7831 = vmatmul.mubr.bf16.gmra.mrb[0].mxu0 %v7632
  %v7832 = vpop.f32.mrb[0].mxu0
  %v7833 = vadd.f32 0.0, %v7832
  %v7834 = vpop.f32.mrb[0].mxu0
  %v7835 = vadd.f32 0.0, %v7834
  %v7836 = vpop.f32.mrb[0].mxu0
  %v7837 = vpop.f32.mrb[0].mxu0
  %7838 = vdwg.mxu0
  %7839 = vmatprep.subr.bf16.mxu0 0
  %7840 = vmatpush1.bf16.msra.mxu0 %v7752
  %7841 = vmatprep.subr.bf16.mxu0 0
  %7842 = vmatpush1.bf16.msra.mxu0 %v7755
  %7843 = vmatprep.subr.bf16.mxu0 0
  %7844 = vmatpush1.bf16.msra.mxu0 %v7758
  %7845 = vmatprep.subr.bf16.mxu0 0
  %7846 = vmatpush1.bf16.msra.mxu0 %v7761
  %7847 = vmatprep.subr.bf16.mxu0 0
  %7848 = vmatpush1.bf16.msra.mxu0 %v7764
  %7849 = vmatprep.subr.bf16.mxu0 0
  %7850 = vmatpush1.bf16.msra.mxu0 %v7767
  %7851 = vmatprep.subr.bf16.mxu0 0
  %7852 = vmatpush1.bf16.msra.mxu0 %v7770
  %7853 = vmatprep.subr.bf16.mxu0 0
  %7854 = vmatpush1.bf16.msra.mxu0 %v7773
  %7855 = vmatprep.subr.bf16.mxu0 0
  %7856 = vmatpush1.bf16.msra.mxu0 0
  %7857 = vmatprep.subr.bf16.mxu0 0
  %7858 = vmatpush1.bf16.msra.mxu0 0
  %7859 = vmatprep.subr.bf16.mxu0 0
  %7860 = vmatpush1.bf16.msra.mxu0 0
  %7861 = vmatprep.subr.bf16.mxu0 0
  %7862 = vmatpush1.bf16.msra.mxu0 0
  %7863 = vmatprep.subr.bf16.mxu0 0
  %7864 = vmatpush1.bf16.msra.mxu0 0
  %7865 = vmatprep.subr.bf16.mxu0 0
  %7866 = vmatpush1.bf16.msra.mxu0 0
  %7867 = vmatprep.subr.bf16.mxu0 0
  %7868 = vmatpush1.bf16.msra.mxu0 0
  %7869 = vmatprep.subr.bf16.mxu0 0
  %7870 = vmatpush1.bf16.msra.mxu0 0
  %7871 = vmatprep.mubr.bf16.mxu0 0
  %7872 = vmatmul.mubr.bf16.gmra.mrb[0].mxu0 %v7632
  %v7873 = vpop.f32.mrb[0].mxu0
  %v7874 = vadd.f32 0.0, %v7873
  %v7875 = vpop.f32.mrb[0].mxu0
  %v7876 = vpop.f32.mrb[0].mxu0
  %v7877 = vpop.f32.mrb[0].mxu0
  %7878 = vdwg.mxu0
  %v7879 = vadd.f32 %v7635, %v7833
  %v7880 = vadd.f32 %v7636, %v7835
  %v7881 = vadd.f32 %v7637, %v7874
  %v7882 = vld [vmem:[%s8] sm:$0xff]
  %v7883 = vld [vmem:[%s8 + $0x8] sm:$0xf]
  %v7884 = vld [vmem:[%s8 + $0xc] sm:$0xff]
  %v7885 = vld [vmem:[%s8 + $0x14] sm:$0xf]
  %v7886 = vld [vmem:[%s8 + $0x18] sm:$0xff]
  %v7887 = vld [vmem:[%s8 + $0x20] sm:$0xf]
  %v7888 = vld [vmem:[%s8 + $0x24] sm:$0xff]
  %v7889 = vld [vmem:[%s8 + $0x2c] sm:$0xf]
  %v7890 = vld [vmem:[%s8 + $0x30] sm:$0xff]
  %v7891 = vld [vmem:[%s8 + $0x38] sm:$0xf]
  %v7892 = vld [vmem:[%s8 + $0x3c] sm:$0xff]
  %v7893 = vld [vmem:[%s8 + $0x44] sm:$0xf]
  %v7894 = vld [vmem:[%s8 + $0x48] sm:$0xff]
  %v7895 = vld [vmem:[%s8 + $0x50] sm:$0xf]
  %v7896 = vld [vmem:[%s8 + $0x54] sm:$0xff]
  %v7897 = vld [vmem:[%s8 + $0x5c] sm:$0xf]
  %v7898 = vld [vmem:[%s8 + $0x60] sm:$0xff]
  %v7899 = vld [vmem:[%s8 + $0x68] sm:$0xf]
  %v7900 = vld [vmem:[%s8 + $0x6c] sm:$0xff]
  %v7901 = vld [vmem:[%s8 + $0x74] sm:$0xf]
  %v7902 = vld [vmem:[%s8 + $0x78] sm:$0xff]
  %v7903 = vld [vmem:[%s8 + $0x80] sm:$0xf]
  %v7904 = vld [vmem:[%s8 + $0x84] sm:$0xff]
  %v7905 = vld [vmem:[%s8 + $0x8c] sm:$0xf]
  %v7906 = vld [vmem:[%s8 + $0x90] sm:$0xff]
  %v7907 = vld [vmem:[%s8 + $0x98] sm:$0xf]
  %v7908 = vld [vmem:[%s8 + $0x9c] sm:$0xff]
  %v7909 = vld [vmem:[%s8 + $0xa4] sm:$0xf]
  %v7910 = vld [vmem:[%s8 + $0xa8] sm:$0xff]
  %v7911 = vld [vmem:[%s8 + $0xb0] sm:$0xf]
  %v7912 = vld [vmem:[%s8 + $0xb4] sm:$0xff]
  %v7913 = vld [vmem:[%s8 + $0xbc] sm:$0xf]
  %v7946 = vunpack.c.l.b16 %v7882
  %v7947 = vunpack.c.h.b16 %v7882
  %v7948 = vunpack.c.l.b16 %v7883
  %v7949 = vunpack.c.l.b16 %v7884
  %v7950 = vunpack.c.h.b16 %v7884
  %v7951 = vunpack.c.l.b16 %v7885
  %v7952 = vunpack.c.l.b16 %v7886
  %v7953 = vunpack.c.h.b16 %v7886
  %v7954 = vunpack.c.l.b16 %v7887
  %v7955 = vunpack.c.l.b16 %v7888
  %v7956 = vunpack.c.h.b16 %v7888
  %v7957 = vunpack.c.l.b16 %v7889
  %v7958 = vunpack.c.l.b16 %v7890
  %v7959 = vunpack.c.h.b16 %v7890
  %v7960 = vunpack.c.l.b16 %v7891
  %v7961 = vunpack.c.l.b16 %v7892
  %v7962 = vunpack.c.h.b16 %v7892
  %v7963 = vunpack.c.l.b16 %v7893
  %v7964 = vunpack.c.l.b16 %v7894
  %v7965 = vunpack.c.h.b16 %v7894
  %v7966 = vunpack.c.l.b16 %v7895
  %v7967 = vunpack.c.l.b16 %v7896
  %v7968 = vunpack.c.h.b16 %v7896
  %v7969 = vunpack.c.l.b16 %v7897
  %v7970 = vunpack.c.l.b16 %v7898
  %v7971 = vunpack.c.h.b16 %v7898
  %v7972 = vunpack.c.l.b16 %v7899
  %v7973 = vunpack.c.l.b16 %v7900
  %v7974 = vunpack.c.h.b16 %v7900
  %v7975 = vunpack.c.l.b16 %v7901
  %v7976 = vunpack.c.l.b16 %v7902
  %v7977 = vunpack.c.h.b16 %v7902
  %v7978 = vunpack.c.l.b16 %v7903
  %v7979 = vunpack.c.l.b16 %v7904
  %v7980 = vunpack.c.h.b16 %v7904
  %v7981 = vunpack.c.l.b16 %v7905
  %v7982 = vunpack.c.l.b16 %v7906
  %v7983 = vunpack.c.h.b16 %v7906
  %v7984 = vunpack.c.l.b16 %v7907
  %v7985 = vunpack.c.l.b16 %v7908
  %v7986 = vunpack.c.h.b16 %v7908
  %v7987 = vunpack.c.l.b16 %v7909
  %v7988 = vunpack.c.l.b16 %v7910
  %v7989 = vunpack.c.h.b16 %v7910
  %v7990 = vunpack.c.l.b16 %v7911
  %v7991 = vunpack.c.l.b16 %v7912
  %v7992 = vunpack.c.h.b16 %v7912
  %v7993 = vunpack.c.l.b16 %v7913
  %v7994 = vpack.c.b16 %v7949, %v7946
  %v7995 = vpack.c.b16 %v7950, %v7947
  %v7996 = vpack.c.b16 %v7951, %v7948
  %v7997 = vpack.c.b16 %v7955, %v7952
  %v7998 = vpack.c.b16 %v7956, %v7953
  %v7999 = vpack.c.b16 %v7957, %v7954
  %v8000 = vpack.c.b16 %v7961, %v7958
  %v8001 = vpack.c.b16 %v7962, %v7959
  %v8002 = vpack.c.b16 %v7963, %v7960
  %v8003 = vpack.c.b16 %v7967, %v7964
  %v8004 = vpack.c.b16 %v7968, %v7965
  %v8005 = vpack.c.b16 %v7969, %v7966
  %v8006 = vpack.c.b16 %v7973, %v7970
  %v8007 = vpack.c.b16 %v7974, %v7971
  %v8008 = vpack.c.b16 %v7975, %v7972
  %v8009 = vpack.c.b16 %v7979, %v7976
  %v8010 = vpack.c.b16 %v7980, %v7977
  %v8011 = vpack.c.b16 %v7981, %v7978
  %v8012 = vpack.c.b16 %v7985, %v7982
  %v8013 = vpack.c.b16 %v7986, %v7983
  %v8014 = vpack.c.b16 %v7987, %v7984
  %v8015 = vpack.c.b16 %v7991, %v7988
  %v8016 = vpack.c.b16 %v7992, %v7989
  %v8017 = vpack.c.b16 %v7993, %v7990
  %8042 = vmatprep.subr.bf16.mxu0 %v7995
  %8043 = vmatpush1.bf16.msra.mxu0 %v7994
  %8044 = vmatprep.subr.bf16.mxu0 %v7998
  %8045 = vmatpush1.bf16.msra.mxu0 %v7997
  %8046 = vmatprep.subr.bf16.mxu0 %v8001
  %8047 = vmatpush1.bf16.msra.mxu0 %v8000
  %8048 = vmatprep.subr.bf16.mxu0 %v8004
  %8049 = vmatpush1.bf16.msra.mxu0 %v8003
  %8050 = vmatprep.subr.bf16.mxu0 %v8007
  %8051 = vmatpush1.bf16.msra.mxu0 %v8006
  %8052 = vmatprep.subr.bf16.mxu0 %v8010
  %8053 = vmatpush1.bf16.msra.mxu0 %v8009
  %8054 = vmatprep.subr.bf16.mxu0 %v8013
  %8055 = vmatpush1.bf16.msra.mxu0 %v8012
  %8056 = vmatprep.subr.bf16.mxu0 %v8016
  %8057 = vmatpush1.bf16.msra.mxu0 %v8015
  %8058 = vmatprep.subr.bf16.mxu0 0
  %8059 = vmatpush1.bf16.msra.mxu0 0
  %8060 = vmatprep.subr.bf16.mxu0 0
  %8061 = vmatpush1.bf16.msra.mxu0 0
  %8062 = vmatprep.subr.bf16.mxu0 0
  %8063 = vmatpush1.bf16.msra.mxu0 0
  %8064 = vmatprep.subr.bf16.mxu0 0
  %8065 = vmatpush1.bf16.msra.mxu0 0
  %8066 = vmatprep.subr.bf16.mxu0 0
  %8067 = vmatpush1.bf16.msra.mxu0 0
  %8068 = vmatprep.subr.bf16.mxu0 0
  %8069 = vmatpush1.bf16.msra.mxu0 0
  %8070 = vmatprep.subr.bf16.mxu0 0
  %8071 = vmatpush1.bf16.msra.mxu0 0
  %8072 = vmatprep.subr.bf16.mxu0 0
  %8073 = vmatpush1.bf16.msra.mxu0 0
  %8074 = vmatprep.mubr.bf16.mxu0 0
  %8075 = vmatmul.mubr.bf16.gmra.mrb[0].mxu0 %v7353
  %v8076 = vpop.f32.mrb[0].mxu0
  %v8077 = vadd.f32 %v832, %v8076
  %v8078 = vpop.f32.mrb[0].mxu0
  %v8079 = vadd.f32 %v836, %v8078
  %v8080 = vpop.f32.mrb[0].mxu0
  %v8081 = vpop.f32.mrb[0].mxu0
  %8082 = vdwg.mxu0
  %8083 = vmatprep.subr.bf16.mxu0 0
  %8084 = vmatpush1.bf16.msra.mxu0 %v7996
  %8085 = vmatprep.subr.bf16.mxu0 0
  %8086 = vmatpush1.bf16.msra.mxu0 %v7999
  %8087 = vmatprep.subr.bf16.mxu0 0
  %8088 = vmatpush1.bf16.msra.mxu0 %v8002
  %8089 = vmatprep.subr.bf16.mxu0 0
  %8090 = vmatpush1.bf16.msra.mxu0 %v8005
  %8091 = vmatprep.subr.bf16.mxu0 0
  %8092 = vmatpush1.bf16.msra.mxu0 %v8008
  %8093 = vmatprep.subr.bf16.mxu0 0
  %8094 = vmatpush1.bf16.msra.mxu0 %v8011
  %8095 = vmatprep.subr.bf16.mxu0 0
  %8096 = vmatpush1.bf16.msra.mxu0 %v8014
  %8097 = vmatprep.subr.bf16.mxu0 0
  %8098 = vmatpush1.bf16.msra.mxu0 %v8017
  %8099 = vmatprep.subr.bf16.mxu0 0
  %8100 = vmatpush1.bf16.msra.mxu0 0
  %8101 = vmatprep.subr.bf16.mxu0 0
  %8102 = vmatpush1.bf16.msra.mxu0 0
  %8103 = vmatprep.subr.bf16.mxu0 0
  %8104 = vmatpush1.bf16.msra.mxu0 0
  %8105 = vmatprep.subr.bf16.mxu0 0
  %8106 = vmatpush1.bf16.msra.mxu0 0
  %8107 = vmatprep.subr.bf16.mxu0 0
  %8108 = vmatpush1.bf16.msra.mxu0 0
  %8109 = vmatprep.subr.bf16.mxu0 0
  %8110 = vmatpush1.bf16.msra.mxu0 0
  %8111 = vmatprep.subr.bf16.mxu0 0
  %8112 = vmatpush1.bf16.msra.mxu0 0
  %8113 = vmatprep.subr.bf16.mxu0 0
  %8114 = vmatpush1.bf16.msra.mxu0 0
  %8115 = vmatprep.mubr.bf16.mxu0 0
  %8116 = vmatmul.mubr.bf16.gmra.mrb[0].mxu0 %v7353
  %v8117 = vpop.f32.mrb[0].mxu0
  %v8118 = vadd.f32 %v840, %v8117
  %v8119 = vpop.f32.mrb[0].mxu0
  %v8120 = vpop.f32.mrb[0].mxu0
  %v8121 = vpop.f32.mrb[0].mxu0
  %8122 = vdwg.mxu0
  %v8123 = vadd.f32 %v7879, %v8077
  %v8124 = vxor.u32 %v8123, 2147483648
  %v8125 = vmul.f32 %v8124, 1.442695
  %v8126 = vpow.pop %v8125
  %v8127 = vadd.f32 %v8126, 1.0
  %v8128 = vrcp.pop %v8127
  %v8129 = vmul.f32 1.0, %v8128
  %v8130 = vadd.f32 %v7880, %v8079
  %v8131 = vxor.u32 %v8130, 2147483648
  %v8132 = vmul.f32 %v8131, 1.442695
  %v8133 = vpow.pop %v8132
  %v8134 = vadd.f32 %v8133, 1.0
  %v8135 = vrcp.pop %v8134
  %v8136 = vmul.f32 1.0, %v8135
  %v8137 = vmul.f32 %v8129, %v8118
  %v8138 = vadd.f32 %v7881, %v8137
  %v8139 = vtanh.pop %v8138
  %v8140 = vsub.f32 1.0, %v8136
  %v8141 = vmul.f32 %v8140, %v8139
  %v8142 = vmul.f32 %v8136, %v7352
  %v8143 = vadd.f32 %v8141, %v8142
  %v8144 = vpack.c.bf16 %v8143, %v8143
  %v8145 = vld [vmem:[%s11] sm:$0xf]
  %v8146 = vld [vmem:[%s11 + $0x4] sm:$0xf]
  %v8147 = vld [vmem:[%s11 + $0x8] sm:$0xf]
  %v8148 = vld [vmem:[%s11 + $0xc] sm:$0xf]
  %v8149 = vld [vmem:[%s11 + $0x10] sm:$0xf]
  %v8150 = vld [vmem:[%s11 + $0x14] sm:$0xf]
  %v8151 = vld [vmem:[%s11 + $0x18] sm:$0xf]
  %v8152 = vld [vmem:[%s11 + $0x1c] sm:$0xf]
  %v8153 = vld [vmem:[%s11 + $0x20] sm:$0xf]
  %v8154 = vld [vmem:[%s11 + $0x24] sm:$0xf]
  %v8155 = vld [vmem:[%s11 + $0x28] sm:$0xf]
  %v8156 = vld [vmem:[%s11 + $0x2c] sm:$0xf]
  %v8157 = vld [vmem:[%s11 + $0x30] sm:$0xf]
  %v8158 = vld [vmem:[%s11 + $0x34] sm:$0xf]
  %v8159 = vld [vmem:[%s11 + $0x38] sm:$0xf]
  %v8160 = vld [vmem:[%s11 + $0x3c] sm:$0xf]
  %v8161 = vld [vmem:[%s11 + $0x40] sm:$0xf]
  %v8162 = vld [vmem:[%s11 + $0x44] sm:$0xf]
  %v8163 = vld [vmem:[%s11 + $0x48] sm:$0xf]
  %v8164 = vld [vmem:[%s11 + $0x4c] sm:$0xf]
  %v8165 = vld [vmem:[%s11 + $0x50] sm:$0xf]
  %v8166 = vld [vmem:[%s11 + $0x54] sm:$0xf]
  %v8167 = vld [vmem:[%s11 + $0x58] sm:$0xf]
  %v8168 = vld [vmem:[%s11 + $0x5c] sm:$0xf]
  %v8169 = vld [vmem:[%s11 + $0x60] sm:$0xf]
  %v8170 = vld [vmem:[%s11 + $0x64] sm:$0xf]
  %v8171 = vld [vmem:[%s11 + $0x68] sm:$0xf]
  %v8172 = vld [vmem:[%s11 + $0x6c] sm:$0xf]
  %v8173 = vld [vmem:[%s11 + $0x70] sm:$0xf]
  %v8174 = vld [vmem:[%s11 + $0x74] sm:$0xf]
  %v8175 = vld [vmem:[%s11 + $0x78] sm:$0xf]
  %v8176 = vld [vmem:[%s11 + $0x7c] sm:$0xf]
  %v8209 = vunpack.c.l.b16 %v8145
  %v8210 = vunpack.c.l.b16 %v8146
  %v8211 = vunpack.c.l.b16 %v8147
  %v8212 = vunpack.c.l.b16 %v8148
  %v8213 = vunpack.c.l.b16 %v8149
  %v8214 = vunpack.c.l.b16 %v8150
  %v8215 = vunpack.c.l.b16 %v8151
  %v8216 = vunpack.c.l.b16 %v8152
  %v8217 = vunpack.c.l.b16 %v8153
  %v8218 = vunpack.c.l.b16 %v8154
  %v8219 = vunpack.c.l.b16 %v8155
  %v8220 = vunpack.c.l.b16 %v8156
  %v8221 = vunpack.c.l.b16 %v8157
  %v8222 = vunpack.c.l.b16 %v8158
  %v8223 = vunpack.c.l.b16 %v8159
  %v8224 = vunpack.c.l.b16 %v8160
  %v8225 = vunpack.c.l.b16 %v8161
  %v8226 = vunpack.c.l.b16 %v8162
  %v8227 = vunpack.c.l.b16 %v8163
  %v8228 = vunpack.c.l.b16 %v8164
  %v8229 = vunpack.c.l.b16 %v8165
  %v8230 = vunpack.c.l.b16 %v8166
  %v8231 = vunpack.c.l.b16 %v8167
  %v8232 = vunpack.c.l.b16 %v8168
  %v8233 = vunpack.c.l.b16 %v8169
  %v8234 = vunpack.c.l.b16 %v8170
  %v8235 = vunpack.c.l.b16 %v8171
  %v8236 = vunpack.c.l.b16 %v8172
  %v8237 = vunpack.c.l.b16 %v8173
  %v8238 = vunpack.c.l.b16 %v8174
  %v8239 = vunpack.c.l.b16 %v8175
  %v8240 = vunpack.c.l.b16 %v8176
  %v8241 = vpack.c.b16 %v8210, %v8209
  %v8242 = vpack.c.b16 %v8212, %v8211
  %v8243 = vpack.c.b16 %v8214, %v8213
  %v8244 = vpack.c.b16 %v8216, %v8215
  %v8245 = vpack.c.b16 %v8218, %v8217
  %v8246 = vpack.c.b16 %v8220, %v8219
  %v8247 = vpack.c.b16 %v8222, %v8221
  %v8248 = vpack.c.b16 %v8224, %v8223
  %v8249 = vpack.c.b16 %v8226, %v8225
  %v8250 = vpack.c.b16 %v8228, %v8227
  %v8251 = vpack.c.b16 %v8230, %v8229
  %v8252 = vpack.c.b16 %v8232, %v8231
  %v8253 = vpack.c.b16 %v8234, %v8233
  %v8254 = vpack.c.b16 %v8236, %v8235
  %v8255 = vpack.c.b16 %v8238, %v8237
  %v8256 = vpack.c.b16 %v8240, %v8239
  %8273 = vmatprep.subr.bf16.mxu0 0
  %8274 = vmatpush1.bf16.msra.mxu0 %v8241
  %8275 = vmatprep.subr.bf16.mxu0 0
  %8276 = vmatpush1.bf16.msra.mxu0 %v8242
  %8277 = vmatprep.subr.bf16.mxu0 0
  %8278 = vmatpush1.bf16.msra.mxu0 %v8243
  %8279 = vmatprep.subr.bf16.mxu0 0
  %8280 = vmatpush1.bf16.msra.mxu0 %v8244
  %8281 = vmatprep.subr.bf16.mxu0 0
  %8282 = vmatpush1.bf16.msra.mxu0 %v8245
  %8283 = vmatprep.subr.bf16.mxu0 0
  %8284 = vmatpush1.bf16.msra.mxu0 %v8246
  %8285 = vmatprep.subr.bf16.mxu0 0
  %8286 = vmatpush1.bf16.msra.mxu0 %v8247
  %8287 = vmatprep.subr.bf16.mxu0 0
  %8288 = vmatpush1.bf16.msra.mxu0 %v8248
  %8289 = vmatprep.subr.bf16.mxu0 0
  %8290 = vmatpush1.bf16.msra.mxu0 %v8249
  %8291 = vmatprep.subr.bf16.mxu0 0
  %8292 = vmatpush1.bf16.msra.mxu0 %v8250
  %8293 = vmatprep.subr.bf16.mxu0 0
  %8294 = vmatpush1.bf16.msra.mxu0 %v8251
  %8295 = vmatprep.subr.bf16.mxu0 0
  %8296 = vmatpush1.bf16.msra.mxu0 %v8252
  %8297 = vmatprep.subr.bf16.mxu0 0
  %8298 = vmatpush1.bf16.msra.mxu0 %v8253
  %8299 = vmatprep.subr.bf16.mxu0 0
  %8300 = vmatpush1.bf16.msra.mxu0 %v8254
  %8301 = vmatprep.subr.bf16.mxu0 0
  %8302 = vmatpush1.bf16.msra.mxu0 %v8255
  %8303 = vmatprep.subr.bf16.mxu0 0
  %8304 = vmatpush1.bf16.msra.mxu0 %v8256
  %8305 = vmatprep.mubr.bf16.mxu0 %v7632
  %8306 = vmatmul.mubr.bf16.gmra.mrb[0].mxu0 %v8144
  %v8307 = vpop.f32.mrb[0].mxu0
  %v8308 = vadd.f32 %v849, %v8307
  %v8309 = vpop.f32.mrb[0].mxu0
  %v8310 = vpop.f32.mrb[0].mxu0
  %v8311 = vpop.f32.mrb[0].mxu0
  %8312 = vdwg.mxu0
  %s8313 = scalar_lea.vmem %s13, 40
  %8314 = vst [vmem:[%s8313] sm:$0xff] %v8308
  %v8315 = vmul.f32 %v3559, %v8143
  %v8316 = vmul.f32 %v3560, %v8143
  %v8317 = vmul.f32 %v3561, %v8143
  %v8318 = vmul.f32 %v3562, %v8143
  %v8319 = vmul.f32 %v3563, %v8143
  %v8320 = vmul.f32 %v3564, %v8143
  %v8321 = vmul.f32 %v3565, %v8143
  %v8322 = vmul.f32 %v3566, %v8143
  %v8323 = vmul.f32 %v3567, %v8143
  %v8324 = vmul.f32 %v3568, %v8143
  %8325 = vadd.xlane.f32.xlu0 %v8315
  %v8326 = vpop.xlane.xlu0 %8325
  %8327 = vadd.xlane.f32.xlu0 %v8316
  %v8328 = vpop.xlane.xlu0 %8327
  %8329 = vadd.xlane.f32.xlu0 %v8317
  %v8330 = vpop.xlane.xlu0 %8329
  %8331 = vadd.xlane.f32.xlu0 %v8318
  %v8332 = vpop.xlane.xlu0 %8331
  %8333 = vadd.xlane.f32.xlu0 %v8319
  %v8334 = vpop.xlane.xlu0 %8333
  %8335 = vadd.xlane.f32.xlu0 %v8320
  %v8336 = vpop.xlane.xlu0 %8335
  %8337 = vadd.xlane.f32.xlu0 %v8321
  %v8338 = vpop.xlane.xlu0 %8337
  %8339 = vadd.xlane.f32.xlu0 %v8322
  %v8340 = vpop.xlane.xlu0 %8339
  %8341 = vadd.xlane.f32.xlu0 %v8323
  %v8342 = vpop.xlane.xlu0 %8341
  %8343 = vadd.xlane.f32.xlu0 %v8324
  %v8344 = vpop.xlane.xlu0 %8343
  %v8345 = vmax.f32 %v8326, %v8334
  %v8346 = vmax.f32 %v8328, %v8336
  %v8347 = vmax.f32 %v8330, %v8338
  %v8348 = vmax.f32 %v8332, %v8340
  %v8349 = vmax.f32 %v8345, %v8342
  %v8350 = vmax.f32 %v8346, %v8344
  %v8351 = vmax.f32 %v8349, %v8350
  %v8352 = vmax.f32 %v8347, %v8348
  %v8353 = vmax.f32 %v8351, %v8352
  %v8354 = vsub.f32 %v8326, %v8353
  %v8355 = vsub.f32 %v8328, %v8353
  %v8356 = vsub.f32 %v8330, %v8353
  %v8357 = vsub.f32 %v8332, %v8353
  %v8358 = vsub.f32 %v8334, %v8353
  %v8359 = vsub.f32 %v8336, %v8353
  %v8360 = vsub.f32 %v8338, %v8353
  %v8361 = vsub.f32 %v8340, %v8353
  %v8362 = vsub.f32 %v8342, %v8353
  %v8363 = vsub.f32 %v8344, %v8353
  %v8364 = vmul.f32 %v8354, 1.442695
  %v8365 = vpow.pop %v8364
  %v8366 = vmul.f32 %v8355, 1.442695
  %v8367 = vpow.pop %v8366
  %v8368 = vmul.f32 %v8356, 1.442695
  %v8369 = vpow.pop %v8368
  %v8370 = vmul.f32 %v8357, 1.442695
  %v8371 = vpow.pop %v8370
  %v8372 = vmul.f32 %v8358, 1.442695
  %v8373 = vpow.pop %v8372
  %v8374 = vmul.f32 %v8359, 1.442695
  %v8375 = vpow.pop %v8374
  %v8376 = vmul.f32 %v8360, 1.442695
  %v8377 = vpow.pop %v8376
  %v8378 = vmul.f32 %v8361, 1.442695
  %v8379 = vpow.pop %v8378
  %v8380 = vmul.f32 %v8362, 1.442695
  %v8381 = vpow.pop %v8380
  %v8382 = vmul.f32 %v8363, 1.442695
  %v8383 = vpow.pop %v8382
  %v8384 = vadd.f32 %v8365, %v8367
  %v8385 = vadd.f32 %v8384, %v8369
  %v8386 = vadd.f32 %v8385, %v8371
  %v8387 = vadd.f32 %v8386, %v8373
  %v8388 = vadd.f32 %v8387, %v8375
  %v8389 = vadd.f32 %v8388, %v8377
  %v8390 = vadd.f32 %v8389, %v8379
  %v8391 = vadd.f32 %v8390, %v8381
  %v8392 = vadd.f32 %v8391, %v8383
  %v8393 = vrcp.pop %v8392
  %v8394 = vmul.f32 %v8365, %v8393
  %v8395 = vmul.f32 %v8367, %v8393
  %v8396 = vmul.f32 %v8369, %v8393
  %v8397 = vmul.f32 %v8371, %v8393
  %v8398 = vmul.f32 %v8373, %v8393
  %v8399 = vmul.f32 %v8375, %v8393
  %v8400 = vmul.f32 %v8377, %v8393
  %v8401 = vmul.f32 %v8379, %v8393
  %v8402 = vmul.f32 %v8381, %v8393
  %v8403 = vmul.f32 %v8383, %v8393
  %v8404 = vmul.f32 %v8394, %v3559
  %v8405 = vmul.f32 %v8395, %v3560
  %v8406 = vmul.f32 %v8396, %v3561
  %v8407 = vmul.f32 %v8397, %v3562
  %v8408 = vmul.f32 %v8398, %v3563
  %v8409 = vmul.f32 %v8399, %v3564
  %v8410 = vmul.f32 %v8400, %v3565
  %v8411 = vmul.f32 %v8401, %v3566
  %v8412 = vmul.f32 %v8402, %v3567
  %v8413 = vmul.f32 %v8403, %v3568
  %v8414 = vadd.f32 %v8404, %v8405
  %v8415 = vadd.f32 %v8414, %v8406
  %v8416 = vadd.f32 %v8415, %v8407
  %v8417 = vadd.f32 %v8416, %v8408
  %v8418 = vadd.f32 %v8417, %v8409
  %v8419 = vadd.f32 %v8418, %v8410
  %v8420 = vadd.f32 %v8419, %v8411
  %v8421 = vadd.f32 %v8420, %v8412
  %v8422 = vadd.f32 %v8421, %v8413
  %v8423 = vpack.c.bf16 %v8422, %v8422
  %s8424 = smul.addr %s2475, 8
  %s8425 = scalar_lea.vmem [#allocation4], %s8424
  %v8426 = vld [vmem:[%s8425] sm:$0xff]
  %v8427 = vld [vmem:[%s8425 + $0x8] sm:$0xff]
  %v8428 = vld [vmem:[%s8425 + $0x10] sm:$0xff]
  %v8429 = vld [vmem:[%s7] sm:$0xff]
  %v8430 = vld [vmem:[%s7 + $0x8] sm:$0xf]
  %v8431 = vld [vmem:[%s7 + $0xc] sm:$0xff]
  %v8432 = vld [vmem:[%s7 + $0x14] sm:$0xf]
  %v8433 = vld [vmem:[%s7 + $0x18] sm:$0xff]
  %v8434 = vld [vmem:[%s7 + $0x20] sm:$0xf]
  %v8435 = vld [vmem:[%s7 + $0x24] sm:$0xff]
  %v8436 = vld [vmem:[%s7 + $0x2c] sm:$0xf]
  %v8437 = vld [vmem:[%s7 + $0x30] sm:$0xff]
  %v8438 = vld [vmem:[%s7 + $0x38] sm:$0xf]
  %v8439 = vld [vmem:[%s7 + $0x3c] sm:$0xff]
  %v8440 = vld [vmem:[%s7 + $0x44] sm:$0xf]
  %v8441 = vld [vmem:[%s7 + $0x48] sm:$0xff]
  %v8442 = vld [vmem:[%s7 + $0x50] sm:$0xf]
  %v8443 = vld [vmem:[%s7 + $0x54] sm:$0xff]
  %v8444 = vld [vmem:[%s7 + $0x5c] sm:$0xf]
  %v8445 = vld [vmem:[%s7 + $0x60] sm:$0xff]
  %v8446 = vld [vmem:[%s7 + $0x68] sm:$0xf]
  %v8447 = vld [vmem:[%s7 + $0x6c] sm:$0xff]
  %v8448 = vld [vmem:[%s7 + $0x74] sm:$0xf]
  %v8449 = vld [vmem:[%s7 + $0x78] sm:$0xff]
  %v8450 = vld [vmem:[%s7 + $0x80] sm:$0xf]
  %v8451 = vld [vmem:[%s7 + $0x84] sm:$0xff]
  %v8452 = vld [vmem:[%s7 + $0x8c] sm:$0xf]
  %v8453 = vld [vmem:[%s7 + $0x90] sm:$0xff]
  %v8454 = vld [vmem:[%s7 + $0x98] sm:$0xf]
  %v8455 = vld [vmem:[%s7 + $0x9c] sm:$0xff]
  %v8456 = vld [vmem:[%s7 + $0xa4] sm:$0xf]
  %v8457 = vld [vmem:[%s7 + $0xa8] sm:$0xff]
  %v8458 = vld [vmem:[%s7 + $0xb0] sm:$0xf]
  %v8459 = vld [vmem:[%s7 + $0xb4] sm:$0xff]
  %v8460 = vld [vmem:[%s7 + $0xbc] sm:$0xf]
  %v8493 = vunpack.c.l.b16 %v8429
  %v8494 = vunpack.c.h.b16 %v8429
  %v8495 = vunpack.c.l.b16 %v8430
  %v8496 = vunpack.c.l.b16 %v8431
  %v8497 = vunpack.c.h.b16 %v8431
  %v8498 = vunpack.c.l.b16 %v8432
  %v8499 = vunpack.c.l.b16 %v8433
  %v8500 = vunpack.c.h.b16 %v8433
  %v8501 = vunpack.c.l.b16 %v8434
  %v8502 = vunpack.c.l.b16 %v8435
  %v8503 = vunpack.c.h.b16 %v8435
  %v8504 = vunpack.c.l.b16 %v8436
  %v8505 = vunpack.c.l.b16 %v8437
  %v8506 = vunpack.c.h.b16 %v8437
  %v8507 = vunpack.c.l.b16 %v8438
  %v8508 = vunpack.c.l.b16 %v8439
  %v8509 = vunpack.c.h.b16 %v8439
  %v8510 = vunpack.c.l.b16 %v8440
  %v8511 = vunpack.c.l.b16 %v8441
  %v8512 = vunpack.c.h.b16 %v8441
  %v8513 = vunpack.c.l.b16 %v8442
  %v8514 = vunpack.c.l.b16 %v8443
  %v8515 = vunpack.c.h.b16 %v8443
  %v8516 = vunpack.c.l.b16 %v8444
  %v8517 = vunpack.c.l.b16 %v8445
  %v8518 = vunpack.c.h.b16 %v8445
  %v8519 = vunpack.c.l.b16 %v8446
  %v8520 = vunpack.c.l.b16 %v8447
  %v8521 = vunpack.c.h.b16 %v8447
  %v8522 = vunpack.c.l.b16 %v8448
  %v8523 = vunpack.c.l.b16 %v8449
  %v8524 = vunpack.c.h.b16 %v8449
  %v8525 = vunpack.c.l.b16 %v8450
  %v8526 = vunpack.c.l.b16 %v8451
  %v8527 = vunpack.c.h.b16 %v8451
  %v8528 = vunpack.c.l.b16 %v8452
  %v8529 = vunpack.c.l.b16 %v8453
  %v8530 = vunpack.c.h.b16 %v8453
  %v8531 = vunpack.c.l.b16 %v8454
  %v8532 = vunpack.c.l.b16 %v8455
  %v8533 = vunpack.c.h.b16 %v8455
  %v8534 = vunpack.c.l.b16 %v8456
  %v8535 = vunpack.c.l.b16 %v8457
  %v8536 = vunpack.c.h.b16 %v8457
  %v8537 = vunpack.c.l.b16 %v8458
  %v8538 = vunpack.c.l.b16 %v8459
  %v8539 = vunpack.c.h.b16 %v8459
  %v8540 = vunpack.c.l.b16 %v8460
  %v8541 = vpack.c.b16 %v8496, %v8493
  %v8542 = vpack.c.b16 %v8497, %v8494
  %v8543 = vpack.c.b16 %v8498, %v8495
  %v8544 = vpack.c.b16 %v8502, %v8499
  %v8545 = vpack.c.b16 %v8503, %v8500
  %v8546 = vpack.c.b16 %v8504, %v8501
  %v8547 = vpack.c.b16 %v8508, %v8505
  %v8548 = vpack.c.b16 %v8509, %v8506
  %v8549 = vpack.c.b16 %v8510, %v8507
  %v8550 = vpack.c.b16 %v8514, %v8511
  %v8551 = vpack.c.b16 %v8515, %v8512
  %v8552 = vpack.c.b16 %v8516, %v8513
  %v8553 = vpack.c.b16 %v8520, %v8517
  %v8554 = vpack.c.b16 %v8521, %v8518
  %v8555 = vpack.c.b16 %v8522, %v8519
  %v8556 = vpack.c.b16 %v8526, %v8523
  %v8557 = vpack.c.b16 %v8527, %v8524
  %v8558 = vpack.c.b16 %v8528, %v8525
  %v8559 = vpack.c.b16 %v8532, %v8529
  %v8560 = vpack.c.b16 %v8533, %v8530
  %v8561 = vpack.c.b16 %v8534, %v8531
  %v8562 = vpack.c.b16 %v8538, %v8535
  %v8563 = vpack.c.b16 %v8539, %v8536
  %v8564 = vpack.c.b16 %v8540, %v8537
  %8589 = vmatprep.subr.bf16.mxu0 %v8542
  %8590 = vmatpush1.bf16.msra.mxu0 %v8541
  %8591 = vmatprep.subr.bf16.mxu0 %v8545
  %8592 = vmatpush1.bf16.msra.mxu0 %v8544
  %8593 = vmatprep.subr.bf16.mxu0 %v8548
  %8594 = vmatpush1.bf16.msra.mxu0 %v8547
  %8595 = vmatprep.subr.bf16.mxu0 %v8551
  %8596 = vmatpush1.bf16.msra.mxu0 %v8550
  %8597 = vmatprep.subr.bf16.mxu0 %v8554
  %8598 = vmatpush1.bf16.msra.mxu0 %v8553
  %8599 = vmatprep.subr.bf16.mxu0 %v8557
  %8600 = vmatpush1.bf16.msra.mxu0 %v8556
  %8601 = vmatprep.subr.bf16.mxu0 %v8560
  %8602 = vmatpush1.bf16.msra.mxu0 %v8559
  %8603 = vmatprep.subr.bf16.mxu0 %v8563
  %8604 = vmatpush1.bf16.msra.mxu0 %v8562
  %8605 = vmatprep.subr.bf16.mxu0 0
  %8606 = vmatpush1.bf16.msra.mxu0 0
  %8607 = vmatprep.subr.bf16.mxu0 0
  %8608 = vmatpush1.bf16.msra.mxu0 0
  %8609 = vmatprep.subr.bf16.mxu0 0
  %8610 = vmatpush1.bf16.msra.mxu0 0
  %8611 = vmatprep.subr.bf16.mxu0 0
  %8612 = vmatpush1.bf16.msra.mxu0 0
  %8613 = vmatprep.subr.bf16.mxu0 0
  %8614 = vmatpush1.bf16.msra.mxu0 0
  %8615 = vmatprep.subr.bf16.mxu0 0
  %8616 = vmatpush1.bf16.msra.mxu0 0
  %8617 = vmatprep.subr.bf16.mxu0 0
  %8618 = vmatpush1.bf16.msra.mxu0 0
  %8619 = vmatprep.subr.bf16.mxu0 0
  %8620 = vmatpush1.bf16.msra.mxu0 0
  %8621 = vmatprep.mubr.bf16.mxu0 0
  %8622 = vmatmul.mubr.bf16.gmra.mrb[0].mxu0 %v8423
  %v8623 = vpop.f32.mrb[0].mxu0
  %v8624 = vadd.f32 0.0, %v8623
  %v8625 = vpop.f32.mrb[0].mxu0
  %v8626 = vadd.f32 0.0, %v8625
  %v8627 = vpop.f32.mrb[0].mxu0
  %v8628 = vpop.f32.mrb[0].mxu0
  %8629 = vdwg.mxu0
  %8630 = vmatprep.subr.bf16.mxu0 0
  %8631 = vmatpush1.bf16.msra.mxu0 %v8543
  %8632 = vmatprep.subr.bf16.mxu0 0
  %8633 = vmatpush1.bf16.msra.mxu0 %v8546
  %8634 = vmatprep.subr.bf16.mxu0 0
  %8635 = vmatpush1.bf16.msra.mxu0 %v8549
  %8636 = vmatprep.subr.bf16.mxu0 0
  %8637 = vmatpush1.bf16.msra.mxu0 %v8552
  %8638 = vmatprep.subr.bf16.mxu0 0
  %8639 = vmatpush1.bf16.msra.mxu0 %v8555
  %8640 = vmatprep.subr.bf16.mxu0 0
  %8641 = vmatpush1.bf16.msra.mxu0 %v8558
  %8642 = vmatprep.subr.bf16.mxu0 0
  %8643 = vmatpush1.bf16.msra.mxu0 %v8561
  %8644 = vmatprep.subr.bf16.mxu0 0
  %8645 = vmatpush1.bf16.msra.mxu0 %v8564
  %8646 = vmatprep.subr.bf16.mxu0 0
  %8647 = vmatpush1.bf16.msra.mxu0 0
  %8648 = vmatprep.subr.bf16.mxu0 0
  %8649 = vmatpush1.bf16.msra.mxu0 0
  %8650 = vmatprep.subr.bf16.mxu0 0
  %8651 = vmatpush1.bf16.msra.mxu0 0
  %8652 = vmatprep.subr.bf16.mxu0 0
  %8653 = vmatpush1.bf16.msra.mxu0 0
  %8654 = vmatprep.subr.bf16.mxu0 0
  %8655 = vmatpush1.bf16.msra.mxu0 0
  %8656 = vmatprep.subr.bf16.mxu0 0
  %8657 = vmatpush1.bf16.msra.mxu0 0
  %8658 = vmatprep.subr.bf16.mxu0 0
  %8659 = vmatpush1.bf16.msra.mxu0 0
  %8660 = vmatprep.subr.bf16.mxu0 0
  %8661 = vmatpush1.bf16.msra.mxu0 0
  %8662 = vmatprep.mubr.bf16.mxu0 0
  %8663 = vmatmul.mubr.bf16.gmra.mrb[0].mxu0 %v8423
  %v8664 = vpop.f32.mrb[0].mxu0
  %v8665 = vadd.f32 0.0, %v8664
  %v8666 = vpop.f32.mrb[0].mxu0
  %v8667 = vpop.f32.mrb[0].mxu0
  %v8668 = vpop.f32.mrb[0].mxu0
  %8669 = vdwg.mxu0
  %v8670 = vadd.f32 %v8426, %v8624
  %v8671 = vadd.f32 %v8427, %v8626
  %v8672 = vadd.f32 %v8428, %v8665
  %v8673 = vld [vmem:[%s8] sm:$0xff]
  %v8674 = vld [vmem:[%s8 + $0x8] sm:$0xf]
  %v8675 = vld [vmem:[%s8 + $0xc] sm:$0xff]
  %v8676 = vld [vmem:[%s8 + $0x14] sm:$0xf]
  %v8677 = vld [vmem:[%s8 + $0x18] sm:$0xff]
  %v8678 = vld [vmem:[%s8 + $0x20] sm:$0xf]
  %v8679 = vld [vmem:[%s8 + $0x24] sm:$0xff]
  %v8680 = vld [vmem:[%s8 + $0x2c] sm:$0xf]
  %v8681 = vld [vmem:[%s8 + $0x30] sm:$0xff]
  %v8682 = vld [vmem:[%s8 + $0x38] sm:$0xf]
  %v8683 = vld [vmem:[%s8 + $0x3c] sm:$0xff]
  %v8684 = vld [vmem:[%s8 + $0x44] sm:$0xf]
  %v8685 = vld [vmem:[%s8 + $0x48] sm:$0xff]
  %v8686 = vld [vmem:[%s8 + $0x50] sm:$0xf]
  %v8687 = vld [vmem:[%s8 + $0x54] sm:$0xff]
  %v8688 = vld [vmem:[%s8 + $0x5c] sm:$0xf]
  %v8689 = vld [vmem:[%s8 + $0x60] sm:$0xff]
  %v8690 = vld [vmem:[%s8 + $0x68] sm:$0xf]
  %v8691 = vld [vmem:[%s8 + $0x6c] sm:$0xff]
  %v8692 = vld [vmem:[%s8 + $0x74] sm:$0xf]
  %v8693 = vld [vmem:[%s8 + $0x78] sm:$0xff]
  %v8694 = vld [vmem:[%s8 + $0x80] sm:$0xf]
  %v8695 = vld [vmem:[%s8 + $0x84] sm:$0xff]
  %v8696 = vld [vmem:[%s8 + $0x8c] sm:$0xf]
  %v8697 = vld [vmem:[%s8 + $0x90] sm:$0xff]
  %v8698 = vld [vmem:[%s8 + $0x98] sm:$0xf]
  %v8699 = vld [vmem:[%s8 + $0x9c] sm:$0xff]
  %v8700 = vld [vmem:[%s8 + $0xa4] sm:$0xf]
  %v8701 = vld [vmem:[%s8 + $0xa8] sm:$0xff]
  %v8702 = vld [vmem:[%s8 + $0xb0] sm:$0xf]
  %v8703 = vld [vmem:[%s8 + $0xb4] sm:$0xff]
  %v8704 = vld [vmem:[%s8 + $0xbc] sm:$0xf]
  %v8737 = vunpack.c.l.b16 %v8673
  %v8738 = vunpack.c.h.b16 %v8673
  %v8739 = vunpack.c.l.b16 %v8674
  %v8740 = vunpack.c.l.b16 %v8675
  %v8741 = vunpack.c.h.b16 %v8675
  %v8742 = vunpack.c.l.b16 %v8676
  %v8743 = vunpack.c.l.b16 %v8677
  %v8744 = vunpack.c.h.b16 %v8677
  %v8745 = vunpack.c.l.b16 %v8678
  %v8746 = vunpack.c.l.b16 %v8679
  %v8747 = vunpack.c.h.b16 %v8679
  %v8748 = vunpack.c.l.b16 %v8680
  %v8749 = vunpack.c.l.b16 %v8681
  %v8750 = vunpack.c.h.b16 %v8681
  %v8751 = vunpack.c.l.b16 %v8682
  %v8752 = vunpack.c.l.b16 %v8683
  %v8753 = vunpack.c.h.b16 %v8683
  %v8754 = vunpack.c.l.b16 %v8684
  %v8755 = vunpack.c.l.b16 %v8685
  %v8756 = vunpack.c.h.b16 %v8685
  %v8757 = vunpack.c.l.b16 %v8686
  %v8758 = vunpack.c.l.b16 %v8687
  %v8759 = vunpack.c.h.b16 %v8687
  %v8760 = vunpack.c.l.b16 %v8688
  %v8761 = vunpack.c.l.b16 %v8689
  %v8762 = vunpack.c.h.b16 %v8689
  %v8763 = vunpack.c.l.b16 %v8690
  %v8764 = vunpack.c.l.b16 %v8691
  %v8765 = vunpack.c.h.b16 %v8691
  %v8766 = vunpack.c.l.b16 %v8692
  %v8767 = vunpack.c.l.b16 %v8693
  %v8768 = vunpack.c.h.b16 %v8693
  %v8769 = vunpack.c.l.b16 %v8694
  %v8770 = vunpack.c.l.b16 %v8695
  %v8771 = vunpack.c.h.b16 %v8695
  %v8772 = vunpack.c.l.b16 %v8696
  %v8773 = vunpack.c.l.b16 %v8697
  %v8774 = vunpack.c.h.b16 %v8697
  %v8775 = vunpack.c.l.b16 %v8698
  %v8776 = vunpack.c.l.b16 %v8699
  %v8777 = vunpack.c.h.b16 %v8699
  %v8778 = vunpack.c.l.b16 %v8700
  %v8779 = vunpack.c.l.b16 %v8701
  %v8780 = vunpack.c.h.b16 %v8701
  %v8781 = vunpack.c.l.b16 %v8702
  %v8782 = vunpack.c.l.b16 %v8703
  %v8783 = vunpack.c.h.b16 %v8703
  %v8784 = vunpack.c.l.b16 %v8704
  %v8785 = vpack.c.b16 %v8740, %v8737
  %v8786 = vpack.c.b16 %v8741, %v8738
  %v8787 = vpack.c.b16 %v8742, %v8739
  %v8788 = vpack.c.b16 %v8746, %v8743
  %v8789 = vpack.c.b16 %v8747, %v8744
  %v8790 = vpack.c.b16 %v8748, %v8745
  %v8791 = vpack.c.b16 %v8752, %v8749
  %v8792 = vpack.c.b16 %v8753, %v8750
  %v8793 = vpack.c.b16 %v8754, %v8751
  %v8794 = vpack.c.b16 %v8758, %v8755
  %v8795 = vpack.c.b16 %v8759, %v8756
  %v8796 = vpack.c.b16 %v8760, %v8757
  %v8797 = vpack.c.b16 %v8764, %v8761
  %v8798 = vpack.c.b16 %v8765, %v8762
  %v8799 = vpack.c.b16 %v8766, %v8763
  %v8800 = vpack.c.b16 %v8770, %v8767
  %v8801 = vpack.c.b16 %v8771, %v8768
  %v8802 = vpack.c.b16 %v8772, %v8769
  %v8803 = vpack.c.b16 %v8776, %v8773
  %v8804 = vpack.c.b16 %v8777, %v8774
  %v8805 = vpack.c.b16 %v8778, %v8775
  %v8806 = vpack.c.b16 %v8782, %v8779
  %v8807 = vpack.c.b16 %v8783, %v8780
  %v8808 = vpack.c.b16 %v8784, %v8781
  %8833 = vmatprep.subr.bf16.mxu0 %v8786
  %8834 = vmatpush1.bf16.msra.mxu0 %v8785
  %8835 = vmatprep.subr.bf16.mxu0 %v8789
  %8836 = vmatpush1.bf16.msra.mxu0 %v8788
  %8837 = vmatprep.subr.bf16.mxu0 %v8792
  %8838 = vmatpush1.bf16.msra.mxu0 %v8791
  %8839 = vmatprep.subr.bf16.mxu0 %v8795
  %8840 = vmatpush1.bf16.msra.mxu0 %v8794
  %8841 = vmatprep.subr.bf16.mxu0 %v8798
  %8842 = vmatpush1.bf16.msra.mxu0 %v8797
  %8843 = vmatprep.subr.bf16.mxu0 %v8801
  %8844 = vmatpush1.bf16.msra.mxu0 %v8800
  %8845 = vmatprep.subr.bf16.mxu0 %v8804
  %8846 = vmatpush1.bf16.msra.mxu0 %v8803
  %8847 = vmatprep.subr.bf16.mxu0 %v8807
  %8848 = vmatpush1.bf16.msra.mxu0 %v8806
  %8849 = vmatprep.subr.bf16.mxu0 0
  %8850 = vmatpush1.bf16.msra.mxu0 0
  %8851 = vmatprep.subr.bf16.mxu0 0
  %8852 = vmatpush1.bf16.msra.mxu0 0
  %8853 = vmatprep.subr.bf16.mxu0 0
  %8854 = vmatpush1.bf16.msra.mxu0 0
  %8855 = vmatprep.subr.bf16.mxu0 0
  %8856 = vmatpush1.bf16.msra.mxu0 0
  %8857 = vmatprep.subr.bf16.mxu0 0
  %8858 = vmatpush1.bf16.msra.mxu0 0
  %8859 = vmatprep.subr.bf16.mxu0 0
  %8860 = vmatpush1.bf16.msra.mxu0 0
  %8861 = vmatprep.subr.bf16.mxu0 0
  %8862 = vmatpush1.bf16.msra.mxu0 0
  %8863 = vmatprep.subr.bf16.mxu0 0
  %8864 = vmatpush1.bf16.msra.mxu0 0
  %8865 = vmatprep.mubr.bf16.mxu0 0
  %8866 = vmatmul.mubr.bf16.gmra.mrb[0].mxu0 %v8144
  %v8867 = vpop.f32.mrb[0].mxu0
  %v8868 = vadd.f32 %v832, %v8867
  %v8869 = vpop.f32.mrb[0].mxu0
  %v8870 = vadd.f32 %v836, %v8869
  %v8871 = vpop.f32.mrb[0].mxu0
  %v8872 = vpop.f32.mrb[0].mxu0
  %8873 = vdwg.mxu0
  %8874 = vmatprep.subr.bf16.mxu0 0
  %8875 = vmatpush1.bf16.msra.mxu0 %v8787
  %8876 = vmatprep.subr.bf16.mxu0 0
  %8877 = vmatpush1.bf16.msra.mxu0 %v8790
  %8878 = vmatprep.subr.bf16.mxu0 0
  %8879 = vmatpush1.bf16.msra.mxu0 %v8793
  %8880 = vmatprep.subr.bf16.mxu0 0
  %8881 = vmatpush1.bf16.msra.mxu0 %v8796
  %8882 = vmatprep.subr.bf16.mxu0 0
  %8883 = vmatpush1.bf16.msra.mxu0 %v8799
  %8884 = vmatprep.subr.bf16.mxu0 0
  %8885 = vmatpush1.bf16.msra.mxu0 %v8802
  %8886 = vmatprep.subr.bf16.mxu0 0
  %8887 = vmatpush1.bf16.msra.mxu0 %v8805
  %8888 = vmatprep.subr.bf16.mxu0 0
  %8889 = vmatpush1.bf16.msra.mxu0 %v8808
  %8890 = vmatprep.subr.bf16.mxu0 0
  %8891 = vmatpush1.bf16.msra.mxu0 0
  %8892 = vmatprep.subr.bf16.mxu0 0
  %8893 = vmatpush1.bf16.msra.mxu0 0
  %8894 = vmatprep.subr.bf16.mxu0 0
  %8895 = vmatpush1.bf16.msra.mxu0 0
  %8896 = vmatprep.subr.bf16.mxu0 0
  %8897 = vmatpush1.bf16.msra.mxu0 0
  %8898 = vmatprep.subr.bf16.mxu0 0
  %8899 = vmatpush1.bf16.msra.mxu0 0
  %8900 = vmatprep.subr.bf16.mxu0 0
  %8901 = vmatpush1.bf16.msra.mxu0 0
  %8902 = vmatprep.subr.bf16.mxu0 0
  %8903 = vmatpush1.bf16.msra.mxu0 0
  %8904 = vmatprep.subr.bf16.mxu0 0
  %8905 = vmatpush1.bf16.msra.mxu0 0
  %8906 = vmatprep.mubr.bf16.mxu0 0
  %8907 = vmatmul.mubr.bf16.gmra.mrb[0].mxu0 %v8144
  %v8908 = vpop.f32.mrb[0].mxu0
  %v8909 = vadd.f32 %v840, %v8908
  %v8910 = vpop.f32.mrb[0].mxu0
  %v8911 = vpop.f32.mrb[0].mxu0
  %v8912 = vpop.f32.mrb[0].mxu0
  %8913 = vdwg.mxu0
  %v8914 = vadd.f32 %v8670, %v8868
  %v8915 = vxor.u32 %v8914, 2147483648
  %v8916 = vmul.f32 %v8915, 1.442695
  %v8917 = vpow.pop %v8916
  %v8918 = vadd.f32 %v8917, 1.0
  %v8919 = vrcp.pop %v8918
  %v8920 = vmul.f32 1.0, %v8919
  %v8921 = vadd.f32 %v8671, %v8870
  %v8922 = vxor.u32 %v8921, 2147483648
  %v8923 = vmul.f32 %v8922, 1.442695
  %v8924 = vpow.pop %v8923
  %v8925 = vadd.f32 %v8924, 1.0
  %v8926 = vrcp.pop %v8925
  %v8927 = vmul.f32 1.0, %v8926
  %v8928 = vmul.f32 %v8920, %v8909
  %v8929 = vadd.f32 %v8672, %v8928
  %v8930 = vtanh.pop %v8929
  %v8931 = vsub.f32 1.0, %v8927
  %v8932 = vmul.f32 %v8931, %v8930
  %v8933 = vmul.f32 %v8927, %v8143
  %v8934 = vadd.f32 %v8932, %v8933
  %v8935 = vpack.c.bf16 %v8934, %v8934
  %v8936 = vld [vmem:[%s11] sm:$0xf]
  %v8937 = vld [vmem:[%s11 + $0x4] sm:$0xf]
  %v8938 = vld [vmem:[%s11 + $0x8] sm:$0xf]
  %v8939 = vld [vmem:[%s11 + $0xc] sm:$0xf]
  %v8940 = vld [vmem:[%s11 + $0x10] sm:$0xf]
  %v8941 = vld [vmem:[%s11 + $0x14] sm:$0xf]
  %v8942 = vld [vmem:[%s11 + $0x18] sm:$0xf]
  %v8943 = vld [vmem:[%s11 + $0x1c] sm:$0xf]
  %v8944 = vld [vmem:[%s11 + $0x20] sm:$0xf]
  %v8945 = vld [vmem:[%s11 + $0x24] sm:$0xf]
  %v8946 = vld [vmem:[%s11 + $0x28] sm:$0xf]
  %v8947 = vld [vmem:[%s11 + $0x2c] sm:$0xf]
  %v8948 = vld [vmem:[%s11 + $0x30] sm:$0xf]
  %v8949 = vld [vmem:[%s11 + $0x34] sm:$0xf]
  %v8950 = vld [vmem:[%s11 + $0x38] sm:$0xf]
  %v8951 = vld [vmem:[%s11 + $0x3c] sm:$0xf]
  %v8952 = vld [vmem:[%s11 + $0x40] sm:$0xf]
  %v8953 = vld [vmem:[%s11 + $0x44] sm:$0xf]
  %v8954 = vld [vmem:[%s11 + $0x48] sm:$0xf]
  %v8955 = vld [vmem:[%s11 + $0x4c] sm:$0xf]
  %v8956 = vld [vmem:[%s11 + $0x50] sm:$0xf]
  %v8957 = vld [vmem:[%s11 + $0x54] sm:$0xf]
  %v8958 = vld [vmem:[%s11 + $0x58] sm:$0xf]
  %v8959 = vld [vmem:[%s11 + $0x5c] sm:$0xf]
  %v8960 = vld [vmem:[%s11 + $0x60] sm:$0xf]
  %v8961 = vld [vmem:[%s11 + $0x64] sm:$0xf]
  %v8962 = vld [vmem:[%s11 + $0x68] sm:$0xf]
  %v8963 = vld [vmem:[%s11 + $0x6c] sm:$0xf]
  %v8964 = vld [vmem:[%s11 + $0x70] sm:$0xf]
  %v8965 = vld [vmem:[%s11 + $0x74] sm:$0xf]
  %v8966 = vld [vmem:[%s11 + $0x78] sm:$0xf]
  %v8967 = vld [vmem:[%s11 + $0x7c] sm:$0xf]
  %v9000 = vunpack.c.l.b16 %v8936
  %v9001 = vunpack.c.l.b16 %v8937
  %v9002 = vunpack.c.l.b16 %v8938
  %v9003 = vunpack.c.l.b16 %v8939
  %v9004 = vunpack.c.l.b16 %v8940
  %v9005 = vunpack.c.l.b16 %v8941
  %v9006 = vunpack.c.l.b16 %v8942
  %v9007 = vunpack.c.l.b16 %v8943
  %v9008 = vunpack.c.l.b16 %v8944
  %v9009 = vunpack.c.l.b16 %v8945
  %v9010 = vunpack.c.l.b16 %v8946
  %v9011 = vunpack.c.l.b16 %v8947
  %v9012 = vunpack.c.l.b16 %v8948
  %v9013 = vunpack.c.l.b16 %v8949
  %v9014 = vunpack.c.l.b16 %v8950
  %v9015 = vunpack.c.l.b16 %v8951
  %v9016 = vunpack.c.l.b16 %v8952
  %v9017 = vunpack.c.l.b16 %v8953
  %v9018 = vunpack.c.l.b16 %v8954
  %v9019 = vunpack.c.l.b16 %v8955
  %v9020 = vunpack.c.l.b16 %v8956
  %v9021 = vunpack.c.l.b16 %v8957
  %v9022 = vunpack.c.l.b16 %v8958
  %v9023 = vunpack.c.l.b16 %v8959
  %v9024 = vunpack.c.l.b16 %v8960
  %v9025 = vunpack.c.l.b16 %v8961
  %v9026 = vunpack.c.l.b16 %v8962
  %v9027 = vunpack.c.l.b16 %v8963
  %v9028 = vunpack.c.l.b16 %v8964
  %v9029 = vunpack.c.l.b16 %v8965
  %v9030 = vunpack.c.l.b16 %v8966
  %v9031 = vunpack.c.l.b16 %v8967
  %v9032 = vpack.c.b16 %v9001, %v9000
  %v9033 = vpack.c.b16 %v9003, %v9002
  %v9034 = vpack.c.b16 %v9005, %v9004
  %v9035 = vpack.c.b16 %v9007, %v9006
  %v9036 = vpack.c.b16 %v9009, %v9008
  %v9037 = vpack.c.b16 %v9011, %v9010
  %v9038 = vpack.c.b16 %v9013, %v9012
  %v9039 = vpack.c.b16 %v9015, %v9014
  %v9040 = vpack.c.b16 %v9017, %v9016
  %v9041 = vpack.c.b16 %v9019, %v9018
  %v9042 = vpack.c.b16 %v9021, %v9020
  %v9043 = vpack.c.b16 %v9023, %v9022
  %v9044 = vpack.c.b16 %v9025, %v9024
  %v9045 = vpack.c.b16 %v9027, %v9026
  %v9046 = vpack.c.b16 %v9029, %v9028
  %v9047 = vpack.c.b16 %v9031, %v9030
  %9064 = vmatprep.subr.bf16.mxu0 0
  %9065 = vmatpush1.bf16.msra.mxu0 %v9032
  %9066 = vmatprep.subr.bf16.mxu0 0
  %9067 = vmatpush1.bf16.msra.mxu0 %v9033
  %9068 = vmatprep.subr.bf16.mxu0 0
  %9069 = vmatpush1.bf16.msra.mxu0 %v9034
  %9070 = vmatprep.subr.bf16.mxu0 0
  %9071 = vmatpush1.bf16.msra.mxu0 %v9035
  %9072 = vmatprep.subr.bf16.mxu0 0
  %9073 = vmatpush1.bf16.msra.mxu0 %v9036
  %9074 = vmatprep.subr.bf16.mxu0 0
  %9075 = vmatpush1.bf16.msra.mxu0 %v9037
  %9076 = vmatprep.subr.bf16.mxu0 0
  %9077 = vmatpush1.bf16.msra.mxu0 %v9038
  %9078 = vmatprep.subr.bf16.mxu0 0
  %9079 = vmatpush1.bf16.msra.mxu0 %v9039
  %9080 = vmatprep.subr.bf16.mxu0 0
  %9081 = vmatpush1.bf16.msra.mxu0 %v9040
  %9082 = vmatprep.subr.bf16.mxu0 0
  %9083 = vmatpush1.bf16.msra.mxu0 %v9041
  %9084 = vmatprep.subr.bf16.mxu0 0
  %9085 = vmatpush1.bf16.msra.mxu0 %v9042
  %9086 = vmatprep.subr.bf16.mxu0 0
  %9087 = vmatpush1.bf16.msra.mxu0 %v9043
  %9088 = vmatprep.subr.bf16.mxu0 0
  %9089 = vmatpush1.bf16.msra.mxu0 %v9044
  %9090 = vmatprep.subr.bf16.mxu0 0
  %9091 = vmatpush1.bf16.msra.mxu0 %v9045
  %9092 = vmatprep.subr.bf16.mxu0 0
  %9093 = vmatpush1.bf16.msra.mxu0 %v9046
  %9094 = vmatprep.subr.bf16.mxu0 0
  %9095 = vmatpush1.bf16.msra.mxu0 %v9047
  %9096 = vmatprep.mubr.bf16.mxu0 %v8423
  %9097 = vmatmul.mubr.bf16.gmra.mrb[0].mxu0 %v8935
  %v9098 = vpop.f32.mrb[0].mxu0
  %v9099 = vadd.f32 %v849, %v9098
  %v9100 = vpop.f32.mrb[0].mxu0
  %v9101 = vpop.f32.mrb[0].mxu0
  %v9102 = vpop.f32.mrb[0].mxu0
  %9103 = vdwg.mxu0
  %s9104 = scalar_lea.vmem %s13, 48
  %9105 = vst [vmem:[%s9104] sm:$0xff] %v9099
  // Predicated region
  $region54: #{seq2seq_forward.1} parent=0 // pred_check
    _
  $region55: #{seq2seq_forward.1} parent=0 // pred_check_branch
    %9107 = sbr.rel (0) target = $region57
  $region56: #{seq2seq_forward.1} parent=0 // pred_region
    _
  $region57: #{seq2seq_forward.1} parent=0 // pred_fallthru
    _
  // Predicated region
  $region58: #{seq2seq_forward.1} parent=0 // pred_check
    _
  $region59: #{seq2seq_forward.1} parent=0 // pred_check_branch
    %9109 = sbr.rel (0) target = $region61
  $region60: #{seq2seq_forward.1} parent=0 // pred_region
    _
  $region61: #{seq2seq_forward.1} parent=0 // pred_fallthru
    _

</llo_original>
